<compile_context>
chip_gen: v5e
topology: v5e:2x2
jax: 0.10.0
libtpu: 0.0.40
codegen_flags: <defaults>
</compile_context>

<pallas_src>
import math

import jax
import jax.numpy as jnp
import numpy as np
from jax.experimental import pallas as pl
from jax.experimental.pallas import tpu as pltpu

# ----------------------------- model constants ------------------------------
C = 16                 # TODO(synk): `midChannels` is an undefined global in the source -> 16.
BT = 8                 # images packed on the lane axis (BT*C = 128). Use 16 on v6e/v7x.
G = BT * C             # packed lane width for activations
NUM_LEVELS = 3
NUM_WIN = 14           # 1 + 4 + 9 SPP windows
DIM = NUM_WIN * C      # 224
HID = 32
OUTC = 16
HIDL = BT * HID        # packed fc1-hidden lane width
H_IN = W_IN = 32       # demo input spatial size (NCHW [N, 1, 32, 32])

S2 = 16                # row stride of the parity-split conv2 input buffers (multiple of 8)
BUF_ROWS = 19 * S2     # 304 rows per buffer (covers 18 padded rows + tap reach)
L2 = 16 * S2           # 256 conv2 output rows per parity stream (rows = h*16 + w')


def _build_im2col_indices():
    """conv1 im2col gather indices; row order = (a, b, w1-parity, h1, w1//2).

    With this order pool-1 becomes 3 elementwise maxima of contiguous,
    8-aligned 128-row slabs, already split by pooled-column parity (which is
    what the parity-split conv2 input buffers consume)."""
    q = np.arange(1024)
    a = q // 512
    b = (q // 256) % 2
    par = (q // 128) % 2
    h1 = (q // 8) % 16
    m = q % 8
    h0 = 2 * h1 + a                       # conv1 output row
    w0 = 2 * (2 * m + par) + b            # conv1 output col
    k = np.arange(9)
    dy, dx = k // 3, k % 3
    rows = h0[:, None] + dy[None, :]      # padded-input coordinates
    cols = w0[:, None] + dx[None, :]
    return rows.astype(np.int32), cols.astype(np.int32)


_IM2COL_R, _IM2COL_C = _build_im2col_indices()


def _spp_windows():
    """(r0, r1, c0, c1, overlaps_zero_pad) on the final 8x8 map."""
    wins = [(0, 8, 0, 8, False)]                                   # level 1
    for i in range(2):                                             # level 2: 4x4 windows
        for j in range(2):
            wins.append((4 * i, 4 * i + 4, 4 * j, 4 * j + 4, False))
    for i in range(3):                                             # level 3: pad 8->10,
        for j in range(3):                                         # 4x4 windows, stride 3
            r0, r1 = max(3 * i - 1, 0), min(3 * i + 3, 8)
            c0, c1 = max(3 * j - 1, 0), min(3 * j + 3, 8)
            wins.append((r0, r1, c0, c1, not (i == 1 and j == 1)))
    return wins


_WINDOWS = _spp_windows()


# --------------------------------- kernel -----------------------------------
def _discriminator_kernel(x_ref, w1e_ref, vecs_ref, w2_ref, wfc1_ref, wfc2_ref,
                          out_ref, be_ref, bo_ref):
    f32 = jnp.float32
    bf16 = jnp.bfloat16

    # ---- conv1: one im2col matmul (kept f32; tiny K=BT*9) --------------------
    y1 = jnp.dot(x_ref[0], w1e_ref[...], preferred_element_type=f32)   # [1024, G]

    # ---- pool1 (2x2/2) + bias + ReLU + BN1 (eval, folded) --------------------
    # max commutes with the per-channel bias / monotone ReLU, BN applied after.
    b1 = vecs_ref[0:1, 0:G]
    s1 = vecs_ref[1:2, 0:G]
    o1 = vecs_ref[2:3, 0:G]

    def pool1(par):                        # par = parity of the pooled column w1
        m = y1[par * 128: par * 128 + 128, :]
        for ab in range(1, 4):
            off = ab * 256 + par * 128
            m = jnp.maximum(m, y1[off: off + 128, :])
        return jnp.maximum(m + b1, 0.0) * s1 + o1          # [128, G], rows = h1*8 + w1//2

    p_even = pool1(0)                      # pooled columns w1 = 0, 2, ..., 14
    p_odd = pool1(1)                       # pooled columns w1 = 1, 3, ..., 15
    # TODO(synk): Dropout(0.3) is an inference-mode identity here.

    # ---- scatter into the parity-split, zero-padded conv2 input buffers ------
    # BO[hp*16 + j]     = padded_map[hp, 2j+1]   (holds even-w1 pooled values)
    # BE[hp*16 + j + 7] = padded_map[hp, 2j]     (holds odd-w1 pooled values)
    # Border / junk rows stay zero from the init; all stores are 8-aligned.
    be_ref[...] = jnp.zeros((BUF_ROWS, G), f32)
    bo_ref[...] = jnp.zeros((BUF_ROWS, G), f32)
    for h1 in range(16):
        bo_ref[(h1 + 1) * S2: (h1 + 1) * S2 + 8, :] = p_even[h1 * 8: h1 * 8 + 8, :]
        be_ref[(h1 + 1) * S2 + 8: (h1 + 1) * S2 + 16, :] = p_odd[h1 * 8: h1 * 8 + 8, :]

    # ---- conv2: 9 taps x {even, odd} output streams, bf16 MXU, f32 accum -----
    bee = be_ref[...].astype(bf16)
    boo = bo_ref[...].astype(bf16)
    acc_e = jnp.zeros((L2, G), f32)        # conv2 output at (h, w=2w'),   rows = h*16 + w'
    acc_o = jnp.zeros((L2, G), f32)        # conv2 output at (h, w=2w'+1), rows = h*16 + w'
    for dy in range(3):
        for dx in range(3):
            wk = w2_ref[dy * 3 + dx]       # block-diagonal [G, G] bf16
            if dx == 0:
                se = bee[dy * S2 + 7: dy * S2 + 7 + L2, :]
                so = boo[dy * S2: dy * S2 + L2, :]
            elif dx == 1:
                se = boo[dy * S2: dy * S2 + L2, :]
                so = bee[dy * S2 + 8: dy * S2 + 8 + L2, :]
            else:
                se = bee[dy * S2 + 8: dy * S2 + 8 + L2, :]
                so = boo[dy * S2 + 1: dy * S2 + 1 + L2, :]
            acc_e = acc_e + jnp.dot(se, wk, preferred_element_type=f32)
            acc_o = acc_o + jnp.dot(so, wk, preferred_element_type=f32)

    # ---- pool2 (2x2/2) + bias + ReLU + BN2 (eval, folded) --------------------
    def hpool(acc):                        # max over adjacent h rows
        a3 = acc.reshape(8, 2 * S2, G)     # free reshape (sublane dim multiple of 8)
        return jnp.maximum(a3[:, 0:S2, :], a3[:, S2:2 * S2, :])   # [8, 16, G]

    zmax = jnp.maximum(hpool(acc_e), hpool(acc_o))                 # [8, 16, G]
    b2v = vecs_ref[3:4, 0:G].reshape(1, 1, G)
    s2v = vecs_ref[4:5, 0:G].reshape(1, 1, G)
    o2v = vecs_ref[5:6, 0:G].reshape(1, 1, G)
    z = jnp.maximum(zmax + b2v, 0.0) * s2v + o2v                   # cols 8..15 are junk

    # ---- SPP (3-level max pyramid) fused with Linear(224, 32) ----------------
    hidden = vecs_ref[6:7, :]                                      # fc1 bias (lane-tiled)
    for idx, (r0, r1, q0, q1, pad0) in enumerate(_WINDOWS):
        v = z[r0, q0:q1, :]
        for r in range(r0 + 1, r1):
            v = jnp.maximum(v, z[r, q0:q1, :])
        v = jnp.max(v, axis=0, keepdims=True)                      # [1, G]
        if pad0:
            v = jnp.maximum(v, 0.0)        # window overlaps the level-3 zero padding
        hidden = hidden + jnp.dot(v, wfc1_ref[idx], preferred_element_type=f32)

    # ---- ELU + Linear(32, 16) (tiny -> kept f32) ------------------------------
    hidden = jnp.where(hidden > 0.0, hidden,
                       jnp.exp(jnp.minimum(hidden, 0.0)) - 1.0)
    out = jnp.dot(hidden, wfc2_ref[...], preferred_element_type=f32) + vecs_ref[7:8, 0:G]
    out_ref[...] = out.reshape(1, 1, G)


# -------------------------------- wrappers -----------------------------------
def _forward_main_impl(x, kparams):
    """conv -> spp -> mid for a stacked NCHW batch x: [B, 1, 32, 32] -> [B, 16]."""
    B = x.shape[0]
    Bg = (B + BT - 1) // BT
    xpad = jnp.pad(x.reshape(B, H_IN, W_IN).astype(jnp.float32),
                   ((0, Bg * BT - B), (1, 1), (1, 1)))
    xg = xpad.reshape(Bg, BT, H_IN + 2, W_IN + 2)
    taps = xg[:, :, _IM2COL_R, _IM2COL_C]                    # [Bg, BT, 1024, 9]
    x_im2col = taps.transpose(0, 2, 1, 3).reshape(Bg, 1024, BT * 9)

    flops = Bg * (2 * 1024 * (BT * 9) * G + 18 * 2 * L2 * G * G
                  + NUM_WIN * 2 * G * HIDL + 2 * HIDL * G)
    bytes_accessed = (4 * x_im2col.size + 4 * kparams["w1e"].size
                      + 2 * kparams["w2big"].size + 4 * kparams["wbd1"].size
                      + 4 * kparams["wbd2"].size + 4 * kparams["vecs"].size
                      + 4 * Bg * G)

    out = pl.pallas_call(
        _discriminator_kernel,
        out_shape=jax.ShapeDtypeStruct((Bg, 1, G), jnp.float32),
        grid=(Bg,),
        in_specs=[
            pl.BlockSpec((1, 1024, BT * 9), lambda g: (g, 0, 0)),    # im2col'd images
            pl.BlockSpec((BT * 9, G), lambda g: (0, 0)),             # conv1 expanded weight
            pl.BlockSpec((8, HIDL), lambda g: (0, 0)),               # biases / folded BN
            pl.BlockSpec((9, G, G), lambda g: (0, 0, 0)),            # conv2 block-diag (bf16)
            pl.BlockSpec((NUM_WIN, G, HIDL), lambda g: (0, 0, 0)),   # fc1 block-diag
            pl.BlockSpec((HIDL, G), lambda g: (0, 0)),               # fc2 block-diag
        ],
        out_specs=pl.BlockSpec((1, 1, G), lambda g: (g, 0, 0)),
        scratch_shapes=[
            pltpu.VMEM((BUF_ROWS, G), jnp.float32),                  # conv2 input (odd cols)
            pltpu.VMEM((BUF_ROWS, G), jnp.float32),                  # conv2 input (even cols)
        ],
        compiler_params=pltpu.CompilerParams(
            dimension_semantics=("parallel",),
            vmem_limit_bytes=32 * 1024 * 1024,
        ),
        cost_estimate=pl.CostEstimate(
            flops=int(flops),
            transcendentals=int(Bg * HIDL),
            bytes_accessed=int(bytes_accessed),
        ),
    )(x_im2col, kparams["w1e"], kparams["vecs"],
      kparams["w2big"], kparams["wbd1"], kparams["wbd2"])
    return out.reshape(Bg * BT, OUTC)[:B]


_forward_main = jax.jit(_forward_main_impl)


def discriminator_forward(x1, x2, kparams):
    """Discriminator.forward(x1, x2) with usingInterpolate = False."""
    n1 = x1.shape[0]
    x = jnp.concatenate([x1, x2], axis=0)      # shared weights -> one stacked batch
    out = _forward_main(x, kparams)
    return out[:n1], out[n1:]
    # TODO(synk): usingInterpolate branch (conv1/spp1/mid1 on 0.5x inputs) omitted.


# --------------------------- parameter construction --------------------------
def init_params(key):
    ks = jax.random.split(key, 16)

    def uni(k, shape, bound):
        return jax.random.uniform(k, shape, jnp.float32, minval=-bound, maxval=bound)

    w1 = uni(ks[0], (9, C), 1.0 / math.sqrt(9))          # [dy*3+dx, cout]
    b1 = uni(ks[1], (C,), 1.0 / math.sqrt(9))
    w2 = uni(ks[2], (9, C, C), 1.0 / math.sqrt(9 * C))   # [dy*3+dx, cin, cout]
    b2 = uni(ks[3], (C,), 1.0 / math.sqrt(9 * C))

    def bn_fold(kg, kb, km, kv):
        gamma = jax.random.uniform(kg, (C,), jnp.float32, 0.5, 1.5)
        beta = jax.random.uniform(kb, (C,), jnp.float32, -0.3, 0.3)
        mean = 0.2 * jax.random.normal(km, (C,), jnp.float32)
        var = jax.random.uniform(kv, (C,), jnp.float32, 0.5, 1.5)
        scale = gamma / jnp.sqrt(var + 1e-5)
        return scale, beta - mean * scale

    s1, o1 = bn_fold(ks[4], ks[5], ks[6], ks[7])
    s2, o2 = bn_fold(ks[8], ks[9], ks[10], ks[11])
    bn = jnp.stack([s1, o1, s2, o2], axis=0)              # [4, C]

    w_fc1 = uni(ks[12], (DIM, HID), 1.0 / math.sqrt(DIM))  # rows = window*C + channel
    b_fc1 = uni(ks[13], (HID,), 1.0 / math.sqrt(DIM))
    w_fc2 = uni(ks[14], (HID, OUTC), 1.0 / math.sqrt(HID))
    b_fc2 = uni(ks[15], (OUTC,), 1.0 / math.sqrt(HID))
    return dict(w1=w1, b1=b1, w2=w2, b2=b2, bn=bn,
                w_fc1=w_fc1, b_fc1=b_fc1, w_fc2=w_fc2, b_fc2=b_fc2)


def pack_params(p):
    """Expand shared weights for the batch-lane-packed kernel (block-diagonal)."""
    eye = jnp.eye(BT, dtype=jnp.float32)
    w1e = jnp.kron(eye, p["w1"])                                           # [BT*9, G]
    w2big = jnp.stack([jnp.kron(eye, p["w2"][k]) for k in range(9)]
                      ).astype(jnp.bfloat16)                               # [9, G, G]
    wbd1 = jnp.stack([jnp.kron(eye, p["w_fc1"][i * C:(i + 1) * C, :])
                      for i in range(NUM_WIN)])                            # [14, G, HIDL]
    wbd2 = jnp.kron(eye, p["w_fc2"])                                       # [HIDL, G]
    vecs = jnp.zeros((8, HIDL), jnp.float32)
    vecs = vecs.at[0, :G].set(jnp.tile(p["b1"], BT))
    vecs = vecs.at[1, :G].set(jnp.tile(p["bn"][0], BT))
    vecs = vecs.at[2, :G].set(jnp.tile(p["bn"][1], BT))
    vecs = vecs.at[3, :G].set(jnp.tile(p["b2"], BT))
    vecs = vecs.at[4, :G].set(jnp.tile(p["bn"][2], BT))
    vecs = vecs.at[5, :G].set(jnp.tile(p["bn"][3], BT))
    vecs = vecs.at[6, :BT * HID].set(jnp.tile(p["b_fc1"], BT))
    vecs = vecs.at[7, :G].set(jnp.tile(p["b_fc2"], BT))
    return dict(w1e=w1e, w2big=w2big, wbd1=wbd1, wbd2=wbd2, vecs=vecs)


# --------------------------- pure-JAX reference ------------------------------
def _maxpool2x2_nhwc(x):
    return jax.lax.reduce_window(x, -jnp.inf, jax.lax.max,
                                 (1, 2, 2, 1), (1, 2, 2, 1), "VALID")


def _spp_nhwc(x, num_levels=NUM_LEVELS):
    n, h, w, _ = x.shape
    feats = []
    for i in range(num_levels):
        level = i + 1
        ks = (math.ceil(h / level), math.ceil(w / level))
        pad = (math.floor((ks[0] * level - h + 1) / 2),
               math.floor((ks[1] * level - w + 1) / 2))
        xp = jnp.pad(x, ((0, 0), (pad[0], pad[0]), (pad[1], pad[1]), (0, 0)))
        hn, wn = h + 2 * pad[0], w + 2 * pad[1]
        ks = (math.ceil(hn / level), math.ceil(wn / level))
        st = (math.floor(hn / level), math.floor(wn / level))
        t = jax.lax.reduce_window(xp, -jnp.inf, jax.lax.max,
                                  (1, ks[0], ks[1], 1), (1, st[0], st[1], 1), "VALID")
        feats.append(t.reshape(n, -1))
    return jnp.concatenate(feats, axis=1)


def _reference_main(x, params):
    h = jnp.transpose(x.astype(jnp.float32), (0, 2, 3, 1))    # NHWC
    w1 = params["w1"].reshape(3, 3, 1, C)
    h = jax.lax.conv_general_dilated(h, w1, (1, 1), "SAME",
                                     dimension_numbers=("NHWC", "HWIO", "NHWC"))
    h = jnp.maximum(h + params["b1"].reshape(1, 1, 1, C), 0.0)
    h = _maxpool2x2_nhwc(h)
    h = h * params["bn"][0].reshape(1, 1, 1, C) + params["bn"][1].reshape(1, 1, 1, C)
    w2 = params["w2"].reshape(3, 3, C, C)
    h = jax.lax.conv_general_dilated(h, w2, (1, 1), "SAME",
                                     dimension_numbers=("NHWC", "HWIO", "NHWC"))
    h = jnp.maximum(h + params["b2"].reshape(1, 1, 1, C), 0.0)
    h = _maxpool2x2_nhwc(h)
    h = h * params["bn"][2].reshape(1, 1, 1, C) + params["bn"][3].reshape(1, 1, 1, C)
    s = _spp_nhwc(h)
    m = s @ params["w_fc1"] + params["b_fc1"]
    m = jnp.where(m > 0.0, m, jnp.exp(m) - 1.0)
    return m @ params["w_fc2"] + params["b_fc2"]


def reference_forward(x1, x2, params):
    return _reference_main(x1, params), _reference_main(x2, params)


# ----------------------------------- demo ------------------------------------
if __name__ == "__main__":
    key = jax.random.PRNGKey(0)
    kp, k1, k2 = jax.random.split(key, 3)
    params = init_params(kp)
    kparams = pack_params(params)

    batch = 2
    x1 = jax.random.normal(k1, (batch, 1, H_IN, W_IN), jnp.float32)
    x2 = jax.random.normal(k2, (batch, 1, H_IN, W_IN), jnp.float32)

    out1, out2 = discriminator_forward(x1, x2, kparams)
    out1, out2 = jax.block_until_ready((out1, out2))

    ref1, ref2 = reference_forward(x1, x2, params)
    assert out1.shape == (batch, OUTC) and out2.shape == (batch, OUTC), (out1.shape, out2.shape)
    err = max(float(jnp.max(jnp.abs(out1 - ref1))),
              float(jnp.max(jnp.abs(out2 - ref2))))
    # 5e-3 tolerance vs the f32 reference: conv2 runs with bf16 MXU operands
    # (f32 accumulation); observed error is well below this.
    assert err < 5e-3, err

    print("KERNEL_OK")
</pallas_src>

<mosaic_0001>
module attributes {stable_mosaic.version = 11 : i64} {
  func.func @_discriminator_kernel(%arg0: i32, %arg1: memref<1x1024x72xf32, #tpu.memory_space<vmem>>, %arg2: memref<72x128xf32, #tpu.memory_space<vmem>>, %arg3: memref<8x256xf32, #tpu.memory_space<vmem>>, %arg4: memref<9x128x128xbf16, #tpu.memory_space<vmem>>, %arg5: memref<14x128x256xf32, #tpu.memory_space<vmem>>, %arg6: memref<256x128xf32, #tpu.memory_space<vmem>>, %arg7: memref<1x1x128xf32, #tpu.memory_space<vmem>>, %arg8: memref<304x128xf32, #tpu.memory_space<vmem>>, %arg9: memref<304x128xf32, #tpu.memory_space<vmem>>) attributes {dimension_semantics = [#tpu.dimension_semantics<parallel>], iteration_bounds = array<i64: 1>, scalar_prefetch = 0 : i64, scratch_operands = 2 : i64, tpu.core_type = #tpu.core_type<tc>, window_params = [{transform_indices = @transform_0, window_bounds = array<i64: 1, 1024, 72>}, {pipeline_mode = #tpu.pipeline_mode<synchronous>, transform_indices = @transform_1, window_bounds = array<i64: 72, 128>}, {pipeline_mode = #tpu.pipeline_mode<synchronous>, transform_indices = @transform_2, window_bounds = array<i64: 8, 256>}, {pipeline_mode = #tpu.pipeline_mode<synchronous>, transform_indices = @transform_3, window_bounds = array<i64: 9, 128, 128>}, {pipeline_mode = #tpu.pipeline_mode<synchronous>, transform_indices = @transform_4, window_bounds = array<i64: 14, 128, 256>}, {pipeline_mode = #tpu.pipeline_mode<synchronous>, transform_indices = @transform_5, window_bounds = array<i64: 256, 128>}, {transform_indices = @transform_6, window_bounds = array<i64: 1, 1, 128>}]} {
    %c0 = arith.constant 0 : index
    %c0_0 = arith.constant 0 : index
    %c0_1 = arith.constant 0 : index
    %0 = vector.load %arg1[%c0, %c0_0, %c0_1] : memref<1x1024x72xf32, #tpu.memory_space<vmem>>, vector<1x1024x72xf32>
    %1 = vector.shape_cast %0 : vector<1x1024x72xf32> to vector<1024x72xf32>
    %c0_2 = arith.constant 0 : index
    %c0_3 = arith.constant 0 : index
    %2 = vector.load %arg2[%c0_2, %c0_3] : memref<72x128xf32, #tpu.memory_space<vmem>>, vector<72x128xf32>
    %cst = arith.constant dense<0.000000e+00> : vector<1024x128xf32>
    %3 = tpu.matmul %1, %2, %cst {dimension_numbers = #tpu.dot_dimension_numbers<[1], [0], [0], [1], [0, 0, 1, 1], [], []>} : vector<1024x72xf32>, vector<72x128xf32>, vector<1024x128xf32> -> vector<1024x128xf32>
    %c0_4 = arith.constant 0 : index
    %c0_5 = arith.constant 0 : index
    %4 = vector.load %arg3[%c0_4, %c0_5] : memref<8x256xf32, #tpu.memory_space<vmem>>, vector<1x128xf32>
    %c1 = arith.constant 1 : index
    %c0_6 = arith.constant 0 : index
    %5 = vector.load %arg3[%c1, %c0_6] : memref<8x256xf32, #tpu.memory_space<vmem>>, vector<1x128xf32>
    %c2 = arith.constant 2 : index
    %c0_7 = arith.constant 0 : index
    %6 = vector.load %arg3[%c2, %c0_7] : memref<8x256xf32, #tpu.memory_space<vmem>>, vector<1x128xf32>
    %7 = vector.extract_strided_slice %3 {offsets = [0, 0], sizes = [128, 128], strides = [1, 1]} : vector<1024x128xf32> to vector<128x128xf32>
    %8 = vector.extract_strided_slice %3 {offsets = [256, 0], sizes = [128, 128], strides = [1, 1]} : vector<1024x128xf32> to vector<128x128xf32>
    %9 = arith.maximumf %7, %8 : vector<128x128xf32>
    %10 = vector.extract_strided_slice %3 {offsets = [512, 0], sizes = [128, 128], strides = [1, 1]} : vector<1024x128xf32> to vector<128x128xf32>
    %11 = arith.maximumf %9, %10 : vector<128x128xf32>
    %12 = vector.extract_strided_slice %3 {offsets = [768, 0], sizes = [128, 128], strides = [1, 1]} : vector<1024x128xf32> to vector<128x128xf32>
    %13 = arith.maximumf %11, %12 : vector<128x128xf32>
    %14 = vector.broadcast %4 : vector<1x128xf32> to vector<128x128xf32>
    %15 = arith.addf %13, %14 : vector<128x128xf32>
    %cst_8 = arith.constant 0.000000e+00 : f32
    %16 = vector.broadcast %cst_8 : f32 to vector<128x128xf32>
    %17 = arith.maximumf %15, %16 : vector<128x128xf32>
    %18 = vector.broadcast %5 : vector<1x128xf32> to vector<128x128xf32>
    %19 = arith.mulf %17, %18 : vector<128x128xf32>
    %20 = vector.broadcast %6 : vector<1x128xf32> to vector<128x128xf32>
    %21 = arith.addf %19, %20 : vector<128x128xf32>
    %22 = vector.extract_strided_slice %3 {offsets = [128, 0], sizes = [128, 128], strides = [1, 1]} : vector<1024x128xf32> to vector<128x128xf32>
    %23 = vector.extract_strided_slice %3 {offsets = [384, 0], sizes = [128, 128], strides = [1, 1]} : vector<1024x128xf32> to vector<128x128xf32>
    %24 = arith.maximumf %22, %23 : vector<128x128xf32>
    %25 = vector.extract_strided_slice %3 {offsets = [640, 0], sizes = [128, 128], strides = [1, 1]} : vector<1024x128xf32> to vector<128x128xf32>
    %26 = arith.maximumf %24, %25 : vector<128x128xf32>
    %27 = vector.extract_strided_slice %3 {offsets = [896, 0], sizes = [128, 128], strides = [1, 1]} : vector<1024x128xf32> to vector<128x128xf32>
    %28 = arith.maximumf %26, %27 : vector<128x128xf32>
    %29 = vector.broadcast %4 : vector<1x128xf32> to vector<128x128xf32>
    %30 = arith.addf %28, %29 : vector<128x128xf32>
    %cst_9 = arith.constant 0.000000e+00 : f32
    %31 = vector.broadcast %cst_9 : f32 to vector<128x128xf32>
    %32 = arith.maximumf %30, %31 : vector<128x128xf32>
    %33 = vector.broadcast %5 : vector<1x128xf32> to vector<128x128xf32>
    %34 = arith.mulf %32, %33 : vector<128x128xf32>
    %35 = vector.broadcast %6 : vector<1x128xf32> to vector<128x128xf32>
    %36 = arith.addf %34, %35 : vector<128x128xf32>
    %cst_10 = arith.constant 0.000000e+00 : f32
    %37 = vector.broadcast %cst_10 : f32 to vector<304x128xf32>
    %c0_11 = arith.constant 0 : index
    %c0_12 = arith.constant 0 : index
    %38 = vector.load %arg8[%c0_11, %c0_12] : memref<304x128xf32, #tpu.memory_space<vmem>>, vector<304x128xf32>
    tpu.vector_store %arg8[%c0_11, %c0_12], %37 {strides = array<i32>} : memref<304x128xf32, #tpu.memory_space<vmem>>, vector<304x128xf32>,
    %cst_13 = arith.constant 0.000000e+00 : f32
    %39 = vector.broadcast %cst_13 : f32 to vector<304x128xf32>
    %c0_14 = arith.constant 0 : index
    %c0_15 = arith.constant 0 : index
    %40 = vector.load %arg9[%c0_14, %c0_15] : memref<304x128xf32, #tpu.memory_space<vmem>>, vector<304x128xf32>
    tpu.vector_store %arg9[%c0_14, %c0_15], %39 {strides = array<i32>} : memref<304x128xf32, #tpu.memory_space<vmem>>, vector<304x128xf32>,
    %41 = vector.extract_strided_slice %21 {offsets = [0, 0], sizes = [8, 128], strides = [1, 1]} : vector<128x128xf32> to vector<8x128xf32>
    %c16 = arith.constant 16 : index
    %c0_16 = arith.constant 0 : index
    %42 = vector.load %arg9[%c16, %c0_16] : memref<304x128xf32, #tpu.memory_space<vmem>>, vector<8x128xf32>
    tpu.vector_store %arg9[%c16, %c0_16], %41 {strides = array<i32>} : memref<304x128xf32, #tpu.memory_space<vmem>>, vector<8x128xf32>,
    %43 = vector.extract_strided_slice %36 {offsets = [0, 0], sizes = [8, 128], strides = [1, 1]} : vector<128x128xf32> to vector<8x128xf32>
    %c24 = arith.constant 24 : index
    %c0_17 = arith.constant 0 : index
    %44 = vector.load %arg8[%c24, %c0_17] : memref<304x128xf32, #tpu.memory_space<vmem>>, vector<8x128xf32>
    tpu.vector_store %arg8[%c24, %c0_17], %43 {strides = array<i32>} : memref<304x128xf32, #tpu.memory_space<vmem>>, vector<8x128xf32>,
    %45 = vector.extract_strided_slice %21 {offsets = [8, 0], sizes = [8, 128], strides = [1, 1]} : vector<128x128xf32> to vector<8x128xf32>
    %c32 = arith.constant 32 : index
    %c0_18 = arith.constant 0 : index
    %46 = vector.load %arg9[%c32, %c0_18] : memref<304x128xf32, #tpu.memory_space<vmem>>, vector<8x128xf32>
    tpu.vector_store %arg9[%c32, %c0_18], %45 {strides = array<i32>} : memref<304x128xf32, #tpu.memory_space<vmem>>, vector<8x128xf32>,
    %47 = vector.extract_strided_slice %36 {offsets = [8, 0], sizes = [8, 128], strides = [1, 1]} : vector<128x128xf32> to vector<8x128xf32>
    %c40 = arith.constant 40 : index
    %c0_19 = arith.constant 0 : index
    %48 = vector.load %arg8[%c40, %c0_19] : memref<304x128xf32, #tpu.memory_space<vmem>>, vector<8x128xf32>
    tpu.vector_store %arg8[%c40, %c0_19], %47 {strides = array<i32>} : memref<304x128xf32, #tpu.memory_space<vmem>>, vector<8x128xf32>,
    %49 = vector.extract_strided_slice %21 {offsets = [16, 0], sizes = [8, 128], strides = [1, 1]} : vector<128x128xf32> to vector<8x128xf32>
    %c48 = arith.constant 48 : index
    %c0_20 = arith.constant 0 : index
    %50 = vector.load %arg9[%c48, %c0_20] : memref<304x128xf32, #tpu.memory_space<vmem>>, vector<8x128xf32>
    tpu.vector_store %arg9[%c48, %c0_20], %49 {strides = array<i32>} : memref<304x128xf32, #tpu.memory_space<vmem>>, vector<8x128xf32>,
    %51 = vector.extract_strided_slice %36 {offsets = [16, 0], sizes = [8, 128], strides = [1, 1]} : vector<128x128xf32> to vector<8x128xf32>
    %c56 = arith.constant 56 : index
    %c0_21 = arith.constant 0 : index
    %52 = vector.load %arg8[%c56, %c0_21] : memref<304x128xf32, #tpu.memory_space<vmem>>, vector<8x128xf32>
    tpu.vector_store %arg8[%c56, %c0_21], %51 {strides = array<i32>} : memref<304x128xf32, #tpu.memory_space<vmem>>, vector<8x128xf32>,
    %53 = vector.extract_strided_slice %21 {offsets = [24, 0], sizes = [8, 128], strides = [1, 1]} : vector<128x128xf32> to vector<8x128xf32>
    %c64 = arith.constant 64 : index
    %c0_22 = arith.constant 0 : index
    %54 = vector.load %arg9[%c64, %c0_22] : memref<304x128xf32, #tpu.memory_space<vmem>>, vector<8x128xf32>
    tpu.vector_store %arg9[%c64, %c0_22], %53 {strides = array<i32>} : memref<304x128xf32, #tpu.memory_space<vmem>>, vector<8x128xf32>,
    %55 = vector.extract_strided_slice %36 {offsets = [24, 0], sizes = [8, 128], strides = [1, 1]} : vector<128x128xf32> to vector<8x128xf32>
    %c72 = arith.constant 72 : index
    %c0_23 = arith.constant 0 : index
    %56 = vector.load %arg8[%c72, %c0_23] : memref<304x128xf32, #tpu.memory_space<vmem>>, vector<8x128xf32>
    tpu.vector_store %arg8[%c72, %c0_23], %55 {strides = array<i32>} : memref<304x128xf32, #tpu.memory_space<vmem>>, vector<8x128xf32>,
    %57 = vector.extract_strided_slice %21 {offsets = [32, 0], sizes = [8, 128], strides = [1, 1]} : vector<128x128xf32> to vector<8x128xf32>
    %c80 = arith.constant 80 : index
    %c0_24 = arith.constant 0 : index
    %58 = vector.load %arg9[%c80, %c0_24] : memref<304x128xf32, #tpu.memory_space<vmem>>, vector<8x128xf32>
    tpu.vector_store %arg9[%c80, %c0_24], %57 {strides = array<i32>} : memref<304x128xf32, #tpu.memory_space<vmem>>, vector<8x128xf32>,
    %59 = vector.extract_strided_slice %36 {offsets = [32, 0], sizes = [8, 128], strides = [1, 1]} : vector<128x128xf32> to vector<8x128xf32>
    %c88 = arith.constant 88 : index
    %c0_25 = arith.constant 0 : index
    %60 = vector.load %arg8[%c88, %c0_25] : memref<304x128xf32, #tpu.memory_space<vmem>>, vector<8x128xf32>
    tpu.vector_store %arg8[%c88, %c0_25], %59 {strides = array<i32>} : memref<304x128xf32, #tpu.memory_space<vmem>>, vector<8x128xf32>,
    %61 = vector.extract_strided_slice %21 {offsets = [40, 0], sizes = [8, 128], strides = [1, 1]} : vector<128x128xf32> to vector<8x128xf32>
    %c96 = arith.constant 96 : index
    %c0_26 = arith.constant 0 : index
    %62 = vector.load %arg9[%c96, %c0_26] : memref<304x128xf32, #tpu.memory_space<vmem>>, vector<8x128xf32>
    tpu.vector_store %arg9[%c96, %c0_26], %61 {strides = array<i32>} : memref<304x128xf32, #tpu.memory_space<vmem>>, vector<8x128xf32>,
    %63 = vector.extract_strided_slice %36 {offsets = [40, 0], sizes = [8, 128], strides = [1, 1]} : vector<128x128xf32> to vector<8x128xf32>
    %c104 = arith.constant 104 : index
    %c0_27 = arith.constant 0 : index
    %64 = vector.load %arg8[%c104, %c0_27] : memref<304x128xf32, #tpu.memory_space<vmem>>, vector<8x128xf32>
    tpu.vector_store %arg8[%c104, %c0_27], %63 {strides = array<i32>} : memref<304x128xf32, #tpu.memory_space<vmem>>, vector<8x128xf32>,
    %65 = vector.extract_strided_slice %21 {offsets = [48, 0], sizes = [8, 128], strides = [1, 1]} : vector<128x128xf32> to vector<8x128xf32>
    %c112 = arith.constant 112 : index
    %c0_28 = arith.constant 0 : index
    %66 = vector.load %arg9[%c112, %c0_28] : memref<304x128xf32, #tpu.memory_space<vmem>>, vector<8x128xf32>
    tpu.vector_store %arg9[%c112, %c0_28], %65 {strides = array<i32>} : memref<304x128xf32, #tpu.memory_space<vmem>>, vector<8x128xf32>,
    %67 = vector.extract_strided_slice %36 {offsets = [48, 0], sizes = [8, 128], strides = [1, 1]} : vector<128x128xf32> to vector<8x128xf32>
    %c120 = arith.constant 120 : index
    %c0_29 = arith.constant 0 : index
    %68 = vector.load %arg8[%c120, %c0_29] : memref<304x128xf32, #tpu.memory_space<vmem>>, vector<8x128xf32>
    tpu.vector_store %arg8[%c120, %c0_29], %67 {strides = array<i32>} : memref<304x128xf32, #tpu.memory_space<vmem>>, vector<8x128xf32>,
    %69 = vector.extract_strided_slice %21 {offsets = [56, 0], sizes = [8, 128], strides = [1, 1]} : vector<128x128xf32> to vector<8x128xf32>
    %c128 = arith.constant 128 : index
    %c0_30 = arith.constant 0 : index
    %70 = vector.load %arg9[%c128, %c0_30] : memref<304x128xf32, #tpu.memory_space<vmem>>, vector<8x128xf32>
    tpu.vector_store %arg9[%c128, %c0_30], %69 {strides = array<i32>} : memref<304x128xf32, #tpu.memory_space<vmem>>, vector<8x128xf32>,
    %71 = vector.extract_strided_slice %36 {offsets = [56, 0], sizes = [8, 128], strides = [1, 1]} : vector<128x128xf32> to vector<8x128xf32>
    %c136 = arith.constant 136 : index
    %c0_31 = arith.constant 0 : index
    %72 = vector.load %arg8[%c136, %c0_31] : memref<304x128xf32, #tpu.memory_space<vmem>>, vector<8x128xf32>
    tpu.vector_store %arg8[%c136, %c0_31], %71 {strides = array<i32>} : memref<304x128xf32, #tpu.memory_space<vmem>>, vector<8x128xf32>,
    %73 = vector.extract_strided_slice %21 {offsets = [64, 0], sizes = [8, 128], strides = [1, 1]} : vector<128x128xf32> to vector<8x128xf32>
    %c144 = arith.constant 144 : index
    %c0_32 = arith.constant 0 : index
    %74 = vector.load %arg9[%c144, %c0_32] : memref<304x128xf32, #tpu.memory_space<vmem>>, vector<8x128xf32>
    tpu.vector_store %arg9[%c144, %c0_32], %73 {strides = array<i32>} : memref<304x128xf32, #tpu.memory_space<vmem>>, vector<8x128xf32>,
    %75 = vector.extract_strided_slice %36 {offsets = [64, 0], sizes = [8, 128], strides = [1, 1]} : vector<128x128xf32> to vector<8x128xf32>
    %c152 = arith.constant 152 : index
    %c0_33 = arith.constant 0 : index
    %76 = vector.load %arg8[%c152, %c0_33] : memref<304x128xf32, #tpu.memory_space<vmem>>, vector<8x128xf32>
    tpu.vector_store %arg8[%c152, %c0_33], %75 {strides = array<i32>} : memref<304x128xf32, #tpu.memory_space<vmem>>, vector<8x128xf32>,
    %77 = vector.extract_strided_slice %21 {offsets = [72, 0], sizes = [8, 128], strides = [1, 1]} : vector<128x128xf32> to vector<8x128xf32>
    %c160 = arith.constant 160 : index
    %c0_34 = arith.constant 0 : index
    %78 = vector.load %arg9[%c160, %c0_34] : memref<304x128xf32, #tpu.memory_space<vmem>>, vector<8x128xf32>
    tpu.vector_store %arg9[%c160, %c0_34], %77 {strides = array<i32>} : memref<304x128xf32, #tpu.memory_space<vmem>>, vector<8x128xf32>,
    %79 = vector.extract_strided_slice %36 {offsets = [72, 0], sizes = [8, 128], strides = [1, 1]} : vector<128x128xf32> to vector<8x128xf32>
    %c168 = arith.constant 168 : index
    %c0_35 = arith.constant 0 : index
    %80 = vector.load %arg8[%c168, %c0_35] : memref<304x128xf32, #tpu.memory_space<vmem>>, vector<8x128xf32>
    tpu.vector_store %arg8[%c168, %c0_35], %79 {strides = array<i32>} : memref<304x128xf32, #tpu.memory_space<vmem>>, vector<8x128xf32>,
    %81 = vector.extract_strided_slice %21 {offsets = [80, 0], sizes = [8, 128], strides = [1, 1]} : vector<128x128xf32> to vector<8x128xf32>
    %c176 = arith.constant 176 : index
    %c0_36 = arith.constant 0 : index
    %82 = vector.load %arg9[%c176, %c0_36] : memref<304x128xf32, #tpu.memory_space<vmem>>, vector<8x128xf32>
    tpu.vector_store %arg9[%c176, %c0_36], %81 {strides = array<i32>} : memref<304x128xf32, #tpu.memory_space<vmem>>, vector<8x128xf32>,
    %83 = vector.extract_strided_slice %36 {offsets = [80, 0], sizes = [8, 128], strides = [1, 1]} : vector<128x128xf32> to vector<8x128xf32>
    %c184 = arith.constant 184 : index
    %c0_37 = arith.constant 0 : index
    %84 = vector.load %arg8[%c184, %c0_37] : memref<304x128xf32, #tpu.memory_space<vmem>>, vector<8x128xf32>
    tpu.vector_store %arg8[%c184, %c0_37], %83 {strides = array<i32>} : memref<304x128xf32, #tpu.memory_space<vmem>>, vector<8x128xf32>,
    %85 = vector.extract_strided_slice %21 {offsets = [88, 0], sizes = [8, 128], strides = [1, 1]} : vector<128x128xf32> to vector<8x128xf32>
    %c192 = arith.constant 192 : index
    %c0_38 = arith.constant 0 : index
    %86 = vector.load %arg9[%c192, %c0_38] : memref<304x128xf32, #tpu.memory_space<vmem>>, vector<8x128xf32>
    tpu.vector_store %arg9[%c192, %c0_38], %85 {strides = array<i32>} : memref<304x128xf32, #tpu.memory_space<vmem>>, vector<8x128xf32>,
    %87 = vector.extract_strided_slice %36 {offsets = [88, 0], sizes = [8, 128], strides = [1, 1]} : vector<128x128xf32> to vector<8x128xf32>
    %c200 = arith.constant 200 : index
    %c0_39 = arith.constant 0 : index
    %88 = vector.load %arg8[%c200, %c0_39] : memref<304x128xf32, #tpu.memory_space<vmem>>, vector<8x128xf32>
    tpu.vector_store %arg8[%c200, %c0_39], %87 {strides = array<i32>} : memref<304x128xf32, #tpu.memory_space<vmem>>, vector<8x128xf32>,
    %89 = vector.extract_strided_slice %21 {offsets = [96, 0], sizes = [8, 128], strides = [1, 1]} : vector<128x128xf32> to vector<8x128xf32>
    %c208 = arith.constant 208 : index
    %c0_40 = arith.constant 0 : index
    %90 = vector.load %arg9[%c208, %c0_40] : memref<304x128xf32, #tpu.memory_space<vmem>>, vector<8x128xf32>
    tpu.vector_store %arg9[%c208, %c0_40], %89 {strides = array<i32>} : memref<304x128xf32, #tpu.memory_space<vmem>>, vector<8x128xf32>,
    %91 = vector.extract_strided_slice %36 {offsets = [96, 0], sizes = [8, 128], strides = [1, 1]} : vector<128x128xf32> to vector<8x128xf32>
    %c216 = arith.constant 216 : index
    %c0_41 = arith.constant 0 : index
    %92 = vector.load %arg8[%c216, %c0_41] : memref<304x128xf32, #tpu.memory_space<vmem>>, vector<8x128xf32>
    tpu.vector_store %arg8[%c216, %c0_41], %91 {strides = array<i32>} : memref<304x128xf32, #tpu.memory_space<vmem>>, vector<8x128xf32>,
    %93 = vector.extract_strided_slice %21 {offsets = [104, 0], sizes = [8, 128], strides = [1, 1]} : vector<128x128xf32> to vector<8x128xf32>
    %c224 = arith.constant 224 : index
    %c0_42 = arith.constant 0 : index
    %94 = vector.load %arg9[%c224, %c0_42] : memref<304x128xf32, #tpu.memory_space<vmem>>, vector<8x128xf32>
    tpu.vector_store %arg9[%c224, %c0_42], %93 {strides = array<i32>} : memref<304x128xf32, #tpu.memory_space<vmem>>, vector<8x128xf32>,
    %95 = vector.extract_strided_slice %36 {offsets = [104, 0], sizes = [8, 128], strides = [1, 1]} : vector<128x128xf32> to vector<8x128xf32>
    %c232 = arith.constant 232 : index
    %c0_43 = arith.constant 0 : index
    %96 = vector.load %arg8[%c232, %c0_43] : memref<304x128xf32, #tpu.memory_space<vmem>>, vector<8x128xf32>
    tpu.vector_store %arg8[%c232, %c0_43], %95 {strides = array<i32>} : memref<304x128xf32, #tpu.memory_space<vmem>>, vector<8x128xf32>,
    %97 = vector.extract_strided_slice %21 {offsets = [112, 0], sizes = [8, 128], strides = [1, 1]} : vector<128x128xf32> to vector<8x128xf32>
    %c240 = arith.constant 240 : index
    %c0_44 = arith.constant 0 : index
    %98 = vector.load %arg9[%c240, %c0_44] : memref<304x128xf32, #tpu.memory_space<vmem>>, vector<8x128xf32>
    tpu.vector_store %arg9[%c240, %c0_44], %97 {strides = array<i32>} : memref<304x128xf32, #tpu.memory_space<vmem>>, vector<8x128xf32>,
    %99 = vector.extract_strided_slice %36 {offsets = [112, 0], sizes = [8, 128], strides = [1, 1]} : vector<128x128xf32> to vector<8x128xf32>
    %c248 = arith.constant 248 : index
    %c0_45 = arith.constant 0 : index
    %100 = vector.load %arg8[%c248, %c0_45] : memref<304x128xf32, #tpu.memory_space<vmem>>, vector<8x128xf32>
    tpu.vector_store %arg8[%c248, %c0_45], %99 {strides = array<i32>} : memref<304x128xf32, #tpu.memory_space<vmem>>, vector<8x128xf32>,
    %101 = vector.extract_strided_slice %21 {offsets = [120, 0], sizes = [8, 128], strides = [1, 1]} : vector<128x128xf32> to vector<8x128xf32>
    %c256 = arith.constant 256 : index
    %c0_46 = arith.constant 0 : index
    %102 = vector.load %arg9[%c256, %c0_46] : memref<304x128xf32, #tpu.memory_space<vmem>>, vector<8x128xf32>
    tpu.vector_store %arg9[%c256, %c0_46], %101 {strides = array<i32>} : memref<304x128xf32, #tpu.memory_space<vmem>>, vector<8x128xf32>,
    %103 = vector.extract_strided_slice %36 {offsets = [120, 0], sizes = [8, 128], strides = [1, 1]} : vector<128x128xf32> to vector<8x128xf32>
    %c264 = arith.constant 264 : index
    %c0_47 = arith.constant 0 : index
    %104 = vector.load %arg8[%c264, %c0_47] : memref<304x128xf32, #tpu.memory_space<vmem>>, vector<8x128xf32>
    tpu.vector_store %arg8[%c264, %c0_47], %103 {strides = array<i32>} : memref<304x128xf32, #tpu.memory_space<vmem>>, vector<8x128xf32>,
    %c0_48 = arith.constant 0 : index
    %c0_49 = arith.constant 0 : index
    %105 = vector.load %arg8[%c0_48, %c0_49] : memref<304x128xf32, #tpu.memory_space<vmem>>, vector<304x128xf32>
    %106 = arith.truncf %105 : vector<304x128xf32> to vector<304x128xbf16>
    %c0_50 = arith.constant 0 : index
    %c0_51 = arith.constant 0 : index
    %107 = vector.load %arg9[%c0_50, %c0_51] : memref<304x128xf32, #tpu.memory_space<vmem>>, vector<304x128xf32>
    %108 = arith.truncf %107 : vector<304x128xf32> to vector<304x128xbf16>
    %cst_52 = arith.constant 0.000000e+00 : f32
    %109 = vector.broadcast %cst_52 : f32 to vector<256x128xf32>
    %cst_53 = arith.constant 0.000000e+00 : f32
    %110 = vector.broadcast %cst_53 : f32 to vector<256x128xf32>
    %c0_54 = arith.constant 0 : index
    %c0_55 = arith.constant 0 : index
    %c0_56 = arith.constant 0 : index
    %111 = vector.load %arg4[%c0_54, %c0_55, %c0_56] : memref<9x128x128xbf16, #tpu.memory_space<vmem>>, vector<1x128x128xbf16>
    %112 = vector.shape_cast %111 : vector<1x128x128xbf16> to vector<128x128xbf16>
    %113 = vector.extract_strided_slice %106 {offsets = [7, 0], sizes = [256, 128], strides = [1, 1]} : vector<304x128xbf16> to vector<256x128xbf16>
    %114 = vector.extract_strided_slice %108 {offsets = [0, 0], sizes = [256, 128], strides = [1, 1]} : vector<304x128xbf16> to vector<256x128xbf16>
    %cst_57 = arith.constant dense<0.000000e+00> : vector<256x128xf32>
    %115 = tpu.matmul %113, %112, %cst_57 {dimension_numbers = #tpu.dot_dimension_numbers<[1], [0], [0], [1], [0, 0, 1, 1], [], []>} : vector<256x128xbf16>, vector<128x128xbf16>, vector<256x128xf32> -> vector<256x128xf32>
    %116 = arith.addf %109, %115 : vector<256x128xf32>
    %cst_58 = arith.constant dense<0.000000e+00> : vector<256x128xf32>
    %117 = tpu.matmul %114, %112, %cst_58 {dimension_numbers = #tpu.dot_dimension_numbers<[1], [0], [0], [1], [0, 0, 1, 1], [], []>} : vector<256x128xbf16>, vector<128x128xbf16>, vector<256x128xf32> -> vector<256x128xf32>
    %118 = arith.addf %110, %117 : vector<256x128xf32>
    %c1_59 = arith.constant 1 : index
    %c0_60 = arith.constant 0 : index
    %c0_61 = arith.constant 0 : index
    %119 = vector.load %arg4[%c1_59, %c0_60, %c0_61] : memref<9x128x128xbf16, #tpu.memory_space<vmem>>, vector<1x128x128xbf16>
    %120 = vector.shape_cast %119 : vector<1x128x128xbf16> to vector<128x128xbf16>
    %121 = vector.extract_strided_slice %108 {offsets = [0, 0], sizes = [256, 128], strides = [1, 1]} : vector<304x128xbf16> to vector<256x128xbf16>
    %122 = vector.extract_strided_slice %106 {offsets = [8, 0], sizes = [256, 128], strides = [1, 1]} : vector<304x128xbf16> to vector<256x128xbf16>
    %cst_62 = arith.constant dense<0.000000e+00> : vector<256x128xf32>
    %123 = tpu.matmul %121, %120, %cst_62 {dimension_numbers = #tpu.dot_dimension_numbers<[1], [0], [0], [1], [0, 0, 1, 1], [], []>} : vector<256x128xbf16>, vector<128x128xbf16>, vector<256x128xf32> -> vector<256x128xf32>
    %124 = arith.addf %116, %123 : vector<256x128xf32>
    %cst_63 = arith.constant dense<0.000000e+00> : vector<256x128xf32>
    %125 = tpu.matmul %122, %120, %cst_63 {dimension_numbers = #tpu.dot_dimension_numbers<[1], [0], [0], [1], [0, 0, 1, 1], [], []>} : vector<256x128xbf16>, vector<128x128xbf16>, vector<256x128xf32> -> vector<256x128xf32>
    %126 = arith.addf %118, %125 : vector<256x128xf32>
    %c2_64 = arith.constant 2 : index
    %c0_65 = arith.constant 0 : index
    %c0_66 = arith.constant 0 : index
    %127 = vector.load %arg4[%c2_64, %c0_65, %c0_66] : memref<9x128x128xbf16, #tpu.memory_space<vmem>>, vector<1x128x128xbf16>
    %128 = vector.shape_cast %127 : vector<1x128x128xbf16> to vector<128x128xbf16>
    %129 = vector.extract_strided_slice %106 {offsets = [8, 0], sizes = [256, 128], strides = [1, 1]} : vector<304x128xbf16> to vector<256x128xbf16>
    %130 = vector.extract_strided_slice %108 {offsets = [1, 0], sizes = [256, 128], strides = [1, 1]} : vector<304x128xbf16> to vector<256x128xbf16>
    %cst_67 = arith.constant dense<0.000000e+00> : vector<256x128xf32>
    %131 = tpu.matmul %129, %128, %cst_67 {dimension_numbers = #tpu.dot_dimension_numbers<[1], [0], [0], [1], [0, 0, 1, 1], [], []>} : vector<256x128xbf16>, vector<128x128xbf16>, vector<256x128xf32> -> vector<256x128xf32>
    %132 = arith.addf %124, %131 : vector<256x128xf32>
    %cst_68 = arith.constant dense<0.000000e+00> : vector<256x128xf32>
    %133 = tpu.matmul %130, %128, %cst_68 {dimension_numbers = #tpu.dot_dimension_numbers<[1], [0], [0], [1], [0, 0, 1, 1], [], []>} : vector<256x128xbf16>, vector<128x128xbf16>, vector<256x128xf32> -> vector<256x128xf32>
    %134 = arith.addf %126, %133 : vector<256x128xf32>
    %c3 = arith.constant 3 : index
    %c0_69 = arith.constant 0 : index
    %c0_70 = arith.constant 0 : index
    %135 = vector.load %arg4[%c3, %c0_69, %c0_70] : memref<9x128x128xbf16, #tpu.memory_space<vmem>>, vector<1x128x128xbf16>
    %136 = vector.shape_cast %135 : vector<1x128x128xbf16> to vector<128x128xbf16>
    %137 = vector.extract_strided_slice %106 {offsets = [23, 0], sizes = [256, 128], strides = [1, 1]} : vector<304x128xbf16> to vector<256x128xbf16>
    %138 = vector.extract_strided_slice %108 {offsets = [16, 0], sizes = [256, 128], strides = [1, 1]} : vector<304x128xbf16> to vector<256x128xbf16>
    %cst_71 = arith.constant dense<0.000000e+00> : vector<256x128xf32>
    %139 = tpu.matmul %137, %136, %cst_71 {dimension_numbers = #tpu.dot_dimension_numbers<[1], [0], [0], [1], [0, 0, 1, 1], [], []>} : vector<256x128xbf16>, vector<128x128xbf16>, vector<256x128xf32> -> vector<256x128xf32>
    %140 = arith.addf %132, %139 : vector<256x128xf32>
    %cst_72 = arith.constant dense<0.000000e+00> : vector<256x128xf32>
    %141 = tpu.matmul %138, %136, %cst_72 {dimension_numbers = #tpu.dot_dimension_numbers<[1], [0], [0], [1], [0, 0, 1, 1], [], []>} : vector<256x128xbf16>, vector<128x128xbf16>, vector<256x128xf32> -> vector<256x128xf32>
    %142 = arith.addf %134, %141 : vector<256x128xf32>
    %c4 = arith.constant 4 : index
    %c0_73 = arith.constant 0 : index
    %c0_74 = arith.constant 0 : index
    %143 = vector.load %arg4[%c4, %c0_73, %c0_74] : memref<9x128x128xbf16, #tpu.memory_space<vmem>>, vector<1x128x128xbf16>
    %144 = vector.shape_cast %143 : vector<1x128x128xbf16> to vector<128x128xbf16>
    %145 = vector.extract_strided_slice %108 {offsets = [16, 0], sizes = [256, 128], strides = [1, 1]} : vector<304x128xbf16> to vector<256x128xbf16>
    %146 = vector.extract_strided_slice %106 {offsets = [24, 0], sizes = [256, 128], strides = [1, 1]} : vector<304x128xbf16> to vector<256x128xbf16>
    %cst_75 = arith.constant dense<0.000000e+00> : vector<256x128xf32>
    %147 = tpu.matmul %145, %144, %cst_75 {dimension_numbers = #tpu.dot_dimension_numbers<[1], [0], [0], [1], [0, 0, 1, 1], [], []>} : vector<256x128xbf16>, vector<128x128xbf16>, vector<256x128xf32> -> vector<256x128xf32>
    %148 = arith.addf %140, %147 : vector<256x128xf32>
    %cst_76 = arith.constant dense<0.000000e+00> : vector<256x128xf32>
    %149 = tpu.matmul %146, %144, %cst_76 {dimension_numbers = #tpu.dot_dimension_numbers<[1], [0], [0], [1], [0, 0, 1, 1], [], []>} : vector<256x128xbf16>, vector<128x128xbf16>, vector<256x128xf32> -> vector<256x128xf32>
    %150 = arith.addf %142, %149 : vector<256x128xf32>
    %c5 = arith.constant 5 : index
    %c0_77 = arith.constant 0 : index
    %c0_78 = arith.constant 0 : index
    %151 = vector.load %arg4[%c5, %c0_77, %c0_78] : memref<9x128x128xbf16, #tpu.memory_space<vmem>>, vector<1x128x128xbf16>
    %152 = vector.shape_cast %151 : vector<1x128x128xbf16> to vector<128x128xbf16>
    %153 = vector.extract_strided_slice %106 {offsets = [24, 0], sizes = [256, 128], strides = [1, 1]} : vector<304x128xbf16> to vector<256x128xbf16>
    %154 = vector.extract_strided_slice %108 {offsets = [17, 0], sizes = [256, 128], strides = [1, 1]} : vector<304x128xbf16> to vector<256x128xbf16>
    %cst_79 = arith.constant dense<0.000000e+00> : vector<256x128xf32>
    %155 = tpu.matmul %153, %152, %cst_79 {dimension_numbers = #tpu.dot_dimension_numbers<[1], [0], [0], [1], [0, 0, 1, 1], [], []>} : vector<256x128xbf16>, vector<128x128xbf16>, vector<256x128xf32> -> vector<256x128xf32>
    %156 = arith.addf %148, %155 : vector<256x128xf32>
    %cst_80 = arith.constant dense<0.000000e+00> : vector<256x128xf32>
    %157 = tpu.matmul %154, %152, %cst_80 {dimension_numbers = #tpu.dot_dimension_numbers<[1], [0], [0], [1], [0, 0, 1, 1], [], []>} : vector<256x128xbf16>, vector<128x128xbf16>, vector<256x128xf32> -> vector<256x128xf32>
    %158 = arith.addf %150, %157 : vector<256x128xf32>
    %c6 = arith.constant 6 : index
    %c0_81 = arith.constant 0 : index
    %c0_82 = arith.constant 0 : index
    %159 = vector.load %arg4[%c6, %c0_81, %c0_82] : memref<9x128x128xbf16, #tpu.memory_space<vmem>>, vector<1x128x128xbf16>
    %160 = vector.shape_cast %159 : vector<1x128x128xbf16> to vector<128x128xbf16>
    %161 = vector.extract_strided_slice %106 {offsets = [39, 0], sizes = [256, 128], strides = [1, 1]} : vector<304x128xbf16> to vector<256x128xbf16>
    %162 = vector.extract_strided_slice %108 {offsets = [32, 0], sizes = [256, 128], strides = [1, 1]} : vector<304x128xbf16> to vector<256x128xbf16>
    %cst_83 = arith.constant dense<0.000000e+00> : vector<256x128xf32>
    %163 = tpu.matmul %161, %160, %cst_83 {dimension_numbers = #tpu.dot_dimension_numbers<[1], [0], [0], [1], [0, 0, 1, 1], [], []>} : vector<256x128xbf16>, vector<128x128xbf16>, vector<256x128xf32> -> vector<256x128xf32>
    %164 = arith.addf %156, %163 : vector<256x128xf32>
    %cst_84 = arith.constant dense<0.000000e+00> : vector<256x128xf32>
    %165 = tpu.matmul %162, %160, %cst_84 {dimension_numbers = #tpu.dot_dimension_numbers<[1], [0], [0], [1], [0, 0, 1, 1], [], []>} : vector<256x128xbf16>, vector<128x128xbf16>, vector<256x128xf32> -> vector<256x128xf32>
    %166 = arith.addf %158, %165 : vector<256x128xf32>
    %c7 = arith.constant 7 : index
    %c0_85 = arith.constant 0 : index
    %c0_86 = arith.constant 0 : index
    %167 = vector.load %arg4[%c7, %c0_85, %c0_86] : memref<9x128x128xbf16, #tpu.memory_space<vmem>>, vector<1x128x128xbf16>
    %168 = vector.shape_cast %167 : vector<1x128x128xbf16> to vector<128x128xbf16>
    %169 = vector.extract_strided_slice %108 {offsets = [32, 0], sizes = [256, 128], strides = [1, 1]} : vector<304x128xbf16> to vector<256x128xbf16>
    %170 = vector.extract_strided_slice %106 {offsets = [40, 0], sizes = [256, 128], strides = [1, 1]} : vector<304x128xbf16> to vector<256x128xbf16>
    %cst_87 = arith.constant dense<0.000000e+00> : vector<256x128xf32>
    %171 = tpu.matmul %169, %168, %cst_87 {dimension_numbers = #tpu.dot_dimension_numbers<[1], [0], [0], [1], [0, 0, 1, 1], [], []>} : vector<256x128xbf16>, vector<128x128xbf16>, vector<256x128xf32> -> vector<256x128xf32>
    %172 = arith.addf %164, %171 : vector<256x128xf32>
    %cst_88 = arith.constant dense<0.000000e+00> : vector<256x128xf32>
    %173 = tpu.matmul %170, %168, %cst_88 {dimension_numbers = #tpu.dot_dimension_numbers<[1], [0], [0], [1], [0, 0, 1, 1], [], []>} : vector<256x128xbf16>, vector<128x128xbf16>, vector<256x128xf32> -> vector<256x128xf32>
    %174 = arith.addf %166, %173 : vector<256x128xf32>
    %c8 = arith.constant 8 : index
    %c0_89 = arith.constant 0 : index
    %c0_90 = arith.constant 0 : index
    %175 = vector.load %arg4[%c8, %c0_89, %c0_90] : memref<9x128x128xbf16, #tpu.memory_space<vmem>>, vector<1x128x128xbf16>
    %176 = vector.shape_cast %175 : vector<1x128x128xbf16> to vector<128x128xbf16>
    %177 = vector.extract_strided_slice %106 {offsets = [40, 0], sizes = [256, 128], strides = [1, 1]} : vector<304x128xbf16> to vector<256x128xbf16>
    %178 = vector.extract_strided_slice %108 {offsets = [33, 0], sizes = [256, 128], strides = [1, 1]} : vector<304x128xbf16> to vector<256x128xbf16>
    %cst_91 = arith.constant dense<0.000000e+00> : vector<256x128xf32>
    %179 = tpu.matmul %177, %176, %cst_91 {dimension_numbers = #tpu.dot_dimension_numbers<[1], [0], [0], [1], [0, 0, 1, 1], [], []>} : vector<256x128xbf16>, vector<128x128xbf16>, vector<256x128xf32> -> vector<256x128xf32>
    %180 = arith.addf %172, %179 : vector<256x128xf32>
    %cst_92 = arith.constant dense<0.000000e+00> : vector<256x128xf32>
    %181 = tpu.matmul %178, %176, %cst_92 {dimension_numbers = #tpu.dot_dimension_numbers<[1], [0], [0], [1], [0, 0, 1, 1], [], []>} : vector<256x128xbf16>, vector<128x128xbf16>, vector<256x128xf32> -> vector<256x128xf32>
    %182 = arith.addf %174, %181 : vector<256x128xf32>
    %183 = vector.shape_cast %180 : vector<256x128xf32> to vector<8x32x128xf32>
    %184 = vector.extract_strided_slice %183 {offsets = [0, 0, 0], sizes = [8, 16, 128], strides = [1, 1, 1]} : vector<8x32x128xf32> to vector<8x16x128xf32>
    %185 = vector.extract_strided_slice %183 {offsets = [0, 16, 0], sizes = [8, 16, 128], strides = [1, 1, 1]} : vector<8x32x128xf32> to vector<8x16x128xf32>
    %186 = arith.maximumf %184, %185 : vector<8x16x128xf32>
    %187 = vector.shape_cast %182 : vector<256x128xf32> to vector<8x32x128xf32>
    %188 = vector.extract_strided_slice %187 {offsets = [0, 0, 0], sizes = [8, 16, 128], strides = [1, 1, 1]} : vector<8x32x128xf32> to vector<8x16x128xf32>
    %189 = vector.extract_strided_slice %187 {offsets = [0, 16, 0], sizes = [8, 16, 128], strides = [1, 1, 1]} : vector<8x32x128xf32> to vector<8x16x128xf32>
    %190 = arith.maximumf %188, %189 : vector<8x16x128xf32>
    %191 = arith.maximumf %186, %190 : vector<8x16x128xf32>
    %c3_93 = arith.constant 3 : index
    %c0_94 = arith.constant 0 : index
    %192 = vector.load %arg3[%c3_93, %c0_94] : memref<8x256xf32, #tpu.memory_space<vmem>>, vector<1x128xf32>
    %193 = vector.shape_cast %192 : vector<1x128xf32> to vector<1x1x128xf32>
    %c4_95 = arith.constant 4 : index
    %c0_96 = arith.constant 0 : index
    %194 = vector.load %arg3[%c4_95, %c0_96] : memref<8x256xf32, #tpu.memory_space<vmem>>, vector<1x128xf32>
    %195 = vector.shape_cast %194 : vector<1x128xf32> to vector<1x1x128xf32>
    %c5_97 = arith.constant 5 : index
    %c0_98 = arith.constant 0 : index
    %196 = vector.load %arg3[%c5_97, %c0_98] : memref<8x256xf32, #tpu.memory_space<vmem>>, vector<1x128xf32>
    %197 = vector.shape_cast %196 : vector<1x128xf32> to vector<1x1x128xf32>
    %198 = vector.broadcast %193 : vector<1x1x128xf32> to vector<8x16x128xf32>
    %199 = arith.addf %191, %198 : vector<8x16x128xf32>
    %cst_99 = arith.constant 0.000000e+00 : f32
    %200 = vector.broadcast %cst_99 : f32 to vector<8x16x128xf32>
    %201 = arith.maximumf %199, %200 : vector<8x16x128xf32>
    %202 = vector.broadcast %195 : vector<1x1x128xf32> to vector<8x16x128xf32>
    %203 = arith.mulf %201, %202 : vector<8x16x128xf32>
    %204 = vector.broadcast %197 : vector<1x1x128xf32> to vector<8x16x128xf32>
    %205 = arith.addf %203, %204 : vector<8x16x128xf32>
    %c6_100 = arith.constant 6 : index
    %c0_101 = arith.constant 0 : index
    %206 = vector.load %arg3[%c6_100, %c0_101] : memref<8x256xf32, #tpu.memory_space<vmem>>, vector<1x256xf32>
    %207 = vector.extract_strided_slice %205 {offsets = [0, 0, 0], sizes = [1, 8, 128], strides = [1, 1, 1]} : vector<8x16x128xf32> to vector<1x8x128xf32>
    %208 = vector.shape_cast %207 : vector<1x8x128xf32> to vector<8x128xf32>
    %209 = vector.extract_strided_slice %205 {offsets = [1, 0, 0], sizes = [1, 8, 128], strides = [1, 1, 1]} : vector<8x16x128xf32> to vector<1x8x128xf32>
    %210 = vector.shape_cast %209 : vector<1x8x128xf32> to vector<8x128xf32>
    %211 = arith.maximumf %208, %210 : vector<8x128xf32>
    %212 = vector.extract_strided_slice %205 {offsets = [2, 0, 0], sizes = [1, 8, 128], strides = [1, 1, 1]} : vector<8x16x128xf32> to vector<1x8x128xf32>
    %213 = vector.shape_cast %212 : vector<1x8x128xf32> to vector<8x128xf32>
    %214 = arith.maximumf %211, %213 : vector<8x128xf32>
    %215 = vector.extract_strided_slice %205 {offsets = [3, 0, 0], sizes = [1, 8, 128], strides = [1, 1, 1]} : vector<8x16x128xf32> to vector<1x8x128xf32>
    %216 = vector.shape_cast %215 : vector<1x8x128xf32> to vector<8x128xf32>
    %217 = arith.maximumf %214, %216 : vector<8x128xf32>
    %218 = vector.extract_strided_slice %205 {offsets = [4, 0, 0], sizes = [1, 8, 128], strides = [1, 1, 1]} : vector<8x16x128xf32> to vector<1x8x128xf32>
    %219 = vector.shape_cast %218 : vector<1x8x128xf32> to vector<8x128xf32>
    %220 = arith.maximumf %217, %219 : vector<8x128xf32>
    %221 = vector.extract_strided_slice %205 {offsets = [5, 0, 0], sizes = [1, 8, 128], strides = [1, 1, 1]} : vector<8x16x128xf32> to vector<1x8x128xf32>
    %222 = vector.shape_cast %221 : vector<1x8x128xf32> to vector<8x128xf32>
    %223 = arith.maximumf %220, %222 : vector<8x128xf32>
    %224 = vector.extract_strided_slice %205 {offsets = [6, 0, 0], sizes = [1, 8, 128], strides = [1, 1, 1]} : vector<8x16x128xf32> to vector<1x8x128xf32>
    %225 = vector.shape_cast %224 : vector<1x8x128xf32> to vector<8x128xf32>
    %226 = arith.maximumf %223, %225 : vector<8x128xf32>
    %227 = vector.extract_strided_slice %205 {offsets = [7, 0, 0], sizes = [1, 8, 128], strides = [1, 1, 1]} : vector<8x16x128xf32> to vector<1x8x128xf32>
    %228 = vector.shape_cast %227 : vector<1x8x128xf32> to vector<8x128xf32>
    %229 = arith.maximumf %226, %228 : vector<8x128xf32>
    %cst_102 = arith.constant dense<0xFF800000> : vector<128xf32>
    %230 = vector.multi_reduction <maximumf>, %229, %cst_102 [0] : vector<8x128xf32> to vector<128xf32>
    %231 = vector.shape_cast %230 : vector<128xf32> to vector<1x128xf32>
    %c0_103 = arith.constant 0 : index
    %c0_104 = arith.constant 0 : index
    %c0_105 = arith.constant 0 : index
    %232 = vector.load %arg5[%c0_103, %c0_104, %c0_105] : memref<14x128x256xf32, #tpu.memory_space<vmem>>, vector<1x128x256xf32>
    %233 = vector.shape_cast %232 : vector<1x128x256xf32> to vector<128x256xf32>
    %cst_106 = arith.constant dense<0.000000e+00> : vector<1x256xf32>
    %234 = tpu.matmul %231, %233, %cst_106 {dimension_numbers = #tpu.dot_dimension_numbers<[1], [0], [0], [1], [0, 0, 1, 1], [], []>} : vector<1x128xf32>, vector<128x256xf32>, vector<1x256xf32> -> vector<1x256xf32>
    %235 = arith.addf %206, %234 : vector<1x256xf32>
    %236 = vector.extract_strided_slice %205 {offsets = [0, 0, 0], sizes = [1, 4, 128], strides = [1, 1, 1]} : vector<8x16x128xf32> to vector<1x4x128xf32>
    %237 = vector.shape_cast %236 : vector<1x4x128xf32> to vector<4x128xf32>
    %238 = vector.extract_strided_slice %205 {offsets = [1, 0, 0], sizes = [1, 4, 128], strides = [1, 1, 1]} : vector<8x16x128xf32> to vector<1x4x128xf32>
    %239 = vector.shape_cast %238 : vector<1x4x128xf32> to vector<4x128xf32>
    %240 = arith.maximumf %237, %239 : vector<4x128xf32>
    %241 = vector.extract_strided_slice %205 {offsets = [2, 0, 0], sizes = [1, 4, 128], strides = [1, 1, 1]} : vector<8x16x128xf32> to vector<1x4x128xf32>
    %242 = vector.shape_cast %241 : vector<1x4x128xf32> to vector<4x128xf32>
    %243 = arith.maximumf %240, %242 : vector<4x128xf32>
    %244 = vector.extract_strided_slice %205 {offsets = [3, 0, 0], sizes = [1, 4, 128], strides = [1, 1, 1]} : vector<8x16x128xf32> to vector<1x4x128xf32>
    %245 = vector.shape_cast %244 : vector<1x4x128xf32> to vector<4x128xf32>
    %246 = arith.maximumf %243, %245 : vector<4x128xf32>
    %cst_107 = arith.constant dense<0xFF800000> : vector<128xf32>
    %247 = vector.multi_reduction <maximumf>, %246, %cst_107 [0] : vector<4x128xf32> to vector<128xf32>
    %248 = vector.shape_cast %247 : vector<128xf32> to vector<1x128xf32>
    %c1_108 = arith.constant 1 : index
    %c0_109 = arith.constant 0 : index
    %c0_110 = arith.constant 0 : index
    %249 = vector.load %arg5[%c1_108, %c0_109, %c0_110] : memref<14x128x256xf32, #tpu.memory_space<vmem>>, vector<1x128x256xf32>
    %250 = vector.shape_cast %249 : vector<1x128x256xf32> to vector<128x256xf32>
    %cst_111 = arith.constant dense<0.000000e+00> : vector<1x256xf32>
    %251 = tpu.matmul %248, %250, %cst_111 {dimension_numbers = #tpu.dot_dimension_numbers<[1], [0], [0], [1], [0, 0, 1, 1], [], []>} : vector<1x128xf32>, vector<128x256xf32>, vector<1x256xf32> -> vector<1x256xf32>
    %252 = arith.addf %235, %251 : vector<1x256xf32>
    %253 = vector.extract_strided_slice %205 {offsets = [0, 4, 0], sizes = [1, 4, 128], strides = [1, 1, 1]} : vector<8x16x128xf32> to vector<1x4x128xf32>
    %254 = vector.shape_cast %253 : vector<1x4x128xf32> to vector<4x128xf32>
    %255 = vector.extract_strided_slice %205 {offsets = [1, 4, 0], sizes = [1, 4, 128], strides = [1, 1, 1]} : vector<8x16x128xf32> to vector<1x4x128xf32>
    %256 = vector.shape_cast %255 : vector<1x4x128xf32> to vector<4x128xf32>
    %257 = arith.maximumf %254, %256 : vector<4x128xf32>
    %258 = vector.extract_strided_slice %205 {offsets = [2, 4, 0], sizes = [1, 4, 128], strides = [1, 1, 1]} : vector<8x16x128xf32> to vector<1x4x128xf32>
    %259 = vector.shape_cast %258 : vector<1x4x128xf32> to vector<4x128xf32>
    %260 = arith.maximumf %257, %259 : vector<4x128xf32>
    %261 = vector.extract_strided_slice %205 {offsets = [3, 4, 0], sizes = [1, 4, 128], strides = [1, 1, 1]} : vector<8x16x128xf32> to vector<1x4x128xf32>
    %262 = vector.shape_cast %261 : vector<1x4x128xf32> to vector<4x128xf32>
    %263 = arith.maximumf %260, %262 : vector<4x128xf32>
    %cst_112 = arith.constant dense<0xFF800000> : vector<128xf32>
    %264 = vector.multi_reduction <maximumf>, %263, %cst_112 [0] : vector<4x128xf32> to vector<128xf32>
    %265 = vector.shape_cast %264 : vector<128xf32> to vector<1x128xf32>
    %c2_113 = arith.constant 2 : index
    %c0_114 = arith.constant 0 : index
    %c0_115 = arith.constant 0 : index
    %266 = vector.load %arg5[%c2_113, %c0_114, %c0_115] : memref<14x128x256xf32, #tpu.memory_space<vmem>>, vector<1x128x256xf32>
    %267 = vector.shape_cast %266 : vector<1x128x256xf32> to vector<128x256xf32>
    %cst_116 = arith.constant dense<0.000000e+00> : vector<1x256xf32>
    %268 = tpu.matmul %265, %267, %cst_116 {dimension_numbers = #tpu.dot_dimension_numbers<[1], [0], [0], [1], [0, 0, 1, 1], [], []>} : vector<1x128xf32>, vector<128x256xf32>, vector<1x256xf32> -> vector<1x256xf32>
    %269 = arith.addf %252, %268 : vector<1x256xf32>
    %270 = vector.extract_strided_slice %205 {offsets = [4, 0, 0], sizes = [1, 4, 128], strides = [1, 1, 1]} : vector<8x16x128xf32> to vector<1x4x128xf32>
    %271 = vector.shape_cast %270 : vector<1x4x128xf32> to vector<4x128xf32>
    %272 = vector.extract_strided_slice %205 {offsets = [5, 0, 0], sizes = [1, 4, 128], strides = [1, 1, 1]} : vector<8x16x128xf32> to vector<1x4x128xf32>
    %273 = vector.shape_cast %272 : vector<1x4x128xf32> to vector<4x128xf32>
    %274 = arith.maximumf %271, %273 : vector<4x128xf32>
    %275 = vector.extract_strided_slice %205 {offsets = [6, 0, 0], sizes = [1, 4, 128], strides = [1, 1, 1]} : vector<8x16x128xf32> to vector<1x4x128xf32>
    %276 = vector.shape_cast %275 : vector<1x4x128xf32> to vector<4x128xf32>
    %277 = arith.maximumf %274, %276 : vector<4x128xf32>
    %278 = vector.extract_strided_slice %205 {offsets = [7, 0, 0], sizes = [1, 4, 128], strides = [1, 1, 1]} : vector<8x16x128xf32> to vector<1x4x128xf32>
    %279 = vector.shape_cast %278 : vector<1x4x128xf32> to vector<4x128xf32>
    %280 = arith.maximumf %277, %279 : vector<4x128xf32>
    %cst_117 = arith.constant dense<0xFF800000> : vector<128xf32>
    %281 = vector.multi_reduction <maximumf>, %280, %cst_117 [0] : vector<4x128xf32> to vector<128xf32>
    %282 = vector.shape_cast %281 : vector<128xf32> to vector<1x128xf32>
    %c3_118 = arith.constant 3 : index
    %c0_119 = arith.constant 0 : index
    %c0_120 = arith.constant 0 : index
    %283 = vector.load %arg5[%c3_118, %c0_119, %c0_120] : memref<14x128x256xf32, #tpu.memory_space<vmem>>, vector<1x128x256xf32>
    %284 = vector.shape_cast %283 : vector<1x128x256xf32> to vector<128x256xf32>
    %cst_121 = arith.constant dense<0.000000e+00> : vector<1x256xf32>
    %285 = tpu.matmul %282, %284, %cst_121 {dimension_numbers = #tpu.dot_dimension_numbers<[1], [0], [0], [1], [0, 0, 1, 1], [], []>} : vector<1x128xf32>, vector<128x256xf32>, vector<1x256xf32> -> vector<1x256xf32>
    %286 = arith.addf %269, %285 : vector<1x256xf32>
    %287 = vector.extract_strided_slice %205 {offsets = [4, 4, 0], sizes = [1, 4, 128], strides = [1, 1, 1]} : vector<8x16x128xf32> to vector<1x4x128xf32>
    %288 = vector.shape_cast %287 : vector<1x4x128xf32> to vector<4x128xf32>
    %289 = vector.extract_strided_slice %205 {offsets = [5, 4, 0], sizes = [1, 4, 128], strides = [1, 1, 1]} : vector<8x16x128xf32> to vector<1x4x128xf32>
    %290 = vector.shape_cast %289 : vector<1x4x128xf32> to vector<4x128xf32>
    %291 = arith.maximumf %288, %290 : vector<4x128xf32>
    %292 = vector.extract_strided_slice %205 {offsets = [6, 4, 0], sizes = [1, 4, 128], strides = [1, 1, 1]} : vector<8x16x128xf32> to vector<1x4x128xf32>
    %293 = vector.shape_cast %292 : vector<1x4x128xf32> to vector<4x128xf32>
    %294 = arith.maximumf %291, %293 : vector<4x128xf32>
    %295 = vector.extract_strided_slice %205 {offsets = [7, 4, 0], sizes = [1, 4, 128], strides = [1, 1, 1]} : vector<8x16x128xf32> to vector<1x4x128xf32>
    %296 = vector.shape_cast %295 : vector<1x4x128xf32> to vector<4x128xf32>
    %297 = arith.maximumf %294, %296 : vector<4x128xf32>
    %cst_122 = arith.constant dense<0xFF800000> : vector<128xf32>
    %298 = vector.multi_reduction <maximumf>, %297, %cst_122 [0] : vector<4x128xf32> to vector<128xf32>
    %299 = vector.shape_cast %298 : vector<128xf32> to vector<1x128xf32>
    %c4_123 = arith.constant 4 : index
    %c0_124 = arith.constant 0 : index
    %c0_125 = arith.constant 0 : index
    %300 = vector.load %arg5[%c4_123, %c0_124, %c0_125] : memref<14x128x256xf32, #tpu.memory_space<vmem>>, vector<1x128x256xf32>
    %301 = vector.shape_cast %300 : vector<1x128x256xf32> to vector<128x256xf32>
    %cst_126 = arith.constant dense<0.000000e+00> : vector<1x256xf32>
    %302 = tpu.matmul %299, %301, %cst_126 {dimension_numbers = #tpu.dot_dimension_numbers<[1], [0], [0], [1], [0, 0, 1, 1], [], []>} : vector<1x128xf32>, vector<128x256xf32>, vector<1x256xf32> -> vector<1x256xf32>
    %303 = arith.addf %286, %302 : vector<1x256xf32>
    %304 = vector.extract_strided_slice %205 {offsets = [0, 0, 0], sizes = [1, 3, 128], strides = [1, 1, 1]} : vector<8x16x128xf32> to vector<1x3x128xf32>
    %305 = vector.shape_cast %304 : vector<1x3x128xf32> to vector<3x128xf32>
    %306 = vector.extract_strided_slice %205 {offsets = [1, 0, 0], sizes = [1, 3, 128], strides = [1, 1, 1]} : vector<8x16x128xf32> to vector<1x3x128xf32>
    %307 = vector.shape_cast %306 : vector<1x3x128xf32> to vector<3x128xf32>
    %308 = arith.maximumf %305, %307 : vector<3x128xf32>
    %309 = vector.extract_strided_slice %205 {offsets = [2, 0, 0], sizes = [1, 3, 128], strides = [1, 1, 1]} : vector<8x16x128xf32> to vector<1x3x128xf32>
    %310 = vector.shape_cast %309 : vector<1x3x128xf32> to vector<3x128xf32>
    %311 = arith.maximumf %308, %310 : vector<3x128xf32>
    %cst_127 = arith.constant dense<0xFF800000> : vector<128xf32>
    %312 = vector.multi_reduction <maximumf>, %311, %cst_127 [0] : vector<3x128xf32> to vector<128xf32>
    %313 = vector.shape_cast %312 : vector<128xf32> to vector<1x128xf32>
    %cst_128 = arith.constant 0.000000e+00 : f32
    %314 = vector.broadcast %cst_128 : f32 to vector<1x128xf32>
    %315 = arith.maximumf %313, %314 : vector<1x128xf32>
    %c5_129 = arith.constant 5 : index
    %c0_130 = arith.constant 0 : index
    %c0_131 = arith.constant 0 : index
    %316 = vector.load %arg5[%c5_129, %c0_130, %c0_131] : memref<14x128x256xf32, #tpu.memory_space<vmem>>, vector<1x128x256xf32>
    %317 = vector.shape_cast %316 : vector<1x128x256xf32> to vector<128x256xf32>
    %cst_132 = arith.constant dense<0.000000e+00> : vector<1x256xf32>
    %318 = tpu.matmul %315, %317, %cst_132 {dimension_numbers = #tpu.dot_dimension_numbers<[1], [0], [0], [1], [0, 0, 1, 1], [], []>} : vector<1x128xf32>, vector<128x256xf32>, vector<1x256xf32> -> vector<1x256xf32>
    %319 = arith.addf %303, %318 : vector<1x256xf32>
    %320 = vector.extract_strided_slice %205 {offsets = [0, 2, 0], sizes = [1, 4, 128], strides = [1, 1, 1]} : vector<8x16x128xf32> to vector<1x4x128xf32>
    %321 = vector.shape_cast %320 : vector<1x4x128xf32> to vector<4x128xf32>
    %322 = vector.extract_strided_slice %205 {offsets = [1, 2, 0], sizes = [1, 4, 128], strides = [1, 1, 1]} : vector<8x16x128xf32> to vector<1x4x128xf32>
    %323 = vector.shape_cast %322 : vector<1x4x128xf32> to vector<4x128xf32>
    %324 = arith.maximumf %321, %323 : vector<4x128xf32>
    %325 = vector.extract_strided_slice %205 {offsets = [2, 2, 0], sizes = [1, 4, 128], strides = [1, 1, 1]} : vector<8x16x128xf32> to vector<1x4x128xf32>
    %326 = vector.shape_cast %325 : vector<1x4x128xf32> to vector<4x128xf32>
    %327 = arith.maximumf %324, %326 : vector<4x128xf32>
    %cst_133 = arith.constant dense<0xFF800000> : vector<128xf32>
    %328 = vector.multi_reduction <maximumf>, %327, %cst_133 [0] : vector<4x128xf32> to vector<128xf32>
    %329 = vector.shape_cast %328 : vector<128xf32> to vector<1x128xf32>
    %cst_134 = arith.constant 0.000000e+00 : f32
    %330 = vector.broadcast %cst_134 : f32 to vector<1x128xf32>
    %331 = arith.maximumf %329, %330 : vector<1x128xf32>
    %c6_135 = arith.constant 6 : index
    %c0_136 = arith.constant 0 : index
    %c0_137 = arith.constant 0 : index
    %332 = vector.load %arg5[%c6_135, %c0_136, %c0_137] : memref<14x128x256xf32, #tpu.memory_space<vmem>>, vector<1x128x256xf32>
    %333 = vector.shape_cast %332 : vector<1x128x256xf32> to vector<128x256xf32>
    %cst_138 = arith.constant dense<0.000000e+00> : vector<1x256xf32>
    %334 = tpu.matmul %331, %333, %cst_138 {dimension_numbers = #tpu.dot_dimension_numbers<[1], [0], [0], [1], [0, 0, 1, 1], [], []>} : vector<1x128xf32>, vector<128x256xf32>, vector<1x256xf32> -> vector<1x256xf32>
    %335 = arith.addf %319, %334 : vector<1x256xf32>
    %336 = vector.extract_strided_slice %205 {offsets = [0, 5, 0], sizes = [1, 3, 128], strides = [1, 1, 1]} : vector<8x16x128xf32> to vector<1x3x128xf32>
    %337 = vector.shape_cast %336 : vector<1x3x128xf32> to vector<3x128xf32>
    %338 = vector.extract_strided_slice %205 {offsets = [1, 5, 0], sizes = [1, 3, 128], strides = [1, 1, 1]} : vector<8x16x128xf32> to vector<1x3x128xf32>
    %339 = vector.shape_cast %338 : vector<1x3x128xf32> to vector<3x128xf32>
    %340 = arith.maximumf %337, %339 : vector<3x128xf32>
    %341 = vector.extract_strided_slice %205 {offsets = [2, 5, 0], sizes = [1, 3, 128], strides = [1, 1, 1]} : vector<8x16x128xf32> to vector<1x3x128xf32>
    %342 = vector.shape_cast %341 : vector<1x3x128xf32> to vector<3x128xf32>
    %343 = arith.maximumf %340, %342 : vector<3x128xf32>
    %cst_139 = arith.constant dense<0xFF800000> : vector<128xf32>
    %344 = vector.multi_reduction <maximumf>, %343, %cst_139 [0] : vector<3x128xf32> to vector<128xf32>
    %345 = vector.shape_cast %344 : vector<128xf32> to vector<1x128xf32>
    %cst_140 = arith.constant 0.000000e+00 : f32
    %346 = vector.broadcast %cst_140 : f32 to vector<1x128xf32>
    %347 = arith.maximumf %345, %346 : vector<1x128xf32>
    %c7_141 = arith.constant 7 : index
    %c0_142 = arith.constant 0 : index
    %c0_143 = arith.constant 0 : index
    %348 = vector.load %arg5[%c7_141, %c0_142, %c0_143] : memref<14x128x256xf32, #tpu.memory_space<vmem>>, vector<1x128x256xf32>
    %349 = vector.shape_cast %348 : vector<1x128x256xf32> to vector<128x256xf32>
    %cst_144 = arith.constant dense<0.000000e+00> : vector<1x256xf32>
    %350 = tpu.matmul %347, %349, %cst_144 {dimension_numbers = #tpu.dot_dimension_numbers<[1], [0], [0], [1], [0, 0, 1, 1], [], []>} : vector<1x128xf32>, vector<128x256xf32>, vector<1x256xf32> -> vector<1x256xf32>
    %351 = arith.addf %335, %350 : vector<1x256xf32>
    %352 = vector.extract_strided_slice %205 {offsets = [2, 0, 0], sizes = [1, 3, 128], strides = [1, 1, 1]} : vector<8x16x128xf32> to vector<1x3x128xf32>
    %353 = vector.shape_cast %352 : vector<1x3x128xf32> to vector<3x128xf32>
    %354 = vector.extract_strided_slice %205 {offsets = [3, 0, 0], sizes = [1, 3, 128], strides = [1, 1, 1]} : vector<8x16x128xf32> to vector<1x3x128xf32>
    %355 = vector.shape_cast %354 : vector<1x3x128xf32> to vector<3x128xf32>
    %356 = arith.maximumf %353, %355 : vector<3x128xf32>
    %357 = vector.extract_strided_slice %205 {offsets = [4, 0, 0], sizes = [1, 3, 128], strides = [1, 1, 1]} : vector<8x16x128xf32> to vector<1x3x128xf32>
    %358 = vector.shape_cast %357 : vector<1x3x128xf32> to vector<3x128xf32>
    %359 = arith.maximumf %356, %358 : vector<3x128xf32>
    %360 = vector.extract_strided_slice %205 {offsets = [5, 0, 0], sizes = [1, 3, 128], strides = [1, 1, 1]} : vector<8x16x128xf32> to vector<1x3x128xf32>
    %361 = vector.shape_cast %360 : vector<1x3x128xf32> to vector<3x128xf32>
    %362 = arith.maximumf %359, %361 : vector<3x128xf32>
    %cst_145 = arith.constant dense<0xFF800000> : vector<128xf32>
    %363 = vector.multi_reduction <maximumf>, %362, %cst_145 [0] : vector<3x128xf32> to vector<128xf32>
    %364 = vector.shape_cast %363 : vector<128xf32> to vector<1x128xf32>
    %cst_146 = arith.constant 0.000000e+00 : f32
    %365 = vector.broadcast %cst_146 : f32 to vector<1x128xf32>
    %366 = arith.maximumf %364, %365 : vector<1x128xf32>
    %c8_147 = arith.constant 8 : index
    %c0_148 = arith.constant 0 : index
    %c0_149 = arith.constant 0 : index
    %367 = vector.load %arg5[%c8_147, %c0_148, %c0_149] : memref<14x128x256xf32, #tpu.memory_space<vmem>>, vector<1x128x256xf32>
    %368 = vector.shape_cast %367 : vector<1x128x256xf32> to vector<128x256xf32>
    %cst_150 = arith.constant dense<0.000000e+00> : vector<1x256xf32>
    %369 = tpu.matmul %366, %368, %cst_150 {dimension_numbers = #tpu.dot_dimension_numbers<[1], [0], [0], [1], [0, 0, 1, 1], [], []>} : vector<1x128xf32>, vector<128x256xf32>, vector<1x256xf32> -> vector<1x256xf32>
    %370 = arith.addf %351, %369 : vector<1x256xf32>
    %371 = vector.extract_strided_slice %205 {offsets = [2, 2, 0], sizes = [1, 4, 128], strides = [1, 1, 1]} : vector<8x16x128xf32> to vector<1x4x128xf32>
    %372 = vector.shape_cast %371 : vector<1x4x128xf32> to vector<4x128xf32>
    %373 = vector.extract_strided_slice %205 {offsets = [3, 2, 0], sizes = [1, 4, 128], strides = [1, 1, 1]} : vector<8x16x128xf32> to vector<1x4x128xf32>
    %374 = vector.shape_cast %373 : vector<1x4x128xf32> to vector<4x128xf32>
    %375 = arith.maximumf %372, %374 : vector<4x128xf32>
    %376 = vector.extract_strided_slice %205 {offsets = [4, 2, 0], sizes = [1, 4, 128], strides = [1, 1, 1]} : vector<8x16x128xf32> to vector<1x4x128xf32>
    %377 = vector.shape_cast %376 : vector<1x4x128xf32> to vector<4x128xf32>
    %378 = arith.maximumf %375, %377 : vector<4x128xf32>
    %379 = vector.extract_strided_slice %205 {offsets = [5, 2, 0], sizes = [1, 4, 128], strides = [1, 1, 1]} : vector<8x16x128xf32> to vector<1x4x128xf32>
    %380 = vector.shape_cast %379 : vector<1x4x128xf32> to vector<4x128xf32>
    %381 = arith.maximumf %378, %380 : vector<4x128xf32>
    %cst_151 = arith.constant dense<0xFF800000> : vector<128xf32>
    %382 = vector.multi_reduction <maximumf>, %381, %cst_151 [0] : vector<4x128xf32> to vector<128xf32>
    %383 = vector.shape_cast %382 : vector<128xf32> to vector<1x128xf32>
    %c9 = arith.constant 9 : index
    %c0_152 = arith.constant 0 : index
    %c0_153 = arith.constant 0 : index
    %384 = vector.load %arg5[%c9, %c0_152, %c0_153] : memref<14x128x256xf32, #tpu.memory_space<vmem>>, vector<1x128x256xf32>
    %385 = vector.shape_cast %384 : vector<1x128x256xf32> to vector<128x256xf32>
    %cst_154 = arith.constant dense<0.000000e+00> : vector<1x256xf32>
    %386 = tpu.matmul %383, %385, %cst_154 {dimension_numbers = #tpu.dot_dimension_numbers<[1], [0], [0], [1], [0, 0, 1, 1], [], []>} : vector<1x128xf32>, vector<128x256xf32>, vector<1x256xf32> -> vector<1x256xf32>
    %387 = arith.addf %370, %386 : vector<1x256xf32>
    %388 = vector.extract_strided_slice %205 {offsets = [2, 5, 0], sizes = [1, 3, 128], strides = [1, 1, 1]} : vector<8x16x128xf32> to vector<1x3x128xf32>
    %389 = vector.shape_cast %388 : vector<1x3x128xf32> to vector<3x128xf32>
    %390 = vector.extract_strided_slice %205 {offsets = [3, 5, 0], sizes = [1, 3, 128], strides = [1, 1, 1]} : vector<8x16x128xf32> to vector<1x3x128xf32>
    %391 = vector.shape_cast %390 : vector<1x3x128xf32> to vector<3x128xf32>
    %392 = arith.maximumf %389, %391 : vector<3x128xf32>
    %393 = vector.extract_strided_slice %205 {offsets = [4, 5, 0], sizes = [1, 3, 128], strides = [1, 1, 1]} : vector<8x16x128xf32> to vector<1x3x128xf32>
    %394 = vector.shape_cast %393 : vector<1x3x128xf32> to vector<3x128xf32>
    %395 = arith.maximumf %392, %394 : vector<3x128xf32>
    %396 = vector.extract_strided_slice %205 {offsets = [5, 5, 0], sizes = [1, 3, 128], strides = [1, 1, 1]} : vector<8x16x128xf32> to vector<1x3x128xf32>
    %397 = vector.shape_cast %396 : vector<1x3x128xf32> to vector<3x128xf32>
    %398 = arith.maximumf %395, %397 : vector<3x128xf32>
    %cst_155 = arith.constant dense<0xFF800000> : vector<128xf32>
    %399 = vector.multi_reduction <maximumf>, %398, %cst_155 [0] : vector<3x128xf32> to vector<128xf32>
    %400 = vector.shape_cast %399 : vector<128xf32> to vector<1x128xf32>
    %cst_156 = arith.constant 0.000000e+00 : f32
    %401 = vector.broadcast %cst_156 : f32 to vector<1x128xf32>
    %402 = arith.maximumf %400, %401 : vector<1x128xf32>
    %c10 = arith.constant 10 : index
    %c0_157 = arith.constant 0 : index
    %c0_158 = arith.constant 0 : index
    %403 = vector.load %arg5[%c10, %c0_157, %c0_158] : memref<14x128x256xf32, #tpu.memory_space<vmem>>, vector<1x128x256xf32>
    %404 = vector.shape_cast %403 : vector<1x128x256xf32> to vector<128x256xf32>
    %cst_159 = arith.constant dense<0.000000e+00> : vector<1x256xf32>
    %405 = tpu.matmul %402, %404, %cst_159 {dimension_numbers = #tpu.dot_dimension_numbers<[1], [0], [0], [1], [0, 0, 1, 1], [], []>} : vector<1x128xf32>, vector<128x256xf32>, vector<1x256xf32> -> vector<1x256xf32>
    %406 = arith.addf %387, %405 : vector<1x256xf32>
    %407 = vector.extract_strided_slice %205 {offsets = [5, 0, 0], sizes = [1, 3, 128], strides = [1, 1, 1]} : vector<8x16x128xf32> to vector<1x3x128xf32>
    %408 = vector.shape_cast %407 : vector<1x3x128xf32> to vector<3x128xf32>
    %409 = vector.extract_strided_slice %205 {offsets = [6, 0, 0], sizes = [1, 3, 128], strides = [1, 1, 1]} : vector<8x16x128xf32> to vector<1x3x128xf32>
    %410 = vector.shape_cast %409 : vector<1x3x128xf32> to vector<3x128xf32>
    %411 = arith.maximumf %408, %410 : vector<3x128xf32>
    %412 = vector.extract_strided_slice %205 {offsets = [7, 0, 0], sizes = [1, 3, 128], strides = [1, 1, 1]} : vector<8x16x128xf32> to vector<1x3x128xf32>
    %413 = vector.shape_cast %412 : vector<1x3x128xf32> to vector<3x128xf32>
    %414 = arith.maximumf %411, %413 : vector<3x128xf32>
    %cst_160 = arith.constant dense<0xFF800000> : vector<128xf32>
    %415 = vector.multi_reduction <maximumf>, %414, %cst_160 [0] : vector<3x128xf32> to vector<128xf32>
    %416 = vector.shape_cast %415 : vector<128xf32> to vector<1x128xf32>
    %cst_161 = arith.constant 0.000000e+00 : f32
    %417 = vector.broadcast %cst_161 : f32 to vector<1x128xf32>
    %418 = arith.maximumf %416, %417 : vector<1x128xf32>
    %c11 = arith.constant 11 : index
    %c0_162 = arith.constant 0 : index
    %c0_163 = arith.constant 0 : index
    %419 = vector.load %arg5[%c11, %c0_162, %c0_163] : memref<14x128x256xf32, #tpu.memory_space<vmem>>, vector<1x128x256xf32>
    %420 = vector.shape_cast %419 : vector<1x128x256xf32> to vector<128x256xf32>
    %cst_164 = arith.constant dense<0.000000e+00> : vector<1x256xf32>
    %421 = tpu.matmul %418, %420, %cst_164 {dimension_numbers = #tpu.dot_dimension_numbers<[1], [0], [0], [1], [0, 0, 1, 1], [], []>} : vector<1x128xf32>, vector<128x256xf32>, vector<1x256xf32> -> vector<1x256xf32>
    %422 = arith.addf %406, %421 : vector<1x256xf32>
    %423 = vector.extract_strided_slice %205 {offsets = [5, 2, 0], sizes = [1, 4, 128], strides = [1, 1, 1]} : vector<8x16x128xf32> to vector<1x4x128xf32>
    %424 = vector.shape_cast %423 : vector<1x4x128xf32> to vector<4x128xf32>
    %425 = vector.extract_strided_slice %205 {offsets = [6, 2, 0], sizes = [1, 4, 128], strides = [1, 1, 1]} : vector<8x16x128xf32> to vector<1x4x128xf32>
    %426 = vector.shape_cast %425 : vector<1x4x128xf32> to vector<4x128xf32>
    %427 = arith.maximumf %424, %426 : vector<4x128xf32>
    %428 = vector.extract_strided_slice %205 {offsets = [7, 2, 0], sizes = [1, 4, 128], strides = [1, 1, 1]} : vector<8x16x128xf32> to vector<1x4x128xf32>
    %429 = vector.shape_cast %428 : vector<1x4x128xf32> to vector<4x128xf32>
    %430 = arith.maximumf %427, %429 : vector<4x128xf32>
    %cst_165 = arith.constant dense<0xFF800000> : vector<128xf32>
    %431 = vector.multi_reduction <maximumf>, %430, %cst_165 [0] : vector<4x128xf32> to vector<128xf32>
    %432 = vector.shape_cast %431 : vector<128xf32> to vector<1x128xf32>
    %cst_166 = arith.constant 0.000000e+00 : f32
    %433 = vector.broadcast %cst_166 : f32 to vector<1x128xf32>
    %434 = arith.maximumf %432, %433 : vector<1x128xf32>
    %c12 = arith.constant 12 : index
    %c0_167 = arith.constant 0 : index
    %c0_168 = arith.constant 0 : index
    %435 = vector.load %arg5[%c12, %c0_167, %c0_168] : memref<14x128x256xf32, #tpu.memory_space<vmem>>, vector<1x128x256xf32>
    %436 = vector.shape_cast %435 : vector<1x128x256xf32> to vector<128x256xf32>
    %cst_169 = arith.constant dense<0.000000e+00> : vector<1x256xf32>
    %437 = tpu.matmul %434, %436, %cst_169 {dimension_numbers = #tpu.dot_dimension_numbers<[1], [0], [0], [1], [0, 0, 1, 1], [], []>} : vector<1x128xf32>, vector<128x256xf32>, vector<1x256xf32> -> vector<1x256xf32>
    %438 = arith.addf %422, %437 : vector<1x256xf32>
    %439 = vector.extract_strided_slice %205 {offsets = [5, 5, 0], sizes = [1, 3, 128], strides = [1, 1, 1]} : vector<8x16x128xf32> to vector<1x3x128xf32>
    %440 = vector.shape_cast %439 : vector<1x3x128xf32> to vector<3x128xf32>
    %441 = vector.extract_strided_slice %205 {offsets = [6, 5, 0], sizes = [1, 3, 128], strides = [1, 1, 1]} : vector<8x16x128xf32> to vector<1x3x128xf32>
    %442 = vector.shape_cast %441 : vector<1x3x128xf32> to vector<3x128xf32>
    %443 = arith.maximumf %440, %442 : vector<3x128xf32>
    %444 = vector.extract_strided_slice %205 {offsets = [7, 5, 0], sizes = [1, 3, 128], strides = [1, 1, 1]} : vector<8x16x128xf32> to vector<1x3x128xf32>
    %445 = vector.shape_cast %444 : vector<1x3x128xf32> to vector<3x128xf32>
    %446 = arith.maximumf %443, %445 : vector<3x128xf32>
    %cst_170 = arith.constant dense<0xFF800000> : vector<128xf32>
    %447 = vector.multi_reduction <maximumf>, %446, %cst_170 [0] : vector<3x128xf32> to vector<128xf32>
    %448 = vector.shape_cast %447 : vector<128xf32> to vector<1x128xf32>
    %cst_171 = arith.constant 0.000000e+00 : f32
    %449 = vector.broadcast %cst_171 : f32 to vector<1x128xf32>
    %450 = arith.maximumf %448, %449 : vector<1x128xf32>
    %c13 = arith.constant 13 : index
    %c0_172 = arith.constant 0 : index
    %c0_173 = arith.constant 0 : index
    %451 = vector.load %arg5[%c13, %c0_172, %c0_173] : memref<14x128x256xf32, #tpu.memory_space<vmem>>, vector<1x128x256xf32>
    %452 = vector.shape_cast %451 : vector<1x128x256xf32> to vector<128x256xf32>
    %cst_174 = arith.constant dense<0.000000e+00> : vector<1x256xf32>
    %453 = tpu.matmul %450, %452, %cst_174 {dimension_numbers = #tpu.dot_dimension_numbers<[1], [0], [0], [1], [0, 0, 1, 1], [], []>} : vector<1x128xf32>, vector<128x256xf32>, vector<1x256xf32> -> vector<1x256xf32>
    %454 = arith.addf %438, %453 : vector<1x256xf32>
    %cst_175 = arith.constant 0.000000e+00 : f32
    %455 = vector.broadcast %cst_175 : f32 to vector<1x256xf32>
    %456 = arith.cmpf ogt, %454, %455 : vector<1x256xf32>
    %cst_176 = arith.constant 0.000000e+00 : f32
    %457 = vector.broadcast %cst_176 : f32 to vector<1x256xf32>
    %458 = arith.minimumf %454, %457 : vector<1x256xf32>
    %459 = math.exp %458 : vector<1x256xf32>
    %cst_177 = arith.constant 1.000000e+00 : f32
    %460 = vector.broadcast %cst_177 : f32 to vector<1x256xf32>
    %461 = arith.subf %459, %460 : vector<1x256xf32>
    %462 = arith.select %456, %454, %461 : vector<1x256xi1>, vector<1x256xf32>
    %c0_178 = arith.constant 0 : index
    %c0_179 = arith.constant 0 : index
    %463 = vector.load %arg6[%c0_178, %c0_179] : memref<256x128xf32, #tpu.memory_space<vmem>>, vector<256x128xf32>
    %cst_180 = arith.constant dense<0.000000e+00> : vector<1x128xf32>
    %464 = tpu.matmul %462, %463, %cst_180 {dimension_numbers = #tpu.dot_dimension_numbers<[1], [0], [0], [1], [0, 0, 1, 1], [], []>} : vector<1x256xf32>, vector<256x128xf32>, vector<1x128xf32> -> vector<1x128xf32>
    %c7_181 = arith.constant 7 : index
    %c0_182 = arith.constant 0 : index
    %465 = vector.load %arg3[%c7_181, %c0_182] : memref<8x256xf32, #tpu.memory_space<vmem>>, vector<1x128xf32>
    %466 = arith.addf %464, %465 : vector<1x128xf32>
    %467 = vector.shape_cast %466 : vector<1x128xf32> to vector<1x1x128xf32>
    %c0_183 = arith.constant 0 : index
    %c0_184 = arith.constant 0 : index
    %c0_185 = arith.constant 0 : index
    %468 = vector.load %arg7[%c0_183, %c0_184, %c0_185] : memref<1x1x128xf32, #tpu.memory_space<vmem>>, vector<1x1x128xf32>
    tpu.vector_store %arg7[%c0_183, %c0_184, %c0_185], %467 {strides = array<i32>} : memref<1x1x128xf32, #tpu.memory_space<vmem>>, vector<1x1x128xf32>,
    return
  }
  func.func @transform_0(%arg0: i32) -> (i32, i32, i32) {
    %c0_i32 = arith.constant 0 : i32
    %c0_i32_0 = arith.constant 0 : i32
    %c0_i32_1 = arith.constant 0 : i32
    return %arg0, %c0_i32, %c0_i32_0 : i32, i32, i32
  }
  func.func @transform_1(%arg0: i32) -> (i32, i32) {
    %c0_i32 = arith.constant 0 : i32
    %c0_i32_0 = arith.constant 0 : i32
    %c0_i32_1 = arith.constant 0 : i32
    return %c0_i32, %c0_i32_0 : i32, i32
  }
  func.func @transform_2(%arg0: i32) -> (i32, i32) {
    %c0_i32 = arith.constant 0 : i32
    %c0_i32_0 = arith.constant 0 : i32
    %c0_i32_1 = arith.constant 0 : i32
    return %c0_i32, %c0_i32_0 : i32, i32
  }
  func.func @transform_3(%arg0: i32) -> (i32, i32, i32) {
    %c0_i32 = arith.constant 0 : i32
    %c0_i32_0 = arith.constant 0 : i32
    %c0_i32_1 = arith.constant 0 : i32
    %c0_i32_2 = arith.constant 0 : i32
    return %c0_i32, %c0_i32_0, %c0_i32_1 : i32, i32, i32
  }
  func.func @transform_4(%arg0: i32) -> (i32, i32, i32) {
    %c0_i32 = arith.constant 0 : i32
    %c0_i32_0 = arith.constant 0 : i32
    %c0_i32_1 = arith.constant 0 : i32
    %c0_i32_2 = arith.constant 0 : i32
    return %c0_i32, %c0_i32_0, %c0_i32_1 : i32, i32, i32
  }
  func.func @transform_5(%arg0: i32) -> (i32, i32) {
    %c0_i32 = arith.constant 0 : i32
    %c0_i32_0 = arith.constant 0 : i32
    %c0_i32_1 = arith.constant 0 : i32
    return %c0_i32, %c0_i32_0 : i32, i32
  }
  func.func @transform_6(%arg0: i32) -> (i32, i32, i32) {
    %c0_i32 = arith.constant 0 : i32
    %c0_i32_0 = arith.constant 0 : i32
    %c0_i32_1 = arith.constant 0 : i32
    return %arg0, %c0_i32, %c0_i32_0 : i32, i32, i32
  }
}

</mosaic_0001>

<llo_original>
// kernel: _forward_main_impl.1
$region0: #{_forward_main_impl.1}
  #allocation0 [shape = 'u32[]', space=smem, size = 0x4, offset = 0x4, fixed_abs, tag = 'smem constant byte address 0x4 - core index']
  #allocation1 [shape = 'u32[72,128]{1,0:T(1,128)}', space=vmem, size = 0x9000, scoped, tag = 'internal scratch']
  #allocation2 [shape = 'f32[304,128]{1,0:T(8,128)}', space=vmem, size = 0x26000, scoped, tag = 'scratch operand']
  #allocation3 [shape = 'f32[304,128]{1,0:T(8,128)}', space=vmem, size = 0x26000, scoped, tag = 'scratch operand']
  %s0 = inlined_call_operand.vmem [shape: f32[1,1024,72], index: 0, kind: input, shape index: {}]
  %s1 = inlined_call_operand.vmem [shape: f32[72,128], index: 1, kind: input, shape index: {}]
  %s2 = inlined_call_operand.vmem [shape: f32[8,256], index: 2, kind: input, shape index: {}]
  %s3 = inlined_call_operand.vmem [shape: bf16[9,128,128], index: 3, kind: input, shape index: {}]
  %s4 = inlined_call_operand.vmem [shape: f32[14,128,256], index: 4, kind: input, shape index: {}]
  %s5 = inlined_call_operand.vmem [shape: f32[256,128], index: 5, kind: input, shape index: {}]
  %s6 = inlined_call_operand.vmem [shape: f32[1,1,128], index: 6, kind: output, shape index: {}]
  %s7 = sld [smem:[#allocation0]]
  $region34: #{_forward_main_impl.1} parent=0
    _
  %s9 = ssub.s32 1, %s7
  %s10 = scalar_select 0, %s9, %s7
  // Predicated region
  $region2: #{_forward_main_impl.1} parent=0 // pred_check
    _
  $region3: #{_forward_main_impl.1} parent=0 // pred_check_branch
    %12 = sbr.rel (0) target = $region5
  $region4: #{_forward_main_impl.1} parent=0 // pred_region
    _
  $region5: #{_forward_main_impl.1} parent=0 // pred_fallthru
    _
  // Predicated region
  $region6: #{_forward_main_impl.1} parent=0 // pred_check
    _
  $region7: #{_forward_main_impl.1} parent=0 // pred_check_branch
    %14 = sbr.rel (0) target = $region9
  $region8: #{_forward_main_impl.1} parent=0 // pred_region
    _
  $region9: #{_forward_main_impl.1} parent=0 // pred_fallthru
    _
  // Predicated region
  $region10: #{_forward_main_impl.1} parent=0 // pred_check
    _
  $region11: #{_forward_main_impl.1} parent=0 // pred_check_branch
    %16 = sbr.rel (0) target = $region13
  $region12: #{_forward_main_impl.1} parent=0 // pred_region
    _
  $region13: #{_forward_main_impl.1} parent=0 // pred_fallthru
    _
  // Predicated region
  $region14: #{_forward_main_impl.1} parent=0 // pred_check
    _
  $region15: #{_forward_main_impl.1} parent=0 // pred_check_branch
    %18 = sbr.rel (0) target = $region17
  $region16: #{_forward_main_impl.1} parent=0 // pred_region
    _
  $region17: #{_forward_main_impl.1} parent=0 // pred_fallthru
    _
  // Predicated region
  $region18: #{_forward_main_impl.1} parent=0 // pred_check
    _
  $region19: #{_forward_main_impl.1} parent=0 // pred_check_branch
    %20 = sbr.rel (0) target = $region21
  $region20: #{_forward_main_impl.1} parent=0 // pred_region
    _
  $region21: #{_forward_main_impl.1} parent=0 // pred_fallthru
    _
  // Predicated region
  $region22: #{_forward_main_impl.1} parent=0 // pred_check
    _
  $region23: #{_forward_main_impl.1} parent=0 // pred_check_branch
    %22 = sbr.rel (0) target = $region25
  $region24: #{_forward_main_impl.1} parent=0 // pred_region
    _
  $region25: #{_forward_main_impl.1} parent=0 // pred_fallthru
    _
  %v23 = vld [vmem:[%s0] sm:$0xff]
  %v24 = vld [vmem:[%s0 + $0x8] sm:$0xff]
  %v25 = vld [vmem:[%s0 + $0x10] sm:$0xff]
  %v26 = vld [vmem:[%s0 + $0x18] sm:$0xff]
  %v27 = vld [vmem:[%s0 + $0x20] sm:$0xff]
  %v28 = vld [vmem:[%s0 + $0x28] sm:$0xff]
  %v29 = vld [vmem:[%s0 + $0x30] sm:$0xff]
  %v30 = vld [vmem:[%s0 + $0x38] sm:$0xff]
  %v31 = vld [vmem:[%s0 + $0x40] sm:$0xff]
  %v32 = vld [vmem:[%s0 + $0x48] sm:$0xff]
  %v33 = vld [vmem:[%s0 + $0x50] sm:$0xff]
  %v34 = vld [vmem:[%s0 + $0x58] sm:$0xff]
  %v35 = vld [vmem:[%s0 + $0x60] sm:$0xff]
  %v36 = vld [vmem:[%s0 + $0x68] sm:$0xff]
  %v37 = vld [vmem:[%s0 + $0x70] sm:$0xff]
  %v38 = vld [vmem:[%s0 + $0x78] sm:$0xff]
  %v39 = vld [vmem:[%s0 + $0x80] sm:$0xff]
  %v40 = vld [vmem:[%s0 + $0x88] sm:$0xff]
  %v41 = vld [vmem:[%s0 + $0x90] sm:$0xff]
  %v42 = vld [vmem:[%s0 + $0x98] sm:$0xff]
  %v43 = vld [vmem:[%s0 + $0xa0] sm:$0xff]
  %v44 = vld [vmem:[%s0 + $0xa8] sm:$0xff]
  %v45 = vld [vmem:[%s0 + $0xb0] sm:$0xff]
  %v46 = vld [vmem:[%s0 + $0xb8] sm:$0xff]
  %v47 = vld [vmem:[%s0 + $0xc0] sm:$0xff]
  %v48 = vld [vmem:[%s0 + $0xc8] sm:$0xff]
  %v49 = vld [vmem:[%s0 + $0xd0] sm:$0xff]
  %v50 = vld [vmem:[%s0 + $0xd8] sm:$0xff]
  %v51 = vld [vmem:[%s0 + $0xe0] sm:$0xff]
  %v52 = vld [vmem:[%s0 + $0xe8] sm:$0xff]
  %v53 = vld [vmem:[%s0 + $0xf0] sm:$0xff]
  %v54 = vld [vmem:[%s0 + $0xf8] sm:$0xff]
  %v55 = vld [vmem:[%s0 + $0x100] sm:$0xff]
  %v56 = vld [vmem:[%s0 + $0x108] sm:$0xff]
  %v57 = vld [vmem:[%s0 + $0x110] sm:$0xff]
  %v58 = vld [vmem:[%s0 + $0x118] sm:$0xff]
  %v59 = vld [vmem:[%s0 + $0x120] sm:$0xff]
  %v60 = vld [vmem:[%s0 + $0x128] sm:$0xff]
  %v61 = vld [vmem:[%s0 + $0x130] sm:$0xff]
  %v62 = vld [vmem:[%s0 + $0x138] sm:$0xff]
  %v63 = vld [vmem:[%s0 + $0x140] sm:$0xff]
  %v64 = vld [vmem:[%s0 + $0x148] sm:$0xff]
  %v65 = vld [vmem:[%s0 + $0x150] sm:$0xff]
  %v66 = vld [vmem:[%s0 + $0x158] sm:$0xff]
  %v67 = vld [vmem:[%s0 + $0x160] sm:$0xff]
  %v68 = vld [vmem:[%s0 + $0x168] sm:$0xff]
  %v69 = vld [vmem:[%s0 + $0x170] sm:$0xff]
  %v70 = vld [vmem:[%s0 + $0x178] sm:$0xff]
  %v71 = vld [vmem:[%s0 + $0x180] sm:$0xff]
  %v72 = vld [vmem:[%s0 + $0x188] sm:$0xff]
  %v73 = vld [vmem:[%s0 + $0x190] sm:$0xff]
  %v74 = vld [vmem:[%s0 + $0x198] sm:$0xff]
  %v75 = vld [vmem:[%s0 + $0x1a0] sm:$0xff]
  %v76 = vld [vmem:[%s0 + $0x1a8] sm:$0xff]
  %v77 = vld [vmem:[%s0 + $0x1b0] sm:$0xff]
  %v78 = vld [vmem:[%s0 + $0x1b8] sm:$0xff]
  %v79 = vld [vmem:[%s0 + $0x1c0] sm:$0xff]
  %v80 = vld [vmem:[%s0 + $0x1c8] sm:$0xff]
  %v81 = vld [vmem:[%s0 + $0x1d0] sm:$0xff]
  %v82 = vld [vmem:[%s0 + $0x1d8] sm:$0xff]
  %v83 = vld [vmem:[%s0 + $0x1e0] sm:$0xff]
  %v84 = vld [vmem:[%s0 + $0x1e8] sm:$0xff]
  %v85 = vld [vmem:[%s0 + $0x1f0] sm:$0xff]
  %v86 = vld [vmem:[%s0 + $0x1f8] sm:$0xff]
  %v87 = vld [vmem:[%s0 + $0x200] sm:$0xff]
  %v88 = vld [vmem:[%s0 + $0x208] sm:$0xff]
  %v89 = vld [vmem:[%s0 + $0x210] sm:$0xff]
  %v90 = vld [vmem:[%s0 + $0x218] sm:$0xff]
  %v91 = vld [vmem:[%s0 + $0x220] sm:$0xff]
  %v92 = vld [vmem:[%s0 + $0x228] sm:$0xff]
  %v93 = vld [vmem:[%s0 + $0x230] sm:$0xff]
  %v94 = vld [vmem:[%s0 + $0x238] sm:$0xff]
  %v95 = vld [vmem:[%s0 + $0x240] sm:$0xff]
  %v96 = vld [vmem:[%s0 + $0x248] sm:$0xff]
  %v97 = vld [vmem:[%s0 + $0x250] sm:$0xff]
  %v98 = vld [vmem:[%s0 + $0x258] sm:$0xff]
  %v99 = vld [vmem:[%s0 + $0x260] sm:$0xff]
  %v100 = vld [vmem:[%s0 + $0x268] sm:$0xff]
  %v101 = vld [vmem:[%s0 + $0x270] sm:$0xff]
  %v102 = vld [vmem:[%s0 + $0x278] sm:$0xff]
  %v103 = vld [vmem:[%s0 + $0x280] sm:$0xff]
  %v104 = vld [vmem:[%s0 + $0x288] sm:$0xff]
  %v105 = vld [vmem:[%s0 + $0x290] sm:$0xff]
  %v106 = vld [vmem:[%s0 + $0x298] sm:$0xff]
  %v107 = vld [vmem:[%s0 + $0x2a0] sm:$0xff]
  %v108 = vld [vmem:[%s0 + $0x2a8] sm:$0xff]
  %v109 = vld [vmem:[%s0 + $0x2b0] sm:$0xff]
  %v110 = vld [vmem:[%s0 + $0x2b8] sm:$0xff]
  %v111 = vld [vmem:[%s0 + $0x2c0] sm:$0xff]
  %v112 = vld [vmem:[%s0 + $0x2c8] sm:$0xff]
  %v113 = vld [vmem:[%s0 + $0x2d0] sm:$0xff]
  %v114 = vld [vmem:[%s0 + $0x2d8] sm:$0xff]
  %v115 = vld [vmem:[%s0 + $0x2e0] sm:$0xff]
  %v116 = vld [vmem:[%s0 + $0x2e8] sm:$0xff]
  %v117 = vld [vmem:[%s0 + $0x2f0] sm:$0xff]
  %v118 = vld [vmem:[%s0 + $0x2f8] sm:$0xff]
  %v119 = vld [vmem:[%s0 + $0x300] sm:$0xff]
  %v120 = vld [vmem:[%s0 + $0x308] sm:$0xff]
  %v121 = vld [vmem:[%s0 + $0x310] sm:$0xff]
  %v122 = vld [vmem:[%s0 + $0x318] sm:$0xff]
  %v123 = vld [vmem:[%s0 + $0x320] sm:$0xff]
  %v124 = vld [vmem:[%s0 + $0x328] sm:$0xff]
  %v125 = vld [vmem:[%s0 + $0x330] sm:$0xff]
  %v126 = vld [vmem:[%s0 + $0x338] sm:$0xff]
  %v127 = vld [vmem:[%s0 + $0x340] sm:$0xff]
  %v128 = vld [vmem:[%s0 + $0x348] sm:$0xff]
  %v129 = vld [vmem:[%s0 + $0x350] sm:$0xff]
  %v130 = vld [vmem:[%s0 + $0x358] sm:$0xff]
  %v131 = vld [vmem:[%s0 + $0x360] sm:$0xff]
  %v132 = vld [vmem:[%s0 + $0x368] sm:$0xff]
  %v133 = vld [vmem:[%s0 + $0x370] sm:$0xff]
  %v134 = vld [vmem:[%s0 + $0x378] sm:$0xff]
  %v135 = vld [vmem:[%s0 + $0x380] sm:$0xff]
  %v136 = vld [vmem:[%s0 + $0x388] sm:$0xff]
  %v137 = vld [vmem:[%s0 + $0x390] sm:$0xff]
  %v138 = vld [vmem:[%s0 + $0x398] sm:$0xff]
  %v139 = vld [vmem:[%s0 + $0x3a0] sm:$0xff]
  %v140 = vld [vmem:[%s0 + $0x3a8] sm:$0xff]
  %v141 = vld [vmem:[%s0 + $0x3b0] sm:$0xff]
  %v142 = vld [vmem:[%s0 + $0x3b8] sm:$0xff]
  %v143 = vld [vmem:[%s0 + $0x3c0] sm:$0xff]
  %v144 = vld [vmem:[%s0 + $0x3c8] sm:$0xff]
  %v145 = vld [vmem:[%s0 + $0x3d0] sm:$0xff]
  %v146 = vld [vmem:[%s0 + $0x3d8] sm:$0xff]
  %v147 = vld [vmem:[%s0 + $0x3e0] sm:$0xff]
  %v148 = vld [vmem:[%s0 + $0x3e8] sm:$0xff]
  %v149 = vld [vmem:[%s0 + $0x3f0] sm:$0xff]
  %v150 = vld [vmem:[%s0 + $0x3f8] sm:$0xff]
  %v151 = vld [vmem:[%s1] sm:$0xff]
  %v152 = vld [vmem:[%s1 + $0x8] sm:$0xff]
  %v153 = vld [vmem:[%s1 + $0x10] sm:$0xff]
  %v154 = vld [vmem:[%s1 + $0x18] sm:$0xff]
  %v155 = vld [vmem:[%s1 + $0x20] sm:$0xff]
  %v156 = vld [vmem:[%s1 + $0x28] sm:$0xff]
  %v157 = vld [vmem:[%s1 + $0x30] sm:$0xff]
  %v158 = vld [vmem:[%s1 + $0x38] sm:$0xff]
  %v159 = vld [vmem:[%s1 + $0x40] sm:$0xff]
  %vm160 = vcmask 588800
  %v162 = vsel %vm160, %v23, 0
  %v165 = vsel %vm160, %v24, 0
  %v168 = vsel %vm160, %v25, 0
  %v171 = vsel %vm160, %v26, 0
  %v174 = vsel %vm160, %v27, 0
  %v177 = vsel %vm160, %v28, 0
  %v180 = vsel %vm160, %v29, 0
  %v183 = vsel %vm160, %v30, 0
  %v186 = vsel %vm160, %v31, 0
  %v189 = vsel %vm160, %v32, 0
  %v192 = vsel %vm160, %v33, 0
  %v195 = vsel %vm160, %v34, 0
  %v198 = vsel %vm160, %v35, 0
  %v201 = vsel %vm160, %v36, 0
  %v204 = vsel %vm160, %v37, 0
  %v207 = vsel %vm160, %v38, 0
  %v210 = vsel %vm160, %v39, 0
  %v213 = vsel %vm160, %v40, 0
  %v216 = vsel %vm160, %v41, 0
  %v219 = vsel %vm160, %v42, 0
  %v222 = vsel %vm160, %v43, 0
  %v225 = vsel %vm160, %v44, 0
  %v228 = vsel %vm160, %v45, 0
  %v231 = vsel %vm160, %v46, 0
  %v234 = vsel %vm160, %v47, 0
  %v237 = vsel %vm160, %v48, 0
  %v240 = vsel %vm160, %v49, 0
  %v243 = vsel %vm160, %v50, 0
  %v246 = vsel %vm160, %v51, 0
  %v249 = vsel %vm160, %v52, 0
  %v252 = vsel %vm160, %v53, 0
  %v255 = vsel %vm160, %v54, 0
  %v258 = vsel %vm160, %v55, 0
  %v261 = vsel %vm160, %v56, 0
  %v264 = vsel %vm160, %v57, 0
  %v267 = vsel %vm160, %v58, 0
  %v270 = vsel %vm160, %v59, 0
  %v273 = vsel %vm160, %v60, 0
  %v276 = vsel %vm160, %v61, 0
  %v279 = vsel %vm160, %v62, 0
  %v282 = vsel %vm160, %v63, 0
  %v285 = vsel %vm160, %v64, 0
  %v288 = vsel %vm160, %v65, 0
  %v291 = vsel %vm160, %v66, 0
  %v294 = vsel %vm160, %v67, 0
  %v297 = vsel %vm160, %v68, 0
  %v300 = vsel %vm160, %v69, 0
  %v303 = vsel %vm160, %v70, 0
  %v306 = vsel %vm160, %v71, 0
  %v309 = vsel %vm160, %v72, 0
  %v312 = vsel %vm160, %v73, 0
  %v315 = vsel %vm160, %v74, 0
  %v318 = vsel %vm160, %v75, 0
  %v321 = vsel %vm160, %v76, 0
  %v324 = vsel %vm160, %v77, 0
  %v327 = vsel %vm160, %v78, 0
  %v330 = vsel %vm160, %v79, 0
  %v333 = vsel %vm160, %v80, 0
  %v336 = vsel %vm160, %v81, 0
  %v339 = vsel %vm160, %v82, 0
  %v342 = vsel %vm160, %v83, 0
  %v345 = vsel %vm160, %v84, 0
  %v348 = vsel %vm160, %v85, 0
  %v351 = vsel %vm160, %v86, 0
  %v354 = vsel %vm160, %v87, 0
  %v357 = vsel %vm160, %v88, 0
  %v360 = vsel %vm160, %v89, 0
  %v363 = vsel %vm160, %v90, 0
  %v366 = vsel %vm160, %v91, 0
  %v369 = vsel %vm160, %v92, 0
  %v372 = vsel %vm160, %v93, 0
  %v375 = vsel %vm160, %v94, 0
  %v378 = vsel %vm160, %v95, 0
  %v381 = vsel %vm160, %v96, 0
  %v384 = vsel %vm160, %v97, 0
  %v387 = vsel %vm160, %v98, 0
  %v390 = vsel %vm160, %v99, 0
  %v393 = vsel %vm160, %v100, 0
  %v396 = vsel %vm160, %v101, 0
  %v399 = vsel %vm160, %v102, 0
  %v402 = vsel %vm160, %v103, 0
  %v405 = vsel %vm160, %v104, 0
  %v408 = vsel %vm160, %v105, 0
  %v411 = vsel %vm160, %v106, 0
  %v414 = vsel %vm160, %v107, 0
  %v417 = vsel %vm160, %v108, 0
  %v420 = vsel %vm160, %v109, 0
  %v423 = vsel %vm160, %v110, 0
  %v426 = vsel %vm160, %v111, 0
  %v429 = vsel %vm160, %v112, 0
  %v432 = vsel %vm160, %v113, 0
  %v435 = vsel %vm160, %v114, 0
  %v438 = vsel %vm160, %v115, 0
  %v441 = vsel %vm160, %v116, 0
  %v444 = vsel %vm160, %v117, 0
  %v447 = vsel %vm160, %v118, 0
  %v450 = vsel %vm160, %v119, 0
  %v453 = vsel %vm160, %v120, 0
  %v456 = vsel %vm160, %v121, 0
  %v459 = vsel %vm160, %v122, 0
  %v462 = vsel %vm160, %v123, 0
  %v465 = vsel %vm160, %v124, 0
  %v468 = vsel %vm160, %v125, 0
  %v471 = vsel %vm160, %v126, 0
  %v474 = vsel %vm160, %v127, 0
  %v477 = vsel %vm160, %v128, 0
  %v480 = vsel %vm160, %v129, 0
  %v483 = vsel %vm160, %v130, 0
  %v486 = vsel %vm160, %v131, 0
  %v489 = vsel %vm160, %v132, 0
  %v492 = vsel %vm160, %v133, 0
  %v495 = vsel %vm160, %v134, 0
  %v498 = vsel %vm160, %v135, 0
  %v501 = vsel %vm160, %v136, 0
  %v504 = vsel %vm160, %v137, 0
  %v507 = vsel %vm160, %v138, 0
  %v510 = vsel %vm160, %v139, 0
  %v513 = vsel %vm160, %v140, 0
  %v516 = vsel %vm160, %v141, 0
  %v519 = vsel %vm160, %v142, 0
  %v522 = vsel %vm160, %v143, 0
  %v525 = vsel %vm160, %v144, 0
  %v528 = vsel %vm160, %v145, 0
  %v531 = vsel %vm160, %v146, 0
  %v534 = vsel %vm160, %v147, 0
  %v537 = vsel %vm160, %v148, 0
  %v540 = vsel %vm160, %v149, 0
  %v543 = vsel %vm160, %v150, 0
  %545 = vmatpush.msra.mxu0 0.0
  %546 = vmatpush.msra.mxu0 0.0
  %547 = vmatpush.msra.mxu0 0.0
  %548 = vmatpush.msra.mxu0 0.0
  %549 = vmatpush.msra.mxu0 0.0
  %550 = vmatpush.msra.mxu0 0.0
  %551 = vmatpush.msra.mxu0 0.0
  %552 = vmatpush.msra.mxu0 %v159
  %553 = vmatpush.msra.mxu0 %v158
  %554 = vmatpush.msra.mxu0 %v157
  %555 = vmatpush.msra.mxu0 %v156
  %556 = vmatpush.msra.mxu0 %v155
  %557 = vmatpush.msra.mxu0 %v154
  %558 = vmatpush.msra.mxu0 %v153
  %559 = vmatpush.msra.mxu0 %v152
  %560 = vmatpush.msra.mxu0 %v151
  %561 = vmatmul.f32.gmra.mxu0 %v162
  %v562 = vpop.f32.mrf.mxu0
  %v563 = vadd.f32 0.0, %v562
  %564 = vmatmul.f32.gmra.mxu0 %v165
  %v565 = vpop.f32.mrf.mxu0
  %v566 = vadd.f32 0.0, %v565
  %567 = vmatmul.f32.gmra.mxu0 %v168
  %v568 = vpop.f32.mrf.mxu0
  %v569 = vadd.f32 0.0, %v568
  %570 = vmatmul.f32.gmra.mxu0 %v171
  %v571 = vpop.f32.mrf.mxu0
  %v572 = vadd.f32 0.0, %v571
  %573 = vmatmul.f32.gmra.mxu0 %v174
  %v574 = vpop.f32.mrf.mxu0
  %v575 = vadd.f32 0.0, %v574
  %576 = vmatmul.f32.gmra.mxu0 %v177
  %v577 = vpop.f32.mrf.mxu0
  %v578 = vadd.f32 0.0, %v577
  %579 = vmatmul.f32.gmra.mxu0 %v180
  %v580 = vpop.f32.mrf.mxu0
  %v581 = vadd.f32 0.0, %v580
  %582 = vmatmul.f32.gmra.mxu0 %v183
  %v583 = vpop.f32.mrf.mxu0
  %v584 = vadd.f32 0.0, %v583
  %585 = vmatmul.f32.gmra.mxu0 %v186
  %v586 = vpop.f32.mrf.mxu0
  %v587 = vadd.f32 0.0, %v586
  %588 = vmatmul.f32.gmra.mxu0 %v189
  %v589 = vpop.f32.mrf.mxu0
  %v590 = vadd.f32 0.0, %v589
  %591 = vmatmul.f32.gmra.mxu0 %v192
  %v592 = vpop.f32.mrf.mxu0
  %v593 = vadd.f32 0.0, %v592
  %594 = vmatmul.f32.gmra.mxu0 %v195
  %v595 = vpop.f32.mrf.mxu0
  %v596 = vadd.f32 0.0, %v595
  %597 = vmatmul.f32.gmra.mxu0 %v198
  %v598 = vpop.f32.mrf.mxu0
  %v599 = vadd.f32 0.0, %v598
  %600 = vmatmul.f32.gmra.mxu0 %v201
  %v601 = vpop.f32.mrf.mxu0
  %v602 = vadd.f32 0.0, %v601
  %603 = vmatmul.f32.gmra.mxu0 %v204
  %v604 = vpop.f32.mrf.mxu0
  %v605 = vadd.f32 0.0, %v604
  %606 = vmatmul.f32.gmra.mxu0 %v207
  %v607 = vpop.f32.mrf.mxu0
  %v608 = vadd.f32 0.0, %v607
  %609 = vmatmul.f32.gmra.mxu0 %v210
  %v610 = vpop.f32.mrf.mxu0
  %v611 = vadd.f32 0.0, %v610
  %612 = vmatmul.f32.gmra.mxu0 %v213
  %v613 = vpop.f32.mrf.mxu0
  %v614 = vadd.f32 0.0, %v613
  %615 = vmatmul.f32.gmra.mxu0 %v216
  %v616 = vpop.f32.mrf.mxu0
  %v617 = vadd.f32 0.0, %v616
  %618 = vmatmul.f32.gmra.mxu0 %v219
  %v619 = vpop.f32.mrf.mxu0
  %v620 = vadd.f32 0.0, %v619
  %621 = vmatmul.f32.gmra.mxu0 %v222
  %v622 = vpop.f32.mrf.mxu0
  %v623 = vadd.f32 0.0, %v622
  %624 = vmatmul.f32.gmra.mxu0 %v225
  %v625 = vpop.f32.mrf.mxu0
  %v626 = vadd.f32 0.0, %v625
  %627 = vmatmul.f32.gmra.mxu0 %v228
  %v628 = vpop.f32.mrf.mxu0
  %v629 = vadd.f32 0.0, %v628
  %630 = vmatmul.f32.gmra.mxu0 %v231
  %v631 = vpop.f32.mrf.mxu0
  %v632 = vadd.f32 0.0, %v631
  %633 = vmatmul.f32.gmra.mxu0 %v234
  %v634 = vpop.f32.mrf.mxu0
  %v635 = vadd.f32 0.0, %v634
  %636 = vmatmul.f32.gmra.mxu0 %v237
  %v637 = vpop.f32.mrf.mxu0
  %v638 = vadd.f32 0.0, %v637
  %639 = vmatmul.f32.gmra.mxu0 %v240
  %v640 = vpop.f32.mrf.mxu0
  %v641 = vadd.f32 0.0, %v640
  %642 = vmatmul.f32.gmra.mxu0 %v243
  %v643 = vpop.f32.mrf.mxu0
  %v644 = vadd.f32 0.0, %v643
  %645 = vmatmul.f32.gmra.mxu0 %v246
  %v646 = vpop.f32.mrf.mxu0
  %v647 = vadd.f32 0.0, %v646
  %648 = vmatmul.f32.gmra.mxu0 %v249
  %v649 = vpop.f32.mrf.mxu0
  %v650 = vadd.f32 0.0, %v649
  %651 = vmatmul.f32.gmra.mxu0 %v252
  %v652 = vpop.f32.mrf.mxu0
  %v653 = vadd.f32 0.0, %v652
  %654 = vmatmul.f32.gmra.mxu0 %v255
  %v655 = vpop.f32.mrf.mxu0
  %v656 = vadd.f32 0.0, %v655
  %657 = vmatmul.f32.gmra.mxu0 %v258
  %v658 = vpop.f32.mrf.mxu0
  %v659 = vadd.f32 0.0, %v658
  %660 = vmatmul.f32.gmra.mxu0 %v261
  %v661 = vpop.f32.mrf.mxu0
  %v662 = vadd.f32 0.0, %v661
  %663 = vmatmul.f32.gmra.mxu0 %v264
  %v664 = vpop.f32.mrf.mxu0
  %v665 = vadd.f32 0.0, %v664
  %666 = vmatmul.f32.gmra.mxu0 %v267
  %v667 = vpop.f32.mrf.mxu0
  %v668 = vadd.f32 0.0, %v667
  %669 = vmatmul.f32.gmra.mxu0 %v270
  %v670 = vpop.f32.mrf.mxu0
  %v671 = vadd.f32 0.0, %v670
  %672 = vmatmul.f32.gmra.mxu0 %v273
  %v673 = vpop.f32.mrf.mxu0
  %v674 = vadd.f32 0.0, %v673
  %675 = vmatmul.f32.gmra.mxu0 %v276
  %v676 = vpop.f32.mrf.mxu0
  %v677 = vadd.f32 0.0, %v676
  %678 = vmatmul.f32.gmra.mxu0 %v279
  %v679 = vpop.f32.mrf.mxu0
  %v680 = vadd.f32 0.0, %v679
  %681 = vmatmul.f32.gmra.mxu0 %v282
  %v682 = vpop.f32.mrf.mxu0
  %v683 = vadd.f32 0.0, %v682
  %684 = vmatmul.f32.gmra.mxu0 %v285
  %v685 = vpop.f32.mrf.mxu0
  %v686 = vadd.f32 0.0, %v685
  %687 = vmatmul.f32.gmra.mxu0 %v288
  %v688 = vpop.f32.mrf.mxu0
  %v689 = vadd.f32 0.0, %v688
  %690 = vmatmul.f32.gmra.mxu0 %v291
  %v691 = vpop.f32.mrf.mxu0
  %v692 = vadd.f32 0.0, %v691
  %693 = vmatmul.f32.gmra.mxu0 %v294
  %v694 = vpop.f32.mrf.mxu0
  %v695 = vadd.f32 0.0, %v694
  %696 = vmatmul.f32.gmra.mxu0 %v297
  %v697 = vpop.f32.mrf.mxu0
  %v698 = vadd.f32 0.0, %v697
  %699 = vmatmul.f32.gmra.mxu0 %v300
  %v700 = vpop.f32.mrf.mxu0
  %v701 = vadd.f32 0.0, %v700
  %702 = vmatmul.f32.gmra.mxu0 %v303
  %v703 = vpop.f32.mrf.mxu0
  %v704 = vadd.f32 0.0, %v703
  %705 = vmatmul.f32.gmra.mxu0 %v306
  %v706 = vpop.f32.mrf.mxu0
  %v707 = vadd.f32 0.0, %v706
  %708 = vmatmul.f32.gmra.mxu0 %v309
  %v709 = vpop.f32.mrf.mxu0
  %v710 = vadd.f32 0.0, %v709
  %711 = vmatmul.f32.gmra.mxu0 %v312
  %v712 = vpop.f32.mrf.mxu0
  %v713 = vadd.f32 0.0, %v712
  %714 = vmatmul.f32.gmra.mxu0 %v315
  %v715 = vpop.f32.mrf.mxu0
  %v716 = vadd.f32 0.0, %v715
  %717 = vmatmul.f32.gmra.mxu0 %v318
  %v718 = vpop.f32.mrf.mxu0
  %v719 = vadd.f32 0.0, %v718
  %720 = vmatmul.f32.gmra.mxu0 %v321
  %v721 = vpop.f32.mrf.mxu0
  %v722 = vadd.f32 0.0, %v721
  %723 = vmatmul.f32.gmra.mxu0 %v324
  %v724 = vpop.f32.mrf.mxu0
  %v725 = vadd.f32 0.0, %v724
  %726 = vmatmul.f32.gmra.mxu0 %v327
  %v727 = vpop.f32.mrf.mxu0
  %v728 = vadd.f32 0.0, %v727
  %729 = vmatmul.f32.gmra.mxu0 %v330
  %v730 = vpop.f32.mrf.mxu0
  %v731 = vadd.f32 0.0, %v730
  %732 = vmatmul.f32.gmra.mxu0 %v333
  %v733 = vpop.f32.mrf.mxu0
  %v734 = vadd.f32 0.0, %v733
  %735 = vmatmul.f32.gmra.mxu0 %v336
  %v736 = vpop.f32.mrf.mxu0
  %v737 = vadd.f32 0.0, %v736
  %738 = vmatmul.f32.gmra.mxu0 %v339
  %v739 = vpop.f32.mrf.mxu0
  %v740 = vadd.f32 0.0, %v739
  %741 = vmatmul.f32.gmra.mxu0 %v342
  %v742 = vpop.f32.mrf.mxu0
  %v743 = vadd.f32 0.0, %v742
  %744 = vmatmul.f32.gmra.mxu0 %v345
  %v745 = vpop.f32.mrf.mxu0
  %v746 = vadd.f32 0.0, %v745
  %747 = vmatmul.f32.gmra.mxu0 %v348
  %v748 = vpop.f32.mrf.mxu0
  %v749 = vadd.f32 0.0, %v748
  %750 = vmatmul.f32.gmra.mxu0 %v351
  %v751 = vpop.f32.mrf.mxu0
  %v752 = vadd.f32 0.0, %v751
  %753 = vmatmul.f32.gmra.mxu0 %v354
  %v754 = vpop.f32.mrf.mxu0
  %v755 = vadd.f32 0.0, %v754
  %756 = vmatmul.f32.gmra.mxu0 %v357
  %v757 = vpop.f32.mrf.mxu0
  %v758 = vadd.f32 0.0, %v757
  %759 = vmatmul.f32.gmra.mxu0 %v360
  %v760 = vpop.f32.mrf.mxu0
  %v761 = vadd.f32 0.0, %v760
  %762 = vmatmul.f32.gmra.mxu0 %v363
  %v763 = vpop.f32.mrf.mxu0
  %v764 = vadd.f32 0.0, %v763
  %765 = vmatmul.f32.gmra.mxu0 %v366
  %v766 = vpop.f32.mrf.mxu0
  %v767 = vadd.f32 0.0, %v766
  %768 = vmatmul.f32.gmra.mxu0 %v369
  %v769 = vpop.f32.mrf.mxu0
  %v770 = vadd.f32 0.0, %v769
  %771 = vmatmul.f32.gmra.mxu0 %v372
  %v772 = vpop.f32.mrf.mxu0
  %v773 = vadd.f32 0.0, %v772
  %774 = vmatmul.f32.gmra.mxu0 %v375
  %v775 = vpop.f32.mrf.mxu0
  %v776 = vadd.f32 0.0, %v775
  %777 = vmatmul.f32.gmra.mxu0 %v378
  %v778 = vpop.f32.mrf.mxu0
  %v779 = vadd.f32 0.0, %v778
  %780 = vmatmul.f32.gmra.mxu0 %v381
  %v781 = vpop.f32.mrf.mxu0
  %v782 = vadd.f32 0.0, %v781
  %783 = vmatmul.f32.gmra.mxu0 %v384
  %v784 = vpop.f32.mrf.mxu0
  %v785 = vadd.f32 0.0, %v784
  %786 = vmatmul.f32.gmra.mxu0 %v387
  %v787 = vpop.f32.mrf.mxu0
  %v788 = vadd.f32 0.0, %v787
  %789 = vmatmul.f32.gmra.mxu0 %v390
  %v790 = vpop.f32.mrf.mxu0
  %v791 = vadd.f32 0.0, %v790
  %792 = vmatmul.f32.gmra.mxu0 %v393
  %v793 = vpop.f32.mrf.mxu0
  %v794 = vadd.f32 0.0, %v793
  %795 = vmatmul.f32.gmra.mxu0 %v396
  %v796 = vpop.f32.mrf.mxu0
  %v797 = vadd.f32 0.0, %v796
  %798 = vmatmul.f32.gmra.mxu0 %v399
  %v799 = vpop.f32.mrf.mxu0
  %v800 = vadd.f32 0.0, %v799
  %801 = vmatmul.f32.gmra.mxu0 %v402
  %v802 = vpop.f32.mrf.mxu0
  %v803 = vadd.f32 0.0, %v802
  %804 = vmatmul.f32.gmra.mxu0 %v405
  %v805 = vpop.f32.mrf.mxu0
  %v806 = vadd.f32 0.0, %v805
  %807 = vmatmul.f32.gmra.mxu0 %v408
  %v808 = vpop.f32.mrf.mxu0
  %v809 = vadd.f32 0.0, %v808
  %810 = vmatmul.f32.gmra.mxu0 %v411
  %v811 = vpop.f32.mrf.mxu0
  %v812 = vadd.f32 0.0, %v811
  %813 = vmatmul.f32.gmra.mxu0 %v414
  %v814 = vpop.f32.mrf.mxu0
  %v815 = vadd.f32 0.0, %v814
  %816 = vmatmul.f32.gmra.mxu0 %v417
  %v817 = vpop.f32.mrf.mxu0
  %v818 = vadd.f32 0.0, %v817
  %819 = vmatmul.f32.gmra.mxu0 %v420
  %v820 = vpop.f32.mrf.mxu0
  %v821 = vadd.f32 0.0, %v820
  %822 = vmatmul.f32.gmra.mxu0 %v423
  %v823 = vpop.f32.mrf.mxu0
  %v824 = vadd.f32 0.0, %v823
  %825 = vmatmul.f32.gmra.mxu0 %v426
  %v826 = vpop.f32.mrf.mxu0
  %v827 = vadd.f32 0.0, %v826
  %828 = vmatmul.f32.gmra.mxu0 %v429
  %v829 = vpop.f32.mrf.mxu0
  %v830 = vadd.f32 0.0, %v829
  %831 = vmatmul.f32.gmra.mxu0 %v432
  %v832 = vpop.f32.mrf.mxu0
  %v833 = vadd.f32 0.0, %v832
  %834 = vmatmul.f32.gmra.mxu0 %v435
  %v835 = vpop.f32.mrf.mxu0
  %v836 = vadd.f32 0.0, %v835
  %837 = vmatmul.f32.gmra.mxu0 %v438
  %v838 = vpop.f32.mrf.mxu0
  %v839 = vadd.f32 0.0, %v838
  %840 = vmatmul.f32.gmra.mxu0 %v441
  %v841 = vpop.f32.mrf.mxu0
  %v842 = vadd.f32 0.0, %v841
  %843 = vmatmul.f32.gmra.mxu0 %v444
  %v844 = vpop.f32.mrf.mxu0
  %v845 = vadd.f32 0.0, %v844
  %846 = vmatmul.f32.gmra.mxu0 %v447
  %v847 = vpop.f32.mrf.mxu0
  %v848 = vadd.f32 0.0, %v847
  %849 = vmatmul.f32.gmra.mxu0 %v450
  %v850 = vpop.f32.mrf.mxu0
  %v851 = vadd.f32 0.0, %v850
  %852 = vmatmul.f32.gmra.mxu0 %v453
  %v853 = vpop.f32.mrf.mxu0
  %v854 = vadd.f32 0.0, %v853
  %855 = vmatmul.f32.gmra.mxu0 %v456
  %v856 = vpop.f32.mrf.mxu0
  %v857 = vadd.f32 0.0, %v856
  %858 = vmatmul.f32.gmra.mxu0 %v459
  %v859 = vpop.f32.mrf.mxu0
  %v860 = vadd.f32 0.0, %v859
  %861 = vmatmul.f32.gmra.mxu0 %v462
  %v862 = vpop.f32.mrf.mxu0
  %v863 = vadd.f32 0.0, %v862
  %864 = vmatmul.f32.gmra.mxu0 %v465
  %v865 = vpop.f32.mrf.mxu0
  %v866 = vadd.f32 0.0, %v865
  %867 = vmatmul.f32.gmra.mxu0 %v468
  %v868 = vpop.f32.mrf.mxu0
  %v869 = vadd.f32 0.0, %v868
  %870 = vmatmul.f32.gmra.mxu0 %v471
  %v871 = vpop.f32.mrf.mxu0
  %v872 = vadd.f32 0.0, %v871
  %873 = vmatmul.f32.gmra.mxu0 %v474
  %v874 = vpop.f32.mrf.mxu0
  %v875 = vadd.f32 0.0, %v874
  %876 = vmatmul.f32.gmra.mxu0 %v477
  %v877 = vpop.f32.mrf.mxu0
  %v878 = vadd.f32 0.0, %v877
  %879 = vmatmul.f32.gmra.mxu0 %v480
  %v880 = vpop.f32.mrf.mxu0
  %v881 = vadd.f32 0.0, %v880
  %882 = vmatmul.f32.gmra.mxu0 %v483
  %v883 = vpop.f32.mrf.mxu0
  %v884 = vadd.f32 0.0, %v883
  %885 = vmatmul.f32.gmra.mxu0 %v486
  %v886 = vpop.f32.mrf.mxu0
  %v887 = vadd.f32 0.0, %v886
  %888 = vmatmul.f32.gmra.mxu0 %v489
  %v889 = vpop.f32.mrf.mxu0
  %v890 = vadd.f32 0.0, %v889
  %891 = vmatmul.f32.gmra.mxu0 %v492
  %v892 = vpop.f32.mrf.mxu0
  %v893 = vadd.f32 0.0, %v892
  %894 = vmatmul.f32.gmra.mxu0 %v495
  %v895 = vpop.f32.mrf.mxu0
  %v896 = vadd.f32 0.0, %v895
  %897 = vmatmul.f32.gmra.mxu0 %v498
  %v898 = vpop.f32.mrf.mxu0
  %v899 = vadd.f32 0.0, %v898
  %900 = vmatmul.f32.gmra.mxu0 %v501
  %v901 = vpop.f32.mrf.mxu0
  %v902 = vadd.f32 0.0, %v901
  %903 = vmatmul.f32.gmra.mxu0 %v504
  %v904 = vpop.f32.mrf.mxu0
  %v905 = vadd.f32 0.0, %v904
  %906 = vmatmul.f32.gmra.mxu0 %v507
  %v907 = vpop.f32.mrf.mxu0
  %v908 = vadd.f32 0.0, %v907
  %909 = vmatmul.f32.gmra.mxu0 %v510
  %v910 = vpop.f32.mrf.mxu0
  %v911 = vadd.f32 0.0, %v910
  %912 = vmatmul.f32.gmra.mxu0 %v513
  %v913 = vpop.f32.mrf.mxu0
  %v914 = vadd.f32 0.0, %v913
  %915 = vmatmul.f32.gmra.mxu0 %v516
  %v916 = vpop.f32.mrf.mxu0
  %v917 = vadd.f32 0.0, %v916
  %918 = vmatmul.f32.gmra.mxu0 %v519
  %v919 = vpop.f32.mrf.mxu0
  %v920 = vadd.f32 0.0, %v919
  %921 = vmatmul.f32.gmra.mxu0 %v522
  %v922 = vpop.f32.mrf.mxu0
  %v923 = vadd.f32 0.0, %v922
  %924 = vmatmul.f32.gmra.mxu0 %v525
  %v925 = vpop.f32.mrf.mxu0
  %v926 = vadd.f32 0.0, %v925
  %927 = vmatmul.f32.gmra.mxu0 %v528
  %v928 = vpop.f32.mrf.mxu0
  %v929 = vadd.f32 0.0, %v928
  %930 = vmatmul.f32.gmra.mxu0 %v531
  %v931 = vpop.f32.mrf.mxu0
  %v932 = vadd.f32 0.0, %v931
  %933 = vmatmul.f32.gmra.mxu0 %v534
  %v934 = vpop.f32.mrf.mxu0
  %v935 = vadd.f32 0.0, %v934
  %936 = vmatmul.f32.gmra.mxu0 %v537
  %v937 = vpop.f32.mrf.mxu0
  %v938 = vadd.f32 0.0, %v937
  %939 = vmatmul.f32.gmra.mxu0 %v540
  %v940 = vpop.f32.mrf.mxu0
  %v941 = vadd.f32 0.0, %v940
  %942 = vmatmul.f32.gmra.mxu0 %v543
  %v943 = vpop.f32.mrf.mxu0
  %v944 = vadd.f32 0.0, %v943
  %945 = vdwg.mxu0
  %v946 = vld [vmem:[%s2] ss:$0 sm:$0xff]
  %v947 = vld [vmem:[%s2 + $0x1] ss:$0 sm:$0xff]
  %v948 = vld [vmem:[%s2 + $0x2] ss:$0 sm:$0xff]
  %v949 = vmax.f32 %v563, %v659
  %v950 = vmax.f32 %v566, %v662
  %v951 = vmax.f32 %v569, %v665
  %v952 = vmax.f32 %v572, %v668
  %v953 = vmax.f32 %v575, %v671
  %v954 = vmax.f32 %v578, %v674
  %v955 = vmax.f32 %v581, %v677
  %v956 = vmax.f32 %v584, %v680
  %v957 = vmax.f32 %v587, %v683
  %v958 = vmax.f32 %v590, %v686
  %v959 = vmax.f32 %v593, %v689
  %v960 = vmax.f32 %v596, %v692
  %v961 = vmax.f32 %v599, %v695
  %v962 = vmax.f32 %v602, %v698
  %v963 = vmax.f32 %v605, %v701
  %v964 = vmax.f32 %v608, %v704
  %v965 = vmax.f32 %v949, %v755
  %v966 = vmax.f32 %v950, %v758
  %v967 = vmax.f32 %v951, %v761
  %v968 = vmax.f32 %v952, %v764
  %v969 = vmax.f32 %v953, %v767
  %v970 = vmax.f32 %v954, %v770
  %v971 = vmax.f32 %v955, %v773
  %v972 = vmax.f32 %v956, %v776
  %v973 = vmax.f32 %v957, %v779
  %v974 = vmax.f32 %v958, %v782
  %v975 = vmax.f32 %v959, %v785
  %v976 = vmax.f32 %v960, %v788
  %v977 = vmax.f32 %v961, %v791
  %v978 = vmax.f32 %v962, %v794
  %v979 = vmax.f32 %v963, %v797
  %v980 = vmax.f32 %v964, %v800
  %v981 = vmax.f32 %v965, %v851
  %v982 = vmax.f32 %v966, %v854
  %v983 = vmax.f32 %v967, %v857
  %v984 = vmax.f32 %v968, %v860
  %v985 = vmax.f32 %v969, %v863
  %v986 = vmax.f32 %v970, %v866
  %v987 = vmax.f32 %v971, %v869
  %v988 = vmax.f32 %v972, %v872
  %v989 = vmax.f32 %v973, %v875
  %v990 = vmax.f32 %v974, %v878
  %v991 = vmax.f32 %v975, %v881
  %v992 = vmax.f32 %v976, %v884
  %v993 = vmax.f32 %v977, %v887
  %v994 = vmax.f32 %v978, %v890
  %v995 = vmax.f32 %v979, %v893
  %v996 = vmax.f32 %v980, %v896
  %v997 = vadd.f32 %v981, %v946
  %v998 = vadd.f32 %v982, %v946
  %v999 = vadd.f32 %v983, %v946
  %v1000 = vadd.f32 %v984, %v946
  %v1001 = vadd.f32 %v985, %v946
  %v1002 = vadd.f32 %v986, %v946
  %v1003 = vadd.f32 %v987, %v946
  %v1004 = vadd.f32 %v988, %v946
  %v1005 = vadd.f32 %v989, %v946
  %v1006 = vadd.f32 %v990, %v946
  %v1007 = vadd.f32 %v991, %v946
  %v1008 = vadd.f32 %v992, %v946
  %v1009 = vadd.f32 %v993, %v946
  %v1010 = vadd.f32 %v994, %v946
  %v1011 = vadd.f32 %v995, %v946
  %v1012 = vadd.f32 %v996, %v946
  %v1013 = vmax.f32 %v997, 0.0
  %v1014 = vmax.f32 %v998, 0.0
  %v1015 = vmax.f32 %v999, 0.0
  %v1016 = vmax.f32 %v1000, 0.0
  %v1017 = vmax.f32 %v1001, 0.0
  %v1018 = vmax.f32 %v1002, 0.0
  %v1019 = vmax.f32 %v1003, 0.0
  %v1020 = vmax.f32 %v1004, 0.0
  %v1021 = vmax.f32 %v1005, 0.0
  %v1022 = vmax.f32 %v1006, 0.0
  %v1023 = vmax.f32 %v1007, 0.0
  %v1024 = vmax.f32 %v1008, 0.0
  %v1025 = vmax.f32 %v1009, 0.0
  %v1026 = vmax.f32 %v1010, 0.0
  %v1027 = vmax.f32 %v1011, 0.0
  %v1028 = vmax.f32 %v1012, 0.0
  %v1029 = vmul.f32 %v1013, %v947
  %v1030 = vmul.f32 %v1014, %v947
  %v1031 = vmul.f32 %v1015, %v947
  %v1032 = vmul.f32 %v1016, %v947
  %v1033 = vmul.f32 %v1017, %v947
  %v1034 = vmul.f32 %v1018, %v947
  %v1035 = vmul.f32 %v1019, %v947
  %v1036 = vmul.f32 %v1020, %v947
  %v1037 = vmul.f32 %v1021, %v947
  %v1038 = vmul.f32 %v1022, %v947
  %v1039 = vmul.f32 %v1023, %v947
  %v1040 = vmul.f32 %v1024, %v947
  %v1041 = vmul.f32 %v1025, %v947
  %v1042 = vmul.f32 %v1026, %v947
  %v1043 = vmul.f32 %v1027, %v947
  %v1044 = vmul.f32 %v1028, %v947
  %v1045 = vadd.f32 %v1029, %v948
  %v1046 = vadd.f32 %v1030, %v948
  %v1047 = vadd.f32 %v1031, %v948
  %v1048 = vadd.f32 %v1032, %v948
  %v1049 = vadd.f32 %v1033, %v948
  %v1050 = vadd.f32 %v1034, %v948
  %v1051 = vadd.f32 %v1035, %v948
  %v1052 = vadd.f32 %v1036, %v948
  %v1053 = vadd.f32 %v1037, %v948
  %v1054 = vadd.f32 %v1038, %v948
  %v1055 = vadd.f32 %v1039, %v948
  %v1056 = vadd.f32 %v1040, %v948
  %v1057 = vadd.f32 %v1041, %v948
  %v1058 = vadd.f32 %v1042, %v948
  %v1059 = vadd.f32 %v1043, %v948
  %v1060 = vadd.f32 %v1044, %v948
  %v1061 = vmax.f32 %v611, %v707
  %v1062 = vmax.f32 %v614, %v710
  %v1063 = vmax.f32 %v617, %v713
  %v1064 = vmax.f32 %v620, %v716
  %v1065 = vmax.f32 %v623, %v719
  %v1066 = vmax.f32 %v626, %v722
  %v1067 = vmax.f32 %v629, %v725
  %v1068 = vmax.f32 %v632, %v728
  %v1069 = vmax.f32 %v635, %v731
  %v1070 = vmax.f32 %v638, %v734
  %v1071 = vmax.f32 %v641, %v737
  %v1072 = vmax.f32 %v644, %v740
  %v1073 = vmax.f32 %v647, %v743
  %v1074 = vmax.f32 %v650, %v746
  %v1075 = vmax.f32 %v653, %v749
  %v1076 = vmax.f32 %v656, %v752
  %v1077 = vmax.f32 %v1061, %v803
  %v1078 = vmax.f32 %v1062, %v806
  %v1079 = vmax.f32 %v1063, %v809
  %v1080 = vmax.f32 %v1064, %v812
  %v1081 = vmax.f32 %v1065, %v815
  %v1082 = vmax.f32 %v1066, %v818
  %v1083 = vmax.f32 %v1067, %v821
  %v1084 = vmax.f32 %v1068, %v824
  %v1085 = vmax.f32 %v1069, %v827
  %v1086 = vmax.f32 %v1070, %v830
  %v1087 = vmax.f32 %v1071, %v833
  %v1088 = vmax.f32 %v1072, %v836
  %v1089 = vmax.f32 %v1073, %v839
  %v1090 = vmax.f32 %v1074, %v842
  %v1091 = vmax.f32 %v1075, %v845
  %v1092 = vmax.f32 %v1076, %v848
  %v1093 = vmax.f32 %v1077, %v899
  %v1094 = vmax.f32 %v1078, %v902
  %v1095 = vmax.f32 %v1079, %v905
  %v1096 = vmax.f32 %v1080, %v908
  %v1097 = vmax.f32 %v1081, %v911
  %v1098 = vmax.f32 %v1082, %v914
  %v1099 = vmax.f32 %v1083, %v917
  %v1100 = vmax.f32 %v1084, %v920
  %v1101 = vmax.f32 %v1085, %v923
  %v1102 = vmax.f32 %v1086, %v926
  %v1103 = vmax.f32 %v1087, %v929
  %v1104 = vmax.f32 %v1088, %v932
  %v1105 = vmax.f32 %v1089, %v935
  %v1106 = vmax.f32 %v1090, %v938
  %v1107 = vmax.f32 %v1091, %v941
  %v1108 = vmax.f32 %v1092, %v944
  %v1109 = vadd.f32 %v1093, %v946
  %v1110 = vadd.f32 %v1094, %v946
  %v1111 = vadd.f32 %v1095, %v946
  %v1112 = vadd.f32 %v1096, %v946
  %v1113 = vadd.f32 %v1097, %v946
  %v1114 = vadd.f32 %v1098, %v946
  %v1115 = vadd.f32 %v1099, %v946
  %v1116 = vadd.f32 %v1100, %v946
  %v1117 = vadd.f32 %v1101, %v946
  %v1118 = vadd.f32 %v1102, %v946
  %v1119 = vadd.f32 %v1103, %v946
  %v1120 = vadd.f32 %v1104, %v946
  %v1121 = vadd.f32 %v1105, %v946
  %v1122 = vadd.f32 %v1106, %v946
  %v1123 = vadd.f32 %v1107, %v946
  %v1124 = vadd.f32 %v1108, %v946
  %v1125 = vmax.f32 %v1109, 0.0
  %v1126 = vmax.f32 %v1110, 0.0
  %v1127 = vmax.f32 %v1111, 0.0
  %v1128 = vmax.f32 %v1112, 0.0
  %v1129 = vmax.f32 %v1113, 0.0
  %v1130 = vmax.f32 %v1114, 0.0
  %v1131 = vmax.f32 %v1115, 0.0
  %v1132 = vmax.f32 %v1116, 0.0
  %v1133 = vmax.f32 %v1117, 0.0
  %v1134 = vmax.f32 %v1118, 0.0
  %v1135 = vmax.f32 %v1119, 0.0
  %v1136 = vmax.f32 %v1120, 0.0
  %v1137 = vmax.f32 %v1121, 0.0
  %v1138 = vmax.f32 %v1122, 0.0
  %v1139 = vmax.f32 %v1123, 0.0
  %v1140 = vmax.f32 %v1124, 0.0
  %v1141 = vmul.f32 %v1125, %v947
  %v1142 = vmul.f32 %v1126, %v947
  %v1143 = vmul.f32 %v1127, %v947
  %v1144 = vmul.f32 %v1128, %v947
  %v1145 = vmul.f32 %v1129, %v947
  %v1146 = vmul.f32 %v1130, %v947
  %v1147 = vmul.f32 %v1131, %v947
  %v1148 = vmul.f32 %v1132, %v947
  %v1149 = vmul.f32 %v1133, %v947
  %v1150 = vmul.f32 %v1134, %v947
  %v1151 = vmul.f32 %v1135, %v947
  %v1152 = vmul.f32 %v1136, %v947
  %v1153 = vmul.f32 %v1137, %v947
  %v1154 = vmul.f32 %v1138, %v947
  %v1155 = vmul.f32 %v1139, %v947
  %v1156 = vmul.f32 %v1140, %v947
  %v1157 = vadd.f32 %v1141, %v948
  %v1158 = vadd.f32 %v1142, %v948
  %v1159 = vadd.f32 %v1143, %v948
  %v1160 = vadd.f32 %v1144, %v948
  %v1161 = vadd.f32 %v1145, %v948
  %v1162 = vadd.f32 %v1146, %v948
  %v1163 = vadd.f32 %v1147, %v948
  %v1164 = vadd.f32 %v1148, %v948
  %v1165 = vadd.f32 %v1149, %v948
  %v1166 = vadd.f32 %v1150, %v948
  %v1167 = vadd.f32 %v1151, %v948
  %v1168 = vadd.f32 %v1152, %v948
  %v1169 = vadd.f32 %v1153, %v948
  %v1170 = vadd.f32 %v1154, %v948
  %v1171 = vadd.f32 %v1155, %v948
  %v1172 = vadd.f32 %v1156, %v948
  %1173 = vst [vmem:[#allocation2] sm:$0xff] 0.0
  %1174 = vst [vmem:[#allocation2 + $0x8] sm:$0xff] 0.0
  %1175 = vst [vmem:[#allocation2 + $0x10] sm:$0xff] 0.0
  %1176 = vst [vmem:[#allocation2 + $0x18] sm:$0xff] 0.0
  %1177 = vst [vmem:[#allocation2 + $0x20] sm:$0xff] 0.0
  %1178 = vst [vmem:[#allocation2 + $0x28] sm:$0xff] 0.0
  %1179 = vst [vmem:[#allocation2 + $0x30] sm:$0xff] 0.0
  %1180 = vst [vmem:[#allocation2 + $0x38] sm:$0xff] 0.0
  %1181 = vst [vmem:[#allocation2 + $0x40] sm:$0xff] 0.0
  %1182 = vst [vmem:[#allocation2 + $0x48] sm:$0xff] 0.0
  %1183 = vst [vmem:[#allocation2 + $0x50] sm:$0xff] 0.0
  %1184 = vst [vmem:[#allocation2 + $0x58] sm:$0xff] 0.0
  %1185 = vst [vmem:[#allocation2 + $0x60] sm:$0xff] 0.0
  %1186 = vst [vmem:[#allocation2 + $0x68] sm:$0xff] 0.0
  %1187 = vst [vmem:[#allocation2 + $0x70] sm:$0xff] 0.0
  %1188 = vst [vmem:[#allocation2 + $0x78] sm:$0xff] 0.0
  %1189 = vst [vmem:[#allocation2 + $0x80] sm:$0xff] 0.0
  %1190 = vst [vmem:[#allocation2 + $0x88] sm:$0xff] 0.0
  %1191 = vst [vmem:[#allocation2 + $0x90] sm:$0xff] 0.0
  %1192 = vst [vmem:[#allocation2 + $0x98] sm:$0xff] 0.0
  %1193 = vst [vmem:[#allocation2 + $0xa0] sm:$0xff] 0.0
  %1194 = vst [vmem:[#allocation2 + $0xa8] sm:$0xff] 0.0
  %1195 = vst [vmem:[#allocation2 + $0xb0] sm:$0xff] 0.0
  %1196 = vst [vmem:[#allocation2 + $0xb8] sm:$0xff] 0.0
  %1197 = vst [vmem:[#allocation2 + $0xc0] sm:$0xff] 0.0
  %1198 = vst [vmem:[#allocation2 + $0xc8] sm:$0xff] 0.0
  %1199 = vst [vmem:[#allocation2 + $0xd0] sm:$0xff] 0.0
  %1200 = vst [vmem:[#allocation2 + $0xd8] sm:$0xff] 0.0
  %1201 = vst [vmem:[#allocation2 + $0xe0] sm:$0xff] 0.0
  %1202 = vst [vmem:[#allocation2 + $0xe8] sm:$0xff] 0.0
  %1203 = vst [vmem:[#allocation2 + $0xf0] sm:$0xff] 0.0
  %1204 = vst [vmem:[#allocation2 + $0xf8] sm:$0xff] 0.0
  %1205 = vst [vmem:[#allocation2 + $0x100] sm:$0xff] 0.0
  %1206 = vst [vmem:[#allocation2 + $0x108] sm:$0xff] 0.0
  %1207 = vst [vmem:[#allocation2 + $0x110] sm:$0xff] 0.0
  %1208 = vst [vmem:[#allocation2 + $0x118] sm:$0xff] 0.0
  %1209 = vst [vmem:[#allocation2 + $0x120] sm:$0xff] 0.0
  %1210 = vst [vmem:[#allocation2 + $0x128] sm:$0xff] 0.0
  %1211 = vst [vmem:[#allocation3] sm:$0xff] 0.0
  %1212 = vst [vmem:[#allocation3 + $0x8] sm:$0xff] 0.0
  %1213 = vst [vmem:[#allocation3 + $0x10] sm:$0xff] 0.0
  %1214 = vst [vmem:[#allocation3 + $0x18] sm:$0xff] 0.0
  %1215 = vst [vmem:[#allocation3 + $0x20] sm:$0xff] 0.0
  %1216 = vst [vmem:[#allocation3 + $0x28] sm:$0xff] 0.0
  %1217 = vst [vmem:[#allocation3 + $0x30] sm:$0xff] 0.0
  %1218 = vst [vmem:[#allocation3 + $0x38] sm:$0xff] 0.0
  %1219 = vst [vmem:[#allocation3 + $0x40] sm:$0xff] 0.0
  %1220 = vst [vmem:[#allocation3 + $0x48] sm:$0xff] 0.0
  %1221 = vst [vmem:[#allocation3 + $0x50] sm:$0xff] 0.0
  %1222 = vst [vmem:[#allocation3 + $0x58] sm:$0xff] 0.0
  %1223 = vst [vmem:[#allocation3 + $0x60] sm:$0xff] 0.0
  %1224 = vst [vmem:[#allocation3 + $0x68] sm:$0xff] 0.0
  %1225 = vst [vmem:[#allocation3 + $0x70] sm:$0xff] 0.0
  %1226 = vst [vmem:[#allocation3 + $0x78] sm:$0xff] 0.0
  %1227 = vst [vmem:[#allocation3 + $0x80] sm:$0xff] 0.0
  %1228 = vst [vmem:[#allocation3 + $0x88] sm:$0xff] 0.0
  %1229 = vst [vmem:[#allocation3 + $0x90] sm:$0xff] 0.0
  %1230 = vst [vmem:[#allocation3 + $0x98] sm:$0xff] 0.0
  %1231 = vst [vmem:[#allocation3 + $0xa0] sm:$0xff] 0.0
  %1232 = vst [vmem:[#allocation3 + $0xa8] sm:$0xff] 0.0
  %1233 = vst [vmem:[#allocation3 + $0xb0] sm:$0xff] 0.0
  %1234 = vst [vmem:[#allocation3 + $0xb8] sm:$0xff] 0.0
  %1235 = vst [vmem:[#allocation3 + $0xc0] sm:$0xff] 0.0
  %1236 = vst [vmem:[#allocation3 + $0xc8] sm:$0xff] 0.0
  %1237 = vst [vmem:[#allocation3 + $0xd0] sm:$0xff] 0.0
  %1238 = vst [vmem:[#allocation3 + $0xd8] sm:$0xff] 0.0
  %1239 = vst [vmem:[#allocation3 + $0xe0] sm:$0xff] 0.0
  %1240 = vst [vmem:[#allocation3 + $0xe8] sm:$0xff] 0.0
  %1241 = vst [vmem:[#allocation3 + $0xf0] sm:$0xff] 0.0
  %1242 = vst [vmem:[#allocation3 + $0xf8] sm:$0xff] 0.0
  %1243 = vst [vmem:[#allocation3 + $0x100] sm:$0xff] 0.0
  %1244 = vst [vmem:[#allocation3 + $0x108] sm:$0xff] 0.0
  %1245 = vst [vmem:[#allocation3 + $0x110] sm:$0xff] 0.0
  %1246 = vst [vmem:[#allocation3 + $0x118] sm:$0xff] 0.0
  %1247 = vst [vmem:[#allocation3 + $0x120] sm:$0xff] 0.0
  %1248 = vst [vmem:[#allocation3 + $0x128] sm:$0xff] 0.0
  %1249 = vst [vmem:[#allocation3 + $0x10] sm:$0xff] %v1045
  %1250 = vst [vmem:[#allocation2 + $0x18] sm:$0xff] %v1157
  %1251 = vst [vmem:[#allocation3 + $0x20] sm:$0xff] %v1046
  %1252 = vst [vmem:[#allocation2 + $0x28] sm:$0xff] %v1158
  %1253 = vst [vmem:[#allocation3 + $0x30] sm:$0xff] %v1047
  %1254 = vst [vmem:[#allocation2 + $0x38] sm:$0xff] %v1159
  %1255 = vst [vmem:[#allocation3 + $0x40] sm:$0xff] %v1048
  %1256 = vst [vmem:[#allocation2 + $0x48] sm:$0xff] %v1160
  %1257 = vst [vmem:[#allocation3 + $0x50] sm:$0xff] %v1049
  %1258 = vst [vmem:[#allocation2 + $0x58] sm:$0xff] %v1161
  %1259 = vst [vmem:[#allocation3 + $0x60] sm:$0xff] %v1050
  %1260 = vst [vmem:[#allocation2 + $0x68] sm:$0xff] %v1162
  %1261 = vst [vmem:[#allocation3 + $0x70] sm:$0xff] %v1051
  %1262 = vst [vmem:[#allocation2 + $0x78] sm:$0xff] %v1163
  %1263 = vst [vmem:[#allocation3 + $0x80] sm:$0xff] %v1052
  %1264 = vst [vmem:[#allocation2 + $0x88] sm:$0xff] %v1164
  %1265 = vst [vmem:[#allocation3 + $0x90] sm:$0xff] %v1053
  %1266 = vst [vmem:[#allocation2 + $0x98] sm:$0xff] %v1165
  %1267 = vst [vmem:[#allocation3 + $0xa0] sm:$0xff] %v1054
  %1268 = vst [vmem:[#allocation2 + $0xa8] sm:$0xff] %v1166
  %1269 = vst [vmem:[#allocation3 + $0xb0] sm:$0xff] %v1055
  %1270 = vst [vmem:[#allocation2 + $0xb8] sm:$0xff] %v1167
  %1271 = vst [vmem:[#allocation3 + $0xc0] sm:$0xff] %v1056
  %1272 = vst [vmem:[#allocation2 + $0xc8] sm:$0xff] %v1168
  %1273 = vst [vmem:[#allocation3 + $0xd0] sm:$0xff] %v1057
  %1274 = vst [vmem:[#allocation2 + $0xd8] sm:$0xff] %v1169
  %1275 = vst [vmem:[#allocation3 + $0xe0] sm:$0xff] %v1058
  %1276 = vst [vmem:[#allocation2 + $0xe8] sm:$0xff] %v1170
  %1277 = vst [vmem:[#allocation3 + $0xf0] sm:$0xff] %v1059
  %1278 = vst [vmem:[#allocation2 + $0xf8] sm:$0xff] %v1171
  %1279 = vst [vmem:[#allocation3 + $0x100] sm:$0xff] %v1060
  %1280 = vst [vmem:[#allocation2 + $0x108] sm:$0xff] %v1172
  %v1281 = vld [vmem:[#allocation2] sm:$0xff]
  %v1282 = vld [vmem:[#allocation2 + $0x8] sm:$0xff]
  %v1283 = vld [vmem:[#allocation2 + $0x10] sm:$0xff]
  %v1284 = vld [vmem:[#allocation2 + $0x18] sm:$0xff]
  %v1285 = vld [vmem:[#allocation2 + $0x20] sm:$0xff]
  %v1286 = vld [vmem:[#allocation2 + $0x28] sm:$0xff]
  %v1287 = vld [vmem:[#allocation2 + $0x30] sm:$0xff]
  %v1288 = vld [vmem:[#allocation2 + $0x38] sm:$0xff]
  %v1289 = vld [vmem:[#allocation2 + $0x40] sm:$0xff]
  %v1290 = vld [vmem:[#allocation2 + $0x48] sm:$0xff]
  %v1291 = vld [vmem:[#allocation2 + $0x50] sm:$0xff]
  %v1292 = vld [vmem:[#allocation2 + $0x58] sm:$0xff]
  %v1293 = vld [vmem:[#allocation2 + $0x60] sm:$0xff]
  %v1294 = vld [vmem:[#allocation2 + $0x68] sm:$0xff]
  %v1295 = vld [vmem:[#allocation2 + $0x70] sm:$0xff]
  %v1296 = vld [vmem:[#allocation2 + $0x78] sm:$0xff]
  %v1297 = vld [vmem:[#allocation2 + $0x80] sm:$0xff]
  %v1298 = vld [vmem:[#allocation2 + $0x88] sm:$0xff]
  %v1299 = vld [vmem:[#allocation2 + $0x90] sm:$0xff]
  %v1300 = vld [vmem:[#allocation2 + $0x98] sm:$0xff]
  %v1301 = vld [vmem:[#allocation2 + $0xa0] sm:$0xff]
  %v1302 = vld [vmem:[#allocation2 + $0xa8] sm:$0xff]
  %v1303 = vld [vmem:[#allocation2 + $0xb0] sm:$0xff]
  %v1304 = vld [vmem:[#allocation2 + $0xb8] sm:$0xff]
  %v1305 = vld [vmem:[#allocation2 + $0xc0] sm:$0xff]
  %v1306 = vld [vmem:[#allocation2 + $0xc8] sm:$0xff]
  %v1307 = vld [vmem:[#allocation2 + $0xd0] sm:$0xff]
  %v1308 = vld [vmem:[#allocation2 + $0xd8] sm:$0xff]
  %v1309 = vld [vmem:[#allocation2 + $0xe0] sm:$0xff]
  %v1310 = vld [vmem:[#allocation2 + $0xe8] sm:$0xff]
  %v1311 = vld [vmem:[#allocation2 + $0xf0] sm:$0xff]
  %v1312 = vld [vmem:[#allocation2 + $0xf8] sm:$0xff]
  %v1313 = vld [vmem:[#allocation2 + $0x100] sm:$0xff]
  %v1314 = vld [vmem:[#allocation2 + $0x108] sm:$0xff]
  %v1315 = vld [vmem:[#allocation2 + $0x110] sm:$0xff]
  %v1316 = vld [vmem:[#allocation2 + $0x118] sm:$0xff]
  %v1317 = vld [vmem:[#allocation2 + $0x120] sm:$0xff]
  %v1318 = vpack.c.bf16 %v1281, %v1281
  %v1319 = vpack.c.bf16 %v1282, %v1282
  %v1320 = vpack.c.bf16 %v1283, %v1283
  %v1321 = vpack.c.bf16 %v1284, %v1284
  %v1322 = vpack.c.bf16 %v1285, %v1285
  %v1323 = vpack.c.bf16 %v1286, %v1286
  %v1324 = vpack.c.bf16 %v1287, %v1287
  %v1325 = vpack.c.bf16 %v1288, %v1288
  %v1326 = vpack.c.bf16 %v1289, %v1289
  %v1327 = vpack.c.bf16 %v1290, %v1290
  %v1328 = vpack.c.bf16 %v1291, %v1291
  %v1329 = vpack.c.bf16 %v1292, %v1292
  %v1330 = vpack.c.bf16 %v1293, %v1293
  %v1331 = vpack.c.bf16 %v1294, %v1294
  %v1332 = vpack.c.bf16 %v1295, %v1295
  %v1333 = vpack.c.bf16 %v1296, %v1296
  %v1334 = vpack.c.bf16 %v1297, %v1297
  %v1335 = vpack.c.bf16 %v1298, %v1298
  %v1336 = vpack.c.bf16 %v1299, %v1299
  %v1337 = vpack.c.bf16 %v1300, %v1300
  %v1338 = vpack.c.bf16 %v1301, %v1301
  %v1339 = vpack.c.bf16 %v1302, %v1302
  %v1340 = vpack.c.bf16 %v1303, %v1303
  %v1341 = vpack.c.bf16 %v1304, %v1304
  %v1342 = vpack.c.bf16 %v1305, %v1305
  %v1343 = vpack.c.bf16 %v1306, %v1306
  %v1344 = vpack.c.bf16 %v1307, %v1307
  %v1345 = vpack.c.bf16 %v1308, %v1308
  %v1346 = vpack.c.bf16 %v1309, %v1309
  %v1347 = vpack.c.bf16 %v1310, %v1310
  %v1348 = vpack.c.bf16 %v1311, %v1311
  %v1349 = vpack.c.bf16 %v1312, %v1312
  %v1350 = vpack.c.bf16 %v1313, %v1313
  %v1351 = vpack.c.bf16 %v1314, %v1314
  %v1352 = vpack.c.bf16 %v1315, %v1315
  %v1353 = vpack.c.bf16 %v1316, %v1316
  %v1354 = vpack.c.bf16 %v1317, %v1317
  %v1355 = vld [vmem:[#allocation3] sm:$0xff]
  %v1356 = vld [vmem:[#allocation3 + $0x8] sm:$0xff]
  %v1357 = vld [vmem:[#allocation3 + $0x10] sm:$0xff]
  %v1358 = vld [vmem:[#allocation3 + $0x18] sm:$0xff]
  %v1359 = vld [vmem:[#allocation3 + $0x20] sm:$0xff]
  %v1360 = vld [vmem:[#allocation3 + $0x28] sm:$0xff]
  %v1361 = vld [vmem:[#allocation3 + $0x30] sm:$0xff]
  %v1362 = vld [vmem:[#allocation3 + $0x38] sm:$0xff]
  %v1363 = vld [vmem:[#allocation3 + $0x40] sm:$0xff]
  %v1364 = vld [vmem:[#allocation3 + $0x48] sm:$0xff]
  %v1365 = vld [vmem:[#allocation3 + $0x50] sm:$0xff]
  %v1366 = vld [vmem:[#allocation3 + $0x58] sm:$0xff]
  %v1367 = vld [vmem:[#allocation3 + $0x60] sm:$0xff]
  %v1368 = vld [vmem:[#allocation3 + $0x68] sm:$0xff]
  %v1369 = vld [vmem:[#allocation3 + $0x70] sm:$0xff]
  %v1370 = vld [vmem:[#allocation3 + $0x78] sm:$0xff]
  %v1371 = vld [vmem:[#allocation3 + $0x80] sm:$0xff]
  %v1372 = vld [vmem:[#allocation3 + $0x88] sm:$0xff]
  %v1373 = vld [vmem:[#allocation3 + $0x90] sm:$0xff]
  %v1374 = vld [vmem:[#allocation3 + $0x98] sm:$0xff]
  %v1375 = vld [vmem:[#allocation3 + $0xa0] sm:$0xff]
  %v1376 = vld [vmem:[#allocation3 + $0xa8] sm:$0xff]
  %v1377 = vld [vmem:[#allocation3 + $0xb0] sm:$0xff]
  %v1378 = vld [vmem:[#allocation3 + $0xb8] sm:$0xff]
  %v1379 = vld [vmem:[#allocation3 + $0xc0] sm:$0xff]
  %v1380 = vld [vmem:[#allocation3 + $0xc8] sm:$0xff]
  %v1381 = vld [vmem:[#allocation3 + $0xd0] sm:$0xff]
  %v1382 = vld [vmem:[#allocation3 + $0xd8] sm:$0xff]
  %v1383 = vld [vmem:[#allocation3 + $0xe0] sm:$0xff]
  %v1384 = vld [vmem:[#allocation3 + $0xe8] sm:$0xff]
  %v1385 = vld [vmem:[#allocation3 + $0xf0] sm:$0xff]
  %v1386 = vld [vmem:[#allocation3 + $0xf8] sm:$0xff]
  %v1387 = vld [vmem:[#allocation3 + $0x100] sm:$0xff]
  %v1388 = vld [vmem:[#allocation3 + $0x108] sm:$0xff]
  %v1389 = vld [vmem:[#allocation3 + $0x110] sm:$0xff]
  %v1390 = vld [vmem:[#allocation3 + $0x118] sm:$0xff]
  %v1391 = vld [vmem:[#allocation3 + $0x120] sm:$0xff]
  %v1392 = vpack.c.bf16 %v1355, %v1355
  %v1393 = vpack.c.bf16 %v1356, %v1356
  %v1394 = vpack.c.bf16 %v1357, %v1357
  %v1395 = vpack.c.bf16 %v1358, %v1358
  %v1396 = vpack.c.bf16 %v1359, %v1359
  %v1397 = vpack.c.bf16 %v1360, %v1360
  %v1398 = vpack.c.bf16 %v1361, %v1361
  %v1399 = vpack.c.bf16 %v1362, %v1362
  %v1400 = vpack.c.bf16 %v1363, %v1363
  %v1401 = vpack.c.bf16 %v1364, %v1364
  %v1402 = vpack.c.bf16 %v1365, %v1365
  %v1403 = vpack.c.bf16 %v1366, %v1366
  %v1404 = vpack.c.bf16 %v1367, %v1367
  %v1405 = vpack.c.bf16 %v1368, %v1368
  %v1406 = vpack.c.bf16 %v1369, %v1369
  %v1407 = vpack.c.bf16 %v1370, %v1370
  %v1408 = vpack.c.bf16 %v1371, %v1371
  %v1409 = vpack.c.bf16 %v1372, %v1372
  %v1410 = vpack.c.bf16 %v1373, %v1373
  %v1411 = vpack.c.bf16 %v1374, %v1374
  %v1412 = vpack.c.bf16 %v1375, %v1375
  %v1413 = vpack.c.bf16 %v1376, %v1376
  %v1414 = vpack.c.bf16 %v1377, %v1377
  %v1415 = vpack.c.bf16 %v1378, %v1378
  %v1416 = vpack.c.bf16 %v1379, %v1379
  %v1417 = vpack.c.bf16 %v1380, %v1380
  %v1418 = vpack.c.bf16 %v1381, %v1381
  %v1419 = vpack.c.bf16 %v1382, %v1382
  %v1420 = vpack.c.bf16 %v1383, %v1383
  %v1421 = vpack.c.bf16 %v1384, %v1384
  %v1422 = vpack.c.bf16 %v1385, %v1385
  %v1423 = vpack.c.bf16 %v1386, %v1386
  %v1424 = vpack.c.bf16 %v1387, %v1387
  %v1425 = vpack.c.bf16 %v1388, %v1388
  %v1426 = vpack.c.bf16 %v1389, %v1389
  %v1427 = vpack.c.bf16 %v1390, %v1390
  %v1428 = vpack.c.bf16 %v1391, %v1391
  %v1429 = vld [vmem:[%s3] sm:$0xf]
  %v1430 = vld [vmem:[%s3 + $0x4] sm:$0xf]
  %v1431 = vld [vmem:[%s3 + $0x8] sm:$0xf]
  %v1432 = vld [vmem:[%s3 + $0xc] sm:$0xf]
  %v1433 = vld [vmem:[%s3 + $0x10] sm:$0xf]
  %v1434 = vld [vmem:[%s3 + $0x14] sm:$0xf]
  %v1435 = vld [vmem:[%s3 + $0x18] sm:$0xf]
  %v1436 = vld [vmem:[%s3 + $0x1c] sm:$0xf]
  %v1437 = vld [vmem:[%s3 + $0x20] sm:$0xf]
  %v1438 = vld [vmem:[%s3 + $0x24] sm:$0xf]
  %v1439 = vld [vmem:[%s3 + $0x28] sm:$0xf]
  %v1440 = vld [vmem:[%s3 + $0x2c] sm:$0xf]
  %v1441 = vld [vmem:[%s3 + $0x30] sm:$0xf]
  %v1442 = vld [vmem:[%s3 + $0x34] sm:$0xf]
  %v1443 = vld [vmem:[%s3 + $0x38] sm:$0xf]
  %v1444 = vld [vmem:[%s3 + $0x3c] sm:$0xf]
  %s1445 = scalar_lea.vmem %s3, 64
  %v1446 = vld [vmem:[%s1445] sm:$0xf]
  %v1447 = vld [vmem:[%s1445 + $0x4] sm:$0xf]
  %v1448 = vld [vmem:[%s1445 + $0x8] sm:$0xf]
  %v1449 = vld [vmem:[%s1445 + $0xc] sm:$0xf]
  %v1450 = vld [vmem:[%s1445 + $0x10] sm:$0xf]
  %v1451 = vld [vmem:[%s1445 + $0x14] sm:$0xf]
  %v1452 = vld [vmem:[%s1445 + $0x18] sm:$0xf]
  %v1453 = vld [vmem:[%s1445 + $0x1c] sm:$0xf]
  %v1454 = vld [vmem:[%s1445 + $0x20] sm:$0xf]
  %v1455 = vld [vmem:[%s1445 + $0x24] sm:$0xf]
  %v1456 = vld [vmem:[%s1445 + $0x28] sm:$0xf]
  %v1457 = vld [vmem:[%s1445 + $0x2c] sm:$0xf]
  %v1458 = vld [vmem:[%s1445 + $0x30] sm:$0xf]
  %v1459 = vld [vmem:[%s1445 + $0x34] sm:$0xf]
  %v1460 = vld [vmem:[%s1445 + $0x38] sm:$0xf]
  %v1461 = vld [vmem:[%s1445 + $0x3c] sm:$0xf]
  %v1494 = vunpack.c.l.b16 %v1392
  %v1495 = vunpack.c.l.b16 %v1393
  %v1496 = vunpack.c.l.b16 %v1394
  %v1497 = vunpack.c.l.b16 %v1395
  %v1498 = vunpack.c.l.b16 %v1396
  %v1499 = vunpack.c.l.b16 %v1397
  %v1500 = vunpack.c.l.b16 %v1398
  %v1501 = vunpack.c.l.b16 %v1399
  %v1502 = vunpack.c.l.b16 %v1400
  %v1503 = vunpack.c.l.b16 %v1401
  %v1504 = vunpack.c.l.b16 %v1402
  %v1505 = vunpack.c.l.b16 %v1403
  %v1506 = vunpack.c.l.b16 %v1404
  %v1507 = vunpack.c.l.b16 %v1405
  %v1508 = vunpack.c.l.b16 %v1406
  %v1509 = vunpack.c.l.b16 %v1407
  %v1510 = vunpack.c.l.b16 %v1408
  %v1511 = vunpack.c.l.b16 %v1409
  %v1512 = vunpack.c.l.b16 %v1410
  %v1513 = vunpack.c.l.b16 %v1411
  %v1514 = vunpack.c.l.b16 %v1412
  %v1515 = vunpack.c.l.b16 %v1413
  %v1516 = vunpack.c.l.b16 %v1414
  %v1517 = vunpack.c.l.b16 %v1415
  %v1518 = vunpack.c.l.b16 %v1416
  %v1519 = vunpack.c.l.b16 %v1417
  %v1520 = vunpack.c.l.b16 %v1418
  %v1521 = vunpack.c.l.b16 %v1419
  %v1522 = vunpack.c.l.b16 %v1420
  %v1523 = vunpack.c.l.b16 %v1421
  %v1524 = vunpack.c.l.b16 %v1422
  %v1525 = vunpack.c.l.b16 %v1423
  %v1526 = vpack.c.b16 %v1495, %v1494
  %v1527 = vpack.c.b16 %v1497, %v1496
  %v1528 = vpack.c.b16 %v1499, %v1498
  %v1529 = vpack.c.b16 %v1501, %v1500
  %v1530 = vpack.c.b16 %v1503, %v1502
  %v1531 = vpack.c.b16 %v1505, %v1504
  %v1532 = vpack.c.b16 %v1507, %v1506
  %v1533 = vpack.c.b16 %v1509, %v1508
  %v1534 = vpack.c.b16 %v1511, %v1510
  %v1535 = vpack.c.b16 %v1513, %v1512
  %v1536 = vpack.c.b16 %v1515, %v1514
  %v1537 = vpack.c.b16 %v1517, %v1516
  %v1538 = vpack.c.b16 %v1519, %v1518
  %v1539 = vpack.c.b16 %v1521, %v1520
  %v1540 = vpack.c.b16 %v1523, %v1522
  %v1541 = vpack.c.b16 %v1525, %v1524
  %v1574 = vunpack.c.l.b16 %v1446
  %v1575 = vunpack.c.l.b16 %v1447
  %v1576 = vunpack.c.l.b16 %v1448
  %v1577 = vunpack.c.l.b16 %v1449
  %v1578 = vunpack.c.l.b16 %v1450
  %v1579 = vunpack.c.l.b16 %v1451
  %v1580 = vunpack.c.l.b16 %v1452
  %v1581 = vunpack.c.l.b16 %v1453
  %v1582 = vunpack.c.l.b16 %v1454
  %v1583 = vunpack.c.l.b16 %v1455
  %v1584 = vunpack.c.l.b16 %v1456
  %v1585 = vunpack.c.l.b16 %v1457
  %v1586 = vunpack.c.l.b16 %v1458
  %v1587 = vunpack.c.l.b16 %v1459
  %v1588 = vunpack.c.l.b16 %v1460
  %v1589 = vunpack.c.l.b16 %v1461
  %v1590 = vpack.c.b16 %v1575, %v1574
  %v1591 = vpack.c.b16 %v1577, %v1576
  %v1592 = vpack.c.b16 %v1579, %v1578
  %v1593 = vpack.c.b16 %v1581, %v1580
  %v1594 = vpack.c.b16 %v1583, %v1582
  %v1595 = vpack.c.b16 %v1585, %v1584
  %v1596 = vpack.c.b16 %v1587, %v1586
  %v1597 = vpack.c.b16 %v1589, %v1588
  %1606 = vmatpush.bf16.msra.mxu0 %v1597
  %1607 = vmatpush.bf16.msra.mxu0 %v1596
  %1608 = vmatpush.bf16.msra.mxu0 %v1595
  %1609 = vmatpush.bf16.msra.mxu0 %v1594
  %1610 = vmatpush.bf16.msra.mxu0 %v1593
  %1611 = vmatpush.bf16.msra.mxu0 %v1592
  %1612 = vmatpush.bf16.msra.mxu0 %v1591
  %1613 = vmatpush.bf16.msra.mxu0 %v1590
  %1614 = vmatmul.bf16.gmra.mxu0 %v1526
  %v1615 = vpop.f32.mrf.mxu0
  %v1616 = vadd.f32 0.0, %v1615
  %v1617 = vpop.f32.mrf.mxu0
  %1618 = vmatmul.bf16.gmra.mxu0 %v1527
  %v1619 = vpop.f32.mrf.mxu0
  %v1620 = vadd.f32 0.0, %v1619
  %v1621 = vpop.f32.mrf.mxu0
  %1622 = vmatmul.bf16.gmra.mxu0 %v1528
  %v1623 = vpop.f32.mrf.mxu0
  %v1624 = vadd.f32 0.0, %v1623
  %v1625 = vpop.f32.mrf.mxu0
  %1626 = vmatmul.bf16.gmra.mxu0 %v1529
  %v1627 = vpop.f32.mrf.mxu0
  %v1628 = vadd.f32 0.0, %v1627
  %v1629 = vpop.f32.mrf.mxu0
  %1630 = vmatmul.bf16.gmra.mxu0 %v1530
  %v1631 = vpop.f32.mrf.mxu0
  %v1632 = vadd.f32 0.0, %v1631
  %v1633 = vpop.f32.mrf.mxu0
  %1634 = vmatmul.bf16.gmra.mxu0 %v1531
  %v1635 = vpop.f32.mrf.mxu0
  %v1636 = vadd.f32 0.0, %v1635
  %v1637 = vpop.f32.mrf.mxu0
  %1638 = vmatmul.bf16.gmra.mxu0 %v1532
  %v1639 = vpop.f32.mrf.mxu0
  %v1640 = vadd.f32 0.0, %v1639
  %v1641 = vpop.f32.mrf.mxu0
  %1642 = vmatmul.bf16.gmra.mxu0 %v1533
  %v1643 = vpop.f32.mrf.mxu0
  %v1644 = vadd.f32 0.0, %v1643
  %v1645 = vpop.f32.mrf.mxu0
  %1646 = vmatmul.bf16.gmra.mxu0 %v1534
  %v1647 = vpop.f32.mrf.mxu0
  %v1648 = vadd.f32 0.0, %v1647
  %v1649 = vpop.f32.mrf.mxu0
  %1650 = vmatmul.bf16.gmra.mxu0 %v1535
  %v1651 = vpop.f32.mrf.mxu0
  %v1652 = vadd.f32 0.0, %v1651
  %v1653 = vpop.f32.mrf.mxu0
  %1654 = vmatmul.bf16.gmra.mxu0 %v1536
  %v1655 = vpop.f32.mrf.mxu0
  %v1656 = vadd.f32 0.0, %v1655
  %v1657 = vpop.f32.mrf.mxu0
  %1658 = vmatmul.bf16.gmra.mxu0 %v1537
  %v1659 = vpop.f32.mrf.mxu0
  %v1660 = vadd.f32 0.0, %v1659
  %v1661 = vpop.f32.mrf.mxu0
  %1662 = vmatmul.bf16.gmra.mxu0 %v1538
  %v1663 = vpop.f32.mrf.mxu0
  %v1664 = vadd.f32 0.0, %v1663
  %v1665 = vpop.f32.mrf.mxu0
  %1666 = vmatmul.bf16.gmra.mxu0 %v1539
  %v1667 = vpop.f32.mrf.mxu0
  %v1668 = vadd.f32 0.0, %v1667
  %v1669 = vpop.f32.mrf.mxu0
  %1670 = vmatmul.bf16.gmra.mxu0 %v1540
  %v1671 = vpop.f32.mrf.mxu0
  %v1672 = vadd.f32 0.0, %v1671
  %v1673 = vpop.f32.mrf.mxu0
  %1674 = vmatmul.bf16.gmra.mxu0 %v1541
  %v1675 = vpop.f32.mrf.mxu0
  %v1676 = vadd.f32 0.0, %v1675
  %v1677 = vpop.f32.mrf.mxu0
  %1678 = vdwg.mxu0
  %v1712 = vunpack.c.l.b16 %v1318
  %v1713 = vunpack.c.l.b16 %v1319
  %v1714 = vunpack.c.l.b16 %v1320
  %v1715 = vunpack.c.l.b16 %v1321
  %v1716 = vunpack.c.l.b16 %v1322
  %v1717 = vunpack.c.l.b16 %v1323
  %v1718 = vunpack.c.l.b16 %v1324
  %v1719 = vunpack.c.l.b16 %v1325
  %v1720 = vunpack.c.l.b16 %v1326
  %v1721 = vunpack.c.l.b16 %v1327
  %v1722 = vunpack.c.l.b16 %v1328
  %v1723 = vunpack.c.l.b16 %v1329
  %v1724 = vunpack.c.l.b16 %v1330
  %v1725 = vunpack.c.l.b16 %v1331
  %v1726 = vunpack.c.l.b16 %v1332
  %v1727 = vunpack.c.l.b16 %v1333
  %v1728 = vunpack.c.l.b16 %v1334
  %v1729 = vunpack.c.l.b16 %v1335
  %v1730 = vunpack.c.l.b16 %v1336
  %v1731 = vunpack.c.l.b16 %v1337
  %v1732 = vunpack.c.l.b16 %v1338
  %v1733 = vunpack.c.l.b16 %v1339
  %v1734 = vunpack.c.l.b16 %v1340
  %v1735 = vunpack.c.l.b16 %v1341
  %v1736 = vunpack.c.l.b16 %v1342
  %v1737 = vunpack.c.l.b16 %v1343
  %v1738 = vunpack.c.l.b16 %v1344
  %v1739 = vunpack.c.l.b16 %v1345
  %v1740 = vunpack.c.l.b16 %v1346
  %v1741 = vunpack.c.l.b16 %v1347
  %v1742 = vunpack.c.l.b16 %v1348
  %v1743 = vunpack.c.l.b16 %v1349
  %v1744 = vunpack.c.l.b16 %v1350
  %v1745 = vpack.c.b16 %v1713, %v1712
  %v1746 = vpack.c.b16 %v1715, %v1714
  %v1747 = vpack.c.b16 %v1717, %v1716
  %v1748 = vpack.c.b16 %v1719, %v1718
  %v1749 = vpack.c.b16 %v1721, %v1720
  %v1750 = vpack.c.b16 %v1723, %v1722
  %v1751 = vpack.c.b16 %v1725, %v1724
  %v1752 = vpack.c.b16 %v1727, %v1726
  %v1753 = vpack.c.b16 %v1729, %v1728
  %v1754 = vpack.c.b16 %v1731, %v1730
  %v1755 = vpack.c.b16 %v1733, %v1732
  %v1756 = vpack.c.b16 %v1735, %v1734
  %v1757 = vpack.c.b16 %v1737, %v1736
  %v1758 = vpack.c.b16 %v1739, %v1738
  %v1759 = vpack.c.b16 %v1741, %v1740
  %v1760 = vpack.c.b16 %v1743, %v1742
  %v1761 = vpack.c.b16 %v1744, %v1744
  %vm1762 = vsmask.f32 4352
  %v1764 = vshrl.u32 %v1745, 16
  %v1766 = vrot.slane %v1764, 3
  %v1767 = vshll.u32 %v1745, 16
  %v1769 = vrot.slane %v1767, 4
  %v1770 = vor.u32 %v1766, %v1769
  %v1772 = vshrl.u32 %v1746, 16
  %v1774 = vrot.slane %v1772, 3
  %v1775 = vshll.u32 %v1746, 16
  %v1777 = vrot.slane %v1775, 4
  %v1778 = vor.u32 %v1774, %v1777
  %v1779 = vsel %vm1762, %v1770, %v1778
  %v1781 = vshrl.u32 %v1747, 16
  %v1783 = vrot.slane %v1781, 3
  %v1784 = vshll.u32 %v1747, 16
  %v1786 = vrot.slane %v1784, 4
  %v1787 = vor.u32 %v1783, %v1786
  %v1788 = vsel %vm1762, %v1778, %v1787
  %v1790 = vshrl.u32 %v1748, 16
  %v1792 = vrot.slane %v1790, 3
  %v1793 = vshll.u32 %v1748, 16
  %v1795 = vrot.slane %v1793, 4
  %v1796 = vor.u32 %v1792, %v1795
  %v1797 = vsel %vm1762, %v1787, %v1796
  %v1799 = vshrl.u32 %v1749, 16
  %v1801 = vrot.slane %v1799, 3
  %v1802 = vshll.u32 %v1749, 16
  %v1804 = vrot.slane %v1802, 4
  %v1805 = vor.u32 %v1801, %v1804
  %v1806 = vsel %vm1762, %v1796, %v1805
  %v1808 = vshrl.u32 %v1750, 16
  %v1810 = vrot.slane %v1808, 3
  %v1811 = vshll.u32 %v1750, 16
  %v1813 = vrot.slane %v1811, 4
  %v1814 = vor.u32 %v1810, %v1813
  %v1815 = vsel %vm1762, %v1805, %v1814
  %v1817 = vshrl.u32 %v1751, 16
  %v1819 = vrot.slane %v1817, 3
  %v1820 = vshll.u32 %v1751, 16
  %v1822 = vrot.slane %v1820, 4
  %v1823 = vor.u32 %v1819, %v1822
  %v1824 = vsel %vm1762, %v1814, %v1823
  %v1826 = vshrl.u32 %v1752, 16
  %v1828 = vrot.slane %v1826, 3
  %v1829 = vshll.u32 %v1752, 16
  %v1831 = vrot.slane %v1829, 4
  %v1832 = vor.u32 %v1828, %v1831
  %v1833 = vsel %vm1762, %v1823, %v1832
  %v1835 = vshrl.u32 %v1753, 16
  %v1837 = vrot.slane %v1835, 3
  %v1838 = vshll.u32 %v1753, 16
  %v1840 = vrot.slane %v1838, 4
  %v1841 = vor.u32 %v1837, %v1840
  %v1842 = vsel %vm1762, %v1832, %v1841
  %v1844 = vshrl.u32 %v1754, 16
  %v1846 = vrot.slane %v1844, 3
  %v1847 = vshll.u32 %v1754, 16
  %v1849 = vrot.slane %v1847, 4
  %v1850 = vor.u32 %v1846, %v1849
  %v1851 = vsel %vm1762, %v1841, %v1850
  %v1853 = vshrl.u32 %v1755, 16
  %v1855 = vrot.slane %v1853, 3
  %v1856 = vshll.u32 %v1755, 16
  %v1858 = vrot.slane %v1856, 4
  %v1859 = vor.u32 %v1855, %v1858
  %v1860 = vsel %vm1762, %v1850, %v1859
  %v1862 = vshrl.u32 %v1756, 16
  %v1864 = vrot.slane %v1862, 3
  %v1865 = vshll.u32 %v1756, 16
  %v1867 = vrot.slane %v1865, 4
  %v1868 = vor.u32 %v1864, %v1867
  %v1869 = vsel %vm1762, %v1859, %v1868
  %v1871 = vshrl.u32 %v1757, 16
  %v1873 = vrot.slane %v1871, 3
  %v1874 = vshll.u32 %v1757, 16
  %v1876 = vrot.slane %v1874, 4
  %v1877 = vor.u32 %v1873, %v1876
  %v1878 = vsel %vm1762, %v1868, %v1877
  %v1880 = vshrl.u32 %v1758, 16
  %v1882 = vrot.slane %v1880, 3
  %v1883 = vshll.u32 %v1758, 16
  %v1885 = vrot.slane %v1883, 4
  %v1886 = vor.u32 %v1882, %v1885
  %v1887 = vsel %vm1762, %v1877, %v1886
  %v1889 = vshrl.u32 %v1759, 16
  %v1891 = vrot.slane %v1889, 3
  %v1892 = vshll.u32 %v1759, 16
  %v1894 = vrot.slane %v1892, 4
  %v1895 = vor.u32 %v1891, %v1894
  %v1896 = vsel %vm1762, %v1886, %v1895
  %v1898 = vshrl.u32 %v1760, 16
  %v1900 = vrot.slane %v1898, 3
  %v1901 = vshll.u32 %v1760, 16
  %v1903 = vrot.slane %v1901, 4
  %v1904 = vor.u32 %v1900, %v1903
  %v1905 = vsel %vm1762, %v1895, %v1904
  %v1907 = vshrl.u32 %v1761, 16
  %v1909 = vrot.slane %v1907, 3
  %v1910 = vshll.u32 %v1761, 16
  %v1912 = vrot.slane %v1910, 4
  %v1913 = vor.u32 %v1909, %v1912
  %v1914 = vsel %vm1762, %v1904, %v1913
  %v1947 = vunpack.c.l.b16 %v1429
  %v1948 = vunpack.c.l.b16 %v1430
  %v1949 = vunpack.c.l.b16 %v1431
  %v1950 = vunpack.c.l.b16 %v1432
  %v1951 = vunpack.c.l.b16 %v1433
  %v1952 = vunpack.c.l.b16 %v1434
  %v1953 = vunpack.c.l.b16 %v1435
  %v1954 = vunpack.c.l.b16 %v1436
  %v1955 = vunpack.c.l.b16 %v1437
  %v1956 = vunpack.c.l.b16 %v1438
  %v1957 = vunpack.c.l.b16 %v1439
  %v1958 = vunpack.c.l.b16 %v1440
  %v1959 = vunpack.c.l.b16 %v1441
  %v1960 = vunpack.c.l.b16 %v1442
  %v1961 = vunpack.c.l.b16 %v1443
  %v1962 = vunpack.c.l.b16 %v1444
  %v1963 = vpack.c.b16 %v1948, %v1947
  %v1964 = vpack.c.b16 %v1950, %v1949
  %v1965 = vpack.c.b16 %v1952, %v1951
  %v1966 = vpack.c.b16 %v1954, %v1953
  %v1967 = vpack.c.b16 %v1956, %v1955
  %v1968 = vpack.c.b16 %v1958, %v1957
  %v1969 = vpack.c.b16 %v1960, %v1959
  %v1970 = vpack.c.b16 %v1962, %v1961
  %1979 = vmatpush.bf16.msra.mxu0 %v1970
  %1980 = vmatpush.bf16.msra.mxu0 %v1969
  %1981 = vmatpush.bf16.msra.mxu0 %v1968
  %1982 = vmatpush.bf16.msra.mxu0 %v1967
  %1983 = vmatpush.bf16.msra.mxu0 %v1966
  %1984 = vmatpush.bf16.msra.mxu0 %v1965
  %1985 = vmatpush.bf16.msra.mxu0 %v1964
  %1986 = vmatpush.bf16.msra.mxu0 %v1963
  %1987 = vmatmul.bf16.gmra.mxu0 %v1779
  %v1988 = vpop.f32.mrf.mxu0
  %v1989 = vadd.f32 %v1616, %v1988
  %v1990 = vpop.f32.mrf.mxu0
  %1991 = vmatmul.bf16.gmra.mxu0 %v1788
  %v1992 = vpop.f32.mrf.mxu0
  %v1993 = vadd.f32 %v1620, %v1992
  %v1994 = vpop.f32.mrf.mxu0
  %1995 = vmatmul.bf16.gmra.mxu0 %v1797
  %v1996 = vpop.f32.mrf.mxu0
  %v1997 = vadd.f32 %v1624, %v1996
  %v1998 = vpop.f32.mrf.mxu0
  %1999 = vmatmul.bf16.gmra.mxu0 %v1806
  %v2000 = vpop.f32.mrf.mxu0
  %v2001 = vadd.f32 %v1628, %v2000
  %v2002 = vpop.f32.mrf.mxu0
  %2003 = vmatmul.bf16.gmra.mxu0 %v1815
  %v2004 = vpop.f32.mrf.mxu0
  %v2005 = vadd.f32 %v1632, %v2004
  %v2006 = vpop.f32.mrf.mxu0
  %2007 = vmatmul.bf16.gmra.mxu0 %v1824
  %v2008 = vpop.f32.mrf.mxu0
  %v2009 = vadd.f32 %v1636, %v2008
  %v2010 = vpop.f32.mrf.mxu0
  %2011 = vmatmul.bf16.gmra.mxu0 %v1833
  %v2012 = vpop.f32.mrf.mxu0
  %v2013 = vadd.f32 %v1640, %v2012
  %v2014 = vpop.f32.mrf.mxu0
  %2015 = vmatmul.bf16.gmra.mxu0 %v1842
  %v2016 = vpop.f32.mrf.mxu0
  %v2017 = vadd.f32 %v1644, %v2016
  %v2018 = vpop.f32.mrf.mxu0
  %2019 = vmatmul.bf16.gmra.mxu0 %v1851
  %v2020 = vpop.f32.mrf.mxu0
  %v2021 = vadd.f32 %v1648, %v2020
  %v2022 = vpop.f32.mrf.mxu0
  %2023 = vmatmul.bf16.gmra.mxu0 %v1860
  %v2024 = vpop.f32.mrf.mxu0
  %v2025 = vadd.f32 %v1652, %v2024
  %v2026 = vpop.f32.mrf.mxu0
  %2027 = vmatmul.bf16.gmra.mxu0 %v1869
  %v2028 = vpop.f32.mrf.mxu0
  %v2029 = vadd.f32 %v1656, %v2028
  %v2030 = vpop.f32.mrf.mxu0
  %2031 = vmatmul.bf16.gmra.mxu0 %v1878
  %v2032 = vpop.f32.mrf.mxu0
  %v2033 = vadd.f32 %v1660, %v2032
  %v2034 = vpop.f32.mrf.mxu0
  %2035 = vmatmul.bf16.gmra.mxu0 %v1887
  %v2036 = vpop.f32.mrf.mxu0
  %v2037 = vadd.f32 %v1664, %v2036
  %v2038 = vpop.f32.mrf.mxu0
  %2039 = vmatmul.bf16.gmra.mxu0 %v1896
  %v2040 = vpop.f32.mrf.mxu0
  %v2041 = vadd.f32 %v1668, %v2040
  %v2042 = vpop.f32.mrf.mxu0
  %2043 = vmatmul.bf16.gmra.mxu0 %v1905
  %v2044 = vpop.f32.mrf.mxu0
  %v2045 = vadd.f32 %v1672, %v2044
  %v2046 = vpop.f32.mrf.mxu0
  %2047 = vmatmul.bf16.gmra.mxu0 %v1914
  %v2048 = vpop.f32.mrf.mxu0
  %v2049 = vadd.f32 %v1676, %v2048
  %v2050 = vpop.f32.mrf.mxu0
  %2051 = vdwg.mxu0
  %v2052 = vpack.c.b16 %v1714, %v1713
  %v2053 = vpack.c.b16 %v1716, %v1715
  %v2054 = vpack.c.b16 %v1718, %v1717
  %v2055 = vpack.c.b16 %v1720, %v1719
  %v2056 = vpack.c.b16 %v1722, %v1721
  %v2057 = vpack.c.b16 %v1724, %v1723
  %v2058 = vpack.c.b16 %v1726, %v1725
  %v2059 = vpack.c.b16 %v1728, %v1727
  %v2060 = vpack.c.b16 %v1730, %v1729
  %v2061 = vpack.c.b16 %v1732, %v1731
  %v2062 = vpack.c.b16 %v1734, %v1733
  %v2063 = vpack.c.b16 %v1736, %v1735
  %v2064 = vpack.c.b16 %v1738, %v1737
  %v2065 = vpack.c.b16 %v1740, %v1739
  %v2066 = vpack.c.b16 %v1742, %v1741
  %v2067 = vpack.c.b16 %v1744, %v1743
  %2084 = vmatpush.bf16.msra.mxu0 %v1597
  %2085 = vmatpush.bf16.msra.mxu0 %v1596
  %2086 = vmatpush.bf16.msra.mxu0 %v1595
  %2087 = vmatpush.bf16.msra.mxu0 %v1594
  %2088 = vmatpush.bf16.msra.mxu0 %v1593
  %2089 = vmatpush.bf16.msra.mxu0 %v1592
  %2090 = vmatpush.bf16.msra.mxu0 %v1591
  %2091 = vmatpush.bf16.msra.mxu0 %v1590
  %2092 = vmatmul.bf16.gmra.mxu0 %v2052
  %v2093 = vpop.f32.mrf.mxu0
  %v2094 = vadd.f32 0.0, %v2093
  %v2095 = vpop.f32.mrf.mxu0
  %2096 = vmatmul.bf16.gmra.mxu0 %v2053
  %v2097 = vpop.f32.mrf.mxu0
  %v2098 = vadd.f32 0.0, %v2097
  %v2099 = vpop.f32.mrf.mxu0
  %2100 = vmatmul.bf16.gmra.mxu0 %v2054
  %v2101 = vpop.f32.mrf.mxu0
  %v2102 = vadd.f32 0.0, %v2101
  %v2103 = vpop.f32.mrf.mxu0
  %2104 = vmatmul.bf16.gmra.mxu0 %v2055
  %v2105 = vpop.f32.mrf.mxu0
  %v2106 = vadd.f32 0.0, %v2105
  %v2107 = vpop.f32.mrf.mxu0
  %2108 = vmatmul.bf16.gmra.mxu0 %v2056
  %v2109 = vpop.f32.mrf.mxu0
  %v2110 = vadd.f32 0.0, %v2109
  %v2111 = vpop.f32.mrf.mxu0
  %2112 = vmatmul.bf16.gmra.mxu0 %v2057
  %v2113 = vpop.f32.mrf.mxu0
  %v2114 = vadd.f32 0.0, %v2113
  %v2115 = vpop.f32.mrf.mxu0
  %2116 = vmatmul.bf16.gmra.mxu0 %v2058
  %v2117 = vpop.f32.mrf.mxu0
  %v2118 = vadd.f32 0.0, %v2117
  %v2119 = vpop.f32.mrf.mxu0
  %2120 = vmatmul.bf16.gmra.mxu0 %v2059
  %v2121 = vpop.f32.mrf.mxu0
  %v2122 = vadd.f32 0.0, %v2121
  %v2123 = vpop.f32.mrf.mxu0
  %2124 = vmatmul.bf16.gmra.mxu0 %v2060
  %v2125 = vpop.f32.mrf.mxu0
  %v2126 = vadd.f32 0.0, %v2125
  %v2127 = vpop.f32.mrf.mxu0
  %2128 = vmatmul.bf16.gmra.mxu0 %v2061
  %v2129 = vpop.f32.mrf.mxu0
  %v2130 = vadd.f32 0.0, %v2129
  %v2131 = vpop.f32.mrf.mxu0
  %2132 = vmatmul.bf16.gmra.mxu0 %v2062
  %v2133 = vpop.f32.mrf.mxu0
  %v2134 = vadd.f32 0.0, %v2133
  %v2135 = vpop.f32.mrf.mxu0
  %2136 = vmatmul.bf16.gmra.mxu0 %v2063
  %v2137 = vpop.f32.mrf.mxu0
  %v2138 = vadd.f32 0.0, %v2137
  %v2139 = vpop.f32.mrf.mxu0
  %2140 = vmatmul.bf16.gmra.mxu0 %v2064
  %v2141 = vpop.f32.mrf.mxu0
  %v2142 = vadd.f32 0.0, %v2141
  %v2143 = vpop.f32.mrf.mxu0
  %2144 = vmatmul.bf16.gmra.mxu0 %v2065
  %v2145 = vpop.f32.mrf.mxu0
  %v2146 = vadd.f32 0.0, %v2145
  %v2147 = vpop.f32.mrf.mxu0
  %2148 = vmatmul.bf16.gmra.mxu0 %v2066
  %v2149 = vpop.f32.mrf.mxu0
  %v2150 = vadd.f32 0.0, %v2149
  %v2151 = vpop.f32.mrf.mxu0
  %2152 = vmatmul.bf16.gmra.mxu0 %v2067
  %v2153 = vpop.f32.mrf.mxu0
  %v2154 = vadd.f32 0.0, %v2153
  %v2155 = vpop.f32.mrf.mxu0
  %2156 = vdwg.mxu0
  %2157 = vmatpush.bf16.msra.mxu0 %v1970
  %2158 = vmatpush.bf16.msra.mxu0 %v1969
  %2159 = vmatpush.bf16.msra.mxu0 %v1968
  %2160 = vmatpush.bf16.msra.mxu0 %v1967
  %2161 = vmatpush.bf16.msra.mxu0 %v1966
  %2162 = vmatpush.bf16.msra.mxu0 %v1965
  %2163 = vmatpush.bf16.msra.mxu0 %v1964
  %2164 = vmatpush.bf16.msra.mxu0 %v1963
  %2165 = vmatmul.bf16.gmra.mxu0 %v1526
  %v2166 = vpop.f32.mrf.mxu0
  %v2167 = vadd.f32 %v2094, %v2166
  %v2168 = vpop.f32.mrf.mxu0
  %2169 = vmatmul.bf16.gmra.mxu0 %v1527
  %v2170 = vpop.f32.mrf.mxu0
  %v2171 = vadd.f32 %v2098, %v2170
  %v2172 = vpop.f32.mrf.mxu0
  %2173 = vmatmul.bf16.gmra.mxu0 %v1528
  %v2174 = vpop.f32.mrf.mxu0
  %v2175 = vadd.f32 %v2102, %v2174
  %v2176 = vpop.f32.mrf.mxu0
  %2177 = vmatmul.bf16.gmra.mxu0 %v1529
  %v2178 = vpop.f32.mrf.mxu0
  %v2179 = vadd.f32 %v2106, %v2178
  %v2180 = vpop.f32.mrf.mxu0
  %2181 = vmatmul.bf16.gmra.mxu0 %v1530
  %v2182 = vpop.f32.mrf.mxu0
  %v2183 = vadd.f32 %v2110, %v2182
  %v2184 = vpop.f32.mrf.mxu0
  %2185 = vmatmul.bf16.gmra.mxu0 %v1531
  %v2186 = vpop.f32.mrf.mxu0
  %v2187 = vadd.f32 %v2114, %v2186
  %v2188 = vpop.f32.mrf.mxu0
  %2189 = vmatmul.bf16.gmra.mxu0 %v1532
  %v2190 = vpop.f32.mrf.mxu0
  %v2191 = vadd.f32 %v2118, %v2190
  %v2192 = vpop.f32.mrf.mxu0
  %2193 = vmatmul.bf16.gmra.mxu0 %v1533
  %v2194 = vpop.f32.mrf.mxu0
  %v2195 = vadd.f32 %v2122, %v2194
  %v2196 = vpop.f32.mrf.mxu0
  %2197 = vmatmul.bf16.gmra.mxu0 %v1534
  %v2198 = vpop.f32.mrf.mxu0
  %v2199 = vadd.f32 %v2126, %v2198
  %v2200 = vpop.f32.mrf.mxu0
  %2201 = vmatmul.bf16.gmra.mxu0 %v1535
  %v2202 = vpop.f32.mrf.mxu0
  %v2203 = vadd.f32 %v2130, %v2202
  %v2204 = vpop.f32.mrf.mxu0
  %2205 = vmatmul.bf16.gmra.mxu0 %v1536
  %v2206 = vpop.f32.mrf.mxu0
  %v2207 = vadd.f32 %v2134, %v2206
  %v2208 = vpop.f32.mrf.mxu0
  %2209 = vmatmul.bf16.gmra.mxu0 %v1537
  %v2210 = vpop.f32.mrf.mxu0
  %v2211 = vadd.f32 %v2138, %v2210
  %v2212 = vpop.f32.mrf.mxu0
  %2213 = vmatmul.bf16.gmra.mxu0 %v1538
  %v2214 = vpop.f32.mrf.mxu0
  %v2215 = vadd.f32 %v2142, %v2214
  %v2216 = vpop.f32.mrf.mxu0
  %2217 = vmatmul.bf16.gmra.mxu0 %v1539
  %v2218 = vpop.f32.mrf.mxu0
  %v2219 = vadd.f32 %v2146, %v2218
  %v2220 = vpop.f32.mrf.mxu0
  %2221 = vmatmul.bf16.gmra.mxu0 %v1540
  %v2222 = vpop.f32.mrf.mxu0
  %v2223 = vadd.f32 %v2150, %v2222
  %v2224 = vpop.f32.mrf.mxu0
  %2225 = vmatmul.bf16.gmra.mxu0 %v1541
  %v2226 = vpop.f32.mrf.mxu0
  %v2227 = vadd.f32 %v2154, %v2226
  %v2228 = vpop.f32.mrf.mxu0
  %2229 = vdwg.mxu0
  %s2230 = scalar_lea.vmem %s3, 128
  %v2231 = vld [vmem:[%s2230] sm:$0xf]
  %v2232 = vld [vmem:[%s2230 + $0x4] sm:$0xf]
  %v2233 = vld [vmem:[%s2230 + $0x8] sm:$0xf]
  %v2234 = vld [vmem:[%s2230 + $0xc] sm:$0xf]
  %v2235 = vld [vmem:[%s2230 + $0x10] sm:$0xf]
  %v2236 = vld [vmem:[%s2230 + $0x14] sm:$0xf]
  %v2237 = vld [vmem:[%s2230 + $0x18] sm:$0xf]
  %v2238 = vld [vmem:[%s2230 + $0x1c] sm:$0xf]
  %v2239 = vld [vmem:[%s2230 + $0x20] sm:$0xf]
  %v2240 = vld [vmem:[%s2230 + $0x24] sm:$0xf]
  %v2241 = vld [vmem:[%s2230 + $0x28] sm:$0xf]
  %v2242 = vld [vmem:[%s2230 + $0x2c] sm:$0xf]
  %v2243 = vld [vmem:[%s2230 + $0x30] sm:$0xf]
  %v2244 = vld [vmem:[%s2230 + $0x34] sm:$0xf]
  %v2245 = vld [vmem:[%s2230 + $0x38] sm:$0xf]
  %v2246 = vld [vmem:[%s2230 + $0x3c] sm:$0xf]
  %v2263 = vunpack.c.l.b16 %v2231
  %v2264 = vunpack.c.l.b16 %v2232
  %v2265 = vunpack.c.l.b16 %v2233
  %v2266 = vunpack.c.l.b16 %v2234
  %v2267 = vunpack.c.l.b16 %v2235
  %v2268 = vunpack.c.l.b16 %v2236
  %v2269 = vunpack.c.l.b16 %v2237
  %v2270 = vunpack.c.l.b16 %v2238
  %v2271 = vunpack.c.l.b16 %v2239
  %v2272 = vunpack.c.l.b16 %v2240
  %v2273 = vunpack.c.l.b16 %v2241
  %v2274 = vunpack.c.l.b16 %v2242
  %v2275 = vunpack.c.l.b16 %v2243
  %v2276 = vunpack.c.l.b16 %v2244
  %v2277 = vunpack.c.l.b16 %v2245
  %v2278 = vunpack.c.l.b16 %v2246
  %v2279 = vpack.c.b16 %v2264, %v2263
  %v2280 = vpack.c.b16 %v2266, %v2265
  %v2281 = vpack.c.b16 %v2268, %v2267
  %v2282 = vpack.c.b16 %v2270, %v2269
  %v2283 = vpack.c.b16 %v2272, %v2271
  %v2284 = vpack.c.b16 %v2274, %v2273
  %v2285 = vpack.c.b16 %v2276, %v2275
  %v2286 = vpack.c.b16 %v2278, %v2277
  %2295 = vmatpush.bf16.msra.mxu0 %v2286
  %2296 = vmatpush.bf16.msra.mxu0 %v2285
  %2297 = vmatpush.bf16.msra.mxu0 %v2284
  %2298 = vmatpush.bf16.msra.mxu0 %v2283
  %2299 = vmatpush.bf16.msra.mxu0 %v2282
  %2300 = vmatpush.bf16.msra.mxu0 %v2281
  %2301 = vmatpush.bf16.msra.mxu0 %v2280
  %2302 = vmatpush.bf16.msra.mxu0 %v2279
  %2303 = vmatmul.bf16.gmra.mxu0 %v2052
  %v2304 = vpop.f32.mrf.mxu0
  %v2305 = vadd.f32 0.0, %v2304
  %v2306 = vpop.f32.mrf.mxu0
  %2307 = vmatmul.bf16.gmra.mxu0 %v2053
  %v2308 = vpop.f32.mrf.mxu0
  %v2309 = vadd.f32 0.0, %v2308
  %v2310 = vpop.f32.mrf.mxu0
  %2311 = vmatmul.bf16.gmra.mxu0 %v2054
  %v2312 = vpop.f32.mrf.mxu0
  %v2313 = vadd.f32 0.0, %v2312
  %v2314 = vpop.f32.mrf.mxu0
  %2315 = vmatmul.bf16.gmra.mxu0 %v2055
  %v2316 = vpop.f32.mrf.mxu0
  %v2317 = vadd.f32 0.0, %v2316
  %v2318 = vpop.f32.mrf.mxu0
  %2319 = vmatmul.bf16.gmra.mxu0 %v2056
  %v2320 = vpop.f32.mrf.mxu0
  %v2321 = vadd.f32 0.0, %v2320
  %v2322 = vpop.f32.mrf.mxu0
  %2323 = vmatmul.bf16.gmra.mxu0 %v2057
  %v2324 = vpop.f32.mrf.mxu0
  %v2325 = vadd.f32 0.0, %v2324
  %v2326 = vpop.f32.mrf.mxu0
  %2327 = vmatmul.bf16.gmra.mxu0 %v2058
  %v2328 = vpop.f32.mrf.mxu0
  %v2329 = vadd.f32 0.0, %v2328
  %v2330 = vpop.f32.mrf.mxu0
  %2331 = vmatmul.bf16.gmra.mxu0 %v2059
  %v2332 = vpop.f32.mrf.mxu0
  %v2333 = vadd.f32 0.0, %v2332
  %v2334 = vpop.f32.mrf.mxu0
  %2335 = vmatmul.bf16.gmra.mxu0 %v2060
  %v2336 = vpop.f32.mrf.mxu0
  %v2337 = vadd.f32 0.0, %v2336
  %v2338 = vpop.f32.mrf.mxu0
  %2339 = vmatmul.bf16.gmra.mxu0 %v2061
  %v2340 = vpop.f32.mrf.mxu0
  %v2341 = vadd.f32 0.0, %v2340
  %v2342 = vpop.f32.mrf.mxu0
  %2343 = vmatmul.bf16.gmra.mxu0 %v2062
  %v2344 = vpop.f32.mrf.mxu0
  %v2345 = vadd.f32 0.0, %v2344
  %v2346 = vpop.f32.mrf.mxu0
  %2347 = vmatmul.bf16.gmra.mxu0 %v2063
  %v2348 = vpop.f32.mrf.mxu0
  %v2349 = vadd.f32 0.0, %v2348
  %v2350 = vpop.f32.mrf.mxu0
  %2351 = vmatmul.bf16.gmra.mxu0 %v2064
  %v2352 = vpop.f32.mrf.mxu0
  %v2353 = vadd.f32 0.0, %v2352
  %v2354 = vpop.f32.mrf.mxu0
  %2355 = vmatmul.bf16.gmra.mxu0 %v2065
  %v2356 = vpop.f32.mrf.mxu0
  %v2357 = vadd.f32 0.0, %v2356
  %v2358 = vpop.f32.mrf.mxu0
  %2359 = vmatmul.bf16.gmra.mxu0 %v2066
  %v2360 = vpop.f32.mrf.mxu0
  %v2361 = vadd.f32 0.0, %v2360
  %v2362 = vpop.f32.mrf.mxu0
  %2363 = vmatmul.bf16.gmra.mxu0 %v2067
  %v2364 = vpop.f32.mrf.mxu0
  %v2365 = vadd.f32 0.0, %v2364
  %v2366 = vpop.f32.mrf.mxu0
  %2367 = vdwg.mxu0
  %v2368 = vadd.f32 %v1989, %v2305
  %v2369 = vadd.f32 %v1993, %v2309
  %v2370 = vadd.f32 %v1997, %v2313
  %v2371 = vadd.f32 %v2001, %v2317
  %v2372 = vadd.f32 %v2005, %v2321
  %v2373 = vadd.f32 %v2009, %v2325
  %v2374 = vadd.f32 %v2013, %v2329
  %v2375 = vadd.f32 %v2017, %v2333
  %v2376 = vadd.f32 %v2021, %v2337
  %v2377 = vadd.f32 %v2025, %v2341
  %v2378 = vadd.f32 %v2029, %v2345
  %v2379 = vadd.f32 %v2033, %v2349
  %v2380 = vadd.f32 %v2037, %v2353
  %v2381 = vadd.f32 %v2041, %v2357
  %v2382 = vadd.f32 %v2045, %v2361
  %v2383 = vadd.f32 %v2049, %v2365
  %v2385 = vunpack.c.l.b16 %v1424
  %v2386 = vpack.c.b16 %v2385, %v2385
  %vm2387 = vsmask.f32 7424
  %v2389 = vshrl.u32 %v1526, 16
  %v2391 = vshll.u32 %v1526, 16
  %v2393 = vrot.slane %v2391, 1
  %v2394 = vor.u32 %v2389, %v2393
  %v2396 = vshll.u32 %v1527, 16
  %v2398 = vrot.slane %v2396, 1
  %v2399 = vsel %vm2387, %v2394, %v2398
  %v2400 = vshrl.u32 %v1527, 16
  %v2402 = vor.u32 %v2400, %v2398
  %v2404 = vshll.u32 %v1528, 16
  %v2406 = vrot.slane %v2404, 1
  %v2407 = vsel %vm2387, %v2402, %v2406
  %v2408 = vshrl.u32 %v1528, 16
  %v2410 = vor.u32 %v2408, %v2406
  %v2412 = vshll.u32 %v1529, 16
  %v2414 = vrot.slane %v2412, 1
  %v2415 = vsel %vm2387, %v2410, %v2414
  %v2416 = vshrl.u32 %v1529, 16
  %v2418 = vor.u32 %v2416, %v2414
  %v2420 = vshll.u32 %v1530, 16
  %v2422 = vrot.slane %v2420, 1
  %v2423 = vsel %vm2387, %v2418, %v2422
  %v2424 = vshrl.u32 %v1530, 16
  %v2426 = vor.u32 %v2424, %v2422
  %v2428 = vshll.u32 %v1531, 16
  %v2430 = vrot.slane %v2428, 1
  %v2431 = vsel %vm2387, %v2426, %v2430
  %v2432 = vshrl.u32 %v1531, 16
  %v2434 = vor.u32 %v2432, %v2430
  %v2436 = vshll.u32 %v1532, 16
  %v2438 = vrot.slane %v2436, 1
  %v2439 = vsel %vm2387, %v2434, %v2438
  %v2440 = vshrl.u32 %v1532, 16
  %v2442 = vor.u32 %v2440, %v2438
  %v2444 = vshll.u32 %v1533, 16
  %v2446 = vrot.slane %v2444, 1
  %v2447 = vsel %vm2387, %v2442, %v2446
  %v2448 = vshrl.u32 %v1533, 16
  %v2450 = vor.u32 %v2448, %v2446
  %v2452 = vshll.u32 %v1534, 16
  %v2454 = vrot.slane %v2452, 1
  %v2455 = vsel %vm2387, %v2450, %v2454
  %v2456 = vshrl.u32 %v1534, 16
  %v2458 = vor.u32 %v2456, %v2454
  %v2460 = vshll.u32 %v1535, 16
  %v2462 = vrot.slane %v2460, 1
  %v2463 = vsel %vm2387, %v2458, %v2462
  %v2464 = vshrl.u32 %v1535, 16
  %v2466 = vor.u32 %v2464, %v2462
  %v2468 = vshll.u32 %v1536, 16
  %v2470 = vrot.slane %v2468, 1
  %v2471 = vsel %vm2387, %v2466, %v2470
  %v2472 = vshrl.u32 %v1536, 16
  %v2474 = vor.u32 %v2472, %v2470
  %v2476 = vshll.u32 %v1537, 16
  %v2478 = vrot.slane %v2476, 1
  %v2479 = vsel %vm2387, %v2474, %v2478
  %v2480 = vshrl.u32 %v1537, 16
  %v2482 = vor.u32 %v2480, %v2478
  %v2484 = vshll.u32 %v1538, 16
  %v2486 = vrot.slane %v2484, 1
  %v2487 = vsel %vm2387, %v2482, %v2486
  %v2488 = vshrl.u32 %v1538, 16
  %v2490 = vor.u32 %v2488, %v2486
  %v2492 = vshll.u32 %v1539, 16
  %v2494 = vrot.slane %v2492, 1
  %v2495 = vsel %vm2387, %v2490, %v2494
  %v2496 = vshrl.u32 %v1539, 16
  %v2498 = vor.u32 %v2496, %v2494
  %v2500 = vshll.u32 %v1540, 16
  %v2502 = vrot.slane %v2500, 1
  %v2503 = vsel %vm2387, %v2498, %v2502
  %v2504 = vshrl.u32 %v1540, 16
  %v2506 = vor.u32 %v2504, %v2502
  %v2508 = vshll.u32 %v1541, 16
  %v2510 = vrot.slane %v2508, 1
  %v2511 = vsel %vm2387, %v2506, %v2510
  %v2512 = vshrl.u32 %v1541, 16
  %v2514 = vor.u32 %v2512, %v2510
  %v2516 = vshll.u32 %v2386, 16
  %v2518 = vrot.slane %v2516, 1
  %v2519 = vsel %vm2387, %v2514, %v2518
  %2536 = vmatpush.bf16.msra.mxu0 %v2286
  %2537 = vmatpush.bf16.msra.mxu0 %v2285
  %2538 = vmatpush.bf16.msra.mxu0 %v2284
  %2539 = vmatpush.bf16.msra.mxu0 %v2283
  %2540 = vmatpush.bf16.msra.mxu0 %v2282
  %2541 = vmatpush.bf16.msra.mxu0 %v2281
  %2542 = vmatpush.bf16.msra.mxu0 %v2280
  %2543 = vmatpush.bf16.msra.mxu0 %v2279
  %2544 = vmatmul.bf16.gmra.mxu0 %v2399
  %v2545 = vpop.f32.mrf.mxu0
  %v2546 = vadd.f32 0.0, %v2545
  %v2547 = vpop.f32.mrf.mxu0
  %2548 = vmatmul.bf16.gmra.mxu0 %v2407
  %v2549 = vpop.f32.mrf.mxu0
  %v2550 = vadd.f32 0.0, %v2549
  %v2551 = vpop.f32.mrf.mxu0
  %2552 = vmatmul.bf16.gmra.mxu0 %v2415
  %v2553 = vpop.f32.mrf.mxu0
  %v2554 = vadd.f32 0.0, %v2553
  %v2555 = vpop.f32.mrf.mxu0
  %2556 = vmatmul.bf16.gmra.mxu0 %v2423
  %v2557 = vpop.f32.mrf.mxu0
  %v2558 = vadd.f32 0.0, %v2557
  %v2559 = vpop.f32.mrf.mxu0
  %2560 = vmatmul.bf16.gmra.mxu0 %v2431
  %v2561 = vpop.f32.mrf.mxu0
  %v2562 = vadd.f32 0.0, %v2561
  %v2563 = vpop.f32.mrf.mxu0
  %2564 = vmatmul.bf16.gmra.mxu0 %v2439
  %v2565 = vpop.f32.mrf.mxu0
  %v2566 = vadd.f32 0.0, %v2565
  %v2567 = vpop.f32.mrf.mxu0
  %2568 = vmatmul.bf16.gmra.mxu0 %v2447
  %v2569 = vpop.f32.mrf.mxu0
  %v2570 = vadd.f32 0.0, %v2569
  %v2571 = vpop.f32.mrf.mxu0
  %2572 = vmatmul.bf16.gmra.mxu0 %v2455
  %v2573 = vpop.f32.mrf.mxu0
  %v2574 = vadd.f32 0.0, %v2573
  %v2575 = vpop.f32.mrf.mxu0
  %2576 = vmatmul.bf16.gmra.mxu0 %v2463
  %v2577 = vpop.f32.mrf.mxu0
  %v2578 = vadd.f32 0.0, %v2577
  %v2579 = vpop.f32.mrf.mxu0
  %2580 = vmatmul.bf16.gmra.mxu0 %v2471
  %v2581 = vpop.f32.mrf.mxu0
  %v2582 = vadd.f32 0.0, %v2581
  %v2583 = vpop.f32.mrf.mxu0
  %2584 = vmatmul.bf16.gmra.mxu0 %v2479
  %v2585 = vpop.f32.mrf.mxu0
  %v2586 = vadd.f32 0.0, %v2585
  %v2587 = vpop.f32.mrf.mxu0
  %2588 = vmatmul.bf16.gmra.mxu0 %v2487
  %v2589 = vpop.f32.mrf.mxu0
  %v2590 = vadd.f32 0.0, %v2589
  %v2591 = vpop.f32.mrf.mxu0
  %2592 = vmatmul.bf16.gmra.mxu0 %v2495
  %v2593 = vpop.f32.mrf.mxu0
  %v2594 = vadd.f32 0.0, %v2593
  %v2595 = vpop.f32.mrf.mxu0
  %2596 = vmatmul.bf16.gmra.mxu0 %v2503
  %v2597 = vpop.f32.mrf.mxu0
  %v2598 = vadd.f32 0.0, %v2597
  %v2599 = vpop.f32.mrf.mxu0
  %2600 = vmatmul.bf16.gmra.mxu0 %v2511
  %v2601 = vpop.f32.mrf.mxu0
  %v2602 = vadd.f32 0.0, %v2601
  %v2603 = vpop.f32.mrf.mxu0
  %2604 = vmatmul.bf16.gmra.mxu0 %v2519
  %v2605 = vpop.f32.mrf.mxu0
  %v2606 = vadd.f32 0.0, %v2605
  %v2607 = vpop.f32.mrf.mxu0
  %2608 = vdwg.mxu0
  %v2609 = vadd.f32 %v2167, %v2546
  %v2610 = vadd.f32 %v2171, %v2550
  %v2611 = vadd.f32 %v2175, %v2554
  %v2612 = vadd.f32 %v2179, %v2558
  %v2613 = vadd.f32 %v2183, %v2562
  %v2614 = vadd.f32 %v2187, %v2566
  %v2615 = vadd.f32 %v2191, %v2570
  %v2616 = vadd.f32 %v2195, %v2574
  %v2617 = vadd.f32 %v2199, %v2578
  %v2618 = vadd.f32 %v2203, %v2582
  %v2619 = vadd.f32 %v2207, %v2586
  %v2620 = vadd.f32 %v2211, %v2590
  %v2621 = vadd.f32 %v2215, %v2594
  %v2622 = vadd.f32 %v2219, %v2598
  %v2623 = vadd.f32 %v2223, %v2602
  %v2624 = vadd.f32 %v2227, %v2606
  %s2625 = scalar_lea.vmem %s3, 192
  %v2626 = vld [vmem:[%s2625] sm:$0xf]
  %v2627 = vld [vmem:[%s2625 + $0x4] sm:$0xf]
  %v2628 = vld [vmem:[%s2625 + $0x8] sm:$0xf]
  %v2629 = vld [vmem:[%s2625 + $0xc] sm:$0xf]
  %v2630 = vld [vmem:[%s2625 + $0x10] sm:$0xf]
  %v2631 = vld [vmem:[%s2625 + $0x14] sm:$0xf]
  %v2632 = vld [vmem:[%s2625 + $0x18] sm:$0xf]
  %v2633 = vld [vmem:[%s2625 + $0x1c] sm:$0xf]
  %v2634 = vld [vmem:[%s2625 + $0x20] sm:$0xf]
  %v2635 = vld [vmem:[%s2625 + $0x24] sm:$0xf]
  %v2636 = vld [vmem:[%s2625 + $0x28] sm:$0xf]
  %v2637 = vld [vmem:[%s2625 + $0x2c] sm:$0xf]
  %v2638 = vld [vmem:[%s2625 + $0x30] sm:$0xf]
  %v2639 = vld [vmem:[%s2625 + $0x34] sm:$0xf]
  %v2640 = vld [vmem:[%s2625 + $0x38] sm:$0xf]
  %v2641 = vld [vmem:[%s2625 + $0x3c] sm:$0xf]
  %v2644 = vunpack.c.l.b16 %v1351
  %v2645 = vunpack.c.l.b16 %v1352
  %v2646 = vpack.c.b16 %v2644, %v1744
  %v2647 = vpack.c.b16 %v2645, %v2645
  %v2649 = vshrl.u32 %v2646, 16
  %v2651 = vrot.slane %v2649, 3
  %v2652 = vshll.u32 %v2646, 16
  %v2654 = vrot.slane %v2652, 4
  %v2655 = vor.u32 %v2651, %v2654
  %v2656 = vsel %vm1762, %v1904, %v2655
  %v2658 = vshrl.u32 %v2647, 16
  %v2660 = vrot.slane %v2658, 3
  %v2661 = vshll.u32 %v2647, 16
  %v2663 = vrot.slane %v2661, 4
  %v2664 = vor.u32 %v2660, %v2663
  %v2665 = vsel %vm1762, %v2655, %v2664
  %v2684 = vunpack.c.l.b16 %v2626
  %v2685 = vunpack.c.l.b16 %v2627
  %v2686 = vunpack.c.l.b16 %v2628
  %v2687 = vunpack.c.l.b16 %v2629
  %v2688 = vunpack.c.l.b16 %v2630
  %v2689 = vunpack.c.l.b16 %v2631
  %v2690 = vunpack.c.l.b16 %v2632
  %v2691 = vunpack.c.l.b16 %v2633
  %v2692 = vunpack.c.l.b16 %v2634
  %v2693 = vunpack.c.l.b16 %v2635
  %v2694 = vunpack.c.l.b16 %v2636
  %v2695 = vunpack.c.l.b16 %v2637
  %v2696 = vunpack.c.l.b16 %v2638
  %v2697 = vunpack.c.l.b16 %v2639
  %v2698 = vunpack.c.l.b16 %v2640
  %v2699 = vunpack.c.l.b16 %v2641
  %v2700 = vpack.c.b16 %v2685, %v2684
  %v2701 = vpack.c.b16 %v2687, %v2686
  %v2702 = vpack.c.b16 %v2689, %v2688
  %v2703 = vpack.c.b16 %v2691, %v2690
  %v2704 = vpack.c.b16 %v2693, %v2692
  %v2705 = vpack.c.b16 %v2695, %v2694
  %v2706 = vpack.c.b16 %v2697, %v2696
  %v2707 = vpack.c.b16 %v2699, %v2698
  %2716 = vmatpush.bf16.msra.mxu0 %v2707
  %2717 = vmatpush.bf16.msra.mxu0 %v2706
  %2718 = vmatpush.bf16.msra.mxu0 %v2705
  %2719 = vmatpush.bf16.msra.mxu0 %v2704
  %2720 = vmatpush.bf16.msra.mxu0 %v2703
  %2721 = vmatpush.bf16.msra.mxu0 %v2702
  %2722 = vmatpush.bf16.msra.mxu0 %v2701
  %2723 = vmatpush.bf16.msra.mxu0 %v2700
  %2724 = vmatmul.bf16.gmra.mxu0 %v1788
  %v2725 = vpop.f32.mrf.mxu0
  %v2726 = vadd.f32 0.0, %v2725
  %v2727 = vpop.f32.mrf.mxu0
  %2728 = vmatmul.bf16.gmra.mxu0 %v1797
  %v2729 = vpop.f32.mrf.mxu0
  %v2730 = vadd.f32 0.0, %v2729
  %v2731 = vpop.f32.mrf.mxu0
  %2732 = vmatmul.bf16.gmra.mxu0 %v1806
  %v2733 = vpop.f32.mrf.mxu0
  %v2734 = vadd.f32 0.0, %v2733
  %v2735 = vpop.f32.mrf.mxu0
  %2736 = vmatmul.bf16.gmra.mxu0 %v1815
  %v2737 = vpop.f32.mrf.mxu0
  %v2738 = vadd.f32 0.0, %v2737
  %v2739 = vpop.f32.mrf.mxu0
  %2740 = vmatmul.bf16.gmra.mxu0 %v1824
  %v2741 = vpop.f32.mrf.mxu0
  %v2742 = vadd.f32 0.0, %v2741
  %v2743 = vpop.f32.mrf.mxu0
  %2744 = vmatmul.bf16.gmra.mxu0 %v1833
  %v2745 = vpop.f32.mrf.mxu0
  %v2746 = vadd.f32 0.0, %v2745
  %v2747 = vpop.f32.mrf.mxu0
  %2748 = vmatmul.bf16.gmra.mxu0 %v1842
  %v2749 = vpop.f32.mrf.mxu0
  %v2750 = vadd.f32 0.0, %v2749
  %v2751 = vpop.f32.mrf.mxu0
  %2752 = vmatmul.bf16.gmra.mxu0 %v1851
  %v2753 = vpop.f32.mrf.mxu0
  %v2754 = vadd.f32 0.0, %v2753
  %v2755 = vpop.f32.mrf.mxu0
  %2756 = vmatmul.bf16.gmra.mxu0 %v1860
  %v2757 = vpop.f32.mrf.mxu0
  %v2758 = vadd.f32 0.0, %v2757
  %v2759 = vpop.f32.mrf.mxu0
  %2760 = vmatmul.bf16.gmra.mxu0 %v1869
  %v2761 = vpop.f32.mrf.mxu0
  %v2762 = vadd.f32 0.0, %v2761
  %v2763 = vpop.f32.mrf.mxu0
  %2764 = vmatmul.bf16.gmra.mxu0 %v1878
  %v2765 = vpop.f32.mrf.mxu0
  %v2766 = vadd.f32 0.0, %v2765
  %v2767 = vpop.f32.mrf.mxu0
  %2768 = vmatmul.bf16.gmra.mxu0 %v1887
  %v2769 = vpop.f32.mrf.mxu0
  %v2770 = vadd.f32 0.0, %v2769
  %v2771 = vpop.f32.mrf.mxu0
  %2772 = vmatmul.bf16.gmra.mxu0 %v1896
  %v2773 = vpop.f32.mrf.mxu0
  %v2774 = vadd.f32 0.0, %v2773
  %v2775 = vpop.f32.mrf.mxu0
  %2776 = vmatmul.bf16.gmra.mxu0 %v1905
  %v2777 = vpop.f32.mrf.mxu0
  %v2778 = vadd.f32 0.0, %v2777
  %v2779 = vpop.f32.mrf.mxu0
  %2780 = vmatmul.bf16.gmra.mxu0 %v2656
  %v2781 = vpop.f32.mrf.mxu0
  %v2782 = vadd.f32 0.0, %v2781
  %v2783 = vpop.f32.mrf.mxu0
  %2784 = vmatmul.bf16.gmra.mxu0 %v2665
  %v2785 = vpop.f32.mrf.mxu0
  %v2786 = vadd.f32 0.0, %v2785
  %v2787 = vpop.f32.mrf.mxu0
  %2788 = vdwg.mxu0
  %v2789 = vadd.f32 %v2368, %v2726
  %v2790 = vadd.f32 %v2369, %v2730
  %v2791 = vadd.f32 %v2370, %v2734
  %v2792 = vadd.f32 %v2371, %v2738
  %v2793 = vadd.f32 %v2372, %v2742
  %v2794 = vadd.f32 %v2373, %v2746
  %v2795 = vadd.f32 %v2374, %v2750
  %v2796 = vadd.f32 %v2375, %v2754
  %v2797 = vadd.f32 %v2376, %v2758
  %v2798 = vadd.f32 %v2377, %v2762
  %v2799 = vadd.f32 %v2378, %v2766
  %v2800 = vadd.f32 %v2379, %v2770
  %v2801 = vadd.f32 %v2380, %v2774
  %v2802 = vadd.f32 %v2381, %v2778
  %v2803 = vadd.f32 %v2382, %v2782
  %v2804 = vadd.f32 %v2383, %v2786
  %v2806 = vunpack.c.l.b16 %v1425
  %v2807 = vpack.c.b16 %v2806, %v2385
  %2809 = vmatpush.bf16.msra.mxu0 %v2707
  %2810 = vmatpush.bf16.msra.mxu0 %v2706
  %2811 = vmatpush.bf16.msra.mxu0 %v2705
  %2812 = vmatpush.bf16.msra.mxu0 %v2704
  %2813 = vmatpush.bf16.msra.mxu0 %v2703
  %2814 = vmatpush.bf16.msra.mxu0 %v2702
  %2815 = vmatpush.bf16.msra.mxu0 %v2701
  %2816 = vmatpush.bf16.msra.mxu0 %v2700
  %2817 = vmatmul.bf16.gmra.mxu0 %v1527
  %v2818 = vpop.f32.mrf.mxu0
  %v2819 = vadd.f32 0.0, %v2818
  %v2820 = vpop.f32.mrf.mxu0
  %2821 = vmatmul.bf16.gmra.mxu0 %v1528
  %v2822 = vpop.f32.mrf.mxu0
  %v2823 = vadd.f32 0.0, %v2822
  %v2824 = vpop.f32.mrf.mxu0
  %2825 = vmatmul.bf16.gmra.mxu0 %v1529
  %v2826 = vpop.f32.mrf.mxu0
  %v2827 = vadd.f32 0.0, %v2826
  %v2828 = vpop.f32.mrf.mxu0
  %2829 = vmatmul.bf16.gmra.mxu0 %v1530
  %v2830 = vpop.f32.mrf.mxu0
  %v2831 = vadd.f32 0.0, %v2830
  %v2832 = vpop.f32.mrf.mxu0
  %2833 = vmatmul.bf16.gmra.mxu0 %v1531
  %v2834 = vpop.f32.mrf.mxu0
  %v2835 = vadd.f32 0.0, %v2834
  %v2836 = vpop.f32.mrf.mxu0
  %2837 = vmatmul.bf16.gmra.mxu0 %v1532
  %v2838 = vpop.f32.mrf.mxu0
  %v2839 = vadd.f32 0.0, %v2838
  %v2840 = vpop.f32.mrf.mxu0
  %2841 = vmatmul.bf16.gmra.mxu0 %v1533
  %v2842 = vpop.f32.mrf.mxu0
  %v2843 = vadd.f32 0.0, %v2842
  %v2844 = vpop.f32.mrf.mxu0
  %2845 = vmatmul.bf16.gmra.mxu0 %v1534
  %v2846 = vpop.f32.mrf.mxu0
  %v2847 = vadd.f32 0.0, %v2846
  %v2848 = vpop.f32.mrf.mxu0
  %2849 = vmatmul.bf16.gmra.mxu0 %v1535
  %v2850 = vpop.f32.mrf.mxu0
  %v2851 = vadd.f32 0.0, %v2850
  %v2852 = vpop.f32.mrf.mxu0
  %2853 = vmatmul.bf16.gmra.mxu0 %v1536
  %v2854 = vpop.f32.mrf.mxu0
  %v2855 = vadd.f32 0.0, %v2854
  %v2856 = vpop.f32.mrf.mxu0
  %2857 = vmatmul.bf16.gmra.mxu0 %v1537
  %v2858 = vpop.f32.mrf.mxu0
  %v2859 = vadd.f32 0.0, %v2858
  %v2860 = vpop.f32.mrf.mxu0
  %2861 = vmatmul.bf16.gmra.mxu0 %v1538
  %v2862 = vpop.f32.mrf.mxu0
  %v2863 = vadd.f32 0.0, %v2862
  %v2864 = vpop.f32.mrf.mxu0
  %2865 = vmatmul.bf16.gmra.mxu0 %v1539
  %v2866 = vpop.f32.mrf.mxu0
  %v2867 = vadd.f32 0.0, %v2866
  %v2868 = vpop.f32.mrf.mxu0
  %2869 = vmatmul.bf16.gmra.mxu0 %v1540
  %v2870 = vpop.f32.mrf.mxu0
  %v2871 = vadd.f32 0.0, %v2870
  %v2872 = vpop.f32.mrf.mxu0
  %2873 = vmatmul.bf16.gmra.mxu0 %v1541
  %v2874 = vpop.f32.mrf.mxu0
  %v2875 = vadd.f32 0.0, %v2874
  %v2876 = vpop.f32.mrf.mxu0
  %2877 = vmatmul.bf16.gmra.mxu0 %v2807
  %v2878 = vpop.f32.mrf.mxu0
  %v2879 = vadd.f32 0.0, %v2878
  %v2880 = vpop.f32.mrf.mxu0
  %2881 = vdwg.mxu0
  %v2882 = vadd.f32 %v2609, %v2819
  %v2883 = vadd.f32 %v2610, %v2823
  %v2884 = vadd.f32 %v2611, %v2827
  %v2885 = vadd.f32 %v2612, %v2831
  %v2886 = vadd.f32 %v2613, %v2835
  %v2887 = vadd.f32 %v2614, %v2839
  %v2888 = vadd.f32 %v2615, %v2843
  %v2889 = vadd.f32 %v2616, %v2847
  %v2890 = vadd.f32 %v2617, %v2851
  %v2891 = vadd.f32 %v2618, %v2855
  %v2892 = vadd.f32 %v2619, %v2859
  %v2893 = vadd.f32 %v2620, %v2863
  %v2894 = vadd.f32 %v2621, %v2867
  %v2895 = vadd.f32 %v2622, %v2871
  %v2896 = vadd.f32 %v2623, %v2875
  %v2897 = vadd.f32 %v2624, %v2879
  %s2898 = scalar_lea.vmem %s3, 256
  %v2899 = vld [vmem:[%s2898] sm:$0xf]
  %v2900 = vld [vmem:[%s2898 + $0x4] sm:$0xf]
  %v2901 = vld [vmem:[%s2898 + $0x8] sm:$0xf]
  %v2902 = vld [vmem:[%s2898 + $0xc] sm:$0xf]
  %v2903 = vld [vmem:[%s2898 + $0x10] sm:$0xf]
  %v2904 = vld [vmem:[%s2898 + $0x14] sm:$0xf]
  %v2905 = vld [vmem:[%s2898 + $0x18] sm:$0xf]
  %v2906 = vld [vmem:[%s2898 + $0x1c] sm:$0xf]
  %v2907 = vld [vmem:[%s2898 + $0x20] sm:$0xf]
  %v2908 = vld [vmem:[%s2898 + $0x24] sm:$0xf]
  %v2909 = vld [vmem:[%s2898 + $0x28] sm:$0xf]
  %v2910 = vld [vmem:[%s2898 + $0x2c] sm:$0xf]
  %v2911 = vld [vmem:[%s2898 + $0x30] sm:$0xf]
  %v2912 = vld [vmem:[%s2898 + $0x34] sm:$0xf]
  %v2913 = vld [vmem:[%s2898 + $0x38] sm:$0xf]
  %v2914 = vld [vmem:[%s2898 + $0x3c] sm:$0xf]
  %v2931 = vunpack.c.l.b16 %v2899
  %v2932 = vunpack.c.l.b16 %v2900
  %v2933 = vunpack.c.l.b16 %v2901
  %v2934 = vunpack.c.l.b16 %v2902
  %v2935 = vunpack.c.l.b16 %v2903
  %v2936 = vunpack.c.l.b16 %v2904
  %v2937 = vunpack.c.l.b16 %v2905
  %v2938 = vunpack.c.l.b16 %v2906
  %v2939 = vunpack.c.l.b16 %v2907
  %v2940 = vunpack.c.l.b16 %v2908
  %v2941 = vunpack.c.l.b16 %v2909
  %v2942 = vunpack.c.l.b16 %v2910
  %v2943 = vunpack.c.l.b16 %v2911
  %v2944 = vunpack.c.l.b16 %v2912
  %v2945 = vunpack.c.l.b16 %v2913
  %v2946 = vunpack.c.l.b16 %v2914
  %v2947 = vpack.c.b16 %v2932, %v2931
  %v2948 = vpack.c.b16 %v2934, %v2933
  %v2949 = vpack.c.b16 %v2936, %v2935
  %v2950 = vpack.c.b16 %v2938, %v2937
  %v2951 = vpack.c.b16 %v2940, %v2939
  %v2952 = vpack.c.b16 %v2942, %v2941
  %v2953 = vpack.c.b16 %v2944, %v2943
  %v2954 = vpack.c.b16 %v2946, %v2945
  %2963 = vmatpush.bf16.msra.mxu0 %v2954
  %2964 = vmatpush.bf16.msra.mxu0 %v2953
  %2965 = vmatpush.bf16.msra.mxu0 %v2952
  %2966 = vmatpush.bf16.msra.mxu0 %v2951
  %2967 = vmatpush.bf16.msra.mxu0 %v2950
  %2968 = vmatpush.bf16.msra.mxu0 %v2949
  %2969 = vmatpush.bf16.msra.mxu0 %v2948
  %2970 = vmatpush.bf16.msra.mxu0 %v2947
  %2971 = vmatmul.bf16.gmra.mxu0 %v1527
  %v2972 = vpop.f32.mrf.mxu0
  %v2973 = vadd.f32 0.0, %v2972
  %v2974 = vpop.f32.mrf.mxu0
  %2975 = vmatmul.bf16.gmra.mxu0 %v1528
  %v2976 = vpop.f32.mrf.mxu0
  %v2977 = vadd.f32 0.0, %v2976
  %v2978 = vpop.f32.mrf.mxu0
  %2979 = vmatmul.bf16.gmra.mxu0 %v1529
  %v2980 = vpop.f32.mrf.mxu0
  %v2981 = vadd.f32 0.0, %v2980
  %v2982 = vpop.f32.mrf.mxu0
  %2983 = vmatmul.bf16.gmra.mxu0 %v1530
  %v2984 = vpop.f32.mrf.mxu0
  %v2985 = vadd.f32 0.0, %v2984
  %v2986 = vpop.f32.mrf.mxu0
  %2987 = vmatmul.bf16.gmra.mxu0 %v1531
  %v2988 = vpop.f32.mrf.mxu0
  %v2989 = vadd.f32 0.0, %v2988
  %v2990 = vpop.f32.mrf.mxu0
  %2991 = vmatmul.bf16.gmra.mxu0 %v1532
  %v2992 = vpop.f32.mrf.mxu0
  %v2993 = vadd.f32 0.0, %v2992
  %v2994 = vpop.f32.mrf.mxu0
  %2995 = vmatmul.bf16.gmra.mxu0 %v1533
  %v2996 = vpop.f32.mrf.mxu0
  %v2997 = vadd.f32 0.0, %v2996
  %v2998 = vpop.f32.mrf.mxu0
  %2999 = vmatmul.bf16.gmra.mxu0 %v1534
  %v3000 = vpop.f32.mrf.mxu0
  %v3001 = vadd.f32 0.0, %v3000
  %v3002 = vpop.f32.mrf.mxu0
  %3003 = vmatmul.bf16.gmra.mxu0 %v1535
  %v3004 = vpop.f32.mrf.mxu0
  %v3005 = vadd.f32 0.0, %v3004
  %v3006 = vpop.f32.mrf.mxu0
  %3007 = vmatmul.bf16.gmra.mxu0 %v1536
  %v3008 = vpop.f32.mrf.mxu0
  %v3009 = vadd.f32 0.0, %v3008
  %v3010 = vpop.f32.mrf.mxu0
  %3011 = vmatmul.bf16.gmra.mxu0 %v1537
  %v3012 = vpop.f32.mrf.mxu0
  %v3013 = vadd.f32 0.0, %v3012
  %v3014 = vpop.f32.mrf.mxu0
  %3015 = vmatmul.bf16.gmra.mxu0 %v1538
  %v3016 = vpop.f32.mrf.mxu0
  %v3017 = vadd.f32 0.0, %v3016
  %v3018 = vpop.f32.mrf.mxu0
  %3019 = vmatmul.bf16.gmra.mxu0 %v1539
  %v3020 = vpop.f32.mrf.mxu0
  %v3021 = vadd.f32 0.0, %v3020
  %v3022 = vpop.f32.mrf.mxu0
  %3023 = vmatmul.bf16.gmra.mxu0 %v1540
  %v3024 = vpop.f32.mrf.mxu0
  %v3025 = vadd.f32 0.0, %v3024
  %v3026 = vpop.f32.mrf.mxu0
  %3027 = vmatmul.bf16.gmra.mxu0 %v1541
  %v3028 = vpop.f32.mrf.mxu0
  %v3029 = vadd.f32 0.0, %v3028
  %v3030 = vpop.f32.mrf.mxu0
  %3031 = vmatmul.bf16.gmra.mxu0 %v2807
  %v3032 = vpop.f32.mrf.mxu0
  %v3033 = vadd.f32 0.0, %v3032
  %v3034 = vpop.f32.mrf.mxu0
  %3035 = vdwg.mxu0
  %v3036 = vadd.f32 %v2789, %v2973
  %v3037 = vadd.f32 %v2790, %v2977
  %v3038 = vadd.f32 %v2791, %v2981
  %v3039 = vadd.f32 %v2792, %v2985
  %v3040 = vadd.f32 %v2793, %v2989
  %v3041 = vadd.f32 %v2794, %v2993
  %v3042 = vadd.f32 %v2795, %v2997
  %v3043 = vadd.f32 %v2796, %v3001
  %v3044 = vadd.f32 %v2797, %v3005
  %v3045 = vadd.f32 %v2798, %v3009
  %v3046 = vadd.f32 %v2799, %v3013
  %v3047 = vadd.f32 %v2800, %v3017
  %v3048 = vadd.f32 %v2801, %v3021
  %v3049 = vadd.f32 %v2802, %v3025
  %v3050 = vadd.f32 %v2803, %v3029
  %v3051 = vadd.f32 %v2804, %v3033
  %v3052 = vpack.c.b16 %v2645, %v2644
  %3054 = vmatpush.bf16.msra.mxu0 %v2954
  %3055 = vmatpush.bf16.msra.mxu0 %v2953
  %3056 = vmatpush.bf16.msra.mxu0 %v2952
  %3057 = vmatpush.bf16.msra.mxu0 %v2951
  %3058 = vmatpush.bf16.msra.mxu0 %v2950
  %3059 = vmatpush.bf16.msra.mxu0 %v2949
  %3060 = vmatpush.bf16.msra.mxu0 %v2948
  %3061 = vmatpush.bf16.msra.mxu0 %v2947
  %3062 = vmatmul.bf16.gmra.mxu0 %v2053
  %v3063 = vpop.f32.mrf.mxu0
  %v3064 = vadd.f32 0.0, %v3063
  %v3065 = vpop.f32.mrf.mxu0
  %3066 = vmatmul.bf16.gmra.mxu0 %v2054
  %v3067 = vpop.f32.mrf.mxu0
  %v3068 = vadd.f32 0.0, %v3067
  %v3069 = vpop.f32.mrf.mxu0
  %3070 = vmatmul.bf16.gmra.mxu0 %v2055
  %v3071 = vpop.f32.mrf.mxu0
  %v3072 = vadd.f32 0.0, %v3071
  %v3073 = vpop.f32.mrf.mxu0
  %3074 = vmatmul.bf16.gmra.mxu0 %v2056
  %v3075 = vpop.f32.mrf.mxu0
  %v3076 = vadd.f32 0.0, %v3075
  %v3077 = vpop.f32.mrf.mxu0
  %3078 = vmatmul.bf16.gmra.mxu0 %v2057
  %v3079 = vpop.f32.mrf.mxu0
  %v3080 = vadd.f32 0.0, %v3079
  %v3081 = vpop.f32.mrf.mxu0
  %3082 = vmatmul.bf16.gmra.mxu0 %v2058
  %v3083 = vpop.f32.mrf.mxu0
  %v3084 = vadd.f32 0.0, %v3083
  %v3085 = vpop.f32.mrf.mxu0
  %3086 = vmatmul.bf16.gmra.mxu0 %v2059
  %v3087 = vpop.f32.mrf.mxu0
  %v3088 = vadd.f32 0.0, %v3087
  %v3089 = vpop.f32.mrf.mxu0
  %3090 = vmatmul.bf16.gmra.mxu0 %v2060
  %v3091 = vpop.f32.mrf.mxu0
  %v3092 = vadd.f32 0.0, %v3091
  %v3093 = vpop.f32.mrf.mxu0
  %3094 = vmatmul.bf16.gmra.mxu0 %v2061
  %v3095 = vpop.f32.mrf.mxu0
  %v3096 = vadd.f32 0.0, %v3095
  %v3097 = vpop.f32.mrf.mxu0
  %3098 = vmatmul.bf16.gmra.mxu0 %v2062
  %v3099 = vpop.f32.mrf.mxu0
  %v3100 = vadd.f32 0.0, %v3099
  %v3101 = vpop.f32.mrf.mxu0
  %3102 = vmatmul.bf16.gmra.mxu0 %v2063
  %v3103 = vpop.f32.mrf.mxu0
  %v3104 = vadd.f32 0.0, %v3103
  %v3105 = vpop.f32.mrf.mxu0
  %3106 = vmatmul.bf16.gmra.mxu0 %v2064
  %v3107 = vpop.f32.mrf.mxu0
  %v3108 = vadd.f32 0.0, %v3107
  %v3109 = vpop.f32.mrf.mxu0
  %3110 = vmatmul.bf16.gmra.mxu0 %v2065
  %v3111 = vpop.f32.mrf.mxu0
  %v3112 = vadd.f32 0.0, %v3111
  %v3113 = vpop.f32.mrf.mxu0
  %3114 = vmatmul.bf16.gmra.mxu0 %v2066
  %v3115 = vpop.f32.mrf.mxu0
  %v3116 = vadd.f32 0.0, %v3115
  %v3117 = vpop.f32.mrf.mxu0
  %3118 = vmatmul.bf16.gmra.mxu0 %v2067
  %v3119 = vpop.f32.mrf.mxu0
  %v3120 = vadd.f32 0.0, %v3119
  %v3121 = vpop.f32.mrf.mxu0
  %3122 = vmatmul.bf16.gmra.mxu0 %v3052
  %v3123 = vpop.f32.mrf.mxu0
  %v3124 = vadd.f32 0.0, %v3123
  %v3125 = vpop.f32.mrf.mxu0
  %3126 = vdwg.mxu0
  %v3127 = vadd.f32 %v2882, %v3064
  %v3128 = vadd.f32 %v2883, %v3068
  %v3129 = vadd.f32 %v2884, %v3072
  %v3130 = vadd.f32 %v2885, %v3076
  %v3131 = vadd.f32 %v2886, %v3080
  %v3132 = vadd.f32 %v2887, %v3084
  %v3133 = vadd.f32 %v2888, %v3088
  %v3134 = vadd.f32 %v2889, %v3092
  %v3135 = vadd.f32 %v2890, %v3096
  %v3136 = vadd.f32 %v2891, %v3100
  %v3137 = vadd.f32 %v2892, %v3104
  %v3138 = vadd.f32 %v2893, %v3108
  %v3139 = vadd.f32 %v2894, %v3112
  %v3140 = vadd.f32 %v2895, %v3116
  %v3141 = vadd.f32 %v2896, %v3120
  %v3142 = vadd.f32 %v2897, %v3124
  %s3143 = scalar_lea.vmem %s3, 320
  %v3144 = vld [vmem:[%s3143] sm:$0xf]
  %v3145 = vld [vmem:[%s3143 + $0x4] sm:$0xf]
  %v3146 = vld [vmem:[%s3143 + $0x8] sm:$0xf]
  %v3147 = vld [vmem:[%s3143 + $0xc] sm:$0xf]
  %v3148 = vld [vmem:[%s3143 + $0x10] sm:$0xf]
  %v3149 = vld [vmem:[%s3143 + $0x14] sm:$0xf]
  %v3150 = vld [vmem:[%s3143 + $0x18] sm:$0xf]
  %v3151 = vld [vmem:[%s3143 + $0x1c] sm:$0xf]
  %v3152 = vld [vmem:[%s3143 + $0x20] sm:$0xf]
  %v3153 = vld [vmem:[%s3143 + $0x24] sm:$0xf]
  %v3154 = vld [vmem:[%s3143 + $0x28] sm:$0xf]
  %v3155 = vld [vmem:[%s3143 + $0x2c] sm:$0xf]
  %v3156 = vld [vmem:[%s3143 + $0x30] sm:$0xf]
  %v3157 = vld [vmem:[%s3143 + $0x34] sm:$0xf]
  %v3158 = vld [vmem:[%s3143 + $0x38] sm:$0xf]
  %v3159 = vld [vmem:[%s3143 + $0x3c] sm:$0xf]
  %v3176 = vunpack.c.l.b16 %v3144
  %v3177 = vunpack.c.l.b16 %v3145
  %v3178 = vunpack.c.l.b16 %v3146
  %v3179 = vunpack.c.l.b16 %v3147
  %v3180 = vunpack.c.l.b16 %v3148
  %v3181 = vunpack.c.l.b16 %v3149
  %v3182 = vunpack.c.l.b16 %v3150
  %v3183 = vunpack.c.l.b16 %v3151
  %v3184 = vunpack.c.l.b16 %v3152
  %v3185 = vunpack.c.l.b16 %v3153
  %v3186 = vunpack.c.l.b16 %v3154
  %v3187 = vunpack.c.l.b16 %v3155
  %v3188 = vunpack.c.l.b16 %v3156
  %v3189 = vunpack.c.l.b16 %v3157
  %v3190 = vunpack.c.l.b16 %v3158
  %v3191 = vunpack.c.l.b16 %v3159
  %v3192 = vpack.c.b16 %v3177, %v3176
  %v3193 = vpack.c.b16 %v3179, %v3178
  %v3194 = vpack.c.b16 %v3181, %v3180
  %v3195 = vpack.c.b16 %v3183, %v3182
  %v3196 = vpack.c.b16 %v3185, %v3184
  %v3197 = vpack.c.b16 %v3187, %v3186
  %v3198 = vpack.c.b16 %v3189, %v3188
  %v3199 = vpack.c.b16 %v3191, %v3190
  %3208 = vmatpush.bf16.msra.mxu0 %v3199
  %3209 = vmatpush.bf16.msra.mxu0 %v3198
  %3210 = vmatpush.bf16.msra.mxu0 %v3197
  %3211 = vmatpush.bf16.msra.mxu0 %v3196
  %3212 = vmatpush.bf16.msra.mxu0 %v3195
  %3213 = vmatpush.bf16.msra.mxu0 %v3194
  %3214 = vmatpush.bf16.msra.mxu0 %v3193
  %3215 = vmatpush.bf16.msra.mxu0 %v3192
  %3216 = vmatmul.bf16.gmra.mxu0 %v2053
  %v3217 = vpop.f32.mrf.mxu0
  %v3218 = vadd.f32 0.0, %v3217
  %v3219 = vpop.f32.mrf.mxu0
  %3220 = vmatmul.bf16.gmra.mxu0 %v2054
  %v3221 = vpop.f32.mrf.mxu0
  %v3222 = vadd.f32 0.0, %v3221
  %v3223 = vpop.f32.mrf.mxu0
  %3224 = vmatmul.bf16.gmra.mxu0 %v2055
  %v3225 = vpop.f32.mrf.mxu0
  %v3226 = vadd.f32 0.0, %v3225
  %v3227 = vpop.f32.mrf.mxu0
  %3228 = vmatmul.bf16.gmra.mxu0 %v2056
  %v3229 = vpop.f32.mrf.mxu0
  %v3230 = vadd.f32 0.0, %v3229
  %v3231 = vpop.f32.mrf.mxu0
  %3232 = vmatmul.bf16.gmra.mxu0 %v2057
  %v3233 = vpop.f32.mrf.mxu0
  %v3234 = vadd.f32 0.0, %v3233
  %v3235 = vpop.f32.mrf.mxu0
  %3236 = vmatmul.bf16.gmra.mxu0 %v2058
  %v3237 = vpop.f32.mrf.mxu0
  %v3238 = vadd.f32 0.0, %v3237
  %v3239 = vpop.f32.mrf.mxu0
  %3240 = vmatmul.bf16.gmra.mxu0 %v2059
  %v3241 = vpop.f32.mrf.mxu0
  %v3242 = vadd.f32 0.0, %v3241
  %v3243 = vpop.f32.mrf.mxu0
  %3244 = vmatmul.bf16.gmra.mxu0 %v2060
  %v3245 = vpop.f32.mrf.mxu0
  %v3246 = vadd.f32 0.0, %v3245
  %v3247 = vpop.f32.mrf.mxu0
  %3248 = vmatmul.bf16.gmra.mxu0 %v2061
  %v3249 = vpop.f32.mrf.mxu0
  %v3250 = vadd.f32 0.0, %v3249
  %v3251 = vpop.f32.mrf.mxu0
  %3252 = vmatmul.bf16.gmra.mxu0 %v2062
  %v3253 = vpop.f32.mrf.mxu0
  %v3254 = vadd.f32 0.0, %v3253
  %v3255 = vpop.f32.mrf.mxu0
  %3256 = vmatmul.bf16.gmra.mxu0 %v2063
  %v3257 = vpop.f32.mrf.mxu0
  %v3258 = vadd.f32 0.0, %v3257
  %v3259 = vpop.f32.mrf.mxu0
  %3260 = vmatmul.bf16.gmra.mxu0 %v2064
  %v3261 = vpop.f32.mrf.mxu0
  %v3262 = vadd.f32 0.0, %v3261
  %v3263 = vpop.f32.mrf.mxu0
  %3264 = vmatmul.bf16.gmra.mxu0 %v2065
  %v3265 = vpop.f32.mrf.mxu0
  %v3266 = vadd.f32 0.0, %v3265
  %v3267 = vpop.f32.mrf.mxu0
  %3268 = vmatmul.bf16.gmra.mxu0 %v2066
  %v3269 = vpop.f32.mrf.mxu0
  %v3270 = vadd.f32 0.0, %v3269
  %v3271 = vpop.f32.mrf.mxu0
  %3272 = vmatmul.bf16.gmra.mxu0 %v2067
  %v3273 = vpop.f32.mrf.mxu0
  %v3274 = vadd.f32 0.0, %v3273
  %v3275 = vpop.f32.mrf.mxu0
  %3276 = vmatmul.bf16.gmra.mxu0 %v3052
  %v3277 = vpop.f32.mrf.mxu0
  %v3278 = vadd.f32 0.0, %v3277
  %v3279 = vpop.f32.mrf.mxu0
  %3280 = vdwg.mxu0
  %v3281 = vadd.f32 %v3036, %v3218
  %v3282 = vadd.f32 %v3037, %v3222
  %v3283 = vadd.f32 %v3038, %v3226
  %v3284 = vadd.f32 %v3039, %v3230
  %v3285 = vadd.f32 %v3040, %v3234
  %v3286 = vadd.f32 %v3041, %v3238
  %v3287 = vadd.f32 %v3042, %v3242
  %v3288 = vadd.f32 %v3043, %v3246
  %v3289 = vadd.f32 %v3044, %v3250
  %v3290 = vadd.f32 %v3045, %v3254
  %v3291 = vadd.f32 %v3046, %v3258
  %v3292 = vadd.f32 %v3047, %v3262
  %v3293 = vadd.f32 %v3048, %v3266
  %v3294 = vadd.f32 %v3049, %v3270
  %v3295 = vadd.f32 %v3050, %v3274
  %v3296 = vadd.f32 %v3051, %v3278
  %v3298 = vunpack.c.l.b16 %v1426
  %v3299 = vpack.c.b16 %v3298, %v3298
  %v3301 = vshll.u32 %v2807, 16
  %v3303 = vrot.slane %v3301, 1
  %v3304 = vsel %vm2387, %v2514, %v3303
  %v3305 = vshrl.u32 %v2807, 16
  %v3307 = vor.u32 %v3305, %v3303
  %v3309 = vshll.u32 %v3299, 16
  %v3311 = vrot.slane %v3309, 1
  %v3312 = vsel %vm2387, %v3307, %v3311
  %3315 = vmatpush.bf16.msra.mxu0 %v3199
  %3316 = vmatpush.bf16.msra.mxu0 %v3198
  %3317 = vmatpush.bf16.msra.mxu0 %v3197
  %3318 = vmatpush.bf16.msra.mxu0 %v3196
  %3319 = vmatpush.bf16.msra.mxu0 %v3195
  %3320 = vmatpush.bf16.msra.mxu0 %v3194
  %3321 = vmatpush.bf16.msra.mxu0 %v3193
  %3322 = vmatpush.bf16.msra.mxu0 %v3192
  %3323 = vmatmul.bf16.gmra.mxu0 %v2407
  %v3324 = vpop.f32.mrf.mxu0
  %v3325 = vadd.f32 0.0, %v3324
  %v3326 = vpop.f32.mrf.mxu0
  %3327 = vmatmul.bf16.gmra.mxu0 %v2415
  %v3328 = vpop.f32.mrf.mxu0
  %v3329 = vadd.f32 0.0, %v3328
  %v3330 = vpop.f32.mrf.mxu0
  %3331 = vmatmul.bf16.gmra.mxu0 %v2423
  %v3332 = vpop.f32.mrf.mxu0
  %v3333 = vadd.f32 0.0, %v3332
  %v3334 = vpop.f32.mrf.mxu0
  %3335 = vmatmul.bf16.gmra.mxu0 %v2431
  %v3336 = vpop.f32.mrf.mxu0
  %v3337 = vadd.f32 0.0, %v3336
  %v3338 = vpop.f32.mrf.mxu0
  %3339 = vmatmul.bf16.gmra.mxu0 %v2439
  %v3340 = vpop.f32.mrf.mxu0
  %v3341 = vadd.f32 0.0, %v3340
  %v3342 = vpop.f32.mrf.mxu0
  %3343 = vmatmul.bf16.gmra.mxu0 %v2447
  %v3344 = vpop.f32.mrf.mxu0
  %v3345 = vadd.f32 0.0, %v3344
  %v3346 = vpop.f32.mrf.mxu0
  %3347 = vmatmul.bf16.gmra.mxu0 %v2455
  %v3348 = vpop.f32.mrf.mxu0
  %v3349 = vadd.f32 0.0, %v3348
  %v3350 = vpop.f32.mrf.mxu0
  %3351 = vmatmul.bf16.gmra.mxu0 %v2463
  %v3352 = vpop.f32.mrf.mxu0
  %v3353 = vadd.f32 0.0, %v3352
  %v3354 = vpop.f32.mrf.mxu0
  %3355 = vmatmul.bf16.gmra.mxu0 %v2471
  %v3356 = vpop.f32.mrf.mxu0
  %v3357 = vadd.f32 0.0, %v3356
  %v3358 = vpop.f32.mrf.mxu0
  %3359 = vmatmul.bf16.gmra.mxu0 %v2479
  %v3360 = vpop.f32.mrf.mxu0
  %v3361 = vadd.f32 0.0, %v3360
  %v3362 = vpop.f32.mrf.mxu0
  %3363 = vmatmul.bf16.gmra.mxu0 %v2487
  %v3364 = vpop.f32.mrf.mxu0
  %v3365 = vadd.f32 0.0, %v3364
  %v3366 = vpop.f32.mrf.mxu0
  %3367 = vmatmul.bf16.gmra.mxu0 %v2495
  %v3368 = vpop.f32.mrf.mxu0
  %v3369 = vadd.f32 0.0, %v3368
  %v3370 = vpop.f32.mrf.mxu0
  %3371 = vmatmul.bf16.gmra.mxu0 %v2503
  %v3372 = vpop.f32.mrf.mxu0
  %v3373 = vadd.f32 0.0, %v3372
  %v3374 = vpop.f32.mrf.mxu0
  %3375 = vmatmul.bf16.gmra.mxu0 %v2511
  %v3376 = vpop.f32.mrf.mxu0
  %v3377 = vadd.f32 0.0, %v3376
  %v3378 = vpop.f32.mrf.mxu0
  %3379 = vmatmul.bf16.gmra.mxu0 %v3304
  %v3380 = vpop.f32.mrf.mxu0
  %v3381 = vadd.f32 0.0, %v3380
  %v3382 = vpop.f32.mrf.mxu0
  %3383 = vmatmul.bf16.gmra.mxu0 %v3312
  %v3384 = vpop.f32.mrf.mxu0
  %v3385 = vadd.f32 0.0, %v3384
  %v3386 = vpop.f32.mrf.mxu0
  %3387 = vdwg.mxu0
  %v3388 = vadd.f32 %v3127, %v3325
  %v3389 = vadd.f32 %v3128, %v3329
  %v3390 = vadd.f32 %v3129, %v3333
  %v3391 = vadd.f32 %v3130, %v3337
  %v3392 = vadd.f32 %v3131, %v3341
  %v3393 = vadd.f32 %v3132, %v3345
  %v3394 = vadd.f32 %v3133, %v3349
  %v3395 = vadd.f32 %v3134, %v3353
  %v3396 = vadd.f32 %v3135, %v3357
  %v3397 = vadd.f32 %v3136, %v3361
  %v3398 = vadd.f32 %v3137, %v3365
  %v3399 = vadd.f32 %v3138, %v3369
  %v3400 = vadd.f32 %v3139, %v3373
  %v3401 = vadd.f32 %v3140, %v3377
  %v3402 = vadd.f32 %v3141, %v3381
  %v3403 = vadd.f32 %v3142, %v3385
  %s3404 = scalar_lea.vmem %s3, 384
  %v3405 = vld [vmem:[%s3404] sm:$0xf]
  %v3406 = vld [vmem:[%s3404 + $0x4] sm:$0xf]
  %v3407 = vld [vmem:[%s3404 + $0x8] sm:$0xf]
  %v3408 = vld [vmem:[%s3404 + $0xc] sm:$0xf]
  %v3409 = vld [vmem:[%s3404 + $0x10] sm:$0xf]
  %v3410 = vld [vmem:[%s3404 + $0x14] sm:$0xf]
  %v3411 = vld [vmem:[%s3404 + $0x18] sm:$0xf]
  %v3412 = vld [vmem:[%s3404 + $0x1c] sm:$0xf]
  %v3413 = vld [vmem:[%s3404 + $0x20] sm:$0xf]
  %v3414 = vld [vmem:[%s3404 + $0x24] sm:$0xf]
  %v3415 = vld [vmem:[%s3404 + $0x28] sm:$0xf]
  %v3416 = vld [vmem:[%s3404 + $0x2c] sm:$0xf]
  %v3417 = vld [vmem:[%s3404 + $0x30] sm:$0xf]
  %v3418 = vld [vmem:[%s3404 + $0x34] sm:$0xf]
  %v3419 = vld [vmem:[%s3404 + $0x38] sm:$0xf]
  %v3420 = vld [vmem:[%s3404 + $0x3c] sm:$0xf]
  %v3423 = vunpack.c.l.b16 %v1353
  %v3424 = vunpack.c.l.b16 %v1354
  %v3425 = vpack.c.b16 %v3423, %v2645
  %v3426 = vpack.c.b16 %v3424, %v3424
  %v3428 = vshrl.u32 %v3425, 16
  %v3430 = vrot.slane %v3428, 3
  %v3431 = vshll.u32 %v3425, 16
  %v3433 = vrot.slane %v3431, 4
  %v3434 = vor.u32 %v3430, %v3433
  %v3435 = vsel %vm1762, %v2655, %v3434
  %v3437 = vshrl.u32 %v3426, 16
  %v3439 = vrot.slane %v3437, 3
  %v3440 = vshll.u32 %v3426, 16
  %v3442 = vrot.slane %v3440, 4
  %v3443 = vor.u32 %v3439, %v3442
  %v3444 = vsel %vm1762, %v3434, %v3443
  %v3463 = vunpack.c.l.b16 %v3405
  %v3464 = vunpack.c.l.b16 %v3406
  %v3465 = vunpack.c.l.b16 %v3407
  %v3466 = vunpack.c.l.b16 %v3408
  %v3467 = vunpack.c.l.b16 %v3409
  %v3468 = vunpack.c.l.b16 %v3410
  %v3469 = vunpack.c.l.b16 %v3411
  %v3470 = vunpack.c.l.b16 %v3412
  %v3471 = vunpack.c.l.b16 %v3413
  %v3472 = vunpack.c.l.b16 %v3414
  %v3473 = vunpack.c.l.b16 %v3415
  %v3474 = vunpack.c.l.b16 %v3416
  %v3475 = vunpack.c.l.b16 %v3417
  %v3476 = vunpack.c.l.b16 %v3418
  %v3477 = vunpack.c.l.b16 %v3419
  %v3478 = vunpack.c.l.b16 %v3420
  %v3479 = vpack.c.b16 %v3464, %v3463
  %v3480 = vpack.c.b16 %v3466, %v3465
  %v3481 = vpack.c.b16 %v3468, %v3467
  %v3482 = vpack.c.b16 %v3470, %v3469
  %v3483 = vpack.c.b16 %v3472, %v3471
  %v3484 = vpack.c.b16 %v3474, %v3473
  %v3485 = vpack.c.b16 %v3476, %v3475
  %v3486 = vpack.c.b16 %v3478, %v3477
  %3495 = vmatpush.bf16.msra.mxu0 %v3486
  %3496 = vmatpush.bf16.msra.mxu0 %v3485
  %3497 = vmatpush.bf16.msra.mxu0 %v3484
  %3498 = vmatpush.bf16.msra.mxu0 %v3483
  %3499 = vmatpush.bf16.msra.mxu0 %v3482
  %3500 = vmatpush.bf16.msra.mxu0 %v3481
  %3501 = vmatpush.bf16.msra.mxu0 %v3480
  %3502 = vmatpush.bf16.msra.mxu0 %v3479
  %3503 = vmatmul.bf16.gmra.mxu0 %v1797
  %v3504 = vpop.f32.mrf.mxu0
  %v3505 = vadd.f32 0.0, %v3504
  %v3506 = vpop.f32.mrf.mxu0
  %3507 = vmatmul.bf16.gmra.mxu0 %v1806
  %v3508 = vpop.f32.mrf.mxu0
  %v3509 = vadd.f32 0.0, %v3508
  %v3510 = vpop.f32.mrf.mxu0
  %3511 = vmatmul.bf16.gmra.mxu0 %v1815
  %v3512 = vpop.f32.mrf.mxu0
  %v3513 = vadd.f32 0.0, %v3512
  %v3514 = vpop.f32.mrf.mxu0
  %3515 = vmatmul.bf16.gmra.mxu0 %v1824
  %v3516 = vpop.f32.mrf.mxu0
  %v3517 = vadd.f32 0.0, %v3516
  %v3518 = vpop.f32.mrf.mxu0
  %3519 = vmatmul.bf16.gmra.mxu0 %v1833
  %v3520 = vpop.f32.mrf.mxu0
  %v3521 = vadd.f32 0.0, %v3520
  %v3522 = vpop.f32.mrf.mxu0
  %3523 = vmatmul.bf16.gmra.mxu0 %v1842
  %v3524 = vpop.f32.mrf.mxu0
  %v3525 = vadd.f32 0.0, %v3524
  %v3526 = vpop.f32.mrf.mxu0
  %3527 = vmatmul.bf16.gmra.mxu0 %v1851
  %v3528 = vpop.f32.mrf.mxu0
  %v3529 = vadd.f32 0.0, %v3528
  %v3530 = vpop.f32.mrf.mxu0
  %3531 = vmatmul.bf16.gmra.mxu0 %v1860
  %v3532 = vpop.f32.mrf.mxu0
  %v3533 = vadd.f32 0.0, %v3532
  %v3534 = vpop.f32.mrf.mxu0
  %3535 = vmatmul.bf16.gmra.mxu0 %v1869
  %v3536 = vpop.f32.mrf.mxu0
  %v3537 = vadd.f32 0.0, %v3536
  %v3538 = vpop.f32.mrf.mxu0
  %3539 = vmatmul.bf16.gmra.mxu0 %v1878
  %v3540 = vpop.f32.mrf.mxu0
  %v3541 = vadd.f32 0.0, %v3540
  %v3542 = vpop.f32.mrf.mxu0
  %3543 = vmatmul.bf16.gmra.mxu0 %v1887
  %v3544 = vpop.f32.mrf.mxu0
  %v3545 = vadd.f32 0.0, %v3544
  %v3546 = vpop.f32.mrf.mxu0
  %3547 = vmatmul.bf16.gmra.mxu0 %v1896
  %v3548 = vpop.f32.mrf.mxu0
  %v3549 = vadd.f32 0.0, %v3548
  %v3550 = vpop.f32.mrf.mxu0
  %3551 = vmatmul.bf16.gmra.mxu0 %v1905
  %v3552 = vpop.f32.mrf.mxu0
  %v3553 = vadd.f32 0.0, %v3552
  %v3554 = vpop.f32.mrf.mxu0
  %3555 = vmatmul.bf16.gmra.mxu0 %v2656
  %v3556 = vpop.f32.mrf.mxu0
  %v3557 = vadd.f32 0.0, %v3556
  %v3558 = vpop.f32.mrf.mxu0
  %3559 = vmatmul.bf16.gmra.mxu0 %v3435
  %v3560 = vpop.f32.mrf.mxu0
  %v3561 = vadd.f32 0.0, %v3560
  %v3562 = vpop.f32.mrf.mxu0
  %3563 = vmatmul.bf16.gmra.mxu0 %v3444
  %v3564 = vpop.f32.mrf.mxu0
  %v3565 = vadd.f32 0.0, %v3564
  %v3566 = vpop.f32.mrf.mxu0
  %3567 = vdwg.mxu0
  %v3568 = vadd.f32 %v3281, %v3505
  %v3569 = vadd.f32 %v3282, %v3509
  %v3570 = vadd.f32 %v3283, %v3513
  %v3571 = vadd.f32 %v3284, %v3517
  %v3572 = vadd.f32 %v3285, %v3521
  %v3573 = vadd.f32 %v3286, %v3525
  %v3574 = vadd.f32 %v3287, %v3529
  %v3575 = vadd.f32 %v3288, %v3533
  %v3576 = vadd.f32 %v3289, %v3537
  %v3577 = vadd.f32 %v3290, %v3541
  %v3578 = vadd.f32 %v3291, %v3545
  %v3579 = vadd.f32 %v3292, %v3549
  %v3580 = vadd.f32 %v3293, %v3553
  %v3581 = vadd.f32 %v3294, %v3557
  %v3582 = vadd.f32 %v3295, %v3561
  %v3583 = vadd.f32 %v3296, %v3565
  %v3585 = vunpack.c.l.b16 %v1427
  %v3586 = vpack.c.b16 %v3585, %v3298
  %3588 = vmatpush.bf16.msra.mxu0 %v3486
  %3589 = vmatpush.bf16.msra.mxu0 %v3485
  %3590 = vmatpush.bf16.msra.mxu0 %v3484
  %3591 = vmatpush.bf16.msra.mxu0 %v3483
  %3592 = vmatpush.bf16.msra.mxu0 %v3482
  %3593 = vmatpush.bf16.msra.mxu0 %v3481
  %3594 = vmatpush.bf16.msra.mxu0 %v3480
  %3595 = vmatpush.bf16.msra.mxu0 %v3479
  %3596 = vmatmul.bf16.gmra.mxu0 %v1528
  %v3597 = vpop.f32.mrf.mxu0
  %v3598 = vadd.f32 0.0, %v3597
  %v3599 = vpop.f32.mrf.mxu0
  %3600 = vmatmul.bf16.gmra.mxu0 %v1529
  %v3601 = vpop.f32.mrf.mxu0
  %v3602 = vadd.f32 0.0, %v3601
  %v3603 = vpop.f32.mrf.mxu0
  %3604 = vmatmul.bf16.gmra.mxu0 %v1530
  %v3605 = vpop.f32.mrf.mxu0
  %v3606 = vadd.f32 0.0, %v3605
  %v3607 = vpop.f32.mrf.mxu0
  %3608 = vmatmul.bf16.gmra.mxu0 %v1531
  %v3609 = vpop.f32.mrf.mxu0
  %v3610 = vadd.f32 0.0, %v3609
  %v3611 = vpop.f32.mrf.mxu0
  %3612 = vmatmul.bf16.gmra.mxu0 %v1532
  %v3613 = vpop.f32.mrf.mxu0
  %v3614 = vadd.f32 0.0, %v3613
  %v3615 = vpop.f32.mrf.mxu0
  %3616 = vmatmul.bf16.gmra.mxu0 %v1533
  %v3617 = vpop.f32.mrf.mxu0
  %v3618 = vadd.f32 0.0, %v3617
  %v3619 = vpop.f32.mrf.mxu0
  %3620 = vmatmul.bf16.gmra.mxu0 %v1534
  %v3621 = vpop.f32.mrf.mxu0
  %v3622 = vadd.f32 0.0, %v3621
  %v3623 = vpop.f32.mrf.mxu0
  %3624 = vmatmul.bf16.gmra.mxu0 %v1535
  %v3625 = vpop.f32.mrf.mxu0
  %v3626 = vadd.f32 0.0, %v3625
  %v3627 = vpop.f32.mrf.mxu0
  %3628 = vmatmul.bf16.gmra.mxu0 %v1536
  %v3629 = vpop.f32.mrf.mxu0
  %v3630 = vadd.f32 0.0, %v3629
  %v3631 = vpop.f32.mrf.mxu0
  %3632 = vmatmul.bf16.gmra.mxu0 %v1537
  %v3633 = vpop.f32.mrf.mxu0
  %v3634 = vadd.f32 0.0, %v3633
  %v3635 = vpop.f32.mrf.mxu0
  %3636 = vmatmul.bf16.gmra.mxu0 %v1538
  %v3637 = vpop.f32.mrf.mxu0
  %v3638 = vadd.f32 0.0, %v3637
  %v3639 = vpop.f32.mrf.mxu0
  %3640 = vmatmul.bf16.gmra.mxu0 %v1539
  %v3641 = vpop.f32.mrf.mxu0
  %v3642 = vadd.f32 0.0, %v3641
  %v3643 = vpop.f32.mrf.mxu0
  %3644 = vmatmul.bf16.gmra.mxu0 %v1540
  %v3645 = vpop.f32.mrf.mxu0
  %v3646 = vadd.f32 0.0, %v3645
  %v3647 = vpop.f32.mrf.mxu0
  %3648 = vmatmul.bf16.gmra.mxu0 %v1541
  %v3649 = vpop.f32.mrf.mxu0
  %v3650 = vadd.f32 0.0, %v3649
  %v3651 = vpop.f32.mrf.mxu0
  %3652 = vmatmul.bf16.gmra.mxu0 %v2807
  %v3653 = vpop.f32.mrf.mxu0
  %v3654 = vadd.f32 0.0, %v3653
  %v3655 = vpop.f32.mrf.mxu0
  %3656 = vmatmul.bf16.gmra.mxu0 %v3586
  %v3657 = vpop.f32.mrf.mxu0
  %v3658 = vadd.f32 0.0, %v3657
  %v3659 = vpop.f32.mrf.mxu0
  %3660 = vdwg.mxu0
  %v3661 = vadd.f32 %v3388, %v3598
  %v3662 = vadd.f32 %v3389, %v3602
  %v3663 = vadd.f32 %v3390, %v3606
  %v3664 = vadd.f32 %v3391, %v3610
  %v3665 = vadd.f32 %v3392, %v3614
  %v3666 = vadd.f32 %v3393, %v3618
  %v3667 = vadd.f32 %v3394, %v3622
  %v3668 = vadd.f32 %v3395, %v3626
  %v3669 = vadd.f32 %v3396, %v3630
  %v3670 = vadd.f32 %v3397, %v3634
  %v3671 = vadd.f32 %v3398, %v3638
  %v3672 = vadd.f32 %v3399, %v3642
  %v3673 = vadd.f32 %v3400, %v3646
  %v3674 = vadd.f32 %v3401, %v3650
  %v3675 = vadd.f32 %v3402, %v3654
  %v3676 = vadd.f32 %v3403, %v3658
  %s3677 = scalar_lea.vmem %s3, 448
  %v3678 = vld [vmem:[%s3677] sm:$0xf]
  %v3679 = vld [vmem:[%s3677 + $0x4] sm:$0xf]
  %v3680 = vld [vmem:[%s3677 + $0x8] sm:$0xf]
  %v3681 = vld [vmem:[%s3677 + $0xc] sm:$0xf]
  %v3682 = vld [vmem:[%s3677 + $0x10] sm:$0xf]
  %v3683 = vld [vmem:[%s3677 + $0x14] sm:$0xf]
  %v3684 = vld [vmem:[%s3677 + $0x18] sm:$0xf]
  %v3685 = vld [vmem:[%s3677 + $0x1c] sm:$0xf]
  %v3686 = vld [vmem:[%s3677 + $0x20] sm:$0xf]
  %v3687 = vld [vmem:[%s3677 + $0x24] sm:$0xf]
  %v3688 = vld [vmem:[%s3677 + $0x28] sm:$0xf]
  %v3689 = vld [vmem:[%s3677 + $0x2c] sm:$0xf]
  %v3690 = vld [vmem:[%s3677 + $0x30] sm:$0xf]
  %v3691 = vld [vmem:[%s3677 + $0x34] sm:$0xf]
  %v3692 = vld [vmem:[%s3677 + $0x38] sm:$0xf]
  %v3693 = vld [vmem:[%s3677 + $0x3c] sm:$0xf]
  %v3710 = vunpack.c.l.b16 %v3678
  %v3711 = vunpack.c.l.b16 %v3679
  %v3712 = vunpack.c.l.b16 %v3680
  %v3713 = vunpack.c.l.b16 %v3681
  %v3714 = vunpack.c.l.b16 %v3682
  %v3715 = vunpack.c.l.b16 %v3683
  %v3716 = vunpack.c.l.b16 %v3684
  %v3717 = vunpack.c.l.b16 %v3685
  %v3718 = vunpack.c.l.b16 %v3686
  %v3719 = vunpack.c.l.b16 %v3687
  %v3720 = vunpack.c.l.b16 %v3688
  %v3721 = vunpack.c.l.b16 %v3689
  %v3722 = vunpack.c.l.b16 %v3690
  %v3723 = vunpack.c.l.b16 %v3691
  %v3724 = vunpack.c.l.b16 %v3692
  %v3725 = vunpack.c.l.b16 %v3693
  %v3726 = vpack.c.b16 %v3711, %v3710
  %v3727 = vpack.c.b16 %v3713, %v3712
  %v3728 = vpack.c.b16 %v3715, %v3714
  %v3729 = vpack.c.b16 %v3717, %v3716
  %v3730 = vpack.c.b16 %v3719, %v3718
  %v3731 = vpack.c.b16 %v3721, %v3720
  %v3732 = vpack.c.b16 %v3723, %v3722
  %v3733 = vpack.c.b16 %v3725, %v3724
  %3742 = vmatpush.bf16.msra.mxu0 %v3733
  %3743 = vmatpush.bf16.msra.mxu0 %v3732
  %3744 = vmatpush.bf16.msra.mxu0 %v3731
  %3745 = vmatpush.bf16.msra.mxu0 %v3730
  %3746 = vmatpush.bf16.msra.mxu0 %v3729
  %3747 = vmatpush.bf16.msra.mxu0 %v3728
  %3748 = vmatpush.bf16.msra.mxu0 %v3727
  %3749 = vmatpush.bf16.msra.mxu0 %v3726
  %3750 = vmatmul.bf16.gmra.mxu0 %v1528
  %v3751 = vpop.f32.mrf.mxu0
  %v3752 = vadd.f32 0.0, %v3751
  %v3753 = vpop.f32.mrf.mxu0
  %3754 = vmatmul.bf16.gmra.mxu0 %v1529
  %v3755 = vpop.f32.mrf.mxu0
  %v3756 = vadd.f32 0.0, %v3755
  %v3757 = vpop.f32.mrf.mxu0
  %3758 = vmatmul.bf16.gmra.mxu0 %v1530
  %v3759 = vpop.f32.mrf.mxu0
  %v3760 = vadd.f32 0.0, %v3759
  %v3761 = vpop.f32.mrf.mxu0
  %3762 = vmatmul.bf16.gmra.mxu0 %v1531
  %v3763 = vpop.f32.mrf.mxu0
  %v3764 = vadd.f32 0.0, %v3763
  %v3765 = vpop.f32.mrf.mxu0
  %3766 = vmatmul.bf16.gmra.mxu0 %v1532
  %v3767 = vpop.f32.mrf.mxu0
  %v3768 = vadd.f32 0.0, %v3767
  %v3769 = vpop.f32.mrf.mxu0
  %3770 = vmatmul.bf16.gmra.mxu0 %v1533
  %v3771 = vpop.f32.mrf.mxu0
  %v3772 = vadd.f32 0.0, %v3771
  %v3773 = vpop.f32.mrf.mxu0
  %3774 = vmatmul.bf16.gmra.mxu0 %v1534
  %v3775 = vpop.f32.mrf.mxu0
  %v3776 = vadd.f32 0.0, %v3775
  %v3777 = vpop.f32.mrf.mxu0
  %3778 = vmatmul.bf16.gmra.mxu0 %v1535
  %v3779 = vpop.f32.mrf.mxu0
  %v3780 = vadd.f32 0.0, %v3779
  %v3781 = vpop.f32.mrf.mxu0
  %3782 = vmatmul.bf16.gmra.mxu0 %v1536
  %v3783 = vpop.f32.mrf.mxu0
  %v3784 = vadd.f32 0.0, %v3783
  %v3785 = vpop.f32.mrf.mxu0
  %3786 = vmatmul.bf16.gmra.mxu0 %v1537
  %v3787 = vpop.f32.mrf.mxu0
  %v3788 = vadd.f32 0.0, %v3787
  %v3789 = vpop.f32.mrf.mxu0
  %3790 = vmatmul.bf16.gmra.mxu0 %v1538
  %v3791 = vpop.f32.mrf.mxu0
  %v3792 = vadd.f32 0.0, %v3791
  %v3793 = vpop.f32.mrf.mxu0
  %3794 = vmatmul.bf16.gmra.mxu0 %v1539
  %v3795 = vpop.f32.mrf.mxu0
  %v3796 = vadd.f32 0.0, %v3795
  %v3797 = vpop.f32.mrf.mxu0
  %3798 = vmatmul.bf16.gmra.mxu0 %v1540
  %v3799 = vpop.f32.mrf.mxu0
  %v3800 = vadd.f32 0.0, %v3799
  %v3801 = vpop.f32.mrf.mxu0
  %3802 = vmatmul.bf16.gmra.mxu0 %v1541
  %v3803 = vpop.f32.mrf.mxu0
  %v3804 = vadd.f32 0.0, %v3803
  %v3805 = vpop.f32.mrf.mxu0
  %3806 = vmatmul.bf16.gmra.mxu0 %v2807
  %v3807 = vpop.f32.mrf.mxu0
  %v3808 = vadd.f32 0.0, %v3807
  %v3809 = vpop.f32.mrf.mxu0
  %3810 = vmatmul.bf16.gmra.mxu0 %v3586
  %v3811 = vpop.f32.mrf.mxu0
  %v3812 = vadd.f32 0.0, %v3811
  %v3813 = vpop.f32.mrf.mxu0
  %3814 = vdwg.mxu0
  %v3815 = vadd.f32 %v3568, %v3752
  %v3816 = vadd.f32 %v3569, %v3756
  %v3817 = vadd.f32 %v3570, %v3760
  %v3818 = vadd.f32 %v3571, %v3764
  %v3819 = vadd.f32 %v3572, %v3768
  %v3820 = vadd.f32 %v3573, %v3772
  %v3821 = vadd.f32 %v3574, %v3776
  %v3822 = vadd.f32 %v3575, %v3780
  %v3823 = vadd.f32 %v3576, %v3784
  %v3824 = vadd.f32 %v3577, %v3788
  %v3825 = vadd.f32 %v3578, %v3792
  %v3826 = vadd.f32 %v3579, %v3796
  %v3827 = vadd.f32 %v3580, %v3800
  %v3828 = vadd.f32 %v3581, %v3804
  %v3829 = vadd.f32 %v3582, %v3808
  %v3830 = vadd.f32 %v3583, %v3812
  %v3831 = vpack.c.b16 %v3424, %v3423
  %3833 = vmatpush.bf16.msra.mxu0 %v3733
  %3834 = vmatpush.bf16.msra.mxu0 %v3732
  %3835 = vmatpush.bf16.msra.mxu0 %v3731
  %3836 = vmatpush.bf16.msra.mxu0 %v3730
  %3837 = vmatpush.bf16.msra.mxu0 %v3729
  %3838 = vmatpush.bf16.msra.mxu0 %v3728
  %3839 = vmatpush.bf16.msra.mxu0 %v3727
  %3840 = vmatpush.bf16.msra.mxu0 %v3726
  %3841 = vmatmul.bf16.gmra.mxu0 %v2054
  %v3842 = vpop.f32.mrf.mxu0
  %v3843 = vadd.f32 0.0, %v3842
  %v3844 = vpop.f32.mrf.mxu0
  %3845 = vmatmul.bf16.gmra.mxu0 %v2055
  %v3846 = vpop.f32.mrf.mxu0
  %v3847 = vadd.f32 0.0, %v3846
  %v3848 = vpop.f32.mrf.mxu0
  %3849 = vmatmul.bf16.gmra.mxu0 %v2056
  %v3850 = vpop.f32.mrf.mxu0
  %v3851 = vadd.f32 0.0, %v3850
  %v3852 = vpop.f32.mrf.mxu0
  %3853 = vmatmul.bf16.gmra.mxu0 %v2057
  %v3854 = vpop.f32.mrf.mxu0
  %v3855 = vadd.f32 0.0, %v3854
  %v3856 = vpop.f32.mrf.mxu0
  %3857 = vmatmul.bf16.gmra.mxu0 %v2058
  %v3858 = vpop.f32.mrf.mxu0
  %v3859 = vadd.f32 0.0, %v3858
  %v3860 = vpop.f32.mrf.mxu0
  %3861 = vmatmul.bf16.gmra.mxu0 %v2059
  %v3862 = vpop.f32.mrf.mxu0
  %v3863 = vadd.f32 0.0, %v3862
  %v3864 = vpop.f32.mrf.mxu0
  %3865 = vmatmul.bf16.gmra.mxu0 %v2060
  %v3866 = vpop.f32.mrf.mxu0
  %v3867 = vadd.f32 0.0, %v3866
  %v3868 = vpop.f32.mrf.mxu0
  %3869 = vmatmul.bf16.gmra.mxu0 %v2061
  %v3870 = vpop.f32.mrf.mxu0
  %v3871 = vadd.f32 0.0, %v3870
  %v3872 = vpop.f32.mrf.mxu0
  %3873 = vmatmul.bf16.gmra.mxu0 %v2062
  %v3874 = vpop.f32.mrf.mxu0
  %v3875 = vadd.f32 0.0, %v3874
  %v3876 = vpop.f32.mrf.mxu0
  %3877 = vmatmul.bf16.gmra.mxu0 %v2063
  %v3878 = vpop.f32.mrf.mxu0
  %v3879 = vadd.f32 0.0, %v3878
  %v3880 = vpop.f32.mrf.mxu0
  %3881 = vmatmul.bf16.gmra.mxu0 %v2064
  %v3882 = vpop.f32.mrf.mxu0
  %v3883 = vadd.f32 0.0, %v3882
  %v3884 = vpop.f32.mrf.mxu0
  %3885 = vmatmul.bf16.gmra.mxu0 %v2065
  %v3886 = vpop.f32.mrf.mxu0
  %v3887 = vadd.f32 0.0, %v3886
  %v3888 = vpop.f32.mrf.mxu0
  %3889 = vmatmul.bf16.gmra.mxu0 %v2066
  %v3890 = vpop.f32.mrf.mxu0
  %v3891 = vadd.f32 0.0, %v3890
  %v3892 = vpop.f32.mrf.mxu0
  %3893 = vmatmul.bf16.gmra.mxu0 %v2067
  %v3894 = vpop.f32.mrf.mxu0
  %v3895 = vadd.f32 0.0, %v3894
  %v3896 = vpop.f32.mrf.mxu0
  %3897 = vmatmul.bf16.gmra.mxu0 %v3052
  %v3898 = vpop.f32.mrf.mxu0
  %v3899 = vadd.f32 0.0, %v3898
  %v3900 = vpop.f32.mrf.mxu0
  %3901 = vmatmul.bf16.gmra.mxu0 %v3831
  %v3902 = vpop.f32.mrf.mxu0
  %v3903 = vadd.f32 0.0, %v3902
  %v3904 = vpop.f32.mrf.mxu0
  %3905 = vdwg.mxu0
  %v3906 = vadd.f32 %v3661, %v3843
  %v3907 = vadd.f32 %v3662, %v3847
  %v3908 = vadd.f32 %v3663, %v3851
  %v3909 = vadd.f32 %v3664, %v3855
  %v3910 = vadd.f32 %v3665, %v3859
  %v3911 = vadd.f32 %v3666, %v3863
  %v3912 = vadd.f32 %v3667, %v3867
  %v3913 = vadd.f32 %v3668, %v3871
  %v3914 = vadd.f32 %v3669, %v3875
  %v3915 = vadd.f32 %v3670, %v3879
  %v3916 = vadd.f32 %v3671, %v3883
  %v3917 = vadd.f32 %v3672, %v3887
  %v3918 = vadd.f32 %v3673, %v3891
  %v3919 = vadd.f32 %v3674, %v3895
  %v3920 = vadd.f32 %v3675, %v3899
  %v3921 = vadd.f32 %v3676, %v3903
  %s3922 = scalar_lea.vmem %s3, 512
  %v3923 = vld [vmem:[%s3922] sm:$0xf]
  %v3924 = vld [vmem:[%s3922 + $0x4] sm:$0xf]
  %v3925 = vld [vmem:[%s3922 + $0x8] sm:$0xf]
  %v3926 = vld [vmem:[%s3922 + $0xc] sm:$0xf]
  %v3927 = vld [vmem:[%s3922 + $0x10] sm:$0xf]
  %v3928 = vld [vmem:[%s3922 + $0x14] sm:$0xf]
  %v3929 = vld [vmem:[%s3922 + $0x18] sm:$0xf]
  %v3930 = vld [vmem:[%s3922 + $0x1c] sm:$0xf]
  %v3931 = vld [vmem:[%s3922 + $0x20] sm:$0xf]
  %v3932 = vld [vmem:[%s3922 + $0x24] sm:$0xf]
  %v3933 = vld [vmem:[%s3922 + $0x28] sm:$0xf]
  %v3934 = vld [vmem:[%s3922 + $0x2c] sm:$0xf]
  %v3935 = vld [vmem:[%s3922 + $0x30] sm:$0xf]
  %v3936 = vld [vmem:[%s3922 + $0x34] sm:$0xf]
  %v3937 = vld [vmem:[%s3922 + $0x38] sm:$0xf]
  %v3938 = vld [vmem:[%s3922 + $0x3c] sm:$0xf]
  %v3955 = vunpack.c.l.b16 %v3923
  %v3956 = vunpack.c.l.b16 %v3924
  %v3957 = vunpack.c.l.b16 %v3925
  %v3958 = vunpack.c.l.b16 %v3926
  %v3959 = vunpack.c.l.b16 %v3927
  %v3960 = vunpack.c.l.b16 %v3928
  %v3961 = vunpack.c.l.b16 %v3929
  %v3962 = vunpack.c.l.b16 %v3930
  %v3963 = vunpack.c.l.b16 %v3931
  %v3964 = vunpack.c.l.b16 %v3932
  %v3965 = vunpack.c.l.b16 %v3933
  %v3966 = vunpack.c.l.b16 %v3934
  %v3967 = vunpack.c.l.b16 %v3935
  %v3968 = vunpack.c.l.b16 %v3936
  %v3969 = vunpack.c.l.b16 %v3937
  %v3970 = vunpack.c.l.b16 %v3938
  %v3971 = vpack.c.b16 %v3956, %v3955
  %v3972 = vpack.c.b16 %v3958, %v3957
  %v3973 = vpack.c.b16 %v3960, %v3959
  %v3974 = vpack.c.b16 %v3962, %v3961
  %v3975 = vpack.c.b16 %v3964, %v3963
  %v3976 = vpack.c.b16 %v3966, %v3965
  %v3977 = vpack.c.b16 %v3968, %v3967
  %v3978 = vpack.c.b16 %v3970, %v3969
  %3987 = vmatpush.bf16.msra.mxu0 %v3978
  %3988 = vmatpush.bf16.msra.mxu0 %v3977
  %3989 = vmatpush.bf16.msra.mxu0 %v3976
  %3990 = vmatpush.bf16.msra.mxu0 %v3975
  %3991 = vmatpush.bf16.msra.mxu0 %v3974
  %3992 = vmatpush.bf16.msra.mxu0 %v3973
  %3993 = vmatpush.bf16.msra.mxu0 %v3972
  %3994 = vmatpush.bf16.msra.mxu0 %v3971
  %3995 = vmatmul.bf16.gmra.mxu0 %v2054
  %v3996 = vpop.f32.mrf.mxu0
  %v3997 = vadd.f32 0.0, %v3996
  %v3998 = vpop.f32.mrf.mxu0
  %3999 = vmatmul.bf16.gmra.mxu0 %v2055
  %v4000 = vpop.f32.mrf.mxu0
  %v4001 = vadd.f32 0.0, %v4000
  %v4002 = vpop.f32.mrf.mxu0
  %4003 = vmatmul.bf16.gmra.mxu0 %v2056
  %v4004 = vpop.f32.mrf.mxu0
  %v4005 = vadd.f32 0.0, %v4004
  %v4006 = vpop.f32.mrf.mxu0
  %4007 = vmatmul.bf16.gmra.mxu0 %v2057
  %v4008 = vpop.f32.mrf.mxu0
  %v4009 = vadd.f32 0.0, %v4008
  %v4010 = vpop.f32.mrf.mxu0
  %4011 = vmatmul.bf16.gmra.mxu0 %v2058
  %v4012 = vpop.f32.mrf.mxu0
  %v4013 = vadd.f32 0.0, %v4012
  %v4014 = vpop.f32.mrf.mxu0
  %4015 = vmatmul.bf16.gmra.mxu0 %v2059
  %v4016 = vpop.f32.mrf.mxu0
  %v4017 = vadd.f32 0.0, %v4016
  %v4018 = vpop.f32.mrf.mxu0
  %4019 = vmatmul.bf16.gmra.mxu0 %v2060
  %v4020 = vpop.f32.mrf.mxu0
  %v4021 = vadd.f32 0.0, %v4020
  %v4022 = vpop.f32.mrf.mxu0
  %4023 = vmatmul.bf16.gmra.mxu0 %v2061
  %v4024 = vpop.f32.mrf.mxu0
  %v4025 = vadd.f32 0.0, %v4024
  %v4026 = vpop.f32.mrf.mxu0
  %4027 = vmatmul.bf16.gmra.mxu0 %v2062
  %v4028 = vpop.f32.mrf.mxu0
  %v4029 = vadd.f32 0.0, %v4028
  %v4030 = vpop.f32.mrf.mxu0
  %4031 = vmatmul.bf16.gmra.mxu0 %v2063
  %v4032 = vpop.f32.mrf.mxu0
  %v4033 = vadd.f32 0.0, %v4032
  %v4034 = vpop.f32.mrf.mxu0
  %4035 = vmatmul.bf16.gmra.mxu0 %v2064
  %v4036 = vpop.f32.mrf.mxu0
  %v4037 = vadd.f32 0.0, %v4036
  %v4038 = vpop.f32.mrf.mxu0
  %4039 = vmatmul.bf16.gmra.mxu0 %v2065
  %v4040 = vpop.f32.mrf.mxu0
  %v4041 = vadd.f32 0.0, %v4040
  %v4042 = vpop.f32.mrf.mxu0
  %4043 = vmatmul.bf16.gmra.mxu0 %v2066
  %v4044 = vpop.f32.mrf.mxu0
  %v4045 = vadd.f32 0.0, %v4044
  %v4046 = vpop.f32.mrf.mxu0
  %4047 = vmatmul.bf16.gmra.mxu0 %v2067
  %v4048 = vpop.f32.mrf.mxu0
  %v4049 = vadd.f32 0.0, %v4048
  %v4050 = vpop.f32.mrf.mxu0
  %4051 = vmatmul.bf16.gmra.mxu0 %v3052
  %v4052 = vpop.f32.mrf.mxu0
  %v4053 = vadd.f32 0.0, %v4052
  %v4054 = vpop.f32.mrf.mxu0
  %4055 = vmatmul.bf16.gmra.mxu0 %v3831
  %v4056 = vpop.f32.mrf.mxu0
  %v4057 = vadd.f32 0.0, %v4056
  %v4058 = vpop.f32.mrf.mxu0
  %4059 = vdwg.mxu0
  %v4060 = vadd.f32 %v3815, %v3997
  %v4061 = vadd.f32 %v3816, %v4001
  %v4062 = vadd.f32 %v3817, %v4005
  %v4063 = vadd.f32 %v3818, %v4009
  %v4064 = vadd.f32 %v3819, %v4013
  %v4065 = vadd.f32 %v3820, %v4017
  %v4066 = vadd.f32 %v3821, %v4021
  %v4067 = vadd.f32 %v3822, %v4025
  %v4068 = vadd.f32 %v3823, %v4029
  %v4069 = vadd.f32 %v3824, %v4033
  %v4070 = vadd.f32 %v3825, %v4037
  %v4071 = vadd.f32 %v3826, %v4041
  %v4072 = vadd.f32 %v3827, %v4045
  %v4073 = vadd.f32 %v3828, %v4049
  %v4074 = vadd.f32 %v3829, %v4053
  %v4075 = vadd.f32 %v3830, %v4057
  %v4077 = vunpack.c.l.b16 %v1428
  %v4078 = vpack.c.b16 %v4077, %v4077
  %v4080 = vshll.u32 %v3586, 16
  %v4082 = vrot.slane %v4080, 1
  %v4083 = vsel %vm2387, %v3307, %v4082
  %v4084 = vshrl.u32 %v3586, 16
  %v4086 = vor.u32 %v4084, %v4082
  %v4088 = vshll.u32 %v4078, 16
  %v4090 = vrot.slane %v4088, 1
  %v4091 = vsel %vm2387, %v4086, %v4090
  %4094 = vmatpush.bf16.msra.mxu0 %v3978
  %4095 = vmatpush.bf16.msra.mxu0 %v3977
  %4096 = vmatpush.bf16.msra.mxu0 %v3976
  %4097 = vmatpush.bf16.msra.mxu0 %v3975
  %4098 = vmatpush.bf16.msra.mxu0 %v3974
  %4099 = vmatpush.bf16.msra.mxu0 %v3973
  %4100 = vmatpush.bf16.msra.mxu0 %v3972
  %4101 = vmatpush.bf16.msra.mxu0 %v3971
  %4102 = vmatmul.bf16.gmra.mxu0 %v2415
  %v4103 = vpop.f32.mrf.mxu0
  %v4104 = vadd.f32 0.0, %v4103
  %v4105 = vpop.f32.mrf.mxu0
  %4106 = vmatmul.bf16.gmra.mxu0 %v2423
  %v4107 = vpop.f32.mrf.mxu0
  %v4108 = vadd.f32 0.0, %v4107
  %v4109 = vpop.f32.mrf.mxu0
  %4110 = vmatmul.bf16.gmra.mxu0 %v2431
  %v4111 = vpop.f32.mrf.mxu0
  %v4112 = vadd.f32 0.0, %v4111
  %v4113 = vpop.f32.mrf.mxu0
  %4114 = vmatmul.bf16.gmra.mxu0 %v2439
  %v4115 = vpop.f32.mrf.mxu0
  %v4116 = vadd.f32 0.0, %v4115
  %v4117 = vpop.f32.mrf.mxu0
  %4118 = vmatmul.bf16.gmra.mxu0 %v2447
  %v4119 = vpop.f32.mrf.mxu0
  %v4120 = vadd.f32 0.0, %v4119
  %v4121 = vpop.f32.mrf.mxu0
  %4122 = vmatmul.bf16.gmra.mxu0 %v2455
  %v4123 = vpop.f32.mrf.mxu0
  %v4124 = vadd.f32 0.0, %v4123
  %v4125 = vpop.f32.mrf.mxu0
  %4126 = vmatmul.bf16.gmra.mxu0 %v2463
  %v4127 = vpop.f32.mrf.mxu0
  %v4128 = vadd.f32 0.0, %v4127
  %v4129 = vpop.f32.mrf.mxu0
  %4130 = vmatmul.bf16.gmra.mxu0 %v2471
  %v4131 = vpop.f32.mrf.mxu0
  %v4132 = vadd.f32 0.0, %v4131
  %v4133 = vpop.f32.mrf.mxu0
  %4134 = vmatmul.bf16.gmra.mxu0 %v2479
  %v4135 = vpop.f32.mrf.mxu0
  %v4136 = vadd.f32 0.0, %v4135
  %v4137 = vpop.f32.mrf.mxu0
  %4138 = vmatmul.bf16.gmra.mxu0 %v2487
  %v4139 = vpop.f32.mrf.mxu0
  %v4140 = vadd.f32 0.0, %v4139
  %v4141 = vpop.f32.mrf.mxu0
  %4142 = vmatmul.bf16.gmra.mxu0 %v2495
  %v4143 = vpop.f32.mrf.mxu0
  %v4144 = vadd.f32 0.0, %v4143
  %v4145 = vpop.f32.mrf.mxu0
  %4146 = vmatmul.bf16.gmra.mxu0 %v2503
  %v4147 = vpop.f32.mrf.mxu0
  %v4148 = vadd.f32 0.0, %v4147
  %v4149 = vpop.f32.mrf.mxu0
  %4150 = vmatmul.bf16.gmra.mxu0 %v2511
  %v4151 = vpop.f32.mrf.mxu0
  %v4152 = vadd.f32 0.0, %v4151
  %v4153 = vpop.f32.mrf.mxu0
  %4154 = vmatmul.bf16.gmra.mxu0 %v3304
  %v4155 = vpop.f32.mrf.mxu0
  %v4156 = vadd.f32 0.0, %v4155
  %v4157 = vpop.f32.mrf.mxu0
  %4158 = vmatmul.bf16.gmra.mxu0 %v4083
  %v4159 = vpop.f32.mrf.mxu0
  %v4160 = vadd.f32 0.0, %v4159
  %v4161 = vpop.f32.mrf.mxu0
  %4162 = vmatmul.bf16.gmra.mxu0 %v4091
  %v4163 = vpop.f32.mrf.mxu0
  %v4164 = vadd.f32 0.0, %v4163
  %v4165 = vpop.f32.mrf.mxu0
  %4166 = vdwg.mxu0
  %v4167 = vadd.f32 %v3906, %v4104
  %v4168 = vadd.f32 %v3907, %v4108
  %v4169 = vadd.f32 %v3908, %v4112
  %v4170 = vadd.f32 %v3909, %v4116
  %v4171 = vadd.f32 %v3910, %v4120
  %v4172 = vadd.f32 %v3911, %v4124
  %v4173 = vadd.f32 %v3912, %v4128
  %v4174 = vadd.f32 %v3913, %v4132
  %v4175 = vadd.f32 %v3914, %v4136
  %v4176 = vadd.f32 %v3915, %v4140
  %v4177 = vadd.f32 %v3916, %v4144
  %v4178 = vadd.f32 %v3917, %v4148
  %v4179 = vadd.f32 %v3918, %v4152
  %v4180 = vadd.f32 %v3919, %v4156
  %v4181 = vadd.f32 %v3920, %v4160
  %v4182 = vadd.f32 %v3921, %v4164
  %v4183 = vmax.f32 %v4060, %v4061
  %v4184 = vmax.f32 %v4062, %v4063
  %v4185 = vmax.f32 %v4064, %v4065
  %v4186 = vmax.f32 %v4066, %v4067
  %v4187 = vmax.f32 %v4068, %v4069
  %v4188 = vmax.f32 %v4070, %v4071
  %v4189 = vmax.f32 %v4072, %v4073
  %v4190 = vmax.f32 %v4074, %v4075
  %v4191 = vmax.f32 %v4167, %v4168
  %v4192 = vmax.f32 %v4169, %v4170
  %v4193 = vmax.f32 %v4171, %v4172
  %v4194 = vmax.f32 %v4173, %v4174
  %v4195 = vmax.f32 %v4175, %v4176
  %v4196 = vmax.f32 %v4177, %v4178
  %v4197 = vmax.f32 %v4179, %v4180
  %v4198 = vmax.f32 %v4181, %v4182
  %v4199 = vmax.f32 %v4183, %v4191
  %v4200 = vmax.f32 %v4184, %v4192
  %v4201 = vmax.f32 %v4185, %v4193
  %v4202 = vmax.f32 %v4186, %v4194
  %v4203 = vmax.f32 %v4187, %v4195
  %v4204 = vmax.f32 %v4188, %v4196
  %v4205 = vmax.f32 %v4189, %v4197
  %v4206 = vmax.f32 %v4190, %v4198
  %v4207 = vld [vmem:[%s2 + $0x3] ss:$0 sm:$0xff]
  %v4208 = vld [vmem:[%s2 + $0x4] ss:$0 sm:$0xff]
  %v4209 = vld [vmem:[%s2 + $0x5] ss:$0 sm:$0xff]
  %v4210 = vadd.f32 %v4199, %v4207
  %v4211 = vadd.f32 %v4200, %v4207
  %v4212 = vadd.f32 %v4201, %v4207
  %v4213 = vadd.f32 %v4202, %v4207
  %v4214 = vadd.f32 %v4203, %v4207
  %v4215 = vadd.f32 %v4204, %v4207
  %v4216 = vadd.f32 %v4205, %v4207
  %v4217 = vadd.f32 %v4206, %v4207
  %v4218 = vmax.f32 %v4210, 0.0
  %v4219 = vmax.f32 %v4211, 0.0
  %v4220 = vmax.f32 %v4212, 0.0
  %v4221 = vmax.f32 %v4213, 0.0
  %v4222 = vmax.f32 %v4214, 0.0
  %v4223 = vmax.f32 %v4215, 0.0
  %v4224 = vmax.f32 %v4216, 0.0
  %v4225 = vmax.f32 %v4217, 0.0
  %v4226 = vmul.f32 %v4218, %v4208
  %v4227 = vmul.f32 %v4219, %v4208
  %v4228 = vmul.f32 %v4220, %v4208
  %v4229 = vmul.f32 %v4221, %v4208
  %v4230 = vmul.f32 %v4222, %v4208
  %v4231 = vmul.f32 %v4223, %v4208
  %v4232 = vmul.f32 %v4224, %v4208
  %v4233 = vmul.f32 %v4225, %v4208
  %v4234 = vadd.f32 %v4226, %v4209
  %v4235 = vadd.f32 %v4227, %v4209
  %v4236 = vadd.f32 %v4228, %v4209
  %v4237 = vadd.f32 %v4229, %v4209
  %v4238 = vadd.f32 %v4230, %v4209
  %v4239 = vadd.f32 %v4231, %v4209
  %v4240 = vadd.f32 %v4232, %v4209
  %v4241 = vadd.f32 %v4233, %v4209
  %s4242 = scalar_lea.vmem %s2, 6
  %v4243 = vld [vmem:[%s4242] ss:$8 sm:$0x3]
  %v4244 = vmax.f32 %v4234, %v4235
  %v4245 = vmax.f32 %v4244, %v4236
  %v4246 = vmax.f32 %v4245, %v4237
  %v4247 = vmax.f32 %v4246, %v4238
  %v4248 = vmax.f32 %v4247, %v4239
  %v4249 = vmax.f32 %v4248, %v4240
  %v4250 = vmax.f32 %v4249, %v4241
  %v4251 = vrot.slane %v4250, 4
  %v4252 = vmax.f32 %v4250, %v4251
  %v4253 = vrot.slane %v4252, 2
  %v4254 = vmax.f32 %v4252, %v4253
  %v4255 = vrot.slane %v4254, 1
  %v4256 = vmax.f32 %v4254, %v4255
  %v4257 = vld [vmem:[%s4] sm:$0xff]
  %v4258 = vld [vmem:[%s4 + $0x8] sm:$0xff]
  %v4259 = vld [vmem:[%s4 + $0x10] sm:$0xff]
  %v4260 = vld [vmem:[%s4 + $0x18] sm:$0xff]
  %v4261 = vld [vmem:[%s4 + $0x20] sm:$0xff]
  %v4262 = vld [vmem:[%s4 + $0x28] sm:$0xff]
  %v4263 = vld [vmem:[%s4 + $0x30] sm:$0xff]
  %v4264 = vld [vmem:[%s4 + $0x38] sm:$0xff]
  %v4265 = vld [vmem:[%s4 + $0x40] sm:$0xff]
  %v4266 = vld [vmem:[%s4 + $0x48] sm:$0xff]
  %v4267 = vld [vmem:[%s4 + $0x50] sm:$0xff]
  %v4268 = vld [vmem:[%s4 + $0x58] sm:$0xff]
  %v4269 = vld [vmem:[%s4 + $0x60] sm:$0xff]
  %v4270 = vld [vmem:[%s4 + $0x68] sm:$0xff]
  %v4271 = vld [vmem:[%s4 + $0x70] sm:$0xff]
  %v4272 = vld [vmem:[%s4 + $0x78] sm:$0xff]
  %v4273 = vld [vmem:[%s4 + $0x80] sm:$0xff]
  %v4274 = vld [vmem:[%s4 + $0x88] sm:$0xff]
  %v4275 = vld [vmem:[%s4 + $0x90] sm:$0xff]
  %v4276 = vld [vmem:[%s4 + $0x98] sm:$0xff]
  %v4277 = vld [vmem:[%s4 + $0xa0] sm:$0xff]
  %v4278 = vld [vmem:[%s4 + $0xa8] sm:$0xff]
  %v4279 = vld [vmem:[%s4 + $0xb0] sm:$0xff]
  %v4280 = vld [vmem:[%s4 + $0xb8] sm:$0xff]
  %v4281 = vld [vmem:[%s4 + $0xc0] sm:$0xff]
  %v4282 = vld [vmem:[%s4 + $0xc8] sm:$0xff]
  %v4283 = vld [vmem:[%s4 + $0xd0] sm:$0xff]
  %v4284 = vld [vmem:[%s4 + $0xd8] sm:$0xff]
  %v4285 = vld [vmem:[%s4 + $0xe0] sm:$0xff]
  %v4286 = vld [vmem:[%s4 + $0xe8] sm:$0xff]
  %v4287 = vld [vmem:[%s4 + $0xf0] sm:$0xff]
  %v4288 = vld [vmem:[%s4 + $0xf8] sm:$0xff]
  %4289 = vmatpush.msra.mxu0 %v4287
  %4290 = vmatpush.msra.mxu0 %v4285
  %4291 = vmatpush.msra.mxu0 %v4283
  %4292 = vmatpush.msra.mxu0 %v4281
  %4293 = vmatpush.msra.mxu0 %v4279
  %4294 = vmatpush.msra.mxu0 %v4277
  %4295 = vmatpush.msra.mxu0 %v4275
  %4296 = vmatpush.msra.mxu0 %v4273
  %4297 = vmatpush.msra.mxu0 %v4271
  %4298 = vmatpush.msra.mxu0 %v4269
  %4299 = vmatpush.msra.mxu0 %v4267
  %4300 = vmatpush.msra.mxu0 %v4265
  %4301 = vmatpush.msra.mxu0 %v4263
  %4302 = vmatpush.msra.mxu0 %v4261
  %4303 = vmatpush.msra.mxu0 %v4259
  %4304 = vmatpush.msra.mxu0 %v4257
  %4305 = vmatmul.f32.gmra.mxu0 %v4256
  %v4306 = vpop.f32.mrf.mxu0
  %v4307 = vadd.f32 0.0, %v4306
  %4308 = vdwg.mxu0
  %4309 = vmatpush.msra.mxu0 %v4288
  %4310 = vmatpush.msra.mxu0 %v4286
  %4311 = vmatpush.msra.mxu0 %v4284
  %4312 = vmatpush.msra.mxu0 %v4282
  %4313 = vmatpush.msra.mxu0 %v4280
  %4314 = vmatpush.msra.mxu0 %v4278
  %4315 = vmatpush.msra.mxu0 %v4276
  %4316 = vmatpush.msra.mxu0 %v4274
  %4317 = vmatpush.msra.mxu0 %v4272
  %4318 = vmatpush.msra.mxu0 %v4270
  %4319 = vmatpush.msra.mxu0 %v4268
  %4320 = vmatpush.msra.mxu0 %v4266
  %4321 = vmatpush.msra.mxu0 %v4264
  %4322 = vmatpush.msra.mxu0 %v4262
  %4323 = vmatpush.msra.mxu0 %v4260
  %4324 = vmatpush.msra.mxu0 %v4258
  %4325 = vmatmul.f32.gmra.mxu0 %v4256
  %v4326 = vpop.f32.mrf.mxu0
  %v4327 = vadd.f32 0.0, %v4326
  %4328 = vdwg.mxu0
  %v4331 = vrot.slane %v4327, 7
  %vm4332 = vcmask 1040384
  %v4333 = vsel %vm4332, %v4307, %v4331
  %v4335 = vadd.f32 %v4243, %v4333
  %vm4336 = vcmask 1043456
  %v4337 = vsel %vm4336, %v4246, -inf
  %v4338 = vrot.slane %v4337, 4
  %v4339 = vmax.f32 %v4337, %v4338
  %v4340 = vrot.slane %v4339, 2
  %v4341 = vmax.f32 %v4339, %v4340
  %v4342 = vrot.slane %v4341, 1
  %v4343 = vmax.f32 %v4341, %v4342
  %s4344 = scalar_lea.vmem %s4, 256
  %v4345 = vld [vmem:[%s4344] sm:$0xff]
  %v4346 = vld [vmem:[%s4344 + $0x8] sm:$0xff]
  %v4347 = vld [vmem:[%s4344 + $0x10] sm:$0xff]
  %v4348 = vld [vmem:[%s4344 + $0x18] sm:$0xff]
  %v4349 = vld [vmem:[%s4344 + $0x20] sm:$0xff]
  %v4350 = vld [vmem:[%s4344 + $0x28] sm:$0xff]
  %v4351 = vld [vmem:[%s4344 + $0x30] sm:$0xff]
  %v4352 = vld [vmem:[%s4344 + $0x38] sm:$0xff]
  %v4353 = vld [vmem:[%s4344 + $0x40] sm:$0xff]
  %v4354 = vld [vmem:[%s4344 + $0x48] sm:$0xff]
  %v4355 = vld [vmem:[%s4344 + $0x50] sm:$0xff]
  %v4356 = vld [vmem:[%s4344 + $0x58] sm:$0xff]
  %v4357 = vld [vmem:[%s4344 + $0x60] sm:$0xff]
  %v4358 = vld [vmem:[%s4344 + $0x68] sm:$0xff]
  %v4359 = vld [vmem:[%s4344 + $0x70] sm:$0xff]
  %v4360 = vld [vmem:[%s4344 + $0x78] sm:$0xff]
  %v4361 = vld [vmem:[%s4344 + $0x80] sm:$0xff]
  %v4362 = vld [vmem:[%s4344 + $0x88] sm:$0xff]
  %v4363 = vld [vmem:[%s4344 + $0x90] sm:$0xff]
  %v4364 = vld [vmem:[%s4344 + $0x98] sm:$0xff]
  %v4365 = vld [vmem:[%s4344 + $0xa0] sm:$0xff]
  %v4366 = vld [vmem:[%s4344 + $0xa8] sm:$0xff]
  %v4367 = vld [vmem:[%s4344 + $0xb0] sm:$0xff]
  %v4368 = vld [vmem:[%s4344 + $0xb8] sm:$0xff]
  %v4369 = vld [vmem:[%s4344 + $0xc0] sm:$0xff]
  %v4370 = vld [vmem:[%s4344 + $0xc8] sm:$0xff]
  %v4371 = vld [vmem:[%s4344 + $0xd0] sm:$0xff]
  %v4372 = vld [vmem:[%s4344 + $0xd8] sm:$0xff]
  %v4373 = vld [vmem:[%s4344 + $0xe0] sm:$0xff]
  %v4374 = vld [vmem:[%s4344 + $0xe8] sm:$0xff]
  %v4375 = vld [vmem:[%s4344 + $0xf0] sm:$0xff]
  %v4376 = vld [vmem:[%s4344 + $0xf8] sm:$0xff]
  %4377 = vmatpush.msra.mxu0 %v4375
  %4378 = vmatpush.msra.mxu0 %v4373
  %4379 = vmatpush.msra.mxu0 %v4371
  %4380 = vmatpush.msra.mxu0 %v4369
  %4381 = vmatpush.msra.mxu0 %v4367
  %4382 = vmatpush.msra.mxu0 %v4365
  %4383 = vmatpush.msra.mxu0 %v4363
  %4384 = vmatpush.msra.mxu0 %v4361
  %4385 = vmatpush.msra.mxu0 %v4359
  %4386 = vmatpush.msra.mxu0 %v4357
  %4387 = vmatpush.msra.mxu0 %v4355
  %4388 = vmatpush.msra.mxu0 %v4353
  %4389 = vmatpush.msra.mxu0 %v4351
  %4390 = vmatpush.msra.mxu0 %v4349
  %4391 = vmatpush.msra.mxu0 %v4347
  %4392 = vmatpush.msra.mxu0 %v4345
  %4393 = vmatmul.f32.gmra.mxu0 %v4343
  %v4394 = vpop.f32.mrf.mxu0
  %v4395 = vadd.f32 0.0, %v4394
  %4396 = vdwg.mxu0
  %4397 = vmatpush.msra.mxu0 %v4376
  %4398 = vmatpush.msra.mxu0 %v4374
  %4399 = vmatpush.msra.mxu0 %v4372
  %4400 = vmatpush.msra.mxu0 %v4370
  %4401 = vmatpush.msra.mxu0 %v4368
  %4402 = vmatpush.msra.mxu0 %v4366
  %4403 = vmatpush.msra.mxu0 %v4364
  %4404 = vmatpush.msra.mxu0 %v4362
  %4405 = vmatpush.msra.mxu0 %v4360
  %4406 = vmatpush.msra.mxu0 %v4358
  %4407 = vmatpush.msra.mxu0 %v4356
  %4408 = vmatpush.msra.mxu0 %v4354
  %4409 = vmatpush.msra.mxu0 %v4352
  %4410 = vmatpush.msra.mxu0 %v4350
  %4411 = vmatpush.msra.mxu0 %v4348
  %4412 = vmatpush.msra.mxu0 %v4346
  %4413 = vmatmul.f32.gmra.mxu0 %v4343
  %v4414 = vpop.f32.mrf.mxu0
  %v4415 = vadd.f32 0.0, %v4414
  %4416 = vdwg.mxu0
  %v4419 = vrot.slane %v4415, 7
  %v4420 = vsel %vm4332, %v4395, %v4419
  %v4422 = vadd.f32 %v4335, %v4420
  %vm4423 = vcmask 1047556
  %v4424 = vsel %vm4423, %v4246, -inf
  %v4425 = vrot.slane %v4424, 4
  %v4426 = vmax.f32 %v4424, %v4425
  %v4427 = vrot.slane %v4426, 2
  %v4428 = vmax.f32 %v4426, %v4427
  %v4429 = vrot.slane %v4428, 1
  %v4430 = vmax.f32 %v4428, %v4429
  %s4431 = scalar_lea.vmem %s4, 512
  %v4432 = vld [vmem:[%s4431] sm:$0xff]
  %v4433 = vld [vmem:[%s4431 + $0x8] sm:$0xff]
  %v4434 = vld [vmem:[%s4431 + $0x10] sm:$0xff]
  %v4435 = vld [vmem:[%s4431 + $0x18] sm:$0xff]
  %v4436 = vld [vmem:[%s4431 + $0x20] sm:$0xff]
  %v4437 = vld [vmem:[%s4431 + $0x28] sm:$0xff]
  %v4438 = vld [vmem:[%s4431 + $0x30] sm:$0xff]
  %v4439 = vld [vmem:[%s4431 + $0x38] sm:$0xff]
  %v4440 = vld [vmem:[%s4431 + $0x40] sm:$0xff]
  %v4441 = vld [vmem:[%s4431 + $0x48] sm:$0xff]
  %v4442 = vld [vmem:[%s4431 + $0x50] sm:$0xff]
  %v4443 = vld [vmem:[%s4431 + $0x58] sm:$0xff]
  %v4444 = vld [vmem:[%s4431 + $0x60] sm:$0xff]
  %v4445 = vld [vmem:[%s4431 + $0x68] sm:$0xff]
  %v4446 = vld [vmem:[%s4431 + $0x70] sm:$0xff]
  %v4447 = vld [vmem:[%s4431 + $0x78] sm:$0xff]
  %v4448 = vld [vmem:[%s4431 + $0x80] sm:$0xff]
  %v4449 = vld [vmem:[%s4431 + $0x88] sm:$0xff]
  %v4450 = vld [vmem:[%s4431 + $0x90] sm:$0xff]
  %v4451 = vld [vmem:[%s4431 + $0x98] sm:$0xff]
  %v4452 = vld [vmem:[%s4431 + $0xa0] sm:$0xff]
  %v4453 = vld [vmem:[%s4431 + $0xa8] sm:$0xff]
  %v4454 = vld [vmem:[%s4431 + $0xb0] sm:$0xff]
  %v4455 = vld [vmem:[%s4431 + $0xb8] sm:$0xff]
  %v4456 = vld [vmem:[%s4431 + $0xc0] sm:$0xff]
  %v4457 = vld [vmem:[%s4431 + $0xc8] sm:$0xff]
  %v4458 = vld [vmem:[%s4431 + $0xd0] sm:$0xff]
  %v4459 = vld [vmem:[%s4431 + $0xd8] sm:$0xff]
  %v4460 = vld [vmem:[%s4431 + $0xe0] sm:$0xff]
  %v4461 = vld [vmem:[%s4431 + $0xe8] sm:$0xff]
  %v4462 = vld [vmem:[%s4431 + $0xf0] sm:$0xff]
  %v4463 = vld [vmem:[%s4431 + $0xf8] sm:$0xff]
  %4464 = vmatpush.msra.mxu0 %v4462
  %4465 = vmatpush.msra.mxu0 %v4460
  %4466 = vmatpush.msra.mxu0 %v4458
  %4467 = vmatpush.msra.mxu0 %v4456
  %4468 = vmatpush.msra.mxu0 %v4454
  %4469 = vmatpush.msra.mxu0 %v4452
  %4470 = vmatpush.msra.mxu0 %v4450
  %4471 = vmatpush.msra.mxu0 %v4448
  %4472 = vmatpush.msra.mxu0 %v4446
  %4473 = vmatpush.msra.mxu0 %v4444
  %4474 = vmatpush.msra.mxu0 %v4442
  %4475 = vmatpush.msra.mxu0 %v4440
  %4476 = vmatpush.msra.mxu0 %v4438
  %4477 = vmatpush.msra.mxu0 %v4436
  %4478 = vmatpush.msra.mxu0 %v4434
  %4479 = vmatpush.msra.mxu0 %v4432
  %4480 = vmatmul.f32.gmra.mxu0 %v4430
  %v4481 = vpop.f32.mrf.mxu0
  %v4482 = vadd.f32 0.0, %v4481
  %4483 = vdwg.mxu0
  %4484 = vmatpush.msra.mxu0 %v4463
  %4485 = vmatpush.msra.mxu0 %v4461
  %4486 = vmatpush.msra.mxu0 %v4459
  %4487 = vmatpush.msra.mxu0 %v4457
  %4488 = vmatpush.msra.mxu0 %v4455
  %4489 = vmatpush.msra.mxu0 %v4453
  %4490 = vmatpush.msra.mxu0 %v4451
  %4491 = vmatpush.msra.mxu0 %v4449
  %4492 = vmatpush.msra.mxu0 %v4447
  %4493 = vmatpush.msra.mxu0 %v4445
  %4494 = vmatpush.msra.mxu0 %v4443
  %4495 = vmatpush.msra.mxu0 %v4441
  %4496 = vmatpush.msra.mxu0 %v4439
  %4497 = vmatpush.msra.mxu0 %v4437
  %4498 = vmatpush.msra.mxu0 %v4435
  %4499 = vmatpush.msra.mxu0 %v4433
  %4500 = vmatmul.f32.gmra.mxu0 %v4430
  %v4501 = vpop.f32.mrf.mxu0
  %v4502 = vadd.f32 0.0, %v4501
  %4503 = vdwg.mxu0
  %v4506 = vrot.slane %v4502, 7
  %v4507 = vsel %vm4332, %v4482, %v4506
  %v4509 = vadd.f32 %v4422, %v4507
  %v4510 = vmax.f32 %v4238, %v4239
  %v4511 = vmax.f32 %v4510, %v4240
  %v4512 = vmax.f32 %v4511, %v4241
  %v4513 = vsel %vm4336, %v4512, -inf
  %v4514 = vrot.slane %v4513, 4
  %v4515 = vmax.f32 %v4513, %v4514
  %v4516 = vrot.slane %v4515, 2
  %v4517 = vmax.f32 %v4515, %v4516
  %v4518 = vrot.slane %v4517, 1
  %v4519 = vmax.f32 %v4517, %v4518
  %s4520 = scalar_lea.vmem %s4, 768
  %v4521 = vld [vmem:[%s4520] sm:$0xff]
  %v4522 = vld [vmem:[%s4520 + $0x8] sm:$0xff]
  %v4523 = vld [vmem:[%s4520 + $0x10] sm:$0xff]
  %v4524 = vld [vmem:[%s4520 + $0x18] sm:$0xff]
  %v4525 = vld [vmem:[%s4520 + $0x20] sm:$0xff]
  %v4526 = vld [vmem:[%s4520 + $0x28] sm:$0xff]
  %v4527 = vld [vmem:[%s4520 + $0x30] sm:$0xff]
  %v4528 = vld [vmem:[%s4520 + $0x38] sm:$0xff]
  %v4529 = vld [vmem:[%s4520 + $0x40] sm:$0xff]
  %v4530 = vld [vmem:[%s4520 + $0x48] sm:$0xff]
  %v4531 = vld [vmem:[%s4520 + $0x50] sm:$0xff]
  %v4532 = vld [vmem:[%s4520 + $0x58] sm:$0xff]
  %v4533 = vld [vmem:[%s4520 + $0x60] sm:$0xff]
  %v4534 = vld [vmem:[%s4520 + $0x68] sm:$0xff]
  %v4535 = vld [vmem:[%s4520 + $0x70] sm:$0xff]
  %v4536 = vld [vmem:[%s4520 + $0x78] sm:$0xff]
  %v4537 = vld [vmem:[%s4520 + $0x80] sm:$0xff]
  %v4538 = vld [vmem:[%s4520 + $0x88] sm:$0xff]
  %v4539 = vld [vmem:[%s4520 + $0x90] sm:$0xff]
  %v4540 = vld [vmem:[%s4520 + $0x98] sm:$0xff]
  %v4541 = vld [vmem:[%s4520 + $0xa0] sm:$0xff]
  %v4542 = vld [vmem:[%s4520 + $0xa8] sm:$0xff]
  %v4543 = vld [vmem:[%s4520 + $0xb0] sm:$0xff]
  %v4544 = vld [vmem:[%s4520 + $0xb8] sm:$0xff]
  %v4545 = vld [vmem:[%s4520 + $0xc0] sm:$0xff]
  %v4546 = vld [vmem:[%s4520 + $0xc8] sm:$0xff]
  %v4547 = vld [vmem:[%s4520 + $0xd0] sm:$0xff]
  %v4548 = vld [vmem:[%s4520 + $0xd8] sm:$0xff]
  %v4549 = vld [vmem:[%s4520 + $0xe0] sm:$0xff]
  %v4550 = vld [vmem:[%s4520 + $0xe8] sm:$0xff]
  %v4551 = vld [vmem:[%s4520 + $0xf0] sm:$0xff]
  %v4552 = vld [vmem:[%s4520 + $0xf8] sm:$0xff]
  %4553 = vmatpush.msra.mxu0 %v4551
  %4554 = vmatpush.msra.mxu0 %v4549
  %4555 = vmatpush.msra.mxu0 %v4547
  %4556 = vmatpush.msra.mxu0 %v4545
  %4557 = vmatpush.msra.mxu0 %v4543
  %4558 = vmatpush.msra.mxu0 %v4541
  %4559 = vmatpush.msra.mxu0 %v4539
  %4560 = vmatpush.msra.mxu0 %v4537
  %4561 = vmatpush.msra.mxu0 %v4535
  %4562 = vmatpush.msra.mxu0 %v4533
  %4563 = vmatpush.msra.mxu0 %v4531
  %4564 = vmatpush.msra.mxu0 %v4529
  %4565 = vmatpush.msra.mxu0 %v4527
  %4566 = vmatpush.msra.mxu0 %v4525
  %4567 = vmatpush.msra.mxu0 %v4523
  %4568 = vmatpush.msra.mxu0 %v4521
  %4569 = vmatmul.f32.gmra.mxu0 %v4519
  %v4570 = vpop.f32.mrf.mxu0
  %v4571 = vadd.f32 0.0, %v4570
  %4572 = vdwg.mxu0
  %4573 = vmatpush.msra.mxu0 %v4552
  %4574 = vmatpush.msra.mxu0 %v4550
  %4575 = vmatpush.msra.mxu0 %v4548
  %4576 = vmatpush.msra.mxu0 %v4546
  %4577 = vmatpush.msra.mxu0 %v4544
  %4578 = vmatpush.msra.mxu0 %v4542
  %4579 = vmatpush.msra.mxu0 %v4540
  %4580 = vmatpush.msra.mxu0 %v4538
  %4581 = vmatpush.msra.mxu0 %v4536
  %4582 = vmatpush.msra.mxu0 %v4534
  %4583 = vmatpush.msra.mxu0 %v4532
  %4584 = vmatpush.msra.mxu0 %v4530
  %4585 = vmatpush.msra.mxu0 %v4528
  %4586 = vmatpush.msra.mxu0 %v4526
  %4587 = vmatpush.msra.mxu0 %v4524
  %4588 = vmatpush.msra.mxu0 %v4522
  %4589 = vmatmul.f32.gmra.mxu0 %v4519
  %v4590 = vpop.f32.mrf.mxu0
  %v4591 = vadd.f32 0.0, %v4590
  %4592 = vdwg.mxu0
  %v4595 = vrot.slane %v4591, 7
  %v4596 = vsel %vm4332, %v4571, %v4595
  %v4598 = vadd.f32 %v4509, %v4596
  %v4599 = vsel %vm4423, %v4512, -inf
  %v4600 = vrot.slane %v4599, 4
  %v4601 = vmax.f32 %v4599, %v4600
  %v4602 = vrot.slane %v4601, 2
  %v4603 = vmax.f32 %v4601, %v4602
  %v4604 = vrot.slane %v4603, 1
  %v4605 = vmax.f32 %v4603, %v4604
  %s4606 = scalar_lea.vmem %s4, 1024
  %v4607 = vld [vmem:[%s4606] sm:$0xff]
  %v4608 = vld [vmem:[%s4606 + $0x8] sm:$0xff]
  %v4609 = vld [vmem:[%s4606 + $0x10] sm:$0xff]
  %v4610 = vld [vmem:[%s4606 + $0x18] sm:$0xff]
  %v4611 = vld [vmem:[%s4606 + $0x20] sm:$0xff]
  %v4612 = vld [vmem:[%s4606 + $0x28] sm:$0xff]
  %v4613 = vld [vmem:[%s4606 + $0x30] sm:$0xff]
  %v4614 = vld [vmem:[%s4606 + $0x38] sm:$0xff]
  %v4615 = vld [vmem:[%s4606 + $0x40] sm:$0xff]
  %v4616 = vld [vmem:[%s4606 + $0x48] sm:$0xff]
  %v4617 = vld [vmem:[%s4606 + $0x50] sm:$0xff]
  %v4618 = vld [vmem:[%s4606 + $0x58] sm:$0xff]
  %v4619 = vld [vmem:[%s4606 + $0x60] sm:$0xff]
  %v4620 = vld [vmem:[%s4606 + $0x68] sm:$0xff]
  %v4621 = vld [vmem:[%s4606 + $0x70] sm:$0xff]
  %v4622 = vld [vmem:[%s4606 + $0x78] sm:$0xff]
  %v4623 = vld [vmem:[%s4606 + $0x80] sm:$0xff]
  %v4624 = vld [vmem:[%s4606 + $0x88] sm:$0xff]
  %v4625 = vld [vmem:[%s4606 + $0x90] sm:$0xff]
  %v4626 = vld [vmem:[%s4606 + $0x98] sm:$0xff]
  %v4627 = vld [vmem:[%s4606 + $0xa0] sm:$0xff]
  %v4628 = vld [vmem:[%s4606 + $0xa8] sm:$0xff]
  %v4629 = vld [vmem:[%s4606 + $0xb0] sm:$0xff]
  %v4630 = vld [vmem:[%s4606 + $0xb8] sm:$0xff]
  %v4631 = vld [vmem:[%s4606 + $0xc0] sm:$0xff]
  %v4632 = vld [vmem:[%s4606 + $0xc8] sm:$0xff]
  %v4633 = vld [vmem:[%s4606 + $0xd0] sm:$0xff]
  %v4634 = vld [vmem:[%s4606 + $0xd8] sm:$0xff]
  %v4635 = vld [vmem:[%s4606 + $0xe0] sm:$0xff]
  %v4636 = vld [vmem:[%s4606 + $0xe8] sm:$0xff]
  %v4637 = vld [vmem:[%s4606 + $0xf0] sm:$0xff]
  %v4638 = vld [vmem:[%s4606 + $0xf8] sm:$0xff]
  %4639 = vmatpush.msra.mxu0 %v4637
  %4640 = vmatpush.msra.mxu0 %v4635
  %4641 = vmatpush.msra.mxu0 %v4633
  %4642 = vmatpush.msra.mxu0 %v4631
  %4643 = vmatpush.msra.mxu0 %v4629
  %4644 = vmatpush.msra.mxu0 %v4627
  %4645 = vmatpush.msra.mxu0 %v4625
  %4646 = vmatpush.msra.mxu0 %v4623
  %4647 = vmatpush.msra.mxu0 %v4621
  %4648 = vmatpush.msra.mxu0 %v4619
  %4649 = vmatpush.msra.mxu0 %v4617
  %4650 = vmatpush.msra.mxu0 %v4615
  %4651 = vmatpush.msra.mxu0 %v4613
  %4652 = vmatpush.msra.mxu0 %v4611
  %4653 = vmatpush.msra.mxu0 %v4609
  %4654 = vmatpush.msra.mxu0 %v4607
  %4655 = vmatmul.f32.gmra.mxu0 %v4605
  %v4656 = vpop.f32.mrf.mxu0
  %v4657 = vadd.f32 0.0, %v4656
  %4658 = vdwg.mxu0
  %4659 = vmatpush.msra.mxu0 %v4638
  %4660 = vmatpush.msra.mxu0 %v4636
  %4661 = vmatpush.msra.mxu0 %v4634
  %4662 = vmatpush.msra.mxu0 %v4632
  %4663 = vmatpush.msra.mxu0 %v4630
  %4664 = vmatpush.msra.mxu0 %v4628
  %4665 = vmatpush.msra.mxu0 %v4626
  %4666 = vmatpush.msra.mxu0 %v4624
  %4667 = vmatpush.msra.mxu0 %v4622
  %4668 = vmatpush.msra.mxu0 %v4620
  %4669 = vmatpush.msra.mxu0 %v4618
  %4670 = vmatpush.msra.mxu0 %v4616
  %4671 = vmatpush.msra.mxu0 %v4614
  %4672 = vmatpush.msra.mxu0 %v4612
  %4673 = vmatpush.msra.mxu0 %v4610
  %4674 = vmatpush.msra.mxu0 %v4608
  %4675 = vmatmul.f32.gmra.mxu0 %v4605
  %v4676 = vpop.f32.mrf.mxu0
  %v4677 = vadd.f32 0.0, %v4676
  %4678 = vdwg.mxu0
  %v4681 = vrot.slane %v4677, 7
  %v4682 = vsel %vm4332, %v4657, %v4681
  %v4684 = vadd.f32 %v4598, %v4682
  %vm4685 = vcmask 1042432
  %v4686 = vsel %vm4685, %v4245, -inf
  %v4687 = vrot.slane %v4686, 4
  %v4688 = vmax.f32 %v4686, %v4687
  %v4689 = vrot.slane %v4688, 2
  %v4690 = vmax.f32 %v4688, %v4689
  %v4691 = vrot.slane %v4690, 1
  %v4692 = vmax.f32 %v4690, %v4691
  %v4693 = vmax.f32 %v4692, 0.0
  %s4694 = scalar_lea.vmem %s4, 1280
  %v4695 = vld [vmem:[%s4694] sm:$0xff]
  %v4696 = vld [vmem:[%s4694 + $0x8] sm:$0xff]
  %v4697 = vld [vmem:[%s4694 + $0x10] sm:$0xff]
  %v4698 = vld [vmem:[%s4694 + $0x18] sm:$0xff]
  %v4699 = vld [vmem:[%s4694 + $0x20] sm:$0xff]
  %v4700 = vld [vmem:[%s4694 + $0x28] sm:$0xff]
  %v4701 = vld [vmem:[%s4694 + $0x30] sm:$0xff]
  %v4702 = vld [vmem:[%s4694 + $0x38] sm:$0xff]
  %v4703 = vld [vmem:[%s4694 + $0x40] sm:$0xff]
  %v4704 = vld [vmem:[%s4694 + $0x48] sm:$0xff]
  %v4705 = vld [vmem:[%s4694 + $0x50] sm:$0xff]
  %v4706 = vld [vmem:[%s4694 + $0x58] sm:$0xff]
  %v4707 = vld [vmem:[%s4694 + $0x60] sm:$0xff]
  %v4708 = vld [vmem:[%s4694 + $0x68] sm:$0xff]
  %v4709 = vld [vmem:[%s4694 + $0x70] sm:$0xff]
  %v4710 = vld [vmem:[%s4694 + $0x78] sm:$0xff]
  %v4711 = vld [vmem:[%s4694 + $0x80] sm:$0xff]
  %v4712 = vld [vmem:[%s4694 + $0x88] sm:$0xff]
  %v4713 = vld [vmem:[%s4694 + $0x90] sm:$0xff]
  %v4714 = vld [vmem:[%s4694 + $0x98] sm:$0xff]
  %v4715 = vld [vmem:[%s4694 + $0xa0] sm:$0xff]
  %v4716 = vld [vmem:[%s4694 + $0xa8] sm:$0xff]
  %v4717 = vld [vmem:[%s4694 + $0xb0] sm:$0xff]
  %v4718 = vld [vmem:[%s4694 + $0xb8] sm:$0xff]
  %v4719 = vld [vmem:[%s4694 + $0xc0] sm:$0xff]
  %v4720 = vld [vmem:[%s4694 + $0xc8] sm:$0xff]
  %v4721 = vld [vmem:[%s4694 + $0xd0] sm:$0xff]
  %v4722 = vld [vmem:[%s4694 + $0xd8] sm:$0xff]
  %v4723 = vld [vmem:[%s4694 + $0xe0] sm:$0xff]
  %v4724 = vld [vmem:[%s4694 + $0xe8] sm:$0xff]
  %v4725 = vld [vmem:[%s4694 + $0xf0] sm:$0xff]
  %v4726 = vld [vmem:[%s4694 + $0xf8] sm:$0xff]
  %4727 = vmatpush.msra.mxu0 %v4725
  %4728 = vmatpush.msra.mxu0 %v4723
  %4729 = vmatpush.msra.mxu0 %v4721
  %4730 = vmatpush.msra.mxu0 %v4719
  %4731 = vmatpush.msra.mxu0 %v4717
  %4732 = vmatpush.msra.mxu0 %v4715
  %4733 = vmatpush.msra.mxu0 %v4713
  %4734 = vmatpush.msra.mxu0 %v4711
  %4735 = vmatpush.msra.mxu0 %v4709
  %4736 = vmatpush.msra.mxu0 %v4707
  %4737 = vmatpush.msra.mxu0 %v4705
  %4738 = vmatpush.msra.mxu0 %v4703
  %4739 = vmatpush.msra.mxu0 %v4701
  %4740 = vmatpush.msra.mxu0 %v4699
  %4741 = vmatpush.msra.mxu0 %v4697
  %4742 = vmatpush.msra.mxu0 %v4695
  %4743 = vmatmul.f32.gmra.mxu0 %v4693
  %v4744 = vpop.f32.mrf.mxu0
  %v4745 = vadd.f32 0.0, %v4744
  %4746 = vdwg.mxu0
  %4747 = vmatpush.msra.mxu0 %v4726
  %4748 = vmatpush.msra.mxu0 %v4724
  %4749 = vmatpush.msra.mxu0 %v4722
  %4750 = vmatpush.msra.mxu0 %v4720
  %4751 = vmatpush.msra.mxu0 %v4718
  %4752 = vmatpush.msra.mxu0 %v4716
  %4753 = vmatpush.msra.mxu0 %v4714
  %4754 = vmatpush.msra.mxu0 %v4712
  %4755 = vmatpush.msra.mxu0 %v4710
  %4756 = vmatpush.msra.mxu0 %v4708
  %4757 = vmatpush.msra.mxu0 %v4706
  %4758 = vmatpush.msra.mxu0 %v4704
  %4759 = vmatpush.msra.mxu0 %v4702
  %4760 = vmatpush.msra.mxu0 %v4700
  %4761 = vmatpush.msra.mxu0 %v4698
  %4762 = vmatpush.msra.mxu0 %v4696
  %4763 = vmatmul.f32.gmra.mxu0 %v4693
  %v4764 = vpop.f32.mrf.mxu0
  %v4765 = vadd.f32 0.0, %v4764
  %4766 = vdwg.mxu0
  %v4769 = vrot.slane %v4765, 7
  %v4770 = vsel %vm4332, %v4745, %v4769
  %v4772 = vadd.f32 %v4684, %v4770
  %vm4773 = vcmask 1045506
  %v4774 = vsel %vm4773, %v4245, -inf
  %v4775 = vrot.slane %v4774, 4
  %v4776 = vmax.f32 %v4774, %v4775
  %v4777 = vrot.slane %v4776, 2
  %v4778 = vmax.f32 %v4776, %v4777
  %v4779 = vrot.slane %v4778, 1
  %v4780 = vmax.f32 %v4778, %v4779
  %v4781 = vmax.f32 %v4780, 0.0
  %s4782 = scalar_lea.vmem %s4, 1536
  %v4783 = vld [vmem:[%s4782] sm:$0xff]
  %v4784 = vld [vmem:[%s4782 + $0x8] sm:$0xff]
  %v4785 = vld [vmem:[%s4782 + $0x10] sm:$0xff]
  %v4786 = vld [vmem:[%s4782 + $0x18] sm:$0xff]
  %v4787 = vld [vmem:[%s4782 + $0x20] sm:$0xff]
  %v4788 = vld [vmem:[%s4782 + $0x28] sm:$0xff]
  %v4789 = vld [vmem:[%s4782 + $0x30] sm:$0xff]
  %v4790 = vld [vmem:[%s4782 + $0x38] sm:$0xff]
  %v4791 = vld [vmem:[%s4782 + $0x40] sm:$0xff]
  %v4792 = vld [vmem:[%s4782 + $0x48] sm:$0xff]
  %v4793 = vld [vmem:[%s4782 + $0x50] sm:$0xff]
  %v4794 = vld [vmem:[%s4782 + $0x58] sm:$0xff]
  %v4795 = vld [vmem:[%s4782 + $0x60] sm:$0xff]
  %v4796 = vld [vmem:[%s4782 + $0x68] sm:$0xff]
  %v4797 = vld [vmem:[%s4782 + $0x70] sm:$0xff]
  %v4798 = vld [vmem:[%s4782 + $0x78] sm:$0xff]
  %v4799 = vld [vmem:[%s4782 + $0x80] sm:$0xff]
  %v4800 = vld [vmem:[%s4782 + $0x88] sm:$0xff]
  %v4801 = vld [vmem:[%s4782 + $0x90] sm:$0xff]
  %v4802 = vld [vmem:[%s4782 + $0x98] sm:$0xff]
  %v4803 = vld [vmem:[%s4782 + $0xa0] sm:$0xff]
  %v4804 = vld [vmem:[%s4782 + $0xa8] sm:$0xff]
  %v4805 = vld [vmem:[%s4782 + $0xb0] sm:$0xff]
  %v4806 = vld [vmem:[%s4782 + $0xb8] sm:$0xff]
  %v4807 = vld [vmem:[%s4782 + $0xc0] sm:$0xff]
  %v4808 = vld [vmem:[%s4782 + $0xc8] sm:$0xff]
  %v4809 = vld [vmem:[%s4782 + $0xd0] sm:$0xff]
  %v4810 = vld [vmem:[%s4782 + $0xd8] sm:$0xff]
  %v4811 = vld [vmem:[%s4782 + $0xe0] sm:$0xff]
  %v4812 = vld [vmem:[%s4782 + $0xe8] sm:$0xff]
  %v4813 = vld [vmem:[%s4782 + $0xf0] sm:$0xff]
  %v4814 = vld [vmem:[%s4782 + $0xf8] sm:$0xff]
  %4815 = vmatpush.msra.mxu0 %v4813
  %4816 = vmatpush.msra.mxu0 %v4811
  %4817 = vmatpush.msra.mxu0 %v4809
  %4818 = vmatpush.msra.mxu0 %v4807
  %4819 = vmatpush.msra.mxu0 %v4805
  %4820 = vmatpush.msra.mxu0 %v4803
  %4821 = vmatpush.msra.mxu0 %v4801
  %4822 = vmatpush.msra.mxu0 %v4799
  %4823 = vmatpush.msra.mxu0 %v4797
  %4824 = vmatpush.msra.mxu0 %v4795
  %4825 = vmatpush.msra.mxu0 %v4793
  %4826 = vmatpush.msra.mxu0 %v4791
  %4827 = vmatpush.msra.mxu0 %v4789
  %4828 = vmatpush.msra.mxu0 %v4787
  %4829 = vmatpush.msra.mxu0 %v4785
  %4830 = vmatpush.msra.mxu0 %v4783
  %4831 = vmatmul.f32.gmra.mxu0 %v4781
  %v4832 = vpop.f32.mrf.mxu0
  %v4833 = vadd.f32 0.0, %v4832
  %4834 = vdwg.mxu0
  %4835 = vmatpush.msra.mxu0 %v4814
  %4836 = vmatpush.msra.mxu0 %v4812
  %4837 = vmatpush.msra.mxu0 %v4810
  %4838 = vmatpush.msra.mxu0 %v4808
  %4839 = vmatpush.msra.mxu0 %v4806
  %4840 = vmatpush.msra.mxu0 %v4804
  %4841 = vmatpush.msra.mxu0 %v4802
  %4842 = vmatpush.msra.mxu0 %v4800
  %4843 = vmatpush.msra.mxu0 %v4798
  %4844 = vmatpush.msra.mxu0 %v4796
  %4845 = vmatpush.msra.mxu0 %v4794
  %4846 = vmatpush.msra.mxu0 %v4792
  %4847 = vmatpush.msra.mxu0 %v4790
  %4848 = vmatpush.msra.mxu0 %v4788
  %4849 = vmatpush.msra.mxu0 %v4786
  %4850 = vmatpush.msra.mxu0 %v4784
  %4851 = vmatmul.f32.gmra.mxu0 %v4781
  %v4852 = vpop.f32.mrf.mxu0
  %v4853 = vadd.f32 0.0, %v4852
  %4854 = vdwg.mxu0
  %v4857 = vrot.slane %v4853, 7
  %v4858 = vsel %vm4332, %v4833, %v4857
  %v4860 = vadd.f32 %v4772, %v4858
  %vm4861 = vcmask 1047557
  %v4862 = vsel %vm4861, %v4245, -inf
  %v4863 = vrot.slane %v4862, 4
  %v4864 = vmax.f32 %v4862, %v4863
  %v4865 = vrot.slane %v4864, 2
  %v4866 = vmax.f32 %v4864, %v4865
  %v4867 = vrot.slane %v4866, 1
  %v4868 = vmax.f32 %v4866, %v4867
  %v4869 = vmax.f32 %v4868, 0.0
  %s4870 = scalar_lea.vmem %s4, 1792
  %v4871 = vld [vmem:[%s4870] sm:$0xff]
  %v4872 = vld [vmem:[%s4870 + $0x8] sm:$0xff]
  %v4873 = vld [vmem:[%s4870 + $0x10] sm:$0xff]
  %v4874 = vld [vmem:[%s4870 + $0x18] sm:$0xff]
  %v4875 = vld [vmem:[%s4870 + $0x20] sm:$0xff]
  %v4876 = vld [vmem:[%s4870 + $0x28] sm:$0xff]
  %v4877 = vld [vmem:[%s4870 + $0x30] sm:$0xff]
  %v4878 = vld [vmem:[%s4870 + $0x38] sm:$0xff]
  %v4879 = vld [vmem:[%s4870 + $0x40] sm:$0xff]
  %v4880 = vld [vmem:[%s4870 + $0x48] sm:$0xff]
  %v4881 = vld [vmem:[%s4870 + $0x50] sm:$0xff]
  %v4882 = vld [vmem:[%s4870 + $0x58] sm:$0xff]
  %v4883 = vld [vmem:[%s4870 + $0x60] sm:$0xff]
  %v4884 = vld [vmem:[%s4870 + $0x68] sm:$0xff]
  %v4885 = vld [vmem:[%s4870 + $0x70] sm:$0xff]
  %v4886 = vld [vmem:[%s4870 + $0x78] sm:$0xff]
  %v4887 = vld [vmem:[%s4870 + $0x80] sm:$0xff]
  %v4888 = vld [vmem:[%s4870 + $0x88] sm:$0xff]
  %v4889 = vld [vmem:[%s4870 + $0x90] sm:$0xff]
  %v4890 = vld [vmem:[%s4870 + $0x98] sm:$0xff]
  %v4891 = vld [vmem:[%s4870 + $0xa0] sm:$0xff]
  %v4892 = vld [vmem:[%s4870 + $0xa8] sm:$0xff]
  %v4893 = vld [vmem:[%s4870 + $0xb0] sm:$0xff]
  %v4894 = vld [vmem:[%s4870 + $0xb8] sm:$0xff]
  %v4895 = vld [vmem:[%s4870 + $0xc0] sm:$0xff]
  %v4896 = vld [vmem:[%s4870 + $0xc8] sm:$0xff]
  %v4897 = vld [vmem:[%s4870 + $0xd0] sm:$0xff]
  %v4898 = vld [vmem:[%s4870 + $0xd8] sm:$0xff]
  %v4899 = vld [vmem:[%s4870 + $0xe0] sm:$0xff]
  %v4900 = vld [vmem:[%s4870 + $0xe8] sm:$0xff]
  %v4901 = vld [vmem:[%s4870 + $0xf0] sm:$0xff]
  %v4902 = vld [vmem:[%s4870 + $0xf8] sm:$0xff]
  %4903 = vmatpush.msra.mxu0 %v4901
  %4904 = vmatpush.msra.mxu0 %v4899
  %4905 = vmatpush.msra.mxu0 %v4897
  %4906 = vmatpush.msra.mxu0 %v4895
  %4907 = vmatpush.msra.mxu0 %v4893
  %4908 = vmatpush.msra.mxu0 %v4891
  %4909 = vmatpush.msra.mxu0 %v4889
  %4910 = vmatpush.msra.mxu0 %v4887
  %4911 = vmatpush.msra.mxu0 %v4885
  %4912 = vmatpush.msra.mxu0 %v4883
  %4913 = vmatpush.msra.mxu0 %v4881
  %4914 = vmatpush.msra.mxu0 %v4879
  %4915 = vmatpush.msra.mxu0 %v4877
  %4916 = vmatpush.msra.mxu0 %v4875
  %4917 = vmatpush.msra.mxu0 %v4873
  %4918 = vmatpush.msra.mxu0 %v4871
  %4919 = vmatmul.f32.gmra.mxu0 %v4869
  %v4920 = vpop.f32.mrf.mxu0
  %v4921 = vadd.f32 0.0, %v4920
  %4922 = vdwg.mxu0
  %4923 = vmatpush.msra.mxu0 %v4902
  %4924 = vmatpush.msra.mxu0 %v4900
  %4925 = vmatpush.msra.mxu0 %v4898
  %4926 = vmatpush.msra.mxu0 %v4896
  %4927 = vmatpush.msra.mxu0 %v4894
  %4928 = vmatpush.msra.mxu0 %v4892
  %4929 = vmatpush.msra.mxu0 %v4890
  %4930 = vmatpush.msra.mxu0 %v4888
  %4931 = vmatpush.msra.mxu0 %v4886
  %4932 = vmatpush.msra.mxu0 %v4884
  %4933 = vmatpush.msra.mxu0 %v4882
  %4934 = vmatpush.msra.mxu0 %v4880
  %4935 = vmatpush.msra.mxu0 %v4878
  %4936 = vmatpush.msra.mxu0 %v4876
  %4937 = vmatpush.msra.mxu0 %v4874
  %4938 = vmatpush.msra.mxu0 %v4872
  %4939 = vmatmul.f32.gmra.mxu0 %v4869
  %v4940 = vpop.f32.mrf.mxu0
  %v4941 = vadd.f32 0.0, %v4940
  %4942 = vdwg.mxu0
  %v4945 = vrot.slane %v4941, 7
  %v4946 = vsel %vm4332, %v4921, %v4945
  %v4948 = vadd.f32 %v4860, %v4946
  %v4949 = vmax.f32 %v4236, %v4237
  %v4950 = vmax.f32 %v4949, %v4238
  %v4951 = vmax.f32 %v4950, %v4239
  %v4952 = vsel %vm4685, %v4951, -inf
  %v4953 = vrot.slane %v4952, 4
  %v4954 = vmax.f32 %v4952, %v4953
  %v4955 = vrot.slane %v4954, 2
  %v4956 = vmax.f32 %v4954, %v4955
  %v4957 = vrot.slane %v4956, 1
  %v4958 = vmax.f32 %v4956, %v4957
  %v4959 = vmax.f32 %v4958, 0.0
  %s4960 = scalar_lea.vmem %s4, 2048
  %v4961 = vld [vmem:[%s4960] sm:$0xff]
  %v4962 = vld [vmem:[%s4960 + $0x8] sm:$0xff]
  %v4963 = vld [vmem:[%s4960 + $0x10] sm:$0xff]
  %v4964 = vld [vmem:[%s4960 + $0x18] sm:$0xff]
  %v4965 = vld [vmem:[%s4960 + $0x20] sm:$0xff]
  %v4966 = vld [vmem:[%s4960 + $0x28] sm:$0xff]
  %v4967 = vld [vmem:[%s4960 + $0x30] sm:$0xff]
  %v4968 = vld [vmem:[%s4960 + $0x38] sm:$0xff]
  %v4969 = vld [vmem:[%s4960 + $0x40] sm:$0xff]
  %v4970 = vld [vmem:[%s4960 + $0x48] sm:$0xff]
  %v4971 = vld [vmem:[%s4960 + $0x50] sm:$0xff]
  %v4972 = vld [vmem:[%s4960 + $0x58] sm:$0xff]
  %v4973 = vld [vmem:[%s4960 + $0x60] sm:$0xff]
  %v4974 = vld [vmem:[%s4960 + $0x68] sm:$0xff]
  %v4975 = vld [vmem:[%s4960 + $0x70] sm:$0xff]
  %v4976 = vld [vmem:[%s4960 + $0x78] sm:$0xff]
  %v4977 = vld [vmem:[%s4960 + $0x80] sm:$0xff]
  %v4978 = vld [vmem:[%s4960 + $0x88] sm:$0xff]
  %v4979 = vld [vmem:[%s4960 + $0x90] sm:$0xff]
  %v4980 = vld [vmem:[%s4960 + $0x98] sm:$0xff]
  %v4981 = vld [vmem:[%s4960 + $0xa0] sm:$0xff]
  %v4982 = vld [vmem:[%s4960 + $0xa8] sm:$0xff]
  %v4983 = vld [vmem:[%s4960 + $0xb0] sm:$0xff]
  %v4984 = vld [vmem:[%s4960 + $0xb8] sm:$0xff]
  %v4985 = vld [vmem:[%s4960 + $0xc0] sm:$0xff]
  %v4986 = vld [vmem:[%s4960 + $0xc8] sm:$0xff]
  %v4987 = vld [vmem:[%s4960 + $0xd0] sm:$0xff]
  %v4988 = vld [vmem:[%s4960 + $0xd8] sm:$0xff]
  %v4989 = vld [vmem:[%s4960 + $0xe0] sm:$0xff]
  %v4990 = vld [vmem:[%s4960 + $0xe8] sm:$0xff]
  %v4991 = vld [vmem:[%s4960 + $0xf0] sm:$0xff]
  %v4992 = vld [vmem:[%s4960 + $0xf8] sm:$0xff]
  %4993 = vmatpush.msra.mxu0 %v4991
  %4994 = vmatpush.msra.mxu0 %v4989
  %4995 = vmatpush.msra.mxu0 %v4987
  %4996 = vmatpush.msra.mxu0 %v4985
  %4997 = vmatpush.msra.mxu0 %v4983
  %4998 = vmatpush.msra.mxu0 %v4981
  %4999 = vmatpush.msra.mxu0 %v4979
  %5000 = vmatpush.msra.mxu0 %v4977
  %5001 = vmatpush.msra.mxu0 %v4975
  %5002 = vmatpush.msra.mxu0 %v4973
  %5003 = vmatpush.msra.mxu0 %v4971
  %5004 = vmatpush.msra.mxu0 %v4969
  %5005 = vmatpush.msra.mxu0 %v4967
  %5006 = vmatpush.msra.mxu0 %v4965
  %5007 = vmatpush.msra.mxu0 %v4963
  %5008 = vmatpush.msra.mxu0 %v4961
  %5009 = vmatmul.f32.gmra.mxu0 %v4959
  %v5010 = vpop.f32.mrf.mxu0
  %v5011 = vadd.f32 0.0, %v5010
  %5012 = vdwg.mxu0
  %5013 = vmatpush.msra.mxu0 %v4992
  %5014 = vmatpush.msra.mxu0 %v4990
  %5015 = vmatpush.msra.mxu0 %v4988
  %5016 = vmatpush.msra.mxu0 %v4986
  %5017 = vmatpush.msra.mxu0 %v4984
  %5018 = vmatpush.msra.mxu0 %v4982
  %5019 = vmatpush.msra.mxu0 %v4980
  %5020 = vmatpush.msra.mxu0 %v4978
  %5021 = vmatpush.msra.mxu0 %v4976
  %5022 = vmatpush.msra.mxu0 %v4974
  %5023 = vmatpush.msra.mxu0 %v4972
  %5024 = vmatpush.msra.mxu0 %v4970
  %5025 = vmatpush.msra.mxu0 %v4968
  %5026 = vmatpush.msra.mxu0 %v4966
  %5027 = vmatpush.msra.mxu0 %v4964
  %5028 = vmatpush.msra.mxu0 %v4962
  %5029 = vmatmul.f32.gmra.mxu0 %v4959
  %v5030 = vpop.f32.mrf.mxu0
  %v5031 = vadd.f32 0.0, %v5030
  %5032 = vdwg.mxu0
  %v5035 = vrot.slane %v5031, 7
  %v5036 = vsel %vm4332, %v5011, %v5035
  %v5038 = vadd.f32 %v4948, %v5036
  %v5039 = vsel %vm4773, %v4951, -inf
  %v5040 = vrot.slane %v5039, 4
  %v5041 = vmax.f32 %v5039, %v5040
  %v5042 = vrot.slane %v5041, 2
  %v5043 = vmax.f32 %v5041, %v5042
  %v5044 = vrot.slane %v5043, 1
  %v5045 = vmax.f32 %v5043, %v5044
  %s5046 = scalar_lea.vmem %s4, 2304
  %v5047 = vld [vmem:[%s5046] sm:$0xff]
  %v5048 = vld [vmem:[%s5046 + $0x8] sm:$0xff]
  %v5049 = vld [vmem:[%s5046 + $0x10] sm:$0xff]
  %v5050 = vld [vmem:[%s5046 + $0x18] sm:$0xff]
  %v5051 = vld [vmem:[%s5046 + $0x20] sm:$0xff]
  %v5052 = vld [vmem:[%s5046 + $0x28] sm:$0xff]
  %v5053 = vld [vmem:[%s5046 + $0x30] sm:$0xff]
  %v5054 = vld [vmem:[%s5046 + $0x38] sm:$0xff]
  %v5055 = vld [vmem:[%s5046 + $0x40] sm:$0xff]
  %v5056 = vld [vmem:[%s5046 + $0x48] sm:$0xff]
  %v5057 = vld [vmem:[%s5046 + $0x50] sm:$0xff]
  %v5058 = vld [vmem:[%s5046 + $0x58] sm:$0xff]
  %v5059 = vld [vmem:[%s5046 + $0x60] sm:$0xff]
  %v5060 = vld [vmem:[%s5046 + $0x68] sm:$0xff]
  %v5061 = vld [vmem:[%s5046 + $0x70] sm:$0xff]
  %v5062 = vld [vmem:[%s5046 + $0x78] sm:$0xff]
  %v5063 = vld [vmem:[%s5046 + $0x80] sm:$0xff]
  %v5064 = vld [vmem:[%s5046 + $0x88] sm:$0xff]
  %v5065 = vld [vmem:[%s5046 + $0x90] sm:$0xff]
  %v5066 = vld [vmem:[%s5046 + $0x98] sm:$0xff]
  %v5067 = vld [vmem:[%s5046 + $0xa0] sm:$0xff]
  %v5068 = vld [vmem:[%s5046 + $0xa8] sm:$0xff]
  %v5069 = vld [vmem:[%s5046 + $0xb0] sm:$0xff]
  %v5070 = vld [vmem:[%s5046 + $0xb8] sm:$0xff]
  %v5071 = vld [vmem:[%s5046 + $0xc0] sm:$0xff]
  %v5072 = vld [vmem:[%s5046 + $0xc8] sm:$0xff]
  %v5073 = vld [vmem:[%s5046 + $0xd0] sm:$0xff]
  %v5074 = vld [vmem:[%s5046 + $0xd8] sm:$0xff]
  %v5075 = vld [vmem:[%s5046 + $0xe0] sm:$0xff]
  %v5076 = vld [vmem:[%s5046 + $0xe8] sm:$0xff]
  %v5077 = vld [vmem:[%s5046 + $0xf0] sm:$0xff]
  %v5078 = vld [vmem:[%s5046 + $0xf8] sm:$0xff]
  %5079 = vmatpush.msra.mxu0 %v5077
  %5080 = vmatpush.msra.mxu0 %v5075
  %5081 = vmatpush.msra.mxu0 %v5073
  %5082 = vmatpush.msra.mxu0 %v5071
  %5083 = vmatpush.msra.mxu0 %v5069
  %5084 = vmatpush.msra.mxu0 %v5067
  %5085 = vmatpush.msra.mxu0 %v5065
  %5086 = vmatpush.msra.mxu0 %v5063
  %5087 = vmatpush.msra.mxu0 %v5061
  %5088 = vmatpush.msra.mxu0 %v5059
  %5089 = vmatpush.msra.mxu0 %v5057
  %5090 = vmatpush.msra.mxu0 %v5055
  %5091 = vmatpush.msra.mxu0 %v5053
  %5092 = vmatpush.msra.mxu0 %v5051
  %5093 = vmatpush.msra.mxu0 %v5049
  %5094 = vmatpush.msra.mxu0 %v5047
  %5095 = vmatmul.f32.gmra.mxu0 %v5045
  %v5096 = vpop.f32.mrf.mxu0
  %v5097 = vadd.f32 0.0, %v5096
  %5098 = vdwg.mxu0
  %5099 = vmatpush.msra.mxu0 %v5078
  %5100 = vmatpush.msra.mxu0 %v5076
  %5101 = vmatpush.msra.mxu0 %v5074
  %5102 = vmatpush.msra.mxu0 %v5072
  %5103 = vmatpush.msra.mxu0 %v5070
  %5104 = vmatpush.msra.mxu0 %v5068
  %5105 = vmatpush.msra.mxu0 %v5066
  %5106 = vmatpush.msra.mxu0 %v5064
  %5107 = vmatpush.msra.mxu0 %v5062
  %5108 = vmatpush.msra.mxu0 %v5060
  %5109 = vmatpush.msra.mxu0 %v5058
  %5110 = vmatpush.msra.mxu0 %v5056
  %5111 = vmatpush.msra.mxu0 %v5054
  %5112 = vmatpush.msra.mxu0 %v5052
  %5113 = vmatpush.msra.mxu0 %v5050
  %5114 = vmatpush.msra.mxu0 %v5048
  %5115 = vmatmul.f32.gmra.mxu0 %v5045
  %v5116 = vpop.f32.mrf.mxu0
  %v5117 = vadd.f32 0.0, %v5116
  %5118 = vdwg.mxu0
  %v5121 = vrot.slane %v5117, 7
  %v5122 = vsel %vm4332, %v5097, %v5121
  %v5124 = vadd.f32 %v5038, %v5122
  %v5125 = vsel %vm4861, %v4951, -inf
  %v5126 = vrot.slane %v5125, 4
  %v5127 = vmax.f32 %v5125, %v5126
  %v5128 = vrot.slane %v5127, 2
  %v5129 = vmax.f32 %v5127, %v5128
  %v5130 = vrot.slane %v5129, 1
  %v5131 = vmax.f32 %v5129, %v5130
  %v5132 = vmax.f32 %v5131, 0.0
  %s5133 = scalar_lea.vmem %s4, 2560
  %v5134 = vld [vmem:[%s5133] sm:$0xff]
  %v5135 = vld [vmem:[%s5133 + $0x8] sm:$0xff]
  %v5136 = vld [vmem:[%s5133 + $0x10] sm:$0xff]
  %v5137 = vld [vmem:[%s5133 + $0x18] sm:$0xff]
  %v5138 = vld [vmem:[%s5133 + $0x20] sm:$0xff]
  %v5139 = vld [vmem:[%s5133 + $0x28] sm:$0xff]
  %v5140 = vld [vmem:[%s5133 + $0x30] sm:$0xff]
  %v5141 = vld [vmem:[%s5133 + $0x38] sm:$0xff]
  %v5142 = vld [vmem:[%s5133 + $0x40] sm:$0xff]
  %v5143 = vld [vmem:[%s5133 + $0x48] sm:$0xff]
  %v5144 = vld [vmem:[%s5133 + $0x50] sm:$0xff]
  %v5145 = vld [vmem:[%s5133 + $0x58] sm:$0xff]
  %v5146 = vld [vmem:[%s5133 + $0x60] sm:$0xff]
  %v5147 = vld [vmem:[%s5133 + $0x68] sm:$0xff]
  %v5148 = vld [vmem:[%s5133 + $0x70] sm:$0xff]
  %v5149 = vld [vmem:[%s5133 + $0x78] sm:$0xff]
  %v5150 = vld [vmem:[%s5133 + $0x80] sm:$0xff]
  %v5151 = vld [vmem:[%s5133 + $0x88] sm:$0xff]
  %v5152 = vld [vmem:[%s5133 + $0x90] sm:$0xff]
  %v5153 = vld [vmem:[%s5133 + $0x98] sm:$0xff]
  %v5154 = vld [vmem:[%s5133 + $0xa0] sm:$0xff]
  %v5155 = vld [vmem:[%s5133 + $0xa8] sm:$0xff]
  %v5156 = vld [vmem:[%s5133 + $0xb0] sm:$0xff]
  %v5157 = vld [vmem:[%s5133 + $0xb8] sm:$0xff]
  %v5158 = vld [vmem:[%s5133 + $0xc0] sm:$0xff]
  %v5159 = vld [vmem:[%s5133 + $0xc8] sm:$0xff]
  %v5160 = vld [vmem:[%s5133 + $0xd0] sm:$0xff]
  %v5161 = vld [vmem:[%s5133 + $0xd8] sm:$0xff]
  %v5162 = vld [vmem:[%s5133 + $0xe0] sm:$0xff]
  %v5163 = vld [vmem:[%s5133 + $0xe8] sm:$0xff]
  %v5164 = vld [vmem:[%s5133 + $0xf0] sm:$0xff]
  %v5165 = vld [vmem:[%s5133 + $0xf8] sm:$0xff]
  %5166 = vmatpush.msra.mxu0 %v5164
  %5167 = vmatpush.msra.mxu0 %v5162
  %5168 = vmatpush.msra.mxu0 %v5160
  %5169 = vmatpush.msra.mxu0 %v5158
  %5170 = vmatpush.msra.mxu0 %v5156
  %5171 = vmatpush.msra.mxu0 %v5154
  %5172 = vmatpush.msra.mxu0 %v5152
  %5173 = vmatpush.msra.mxu0 %v5150
  %5174 = vmatpush.msra.mxu0 %v5148
  %5175 = vmatpush.msra.mxu0 %v5146
  %5176 = vmatpush.msra.mxu0 %v5144
  %5177 = vmatpush.msra.mxu0 %v5142
  %5178 = vmatpush.msra.mxu0 %v5140
  %5179 = vmatpush.msra.mxu0 %v5138
  %5180 = vmatpush.msra.mxu0 %v5136
  %5181 = vmatpush.msra.mxu0 %v5134
  %5182 = vmatmul.f32.gmra.mxu0 %v5132
  %v5183 = vpop.f32.mrf.mxu0
  %v5184 = vadd.f32 0.0, %v5183
  %5185 = vdwg.mxu0
  %5186 = vmatpush.msra.mxu0 %v5165
  %5187 = vmatpush.msra.mxu0 %v5163
  %5188 = vmatpush.msra.mxu0 %v5161
  %5189 = vmatpush.msra.mxu0 %v5159
  %5190 = vmatpush.msra.mxu0 %v5157
  %5191 = vmatpush.msra.mxu0 %v5155
  %5192 = vmatpush.msra.mxu0 %v5153
  %5193 = vmatpush.msra.mxu0 %v5151
  %5194 = vmatpush.msra.mxu0 %v5149
  %5195 = vmatpush.msra.mxu0 %v5147
  %5196 = vmatpush.msra.mxu0 %v5145
  %5197 = vmatpush.msra.mxu0 %v5143
  %5198 = vmatpush.msra.mxu0 %v5141
  %5199 = vmatpush.msra.mxu0 %v5139
  %5200 = vmatpush.msra.mxu0 %v5137
  %5201 = vmatpush.msra.mxu0 %v5135
  %5202 = vmatmul.f32.gmra.mxu0 %v5132
  %v5203 = vpop.f32.mrf.mxu0
  %v5204 = vadd.f32 0.0, %v5203
  %5205 = vdwg.mxu0
  %v5208 = vrot.slane %v5204, 7
  %v5209 = vsel %vm4332, %v5184, %v5208
  %v5211 = vadd.f32 %v5124, %v5209
  %v5212 = vmax.f32 %v4239, %v4240
  %v5213 = vmax.f32 %v5212, %v4241
  %v5214 = vsel %vm4685, %v5213, -inf
  %v5215 = vrot.slane %v5214, 4
  %v5216 = vmax.f32 %v5214, %v5215
  %v5217 = vrot.slane %v5216, 2
  %v5218 = vmax.f32 %v5216, %v5217
  %v5219 = vrot.slane %v5218, 1
  %v5220 = vmax.f32 %v5218, %v5219
  %v5221 = vmax.f32 %v5220, 0.0
  %s5222 = scalar_lea.vmem %s4, 2816
  %v5223 = vld [vmem:[%s5222] sm:$0xff]
  %v5224 = vld [vmem:[%s5222 + $0x8] sm:$0xff]
  %v5225 = vld [vmem:[%s5222 + $0x10] sm:$0xff]
  %v5226 = vld [vmem:[%s5222 + $0x18] sm:$0xff]
  %v5227 = vld [vmem:[%s5222 + $0x20] sm:$0xff]
  %v5228 = vld [vmem:[%s5222 + $0x28] sm:$0xff]
  %v5229 = vld [vmem:[%s5222 + $0x30] sm:$0xff]
  %v5230 = vld [vmem:[%s5222 + $0x38] sm:$0xff]
  %v5231 = vld [vmem:[%s5222 + $0x40] sm:$0xff]
  %v5232 = vld [vmem:[%s5222 + $0x48] sm:$0xff]
  %v5233 = vld [vmem:[%s5222 + $0x50] sm:$0xff]
  %v5234 = vld [vmem:[%s5222 + $0x58] sm:$0xff]
  %v5235 = vld [vmem:[%s5222 + $0x60] sm:$0xff]
  %v5236 = vld [vmem:[%s5222 + $0x68] sm:$0xff]
  %v5237 = vld [vmem:[%s5222 + $0x70] sm:$0xff]
  %v5238 = vld [vmem:[%s5222 + $0x78] sm:$0xff]
  %v5239 = vld [vmem:[%s5222 + $0x80] sm:$0xff]
  %v5240 = vld [vmem:[%s5222 + $0x88] sm:$0xff]
  %v5241 = vld [vmem:[%s5222 + $0x90] sm:$0xff]
  %v5242 = vld [vmem:[%s5222 + $0x98] sm:$0xff]
  %v5243 = vld [vmem:[%s5222 + $0xa0] sm:$0xff]
  %v5244 = vld [vmem:[%s5222 + $0xa8] sm:$0xff]
  %v5245 = vld [vmem:[%s5222 + $0xb0] sm:$0xff]
  %v5246 = vld [vmem:[%s5222 + $0xb8] sm:$0xff]
  %v5247 = vld [vmem:[%s5222 + $0xc0] sm:$0xff]
  %v5248 = vld [vmem:[%s5222 + $0xc8] sm:$0xff]
  %v5249 = vld [vmem:[%s5222 + $0xd0] sm:$0xff]
  %v5250 = vld [vmem:[%s5222 + $0xd8] sm:$0xff]
  %v5251 = vld [vmem:[%s5222 + $0xe0] sm:$0xff]
  %v5252 = vld [vmem:[%s5222 + $0xe8] sm:$0xff]
  %v5253 = vld [vmem:[%s5222 + $0xf0] sm:$0xff]
  %v5254 = vld [vmem:[%s5222 + $0xf8] sm:$0xff]
  %5255 = vmatpush.msra.mxu0 %v5253
  %5256 = vmatpush.msra.mxu0 %v5251
  %5257 = vmatpush.msra.mxu0 %v5249
  %5258 = vmatpush.msra.mxu0 %v5247
  %5259 = vmatpush.msra.mxu0 %v5245
  %5260 = vmatpush.msra.mxu0 %v5243
  %5261 = vmatpush.msra.mxu0 %v5241
  %5262 = vmatpush.msra.mxu0 %v5239
  %5263 = vmatpush.msra.mxu0 %v5237
  %5264 = vmatpush.msra.mxu0 %v5235
  %5265 = vmatpush.msra.mxu0 %v5233
  %5266 = vmatpush.msra.mxu0 %v5231
  %5267 = vmatpush.msra.mxu0 %v5229
  %5268 = vmatpush.msra.mxu0 %v5227
  %5269 = vmatpush.msra.mxu0 %v5225
  %5270 = vmatpush.msra.mxu0 %v5223
  %5271 = vmatmul.f32.gmra.mxu0 %v5221
  %v5272 = vpop.f32.mrf.mxu0
  %v5273 = vadd.f32 0.0, %v5272
  %5274 = vdwg.mxu0
  %5275 = vmatpush.msra.mxu0 %v5254
  %5276 = vmatpush.msra.mxu0 %v5252
  %5277 = vmatpush.msra.mxu0 %v5250
  %5278 = vmatpush.msra.mxu0 %v5248
  %5279 = vmatpush.msra.mxu0 %v5246
  %5280 = vmatpush.msra.mxu0 %v5244
  %5281 = vmatpush.msra.mxu0 %v5242
  %5282 = vmatpush.msra.mxu0 %v5240
  %5283 = vmatpush.msra.mxu0 %v5238
  %5284 = vmatpush.msra.mxu0 %v5236
  %5285 = vmatpush.msra.mxu0 %v5234
  %5286 = vmatpush.msra.mxu0 %v5232
  %5287 = vmatpush.msra.mxu0 %v5230
  %5288 = vmatpush.msra.mxu0 %v5228
  %5289 = vmatpush.msra.mxu0 %v5226
  %5290 = vmatpush.msra.mxu0 %v5224
  %5291 = vmatmul.f32.gmra.mxu0 %v5221
  %v5292 = vpop.f32.mrf.mxu0
  %v5293 = vadd.f32 0.0, %v5292
  %5294 = vdwg.mxu0
  %v5297 = vrot.slane %v5293, 7
  %v5298 = vsel %vm4332, %v5273, %v5297
  %v5300 = vadd.f32 %v5211, %v5298
  %v5301 = vsel %vm4773, %v5213, -inf
  %v5302 = vrot.slane %v5301, 4
  %v5303 = vmax.f32 %v5301, %v5302
  %v5304 = vrot.slane %v5303, 2
  %v5305 = vmax.f32 %v5303, %v5304
  %v5306 = vrot.slane %v5305, 1
  %v5307 = vmax.f32 %v5305, %v5306
  %v5308 = vmax.f32 %v5307, 0.0
  %s5309 = scalar_lea.vmem %s4, 3072
  %v5310 = vld [vmem:[%s5309] sm:$0xff]
  %v5311 = vld [vmem:[%s5309 + $0x8] sm:$0xff]
  %v5312 = vld [vmem:[%s5309 + $0x10] sm:$0xff]
  %v5313 = vld [vmem:[%s5309 + $0x18] sm:$0xff]
  %v5314 = vld [vmem:[%s5309 + $0x20] sm:$0xff]
  %v5315 = vld [vmem:[%s5309 + $0x28] sm:$0xff]
  %v5316 = vld [vmem:[%s5309 + $0x30] sm:$0xff]
  %v5317 = vld [vmem:[%s5309 + $0x38] sm:$0xff]
  %v5318 = vld [vmem:[%s5309 + $0x40] sm:$0xff]
  %v5319 = vld [vmem:[%s5309 + $0x48] sm:$0xff]
  %v5320 = vld [vmem:[%s5309 + $0x50] sm:$0xff]
  %v5321 = vld [vmem:[%s5309 + $0x58] sm:$0xff]
  %v5322 = vld [vmem:[%s5309 + $0x60] sm:$0xff]
  %v5323 = vld [vmem:[%s5309 + $0x68] sm:$0xff]
  %v5324 = vld [vmem:[%s5309 + $0x70] sm:$0xff]
  %v5325 = vld [vmem:[%s5309 + $0x78] sm:$0xff]
  %v5326 = vld [vmem:[%s5309 + $0x80] sm:$0xff]
  %v5327 = vld [vmem:[%s5309 + $0x88] sm:$0xff]
  %v5328 = vld [vmem:[%s5309 + $0x90] sm:$0xff]
  %v5329 = vld [vmem:[%s5309 + $0x98] sm:$0xff]
  %v5330 = vld [vmem:[%s5309 + $0xa0] sm:$0xff]
  %v5331 = vld [vmem:[%s5309 + $0xa8] sm:$0xff]
  %v5332 = vld [vmem:[%s5309 + $0xb0] sm:$0xff]
  %v5333 = vld [vmem:[%s5309 + $0xb8] sm:$0xff]
  %v5334 = vld [vmem:[%s5309 + $0xc0] sm:$0xff]
  %v5335 = vld [vmem:[%s5309 + $0xc8] sm:$0xff]
  %v5336 = vld [vmem:[%s5309 + $0xd0] sm:$0xff]
  %v5337 = vld [vmem:[%s5309 + $0xd8] sm:$0xff]
  %v5338 = vld [vmem:[%s5309 + $0xe0] sm:$0xff]
  %v5339 = vld [vmem:[%s5309 + $0xe8] sm:$0xff]
  %v5340 = vld [vmem:[%s5309 + $0xf0] sm:$0xff]
  %v5341 = vld [vmem:[%s5309 + $0xf8] sm:$0xff]
  %5342 = vmatpush.msra.mxu0 %v5340
  %5343 = vmatpush.msra.mxu0 %v5338
  %5344 = vmatpush.msra.mxu0 %v5336
  %5345 = vmatpush.msra.mxu0 %v5334
  %5346 = vmatpush.msra.mxu0 %v5332
  %5347 = vmatpush.msra.mxu0 %v5330
  %5348 = vmatpush.msra.mxu0 %v5328
  %5349 = vmatpush.msra.mxu0 %v5326
  %5350 = vmatpush.msra.mxu0 %v5324
  %5351 = vmatpush.msra.mxu0 %v5322
  %5352 = vmatpush.msra.mxu0 %v5320
  %5353 = vmatpush.msra.mxu0 %v5318
  %5354 = vmatpush.msra.mxu0 %v5316
  %5355 = vmatpush.msra.mxu0 %v5314
  %5356 = vmatpush.msra.mxu0 %v5312
  %5357 = vmatpush.msra.mxu0 %v5310
  %5358 = vmatmul.f32.gmra.mxu0 %v5308
  %v5359 = vpop.f32.mrf.mxu0
  %v5360 = vadd.f32 0.0, %v5359
  %5361 = vdwg.mxu0
  %5362 = vmatpush.msra.mxu0 %v5341
  %5363 = vmatpush.msra.mxu0 %v5339
  %5364 = vmatpush.msra.mxu0 %v5337
  %5365 = vmatpush.msra.mxu0 %v5335
  %5366 = vmatpush.msra.mxu0 %v5333
  %5367 = vmatpush.msra.mxu0 %v5331
  %5368 = vmatpush.msra.mxu0 %v5329
  %5369 = vmatpush.msra.mxu0 %v5327
  %5370 = vmatpush.msra.mxu0 %v5325
  %5371 = vmatpush.msra.mxu0 %v5323
  %5372 = vmatpush.msra.mxu0 %v5321
  %5373 = vmatpush.msra.mxu0 %v5319
  %5374 = vmatpush.msra.mxu0 %v5317
  %5375 = vmatpush.msra.mxu0 %v5315
  %5376 = vmatpush.msra.mxu0 %v5313
  %5377 = vmatpush.msra.mxu0 %v5311
  %5378 = vmatmul.f32.gmra.mxu0 %v5308
  %v5379 = vpop.f32.mrf.mxu0
  %v5380 = vadd.f32 0.0, %v5379
  %5381 = vdwg.mxu0
  %v5384 = vrot.slane %v5380, 7
  %v5385 = vsel %vm4332, %v5360, %v5384
  %v5387 = vadd.f32 %v5300, %v5385
  %v5388 = vsel %vm4861, %v5213, -inf
  %v5389 = vrot.slane %v5388, 4
  %v5390 = vmax.f32 %v5388, %v5389
  %v5391 = vrot.slane %v5390, 2
  %v5392 = vmax.f32 %v5390, %v5391
  %v5393 = vrot.slane %v5392, 1
  %v5394 = vmax.f32 %v5392, %v5393
  %v5395 = vmax.f32 %v5394, 0.0
  %s5396 = scalar_lea.vmem %s4, 3328
  %v5397 = vld [vmem:[%s5396] sm:$0xff]
  %v5398 = vld [vmem:[%s5396 + $0x8] sm:$0xff]
  %v5399 = vld [vmem:[%s5396 + $0x10] sm:$0xff]
  %v5400 = vld [vmem:[%s5396 + $0x18] sm:$0xff]
  %v5401 = vld [vmem:[%s5396 + $0x20] sm:$0xff]
  %v5402 = vld [vmem:[%s5396 + $0x28] sm:$0xff]
  %v5403 = vld [vmem:[%s5396 + $0x30] sm:$0xff]
  %v5404 = vld [vmem:[%s5396 + $0x38] sm:$0xff]
  %v5405 = vld [vmem:[%s5396 + $0x40] sm:$0xff]
  %v5406 = vld [vmem:[%s5396 + $0x48] sm:$0xff]
  %v5407 = vld [vmem:[%s5396 + $0x50] sm:$0xff]
  %v5408 = vld [vmem:[%s5396 + $0x58] sm:$0xff]
  %v5409 = vld [vmem:[%s5396 + $0x60] sm:$0xff]
  %v5410 = vld [vmem:[%s5396 + $0x68] sm:$0xff]
  %v5411 = vld [vmem:[%s5396 + $0x70] sm:$0xff]
  %v5412 = vld [vmem:[%s5396 + $0x78] sm:$0xff]
  %v5413 = vld [vmem:[%s5396 + $0x80] sm:$0xff]
  %v5414 = vld [vmem:[%s5396 + $0x88] sm:$0xff]
  %v5415 = vld [vmem:[%s5396 + $0x90] sm:$0xff]
  %v5416 = vld [vmem:[%s5396 + $0x98] sm:$0xff]
  %v5417 = vld [vmem:[%s5396 + $0xa0] sm:$0xff]
  %v5418 = vld [vmem:[%s5396 + $0xa8] sm:$0xff]
  %v5419 = vld [vmem:[%s5396 + $0xb0] sm:$0xff]
  %v5420 = vld [vmem:[%s5396 + $0xb8] sm:$0xff]
  %v5421 = vld [vmem:[%s5396 + $0xc0] sm:$0xff]
  %v5422 = vld [vmem:[%s5396 + $0xc8] sm:$0xff]
  %v5423 = vld [vmem:[%s5396 + $0xd0] sm:$0xff]
  %v5424 = vld [vmem:[%s5396 + $0xd8] sm:$0xff]
  %v5425 = vld [vmem:[%s5396 + $0xe0] sm:$0xff]
  %v5426 = vld [vmem:[%s5396 + $0xe8] sm:$0xff]
  %v5427 = vld [vmem:[%s5396 + $0xf0] sm:$0xff]
  %v5428 = vld [vmem:[%s5396 + $0xf8] sm:$0xff]
  %5429 = vmatpush.msra.mxu0 %v5427
  %5430 = vmatpush.msra.mxu0 %v5425
  %5431 = vmatpush.msra.mxu0 %v5423
  %5432 = vmatpush.msra.mxu0 %v5421
  %5433 = vmatpush.msra.mxu0 %v5419
  %5434 = vmatpush.msra.mxu0 %v5417
  %5435 = vmatpush.msra.mxu0 %v5415
  %5436 = vmatpush.msra.mxu0 %v5413
  %5437 = vmatpush.msra.mxu0 %v5411
  %5438 = vmatpush.msra.mxu0 %v5409
  %5439 = vmatpush.msra.mxu0 %v5407
  %5440 = vmatpush.msra.mxu0 %v5405
  %5441 = vmatpush.msra.mxu0 %v5403
  %5442 = vmatpush.msra.mxu0 %v5401
  %5443 = vmatpush.msra.mxu0 %v5399
  %5444 = vmatpush.msra.mxu0 %v5397
  %5445 = vmatmul.f32.gmra.mxu0 %v5395
  %v5446 = vpop.f32.mrf.mxu0
  %v5447 = vadd.f32 0.0, %v5446
  %5448 = vdwg.mxu0
  %5449 = vmatpush.msra.mxu0 %v5428
  %5450 = vmatpush.msra.mxu0 %v5426
  %5451 = vmatpush.msra.mxu0 %v5424
  %5452 = vmatpush.msra.mxu0 %v5422
  %5453 = vmatpush.msra.mxu0 %v5420
  %5454 = vmatpush.msra.mxu0 %v5418
  %5455 = vmatpush.msra.mxu0 %v5416
  %5456 = vmatpush.msra.mxu0 %v5414
  %5457 = vmatpush.msra.mxu0 %v5412
  %5458 = vmatpush.msra.mxu0 %v5410
  %5459 = vmatpush.msra.mxu0 %v5408
  %5460 = vmatpush.msra.mxu0 %v5406
  %5461 = vmatpush.msra.mxu0 %v5404
  %5462 = vmatpush.msra.mxu0 %v5402
  %5463 = vmatpush.msra.mxu0 %v5400
  %5464 = vmatpush.msra.mxu0 %v5398
  %5465 = vmatmul.f32.gmra.mxu0 %v5395
  %v5466 = vpop.f32.mrf.mxu0
  %v5467 = vadd.f32 0.0, %v5466
  %5468 = vdwg.mxu0
  %v5471 = vrot.slane %v5467, 7
  %v5472 = vsel %vm4332, %v5447, %v5471
  %v5474 = vadd.f32 %v5387, %v5472
  %vm5475 = vcmp.gt.f32.partialorder %v5474, 0.0
  %v5476 = vmin.f32 %v5474, 0.0
  %v5477 = vmul.f32 %v5476, 1.442695
  %v5478 = vpow.pop %v5477
  %v5479 = vsub.f32 %v5478, 1.0
  %v5480 = vsel %vm5475, %v5474, %v5479
  %v5481 = vld [vmem:[%s5] sm:$0xff]
  %v5482 = vld [vmem:[%s5 + $0x8] sm:$0xff]
  %v5483 = vld [vmem:[%s5 + $0x10] sm:$0xff]
  %v5484 = vld [vmem:[%s5 + $0x18] sm:$0xff]
  %v5485 = vld [vmem:[%s5 + $0x20] sm:$0xff]
  %v5486 = vld [vmem:[%s5 + $0x28] sm:$0xff]
  %v5487 = vld [vmem:[%s5 + $0x30] sm:$0xff]
  %v5488 = vld [vmem:[%s5 + $0x38] sm:$0xff]
  %v5489 = vld [vmem:[%s5 + $0x40] sm:$0xff]
  %v5490 = vld [vmem:[%s5 + $0x48] sm:$0xff]
  %v5491 = vld [vmem:[%s5 + $0x50] sm:$0xff]
  %v5492 = vld [vmem:[%s5 + $0x58] sm:$0xff]
  %v5493 = vld [vmem:[%s5 + $0x60] sm:$0xff]
  %v5494 = vld [vmem:[%s5 + $0x68] sm:$0xff]
  %v5495 = vld [vmem:[%s5 + $0x70] sm:$0xff]
  %v5496 = vld [vmem:[%s5 + $0x78] sm:$0xff]
  %v5497 = vld [vmem:[%s5 + $0x80] sm:$0xff]
  %v5498 = vld [vmem:[%s5 + $0x88] sm:$0xff]
  %v5499 = vld [vmem:[%s5 + $0x90] sm:$0xff]
  %v5500 = vld [vmem:[%s5 + $0x98] sm:$0xff]
  %v5501 = vld [vmem:[%s5 + $0xa0] sm:$0xff]
  %v5502 = vld [vmem:[%s5 + $0xa8] sm:$0xff]
  %v5503 = vld [vmem:[%s5 + $0xb0] sm:$0xff]
  %v5504 = vld [vmem:[%s5 + $0xb8] sm:$0xff]
  %v5505 = vld [vmem:[%s5 + $0xc0] sm:$0xff]
  %v5506 = vld [vmem:[%s5 + $0xc8] sm:$0xff]
  %v5507 = vld [vmem:[%s5 + $0xd0] sm:$0xff]
  %v5508 = vld [vmem:[%s5 + $0xd8] sm:$0xff]
  %v5509 = vld [vmem:[%s5 + $0xe0] sm:$0xff]
  %v5510 = vld [vmem:[%s5 + $0xe8] sm:$0xff]
  %v5511 = vld [vmem:[%s5 + $0xf0] sm:$0xff]
  %v5512 = vld [vmem:[%s5 + $0xf8] sm:$0xff]
  %v5513 = vld [vmem:[%s2 + $0x7] ss:$0 sm:$0xff]
  %v5515 = vperm.slane %v5480, 0
  %v5516 = vperm.slane %v5480, 1
  %5519 = vmatpush.msra.mxu0 %v5496
  %5520 = vmatpush.msra.mxu0 %v5495
  %5521 = vmatpush.msra.mxu0 %v5494
  %5522 = vmatpush.msra.mxu0 %v5493
  %5523 = vmatpush.msra.mxu0 %v5492
  %5524 = vmatpush.msra.mxu0 %v5491
  %5525 = vmatpush.msra.mxu0 %v5490
  %5526 = vmatpush.msra.mxu0 %v5489
  %5527 = vmatpush.msra.mxu0 %v5488
  %5528 = vmatpush.msra.mxu0 %v5487
  %5529 = vmatpush.msra.mxu0 %v5486
  %5530 = vmatpush.msra.mxu0 %v5485
  %5531 = vmatpush.msra.mxu0 %v5484
  %5532 = vmatpush.msra.mxu0 %v5483
  %5533 = vmatpush.msra.mxu0 %v5482
  %5534 = vmatpush.msra.mxu0 %v5481
  %5535 = vmatmul.f32.gmra.mxu0 %v5515
  %v5536 = vpop.f32.mrf.mxu0
  %v5537 = vadd.f32 %v5513, %v5536
  %5538 = vdwg.mxu0
  %5539 = vmatpush.msra.mxu0 %v5512
  %5540 = vmatpush.msra.mxu0 %v5511
  %5541 = vmatpush.msra.mxu0 %v5510
  %5542 = vmatpush.msra.mxu0 %v5509
  %5543 = vmatpush.msra.mxu0 %v5508
  %5544 = vmatpush.msra.mxu0 %v5507
  %5545 = vmatpush.msra.mxu0 %v5506
  %5546 = vmatpush.msra.mxu0 %v5505
  %5547 = vmatpush.msra.mxu0 %v5504
  %5548 = vmatpush.msra.mxu0 %v5503
  %5549 = vmatpush.msra.mxu0 %v5502
  %5550 = vmatpush.msra.mxu0 %v5501
  %5551 = vmatpush.msra.mxu0 %v5500
  %5552 = vmatpush.msra.mxu0 %v5499
  %5553 = vmatpush.msra.mxu0 %v5498
  %5554 = vmatpush.msra.mxu0 %v5497
  %5555 = vmatmul.f32.gmra.mxu0 %v5516
  %v5556 = vpop.f32.mrf.mxu0
  %v5557 = vadd.f32 %v5537, %v5556
  %5558 = vdwg.mxu0
  %5559 = vst [vmem:[%s6] sm:$0x1] %v5557
  // Predicated region
  $region26: #{_forward_main_impl.1} parent=0 // pred_check
    _
  $region27: #{_forward_main_impl.1} parent=0 // pred_check_branch
    %5561 = sbr.rel (0) target = $region29
  $region28: #{_forward_main_impl.1} parent=0 // pred_region
    _
  $region29: #{_forward_main_impl.1} parent=0 // pred_fallthru
    _
  // Predicated region
  $region30: #{_forward_main_impl.1} parent=0 // pred_check
    _
  $region31: #{_forward_main_impl.1} parent=0 // pred_check_branch
    %5563 = sbr.rel (0) target = $region33
  $region32: #{_forward_main_impl.1} parent=0 // pred_region
    _
  $region33: #{_forward_main_impl.1} parent=0 // pred_fallthru
    _

</llo_original>
